<compile_context>
chip_gen: v7x
topology: tpu7x:2x2x1
jax: 0.10.0
libtpu: 0.0.40
codegen_flags: <defaults>
</compile_context>

<pallas_src>
import functools
import math

import jax
import jax.numpy as jnp
from jax.experimental import pallas as pl
from jax.experimental.pallas import tpu as pltpu


# --------------------------------------------------------------------------
# small helpers
# --------------------------------------------------------------------------

def _pick_tile(hw, max_tile=4096):
    """Largest lane tile (multiple of 128) dividing hw, capped so per-pixel
    grids keep >= 2 steps (v7x has 2 TensorCores)."""
    if hw % 128 != 0:
        # TODO(synk): pad the pixel axis to a multiple of 128 (with a masked
        # LayerNorm) so stores stay lane-dense for odd image sizes.
        return hw
    cap = min(hw, max_tile)
    if hw >= 256:
        cap = min(cap, hw // 2)          # guarantee >= 2 grid steps when possible
    t = max(cap - cap % 128, 128)
    while hw % t:
        t -= 128
    return t


def _const_spec(shape):
    """BlockSpec for a small weight replicated at every grid step."""
    zeros = (0,) * len(shape)
    return pl.BlockSpec(shape, lambda *_: zeros)


def _cparams(*sems):
    # Raise the scoped-VMEM cap so bigger lane tiles double-buffer on v5e/v6e
    # while staying under v7x's 64 MiB physical VMEM.
    return pltpu.CompilerParams(dimension_semantics=sems,
                                vmem_limit_bytes=48 * 1024 * 1024)


def _mix(w_ref, x, b_ref):
    """1x1 conv: (Cout, Cin) @ (Cin, pixels) + bias -> lane-dense output."""
    return jnp.dot(w_ref[...], x, preferred_element_type=jnp.float32) + b_ref[...]


def _gelu_exact(x):
    """Exact (erf) GELU.  erf via Abramowitz-Stegun 7.1.26, |err| <= 1.5e-7
    (~f32 eps), built only from exp / div so it lowers in Mosaic.
    TODO(synk): swap to lax.erf once its Mosaic lowering is confirmed."""
    z = x * 0.7071067811865476
    az = jnp.abs(z)
    t = 1.0 / (1.0 + 0.3275911 * az)
    poly = t * (0.254829592 + t * (-0.284496736 + t * (1.421413741
               + t * (-1.453152027 + t * 1.061405429))))
    erf_az = 1.0 - poly * jnp.exp(-az * az)
    erf_z = jnp.where(z < 0.0, -erf_az, erf_az)
    return 0.5 * x * (1.0 + erf_z)


# --------------------------------------------------------------------------
# K1: LayerNorm(ev), LayerNorm(im), conv1x1_1(cat), conv1x1_2, conv1x1_6
# --------------------------------------------------------------------------

def _norm_mix_kernel(ev_ref, im_ref, w1a_ref, w1b_ref, b1_ref, w2_ref, b2_ref,
                     w6_ref, b6_ref, x2_ref, x3_ref, t2_ref, x1p_ref, *, eps):
    # Blocks are (1, C, H*W); LayerNorm([C,H,W]) is a per-batch reduce over the
    # whole block (fresh nn.LayerNorm in forward() => identity affine).
    # TODO(synk): for very large H*W on v7x, switch to a two-pass LayerNorm over
    # an 'arbitrary' pixel-tile grid axis to bound the (1,C,HW) block.
    def layernorm(x):
        mean = jnp.mean(x, axis=1, keepdims=True)      # lane reduce    -> (C, 1)
        mean = jnp.mean(mean, axis=0, keepdims=True)   # sublane reduce -> (1, 1)
        xc = x - mean
        var = jnp.mean(xc * xc, axis=1, keepdims=True)
        var = jnp.mean(var, axis=0, keepdims=True)
        return xc * jax.lax.rsqrt(var + eps)

    x1 = layernorm(ev_ref[0].astype(jnp.float32))
    x2 = layernorm(im_ref[0].astype(jnp.float32))
    x2_ref[0] = x2
    # conv1x1_1 on cat([x1, x2]) split into two matmuls (no in-kernel concat).
    x3_ref[0] = (jnp.dot(w1a_ref[...], x1, preferred_element_type=jnp.float32)
                 + jnp.dot(w1b_ref[...], x2, preferred_element_type=jnp.float32)
                 + b1_ref[...])
    t2_ref[0] = _mix(w2_ref, x2, b2_ref)
    x1p_ref[0] = _mix(w6_ref, x1, b6_ref)   # conv1x1_6(x1): x1 never hits HBM


def _stage_norm_mix(ev, im, q, eps=1e-5):
    B, C, HW = ev.shape
    data = pl.BlockSpec((1, C, HW), lambda b: (b, 0, 0))
    cw, cb = _const_spec((C, C)), _const_spec((C, 1))
    out = jax.ShapeDtypeStruct((B, C, HW), jnp.float32)
    return pl.pallas_call(
        functools.partial(_norm_mix_kernel, eps=eps),
        grid=(B,),
        in_specs=[data, data, cw, cw, cb, cw, cb, cw, cb],
        out_specs=[data, data, data, data],
        out_shape=[out, out, out, out],
        compiler_params=_cparams("parallel"),
    )(ev, im, q["k1_w1a"], q["k1_w1b"], q["k1_b1"], q["k1_w2"], q["k1_b2"],
      q["k1_w6"], q["k1_b6"])


# --------------------------------------------------------------------------
# K2 / K6: depthwise 3x3, channel-vectorized, halo built in-kernel
# --------------------------------------------------------------------------

def _dw_conv(x, w_ref, b_ref, C, H, W):
    """Depthwise 3x3, padding=1, on a whole (C, H, W) channel stack at once.
    w_ref: (9, C, 1, 1) tap weights, b_ref: (C, 1, 1)."""
    zc = jnp.zeros((C, H, 1), jnp.float32)
    xp = jnp.concatenate([zc, x, zc], axis=2)          # (C, H, W+2)
    zr = jnp.zeros((C, 1, W + 2), jnp.float32)
    xp = jnp.concatenate([zr, xp, zr], axis=1)         # (C, H+2, W+2)
    acc = b_ref[...]                                   # (C, 1, 1) -> broadcasts
    for k in range(9):
        kh, kw = divmod(k, 3)
        acc = acc + xp[:, kh:kh + H, kw:kw + W] * w_ref[k]
    return acc


def _dw_pair_kernel(xa_ref, xb_ref, wa_ref, ba_ref, wb_ref, bb_ref,
                    oa_ref, ob_ref, *, C, H, W):
    oa_ref[0] = _dw_conv(xa_ref[0].astype(jnp.float32), wa_ref, ba_ref, C, H, W)
    ob_ref[0] = _dw_conv(xb_ref[0].astype(jnp.float32), wb_ref, bb_ref, C, H, W)


def _stage_dw_pair(xa, xb, q):
    B, C, H, W = xa.shape
    data = pl.BlockSpec((1, C, H, W), lambda b: (b, 0, 0, 0))
    cw, cb = _const_spec((9, C, 1, 1)), _const_spec((C, 1, 1))
    out = jax.ShapeDtypeStruct((B, C, H, W), jnp.float32)
    return pl.pallas_call(
        functools.partial(_dw_pair_kernel, C=C, H=H, W=W),
        grid=(B,),
        in_specs=[data, data, cw, cb, cw, cb],
        out_specs=[data, data],
        out_shape=[out, out],
        compiler_params=_cparams("parallel"),
    )(xa, xb, q["dw_conv_1_w"], q["dw_conv_1_b"], q["dw_conv_2_w"], q["dw_conv_2_b"])


# --------------------------------------------------------------------------
# K3: fused spectral per-pixel chain (stacked real/imag, block-diag weights)
# --------------------------------------------------------------------------

def _spectral_kernel(x4s_ref, x6s_ref, wri_ref, bri_ref, w5d_ref, b5d_ref,
                     w4_ref, b4_ref, w3_ref, b3_ref, out_ref, *, B):
    for b in range(B):                                   # tiny, Python-unrolled
        s = x4s_ref[b].astype(jnp.float32)               # (2C, TN) = [x4.re; x4.im]
        ri = jnp.maximum(_mix(wri_ref, s, bri_ref), 0.0)           # [relu(real); relu(imag)]
        x5d = jax.nn.sigmoid(_mix(w5d_ref, ri, b5d_ref))           # x5 duplicated in both halves
        prod = x5d * x6s_ref[b].astype(jnp.float32)                # [x5*x6.re; x5*x6.im]
        h = jnp.maximum(_mix(w4_ref, prod, b4_ref), 0.0)           # conv1x1_4_{r,i} + relu
        out_ref[b] = _mix(w3_ref, h, b3_ref)                       # conv1x1_3_{r,i}


def _stage_spectral(x4s, x6s, q):
    B, C2, HW = x4s.shape
    TN = _pick_tile(HW)
    data = pl.BlockSpec((B, C2, TN), lambda t: (0, 0, t))
    cw, cb = _const_spec((C2, C2)), _const_spec((C2, 1))
    return pl.pallas_call(
        functools.partial(_spectral_kernel, B=B),
        grid=(HW // TN,),
        in_specs=[data, data, cw, cb, cw, cb, cw, cb, cw, cb],
        out_specs=data,
        out_shape=jax.ShapeDtypeStruct((B, C2, HW), jnp.float32),
        compiler_params=_cparams("parallel"),
    )(x4s, x6s, q["k3_wri"], q["k3_bri"], q["k3_w5d"], q["k3_b5d"],
      q["k3_w4"], q["k3_b4"], q["k3_w3"], q["k3_b3"])


# --------------------------------------------------------------------------
# K4: folded filter_generation∘channel_attention, emit x8*x9 directly
# --------------------------------------------------------------------------

def _filter_kernel(x7r_ref, x7i_ref, x3_ref, x8s_ref, wfd_ref, bfd_ref,
                   ys_ref, *, B):
    for b in range(B):
        s = (x7r_ref[b].astype(jnp.float32) + x3_ref[b].astype(jnp.float32)
             + x7i_ref[b].astype(jnp.float32))
        x9d = _mix(wfd_ref, s, bfd_ref)                  # (2C, TN), x9 duplicated halves
        ys_ref[b] = x9d * x8s_ref[b].astype(jnp.float32)  # [x9*x8.re; x9*x8.im]


def _stage_filter(x7r, x7i, x3, x8s, q):
    B, C, HW = x3.shape
    TN = _pick_tile(HW)
    d1 = pl.BlockSpec((B, C, TN), lambda t: (0, 0, t))
    d2 = pl.BlockSpec((B, 2 * C, TN), lambda t: (0, 0, t))
    return pl.pallas_call(
        functools.partial(_filter_kernel, B=B),
        grid=(HW // TN,),
        in_specs=[d1, d1, d1, d2, _const_spec((2 * C, C)), _const_spec((2 * C, 1))],
        out_specs=d2,
        out_shape=jax.ShapeDtypeStruct((B, 2 * C, HW), jnp.float32),
        compiler_params=_cparams("parallel"),
    )(x7r, x7i, x3, x8s, q["k4_wfd"], q["k4_bfd"])


# --------------------------------------------------------------------------
# K5: both single-head cross-attentions fused (stacked projections)
# --------------------------------------------------------------------------

def _cross_attn_kernel(x10s_ref, kv_ref, wq_ref, bq_ref, wkv_ref, bkv_ref,
                       wor_ref, bor_ref, woi_ref, boi_ref, xabs_ref,
                       *, L, C, scale):
    # nn.MultiheadAttention is seq-first: the model batch B is the sequence (L),
    # the H*W pixels are the attention batch and sit on lanes (lane-dense).
    # TODO(synk): L(=B) is Python-unrolled (O(L^2) live slabs); switch to an
    # online-softmax / lax loop if the batch grows beyond ~4.
    q_r, q_i, k_r, v_r, k_i, v_i = [], [], [], [], [], []
    for l in range(L):
        qa = _mix(wq_ref, x10s_ref[l].astype(jnp.float32), bq_ref)   # (2C, TN)
        kva = _mix(wkv_ref, kv_ref[l].astype(jnp.float32), bkv_ref)  # (4C, TN)
        q_r.append(qa[:C])
        q_i.append(qa[C:])
        k_r.append(kva[:C])
        v_r.append(kva[C:2 * C])
        k_i.append(kva[2 * C:3 * C])
        v_i.append(kva[3 * C:])

    def attend(qs, ks, vs, wo_ref, bo_ref):
        outs = []
        for i in range(L):
            scores = [jnp.sum(qs[i] * ks[j], axis=0, keepdims=True) * scale
                      for j in range(L)]                 # (1, TN) each
            m = scores[0]
            for j in range(1, L):
                m = jnp.maximum(m, scores[j])
            exps = [jnp.exp(s - m) for s in scores]
            denom = exps[0]
            for j in range(1, L):
                denom = denom + exps[j]
            ctx = exps[0] * vs[0]
            for j in range(1, L):
                ctx = ctx + exps[j] * vs[j]
            ctx = ctx / denom            # exact divide: numerical parity with torch softmax
            outs.append(_mix(wo_ref, ctx, bo_ref))
        return outs

    out_r = attend(q_r, k_r, v_r, wor_ref, bor_ref)
    out_i = attend(q_i, k_i, v_i, woi_ref, boi_ref)
    for l in range(L):
        xabs_ref[l] = jnp.sqrt(out_r[l] * out_r[l] + out_i[l] * out_i[l])


def _stage_cross_attention(x10s, x1p, q):
    B, C, HW = x1p.shape
    TN = _pick_tile(HW)
    dq = pl.BlockSpec((B, 2 * C, TN), lambda t: (0, 0, t))
    dk = pl.BlockSpec((B, C, TN), lambda t: (0, 0, t))
    return pl.pallas_call(
        functools.partial(_cross_attn_kernel, L=B, C=C, scale=1.0 / math.sqrt(C)),
        grid=(HW // TN,),
        in_specs=[dq, dk,
                  _const_spec((2 * C, 2 * C)), _const_spec((2 * C, 1)),
                  _const_spec((4 * C, C)), _const_spec((4 * C, 1)),
                  _const_spec((C, C)), _const_spec((C, 1)),
                  _const_spec((C, C)), _const_spec((C, 1))],
        out_specs=dk,
        out_shape=jax.ShapeDtypeStruct((B, C, HW), jnp.float32),
        compiler_params=_cparams("parallel"),
    )(x10s, x1p, q["k5_wq"], q["k5_bq"], q["k5_wkv"], q["k5_bkv"],
      q["k5_wor"], q["k5_bor"], q["k5_woi"], q["k5_boi"])


# --------------------------------------------------------------------------
# K6: dw_conv_3 + exact GELU + conv1x1_7 + residual, fully fused
# --------------------------------------------------------------------------

def _tail_kernel(x_ref, x2_ref, w3_ref, b3_ref, w7t_ref, b7_ref, o_ref, *, C, H, W):
    g = _dw_conv(x_ref[0].astype(jnp.float32), w3_ref, b3_ref, C, H, W)
    g = _gelu_exact(g)
    # conv1x1_7 as C broadcast-FMAs on the VPU (C is tiny; no MXU padding waste).
    acc = b7_ref[...]                                    # (C, 1, 1)
    for i in range(C):
        acc = acc + w7t_ref[i] * g[i]                    # (C,1,1) * (H,W) -> (C,H,W)
    o_ref[0] = acc + x2_ref[0].astype(jnp.float32)


def _stage_tail(xabs, x2, q):
    B, C, H, W = xabs.shape
    data = pl.BlockSpec((1, C, H, W), lambda b: (b, 0, 0, 0))
    return pl.pallas_call(
        functools.partial(_tail_kernel, C=C, H=H, W=W),
        grid=(B,),
        in_specs=[data, data, _const_spec((9, C, 1, 1)), _const_spec((C, 1, 1)),
                  _const_spec((C, C, 1, 1)), _const_spec((C, 1, 1))],
        out_specs=data,
        out_shape=jax.ShapeDtypeStruct((B, C, H, W), jnp.float32),
        compiler_params=_cparams("parallel"),
    )(xabs, x2, q["dw_conv_3_w"], q["dw_conv_3_b"], q["k6_w7t"], q["k6_b7"])


# --------------------------------------------------------------------------
# parameters (random, PyTorch-layer-equivalent shapes; stored (in, out))
# --------------------------------------------------------------------------

def init_params(key, C):
    keys = iter(jax.random.split(key, 64))

    def w(shape, scale=0.1):
        return jax.random.normal(next(keys), shape, jnp.float32) * scale

    def b(n):
        return jax.random.normal(next(keys), (n,), jnp.float32) * 0.01

    p = {}
    p["conv1x1_1_w"], p["conv1x1_1_b"] = w((2 * C, C)), b(C)
    for name in ["dw_conv_1", "dw_conv_2", "dw_conv_3"]:
        p[name + "_w"], p[name + "_b"] = w((9, C)), b(C)
    for name in ["conv1x1_real", "conv1x1_imag", "conv1x1_2",
                 "conv1x1_3_real", "conv1x1_3_imag", "conv1x1_4_real",
                 "conv1x1_4_imag", "conv1x1_6", "conv1x1_7",
                 "channel_attention", "filter_generation"]:
        p[name + "_w"], p[name + "_b"] = w((C, C)), b(C)
    p["conv1x1_5_w"], p["conv1x1_5_b"] = w((2 * C, C)), b(C)
    for name in ["cross_attention_real", "cross_attention_imag"]:
        p[name] = dict(wq=w((C, C)), bq=b(C), wk=w((C, C)), bk=b(C),
                       wv=w((C, C)), bv=b(C), wo=w((C, C)), bo=b(C))
    return p


def prepack_params(p, C):
    """One-time packing of all weights into kernel-ready (out,in)/broadcast
    layouts (hoisted out of the forward pass)."""
    def col(v):
        return v.reshape(-1, 1)

    def blkdiag(a, b):
        z01 = jnp.zeros((a.shape[0], b.shape[1]), jnp.float32)
        z10 = jnp.zeros((b.shape[0], a.shape[1]), jnp.float32)
        return jnp.concatenate([jnp.concatenate([a, z01], axis=1),
                                jnp.concatenate([z10, b], axis=1)], axis=0)

    q = {}
    # K1
    w1 = p["conv1x1_1_w"]
    q["k1_w1a"], q["k1_w1b"], q["k1_b1"] = w1[:C].T, w1[C:].T, col(p["conv1x1_1_b"])
    q["k1_w2"], q["k1_b2"] = p["conv1x1_2_w"].T, col(p["conv1x1_2_b"])
    q["k1_w6"], q["k1_b6"] = p["conv1x1_6_w"].T, col(p["conv1x1_6_b"])
    # K2 / K6: depthwise taps as channel vectors
    for name in ["dw_conv_1", "dw_conv_2", "dw_conv_3"]:
        q[name + "_w"] = p[name + "_w"].reshape(9, C, 1, 1)
        q[name + "_b"] = p[name + "_b"].reshape(C, 1, 1)
    # K3: block-diagonal / duplicated stacks
    q["k3_wri"] = blkdiag(p["conv1x1_real_w"].T, p["conv1x1_imag_w"].T)
    q["k3_bri"] = col(jnp.concatenate([p["conv1x1_real_b"], p["conv1x1_imag_b"]]))
    w5 = p["conv1x1_5_w"].T                              # (C, 2C)
    q["k3_w5d"] = jnp.concatenate([w5, w5], axis=0)      # x5 duplicated in both halves
    q["k3_b5d"] = col(jnp.concatenate([p["conv1x1_5_b"]] * 2))
    q["k3_w4"] = blkdiag(p["conv1x1_4_real_w"].T, p["conv1x1_4_imag_w"].T)
    q["k3_b4"] = col(jnp.concatenate([p["conv1x1_4_real_b"], p["conv1x1_4_imag_b"]]))
    q["k3_w3"] = blkdiag(p["conv1x1_3_real_w"].T, p["conv1x1_3_imag_w"].T)
    q["k3_b3"] = col(jnp.concatenate([p["conv1x1_3_real_b"], p["conv1x1_3_imag_b"]]))
    # K4: fold filter_generation(channel_attention(.)) -> single affine map
    # (valid: the reference has no nonlinearity between the two 1x1 convs).
    wca, bca = p["channel_attention_w"].T, p["channel_attention_b"]
    wfg, bfg = p["filter_generation_w"].T, p["filter_generation_b"]
    wf = wfg @ wca
    bf = wfg @ bca + bfg
    q["k4_wfd"] = jnp.concatenate([wf, wf], axis=0)      # gate applied to [x8.re; x8.im]
    q["k4_bfd"] = col(jnp.concatenate([bf, bf]))
    # K5: stacked cross-attention projections
    ar, ai = p["cross_attention_real"], p["cross_attention_imag"]
    q["k5_wq"] = blkdiag(ar["wq"].T, ai["wq"].T)
    q["k5_bq"] = col(jnp.concatenate([ar["bq"], ai["bq"]]))
    q["k5_wkv"] = jnp.concatenate([ar["wk"].T, ar["wv"].T, ai["wk"].T, ai["wv"].T], axis=0)
    q["k5_bkv"] = col(jnp.concatenate([ar["bk"], ar["bv"], ai["bk"], ai["bv"]]))
    q["k5_wor"], q["k5_bor"] = ar["wo"].T, col(ar["bo"])
    q["k5_woi"], q["k5_boi"] = ai["wo"].T, col(ai["bo"])
    # K6: conv1x1_7 as per-input-channel broadcast FMA
    q["k6_w7t"] = p["conv1x1_7_w"].reshape(C, C, 1, 1)   # (in, out, 1, 1)
    q["k6_b7"] = p["conv1x1_7_b"].reshape(C, 1, 1)
    return q


# --------------------------------------------------------------------------
# forward
# --------------------------------------------------------------------------

def fcfe_forward(packed, event_features, image_features):
    B, C, H, W = event_features.shape
    HW = H * W
    ev = event_features.astype(jnp.float32).reshape(B, C, HW)
    im = image_features.astype(jnp.float32).reshape(B, C, HW)

    # K1: LayerNorms + conv1x1_1(cat) + conv1x1_2 + conv1x1_6 (fused).
    x2, x3, t2, x1p = _stage_norm_mix(ev, im, packed)

    # K2: both leading depthwise 3x3 convs, channel-vectorized, halo in-kernel.
    d1, d2 = _stage_dw_pair(x3.reshape(B, C, H, W), t2.reshape(B, C, H, W), packed)

    # TODO(synk): FFT / iFFT stages stay in XLA (no Pallas FFT primitive).
    x4 = jnp.fft.fft2(d1, axes=(-2, -1))
    x6 = jnp.fft.fft2(d2, axes=(-2, -1))
    x4s = jnp.concatenate([jnp.real(x4), jnp.imag(x4)], axis=1).reshape(B, 2 * C, HW)
    x6s = jnp.concatenate([jnp.real(x6), jnp.imag(x6)], axis=1).reshape(B, 2 * C, HW)

    # K3: fused spectral per-pixel chain (stacked real/imag halves).
    ps = _stage_spectral(x4s, x6s, packed).reshape(B, 2 * C, H, W)
    x7 = jnp.fft.ifft2(jax.lax.complex(ps[:, :C], ps[:, C:]), axes=(-2, -1))
    # torch: fft(reshape(x7,(B*C,H,W))) == 1-D FFT along W.
    x8 = jnp.fft.fft(x7, axis=-1)
    x8s = jnp.concatenate([jnp.real(x8), jnp.imag(x8)], axis=1).reshape(B, 2 * C, HW)

    # K4: folded channel_attention∘filter_generation + fused x8*x9 product.
    ys = _stage_filter(jnp.real(x7).reshape(B, C, HW),
                       jnp.imag(x7).reshape(B, C, HW),
                       x3, x8s, packed).reshape(B, 2 * C, H, W)
    x10 = jnp.fft.ifft(jax.lax.complex(ys[:, :C], ys[:, C:]), axis=-1)
    x10s = jnp.concatenate([jnp.real(x10), jnp.imag(x10)], axis=1).reshape(B, 2 * C, HW)

    # K5: both single-head cross-attentions, emitting the complex magnitude.
    xabs = _stage_cross_attention(x10s, x1p, packed)

    # K6: dw_conv_3 + exact GELU + conv1x1_7 + residual, fully fused.
    out = _stage_tail(xabs.reshape(B, C, H, W), x2.reshape(B, C, H, W), packed)
    return out


if __name__ == "__main__":
    B, C, H, W = 2, 4, 16, 16
    key = jax.random.PRNGKey(0)
    k1, k2, k3 = jax.random.split(key, 3)
    event = jax.random.normal(k1, (B, C, H, W), jnp.float32)
    image = jax.random.normal(k2, (B, C, H, W), jnp.float32)
    params = init_params(k3, C)
    packed = prepack_params(params, C)          # one-time weight prepack (hoisted)

    out = jax.jit(fcfe_forward)(packed, event, image)
    out = jax.block_until_ready(out)
    assert out.shape == (B, C, H, W) and out.dtype == jnp.float32
    print("KERNEL_OK")
</pallas_src>

<mosaic_0001>
module attributes {stable_mosaic.version = 11 : i64} {
  func.func @_norm_mix_kernel(%arg0: i32, %arg1: memref<1x4x256xf32, #tpu.memory_space<vmem>>, %arg2: memref<1x4x256xf32, #tpu.memory_space<vmem>>, %arg3: memref<4x4xf32, #tpu.memory_space<vmem>>, %arg4: memref<4x4xf32, #tpu.memory_space<vmem>>, %arg5: memref<4x1xf32, #tpu.memory_space<vmem>>, %arg6: memref<4x4xf32, #tpu.memory_space<vmem>>, %arg7: memref<4x1xf32, #tpu.memory_space<vmem>>, %arg8: memref<4x4xf32, #tpu.memory_space<vmem>>, %arg9: memref<4x1xf32, #tpu.memory_space<vmem>>, %arg10: memref<1x4x256xf32, #tpu.memory_space<vmem>>, %arg11: memref<1x4x256xf32, #tpu.memory_space<vmem>>, %arg12: memref<1x4x256xf32, #tpu.memory_space<vmem>>, %arg13: memref<1x4x256xf32, #tpu.memory_space<vmem>>) attributes {dimension_semantics = [#tpu.dimension_semantics<parallel>], iteration_bounds = array<i64: 2>, scalar_prefetch = 0 : i64, scratch_operands = 0 : i64, tpu.core_type = #tpu.core_type<tc>, window_params = [{transform_indices = @transform_0, window_bounds = array<i64: 1, 4, 256>}, {transform_indices = @transform_1, window_bounds = array<i64: 1, 4, 256>}, {pipeline_mode = #tpu.pipeline_mode<synchronous>, transform_indices = @transform_2, window_bounds = array<i64: 4, 4>}, {pipeline_mode = #tpu.pipeline_mode<synchronous>, transform_indices = @transform_3, window_bounds = array<i64: 4, 4>}, {pipeline_mode = #tpu.pipeline_mode<synchronous>, transform_indices = @transform_4, window_bounds = array<i64: 4, 1>}, {pipeline_mode = #tpu.pipeline_mode<synchronous>, transform_indices = @transform_5, window_bounds = array<i64: 4, 4>}, {pipeline_mode = #tpu.pipeline_mode<synchronous>, transform_indices = @transform_6, window_bounds = array<i64: 4, 1>}, {pipeline_mode = #tpu.pipeline_mode<synchronous>, transform_indices = @transform_7, window_bounds = array<i64: 4, 4>}, {pipeline_mode = #tpu.pipeline_mode<synchronous>, transform_indices = @transform_8, window_bounds = array<i64: 4, 1>}, {transform_indices = @transform_9, window_bounds = array<i64: 1, 4, 256>}, {transform_indices = @transform_10, window_bounds = array<i64: 1, 4, 256>}, {transform_indices = @transform_11, window_bounds = array<i64: 1, 4, 256>}, {transform_indices = @transform_12, window_bounds = array<i64: 1, 4, 256>}]} {
    %c0 = arith.constant 0 : index
    %c0_0 = arith.constant 0 : index
    %c0_1 = arith.constant 0 : index
    %0 = vector.load %arg1[%c0, %c0_0, %c0_1] : memref<1x4x256xf32, #tpu.memory_space<vmem>>, vector<1x4x256xf32>
    %1 = vector.shape_cast %0 : vector<1x4x256xf32> to vector<4x256xf32>
    %cst = arith.constant dense<0.000000e+00> : vector<4xf32>
    %2 = vector.multi_reduction <add>, %1, %cst [1] : vector<4x256xf32> to vector<4xf32>
    %3 = vector.shape_cast %2 : vector<4xf32> to vector<4x1xf32>
    %cst_2 = arith.constant 2.560000e+02 : f32
    %4 = vector.broadcast %cst_2 : f32 to vector<4x1xf32>
    %5 = arith.divf %3, %4 : vector<4x1xf32>
    %cst_3 = arith.constant dense<0.000000e+00> : vector<1xf32>
    %6 = vector.multi_reduction <add>, %5, %cst_3 [0] : vector<4x1xf32> to vector<1xf32>
    %7 = vector.shape_cast %6 : vector<1xf32> to vector<1x1xf32>
    %cst_4 = arith.constant 4.000000e+00 : f32
    %8 = vector.broadcast %cst_4 : f32 to vector<1x1xf32>
    %9 = arith.divf %7, %8 : vector<1x1xf32>
    %10 = vector.broadcast %9 : vector<1x1xf32> to vector<4x256xf32>
    %11 = arith.subf %1, %10 : vector<4x256xf32>
    %12 = arith.mulf %11, %11 : vector<4x256xf32>
    %cst_5 = arith.constant dense<0.000000e+00> : vector<4xf32>
    %13 = vector.multi_reduction <add>, %12, %cst_5 [1] : vector<4x256xf32> to vector<4xf32>
    %14 = vector.shape_cast %13 : vector<4xf32> to vector<4x1xf32>
    %cst_6 = arith.constant 2.560000e+02 : f32
    %15 = vector.broadcast %cst_6 : f32 to vector<4x1xf32>
    %16 = arith.divf %14, %15 : vector<4x1xf32>
    %cst_7 = arith.constant dense<0.000000e+00> : vector<1xf32>
    %17 = vector.multi_reduction <add>, %16, %cst_7 [0] : vector<4x1xf32> to vector<1xf32>
    %18 = vector.shape_cast %17 : vector<1xf32> to vector<1x1xf32>
    %cst_8 = arith.constant 4.000000e+00 : f32
    %19 = vector.broadcast %cst_8 : f32 to vector<1x1xf32>
    %20 = arith.divf %18, %19 : vector<1x1xf32>
    %cst_9 = arith.constant 9.99999974E-6 : f32
    %21 = vector.broadcast %cst_9 : f32 to vector<1x1xf32>
    %22 = arith.addf %20, %21 : vector<1x1xf32>
    %23 = math.rsqrt %22 : vector<1x1xf32>
    %24 = vector.broadcast %23 : vector<1x1xf32> to vector<4x256xf32>
    %25 = arith.mulf %11, %24 : vector<4x256xf32>
    %c0_10 = arith.constant 0 : index
    %c0_11 = arith.constant 0 : index
    %c0_12 = arith.constant 0 : index
    %26 = vector.load %arg2[%c0_10, %c0_11, %c0_12] : memref<1x4x256xf32, #tpu.memory_space<vmem>>, vector<1x4x256xf32>
    %27 = vector.shape_cast %26 : vector<1x4x256xf32> to vector<4x256xf32>
    %cst_13 = arith.constant dense<0.000000e+00> : vector<4xf32>
    %28 = vector.multi_reduction <add>, %27, %cst_13 [1] : vector<4x256xf32> to vector<4xf32>
    %29 = vector.shape_cast %28 : vector<4xf32> to vector<4x1xf32>
    %cst_14 = arith.constant 2.560000e+02 : f32
    %30 = vector.broadcast %cst_14 : f32 to vector<4x1xf32>
    %31 = arith.divf %29, %30 : vector<4x1xf32>
    %cst_15 = arith.constant dense<0.000000e+00> : vector<1xf32>
    %32 = vector.multi_reduction <add>, %31, %cst_15 [0] : vector<4x1xf32> to vector<1xf32>
    %33 = vector.shape_cast %32 : vector<1xf32> to vector<1x1xf32>
    %cst_16 = arith.constant 4.000000e+00 : f32
    %34 = vector.broadcast %cst_16 : f32 to vector<1x1xf32>
    %35 = arith.divf %33, %34 : vector<1x1xf32>
    %36 = vector.broadcast %35 : vector<1x1xf32> to vector<4x256xf32>
    %37 = arith.subf %27, %36 : vector<4x256xf32>
    %38 = arith.mulf %37, %37 : vector<4x256xf32>
    %cst_17 = arith.constant dense<0.000000e+00> : vector<4xf32>
    %39 = vector.multi_reduction <add>, %38, %cst_17 [1] : vector<4x256xf32> to vector<4xf32>
    %40 = vector.shape_cast %39 : vector<4xf32> to vector<4x1xf32>
    %cst_18 = arith.constant 2.560000e+02 : f32
    %41 = vector.broadcast %cst_18 : f32 to vector<4x1xf32>
    %42 = arith.divf %40, %41 : vector<4x1xf32>
    %cst_19 = arith.constant dense<0.000000e+00> : vector<1xf32>
    %43 = vector.multi_reduction <add>, %42, %cst_19 [0] : vector<4x1xf32> to vector<1xf32>
    %44 = vector.shape_cast %43 : vector<1xf32> to vector<1x1xf32>
    %cst_20 = arith.constant 4.000000e+00 : f32
    %45 = vector.broadcast %cst_20 : f32 to vector<1x1xf32>
    %46 = arith.divf %44, %45 : vector<1x1xf32>
    %cst_21 = arith.constant 9.99999974E-6 : f32
    %47 = vector.broadcast %cst_21 : f32 to vector<1x1xf32>
    %48 = arith.addf %46, %47 : vector<1x1xf32>
    %49 = math.rsqrt %48 : vector<1x1xf32>
    %50 = vector.broadcast %49 : vector<1x1xf32> to vector<4x256xf32>
    %51 = arith.mulf %37, %50 : vector<4x256xf32>
    %c0_22 = arith.constant 0 : index
    %c0_23 = arith.constant 0 : index
    %c0_24 = arith.constant 0 : index
    %52 = vector.load %arg10[%c0_22, %c0_23, %c0_24] : memref<1x4x256xf32, #tpu.memory_space<vmem>>, vector<1x4x256xf32>
    %53 = vector.shape_cast %52 : vector<1x4x256xf32> to vector<4x256xf32>
    %54 = vector.shape_cast %51 : vector<4x256xf32> to vector<1x4x256xf32>
    tpu.vector_store %arg10[%c0_22, %c0_23, %c0_24], %54 {strides = array<i32>} : memref<1x4x256xf32, #tpu.memory_space<vmem>>, vector<1x4x256xf32>,
    %c0_25 = arith.constant 0 : index
    %c0_26 = arith.constant 0 : index
    %55 = vector.load %arg3[%c0_25, %c0_26] : memref<4x4xf32, #tpu.memory_space<vmem>>, vector<4x4xf32>
    %cst_27 = arith.constant dense<0.000000e+00> : vector<4x256xf32>
    %56 = tpu.matmul %55, %25, %cst_27 {dimension_numbers = #tpu.dot_dimension_numbers<[1], [0], [0], [1], [0, 0, 1, 1], [], []>} : vector<4x4xf32>, vector<4x256xf32>, vector<4x256xf32> -> vector<4x256xf32>
    %c0_28 = arith.constant 0 : index
    %c0_29 = arith.constant 0 : index
    %57 = vector.load %arg4[%c0_28, %c0_29] : memref<4x4xf32, #tpu.memory_space<vmem>>, vector<4x4xf32>
    %cst_30 = arith.constant dense<0.000000e+00> : vector<4x256xf32>
    %58 = tpu.matmul %57, %51, %cst_30 {dimension_numbers = #tpu.dot_dimension_numbers<[1], [0], [0], [1], [0, 0, 1, 1], [], []>} : vector<4x4xf32>, vector<4x256xf32>, vector<4x256xf32> -> vector<4x256xf32>
    %59 = arith.addf %56, %58 : vector<4x256xf32>
    %c0_31 = arith.constant 0 : index
    %c0_32 = arith.constant 0 : index
    %60 = vector.load %arg5[%c0_31, %c0_32] : memref<4x1xf32, #tpu.memory_space<vmem>>, vector<4x1xf32>
    %61 = vector.broadcast %60 : vector<4x1xf32> to vector<4x256xf32>
    %62 = arith.addf %59, %61 : vector<4x256xf32>
    %c0_33 = arith.constant 0 : index
    %c0_34 = arith.constant 0 : index
    %c0_35 = arith.constant 0 : index
    %63 = vector.load %arg11[%c0_33, %c0_34, %c0_35] : memref<1x4x256xf32, #tpu.memory_space<vmem>>, vector<1x4x256xf32>
    %64 = vector.shape_cast %63 : vector<1x4x256xf32> to vector<4x256xf32>
    %65 = vector.shape_cast %62 : vector<4x256xf32> to vector<1x4x256xf32>
    tpu.vector_store %arg11[%c0_33, %c0_34, %c0_35], %65 {strides = array<i32>} : memref<1x4x256xf32, #tpu.memory_space<vmem>>, vector<1x4x256xf32>,
    %c0_36 = arith.constant 0 : index
    %c0_37 = arith.constant 0 : index
    %66 = vector.load %arg6[%c0_36, %c0_37] : memref<4x4xf32, #tpu.memory_space<vmem>>, vector<4x4xf32>
    %cst_38 = arith.constant dense<0.000000e+00> : vector<4x256xf32>
    %67 = tpu.matmul %66, %51, %cst_38 {dimension_numbers = #tpu.dot_dimension_numbers<[1], [0], [0], [1], [0, 0, 1, 1], [], []>} : vector<4x4xf32>, vector<4x256xf32>, vector<4x256xf32> -> vector<4x256xf32>
    %c0_39 = arith.constant 0 : index
    %c0_40 = arith.constant 0 : index
    %68 = vector.load %arg7[%c0_39, %c0_40] : memref<4x1xf32, #tpu.memory_space<vmem>>, vector<4x1xf32>
    %69 = vector.broadcast %68 : vector<4x1xf32> to vector<4x256xf32>
    %70 = arith.addf %67, %69 : vector<4x256xf32>
    %c0_41 = arith.constant 0 : index
    %c0_42 = arith.constant 0 : index
    %c0_43 = arith.constant 0 : index
    %71 = vector.load %arg12[%c0_41, %c0_42, %c0_43] : memref<1x4x256xf32, #tpu.memory_space<vmem>>, vector<1x4x256xf32>
    %72 = vector.shape_cast %71 : vector<1x4x256xf32> to vector<4x256xf32>
    %73 = vector.shape_cast %70 : vector<4x256xf32> to vector<1x4x256xf32>
    tpu.vector_store %arg12[%c0_41, %c0_42, %c0_43], %73 {strides = array<i32>} : memref<1x4x256xf32, #tpu.memory_space<vmem>>, vector<1x4x256xf32>,
    %c0_44 = arith.constant 0 : index
    %c0_45 = arith.constant 0 : index
    %74 = vector.load %arg8[%c0_44, %c0_45] : memref<4x4xf32, #tpu.memory_space<vmem>>, vector<4x4xf32>
    %cst_46 = arith.constant dense<0.000000e+00> : vector<4x256xf32>
    %75 = tpu.matmul %74, %25, %cst_46 {dimension_numbers = #tpu.dot_dimension_numbers<[1], [0], [0], [1], [0, 0, 1, 1], [], []>} : vector<4x4xf32>, vector<4x256xf32>, vector<4x256xf32> -> vector<4x256xf32>
    %c0_47 = arith.constant 0 : index
    %c0_48 = arith.constant 0 : index
    %76 = vector.load %arg9[%c0_47, %c0_48] : memref<4x1xf32, #tpu.memory_space<vmem>>, vector<4x1xf32>
    %77 = vector.broadcast %76 : vector<4x1xf32> to vector<4x256xf32>
    %78 = arith.addf %75, %77 : vector<4x256xf32>
    %c0_49 = arith.constant 0 : index
    %c0_50 = arith.constant 0 : index
    %c0_51 = arith.constant 0 : index
    %79 = vector.load %arg13[%c0_49, %c0_50, %c0_51] : memref<1x4x256xf32, #tpu.memory_space<vmem>>, vector<1x4x256xf32>
    %80 = vector.shape_cast %79 : vector<1x4x256xf32> to vector<4x256xf32>
    %81 = vector.shape_cast %78 : vector<4x256xf32> to vector<1x4x256xf32>
    tpu.vector_store %arg13[%c0_49, %c0_50, %c0_51], %81 {strides = array<i32>} : memref<1x4x256xf32, #tpu.memory_space<vmem>>, vector<1x4x256xf32>,
    return
  }
  func.func @transform_0(%arg0: i32) -> (i32, i32, i32) {
    %c0_i32 = arith.constant 0 : i32
    %c0_i32_0 = arith.constant 0 : i32
    %c0_i32_1 = arith.constant 0 : i32
    return %arg0, %c0_i32, %c0_i32_0 : i32, i32, i32
  }
  func.func @transform_1(%arg0: i32) -> (i32, i32, i32) {
    %c0_i32 = arith.constant 0 : i32
    %c0_i32_0 = arith.constant 0 : i32
    %c0_i32_1 = arith.constant 0 : i32
    return %arg0, %c0_i32, %c0_i32_0 : i32, i32, i32
  }
  func.func @transform_2(%arg0: i32) -> (i32, i32) {
    %c0_i32 = arith.constant 0 : i32
    %c0_i32_0 = arith.constant 0 : i32
    %c0_i32_1 = arith.constant 0 : i32
    return %c0_i32, %c0_i32_0 : i32, i32
  }
  func.func @transform_3(%arg0: i32) -> (i32, i32) {
    %c0_i32 = arith.constant 0 : i32
    %c0_i32_0 = arith.constant 0 : i32
    %c0_i32_1 = arith.constant 0 : i32
    return %c0_i32, %c0_i32_0 : i32, i32
  }
  func.func @transform_4(%arg0: i32) -> (i32, i32) {
    %c0_i32 = arith.constant 0 : i32
    %c0_i32_0 = arith.constant 0 : i32
    %c0_i32_1 = arith.constant 0 : i32
    return %c0_i32, %c0_i32_0 : i32, i32
  }
  func.func @transform_5(%arg0: i32) -> (i32, i32) {
    %c0_i32 = arith.constant 0 : i32
    %c0_i32_0 = arith.constant 0 : i32
    %c0_i32_1 = arith.constant 0 : i32
    return %c0_i32, %c0_i32_0 : i32, i32
  }
  func.func @transform_6(%arg0: i32) -> (i32, i32) {
    %c0_i32 = arith.constant 0 : i32
    %c0_i32_0 = arith.constant 0 : i32
    %c0_i32_1 = arith.constant 0 : i32
    return %c0_i32, %c0_i32_0 : i32, i32
  }
  func.func @transform_7(%arg0: i32) -> (i32, i32) {
    %c0_i32 = arith.constant 0 : i32
    %c0_i32_0 = arith.constant 0 : i32
    %c0_i32_1 = arith.constant 0 : i32
    return %c0_i32, %c0_i32_0 : i32, i32
  }
  func.func @transform_8(%arg0: i32) -> (i32, i32) {
    %c0_i32 = arith.constant 0 : i32
    %c0_i32_0 = arith.constant 0 : i32
    %c0_i32_1 = arith.constant 0 : i32
    return %c0_i32, %c0_i32_0 : i32, i32
  }
  func.func @transform_9(%arg0: i32) -> (i32, i32, i32) {
    %c0_i32 = arith.constant 0 : i32
    %c0_i32_0 = arith.constant 0 : i32
    %c0_i32_1 = arith.constant 0 : i32
    return %arg0, %c0_i32, %c0_i32_0 : i32, i32, i32
  }
  func.func @transform_10(%arg0: i32) -> (i32, i32, i32) {
    %c0_i32 = arith.constant 0 : i32
    %c0_i32_0 = arith.constant 0 : i32
    %c0_i32_1 = arith.constant 0 : i32
    return %arg0, %c0_i32, %c0_i32_0 : i32, i32, i32
  }
  func.func @transform_11(%arg0: i32) -> (i32, i32, i32) {
    %c0_i32 = arith.constant 0 : i32
    %c0_i32_0 = arith.constant 0 : i32
    %c0_i32_1 = arith.constant 0 : i32
    return %arg0, %c0_i32, %c0_i32_0 : i32, i32, i32
  }
  func.func @transform_12(%arg0: i32) -> (i32, i32, i32) {
    %c0_i32 = arith.constant 0 : i32
    %c0_i32_0 = arith.constant 0 : i32
    %c0_i32_1 = arith.constant 0 : i32
    return %arg0, %c0_i32, %c0_i32_0 : i32, i32, i32
  }
}

module attributes {stable_mosaic.version = 11 : i64} {
  func.func @_dw_pair_kernel(%arg0: i32, %arg1: memref<1x4x16x16xf32, #tpu.memory_space<vmem>>, %arg2: memref<1x4x16x16xf32, #tpu.memory_space<vmem>>, %arg3: memref<9x4x1x1xf32, #tpu.memory_space<vmem>>, %arg4: memref<4x1x1xf32, #tpu.memory_space<vmem>>, %arg5: memref<9x4x1x1xf32, #tpu.memory_space<vmem>>, %arg6: memref<4x1x1xf32, #tpu.memory_space<vmem>>, %arg7: memref<1x4x16x16xf32, #tpu.memory_space<vmem>>, %arg8: memref<1x4x16x16xf32, #tpu.memory_space<vmem>>) attributes {dimension_semantics = [#tpu.dimension_semantics<parallel>], iteration_bounds = array<i64: 2>, scalar_prefetch = 0 : i64, scratch_operands = 0 : i64, tpu.core_type = #tpu.core_type<tc>, window_params = [{transform_indices = @transform_0, window_bounds = array<i64: 1, 4, 16, 16>}, {transform_indices = @transform_1, window_bounds = array<i64: 1, 4, 16, 16>}, {pipeline_mode = #tpu.pipeline_mode<synchronous>, transform_indices = @transform_2, window_bounds = array<i64: 9, 4, 1, 1>}, {pipeline_mode = #tpu.pipeline_mode<synchronous>, transform_indices = @transform_3, window_bounds = array<i64: 4, 1, 1>}, {pipeline_mode = #tpu.pipeline_mode<synchronous>, transform_indices = @transform_4, window_bounds = array<i64: 9, 4, 1, 1>}, {pipeline_mode = #tpu.pipeline_mode<synchronous>, transform_indices = @transform_5, window_bounds = array<i64: 4, 1, 1>}, {transform_indices = @transform_6, window_bounds = array<i64: 1, 4, 16, 16>}, {transform_indices = @transform_7, window_bounds = array<i64: 1, 4, 16, 16>}]} {
    %c0 = arith.constant 0 : index
    %c0_0 = arith.constant 0 : index
    %c0_1 = arith.constant 0 : index
    %c0_2 = arith.constant 0 : index
    %0 = vector.load %arg1[%c0, %c0_0, %c0_1, %c0_2] : memref<1x4x16x16xf32, #tpu.memory_space<vmem>>, vector<1x4x16x16xf32>
    %1 = vector.shape_cast %0 : vector<1x4x16x16xf32> to vector<4x16x16xf32>
    %cst = arith.constant 0.000000e+00 : f32
    %2 = vector.broadcast %cst : f32 to vector<4x16x1xf32>
    %3 = tpu.concatenate %2, %1, %2 in 2 : vector<4x16x1xf32>, vector<4x16x16xf32>, vector<4x16x1xf32> -> vector<4x16x18xf32>
    %cst_3 = arith.constant 0.000000e+00 : f32
    %4 = vector.broadcast %cst_3 : f32 to vector<4x1x18xf32>
    %5 = tpu.concatenate %4, %3, %4 in 1 : vector<4x1x18xf32>, vector<4x16x18xf32>, vector<4x1x18xf32> -> vector<4x18x18xf32>
    %c0_4 = arith.constant 0 : index
    %c0_5 = arith.constant 0 : index
    %c0_6 = arith.constant 0 : index
    %6 = vector.load %arg4[%c0_4, %c0_5, %c0_6] : memref<4x1x1xf32, #tpu.memory_space<vmem>>, vector<4x1x1xf32>
    %7 = vector.extract_strided_slice %5 {offsets = [0, 0, 0], sizes = [4, 16, 16], strides = [1, 1, 1]} : vector<4x18x18xf32> to vector<4x16x16xf32>
    %c0_7 = arith.constant 0 : index
    %c0_8 = arith.constant 0 : index
    %c0_9 = arith.constant 0 : index
    %c0_10 = arith.constant 0 : index
    %8 = vector.load %arg3[%c0_7, %c0_8, %c0_9, %c0_10] : memref<9x4x1x1xf32, #tpu.memory_space<vmem>>, vector<1x4x1x1xf32>
    %9 = vector.shape_cast %8 : vector<1x4x1x1xf32> to vector<4x1x1xf32>
    %10 = vector.broadcast %9 : vector<4x1x1xf32> to vector<4x16x16xf32>
    %11 = arith.mulf %7, %10 : vector<4x16x16xf32>
    %12 = vector.broadcast %6 : vector<4x1x1xf32> to vector<4x16x16xf32>
    %13 = arith.addf %12, %11 : vector<4x16x16xf32>
    %14 = vector.extract_strided_slice %5 {offsets = [0, 0, 1], sizes = [4, 16, 16], strides = [1, 1, 1]} : vector<4x18x18xf32> to vector<4x16x16xf32>
    %c1 = arith.constant 1 : index
    %c0_11 = arith.constant 0 : index
    %c0_12 = arith.constant 0 : index
    %c0_13 = arith.constant 0 : index
    %15 = vector.load %arg3[%c1, %c0_11, %c0_12, %c0_13] : memref<9x4x1x1xf32, #tpu.memory_space<vmem>>, vector<1x4x1x1xf32>
    %16 = vector.shape_cast %15 : vector<1x4x1x1xf32> to vector<4x1x1xf32>
    %17 = vector.broadcast %16 : vector<4x1x1xf32> to vector<4x16x16xf32>
    %18 = arith.mulf %14, %17 : vector<4x16x16xf32>
    %19 = arith.addf %13, %18 : vector<4x16x16xf32>
    %20 = vector.extract_strided_slice %5 {offsets = [0, 0, 2], sizes = [4, 16, 16], strides = [1, 1, 1]} : vector<4x18x18xf32> to vector<4x16x16xf32>
    %c2 = arith.constant 2 : index
    %c0_14 = arith.constant 0 : index
    %c0_15 = arith.constant 0 : index
    %c0_16 = arith.constant 0 : index
    %21 = vector.load %arg3[%c2, %c0_14, %c0_15, %c0_16] : memref<9x4x1x1xf32, #tpu.memory_space<vmem>>, vector<1x4x1x1xf32>
    %22 = vector.shape_cast %21 : vector<1x4x1x1xf32> to vector<4x1x1xf32>
    %23 = vector.broadcast %22 : vector<4x1x1xf32> to vector<4x16x16xf32>
    %24 = arith.mulf %20, %23 : vector<4x16x16xf32>
    %25 = arith.addf %19, %24 : vector<4x16x16xf32>
    %26 = vector.extract_strided_slice %5 {offsets = [0, 1, 0], sizes = [4, 16, 16], strides = [1, 1, 1]} : vector<4x18x18xf32> to vector<4x16x16xf32>
    %c3 = arith.constant 3 : index
    %c0_17 = arith.constant 0 : index
    %c0_18 = arith.constant 0 : index
    %c0_19 = arith.constant 0 : index
    %27 = vector.load %arg3[%c3, %c0_17, %c0_18, %c0_19] : memref<9x4x1x1xf32, #tpu.memory_space<vmem>>, vector<1x4x1x1xf32>
    %28 = vector.shape_cast %27 : vector<1x4x1x1xf32> to vector<4x1x1xf32>
    %29 = vector.broadcast %28 : vector<4x1x1xf32> to vector<4x16x16xf32>
    %30 = arith.mulf %26, %29 : vector<4x16x16xf32>
    %31 = arith.addf %25, %30 : vector<4x16x16xf32>
    %32 = vector.extract_strided_slice %5 {offsets = [0, 1, 1], sizes = [4, 16, 16], strides = [1, 1, 1]} : vector<4x18x18xf32> to vector<4x16x16xf32>
    %c4 = arith.constant 4 : index
    %c0_20 = arith.constant 0 : index
    %c0_21 = arith.constant 0 : index
    %c0_22 = arith.constant 0 : index
    %33 = vector.load %arg3[%c4, %c0_20, %c0_21, %c0_22] : memref<9x4x1x1xf32, #tpu.memory_space<vmem>>, vector<1x4x1x1xf32>
    %34 = vector.shape_cast %33 : vector<1x4x1x1xf32> to vector<4x1x1xf32>
    %35 = vector.broadcast %34 : vector<4x1x1xf32> to vector<4x16x16xf32>
    %36 = arith.mulf %32, %35 : vector<4x16x16xf32>
    %37 = arith.addf %31, %36 : vector<4x16x16xf32>
    %38 = vector.extract_strided_slice %5 {offsets = [0, 1, 2], sizes = [4, 16, 16], strides = [1, 1, 1]} : vector<4x18x18xf32> to vector<4x16x16xf32>
    %c5 = arith.constant 5 : index
    %c0_23 = arith.constant 0 : index
    %c0_24 = arith.constant 0 : index
    %c0_25 = arith.constant 0 : index
    %39 = vector.load %arg3[%c5, %c0_23, %c0_24, %c0_25] : memref<9x4x1x1xf32, #tpu.memory_space<vmem>>, vector<1x4x1x1xf32>
    %40 = vector.shape_cast %39 : vector<1x4x1x1xf32> to vector<4x1x1xf32>
    %41 = vector.broadcast %40 : vector<4x1x1xf32> to vector<4x16x16xf32>
    %42 = arith.mulf %38, %41 : vector<4x16x16xf32>
    %43 = arith.addf %37, %42 : vector<4x16x16xf32>
    %44 = vector.extract_strided_slice %5 {offsets = [0, 2, 0], sizes = [4, 16, 16], strides = [1, 1, 1]} : vector<4x18x18xf32> to vector<4x16x16xf32>
    %c6 = arith.constant 6 : index
    %c0_26 = arith.constant 0 : index
    %c0_27 = arith.constant 0 : index
    %c0_28 = arith.constant 0 : index
    %45 = vector.load %arg3[%c6, %c0_26, %c0_27, %c0_28] : memref<9x4x1x1xf32, #tpu.memory_space<vmem>>, vector<1x4x1x1xf32>
    %46 = vector.shape_cast %45 : vector<1x4x1x1xf32> to vector<4x1x1xf32>
    %47 = vector.broadcast %46 : vector<4x1x1xf32> to vector<4x16x16xf32>
    %48 = arith.mulf %44, %47 : vector<4x16x16xf32>
    %49 = arith.addf %43, %48 : vector<4x16x16xf32>
    %50 = vector.extract_strided_slice %5 {offsets = [0, 2, 1], sizes = [4, 16, 16], strides = [1, 1, 1]} : vector<4x18x18xf32> to vector<4x16x16xf32>
    %c7 = arith.constant 7 : index
    %c0_29 = arith.constant 0 : index
    %c0_30 = arith.constant 0 : index
    %c0_31 = arith.constant 0 : index
    %51 = vector.load %arg3[%c7, %c0_29, %c0_30, %c0_31] : memref<9x4x1x1xf32, #tpu.memory_space<vmem>>, vector<1x4x1x1xf32>
    %52 = vector.shape_cast %51 : vector<1x4x1x1xf32> to vector<4x1x1xf32>
    %53 = vector.broadcast %52 : vector<4x1x1xf32> to vector<4x16x16xf32>
    %54 = arith.mulf %50, %53 : vector<4x16x16xf32>
    %55 = arith.addf %49, %54 : vector<4x16x16xf32>
    %56 = vector.extract_strided_slice %5 {offsets = [0, 2, 2], sizes = [4, 16, 16], strides = [1, 1, 1]} : vector<4x18x18xf32> to vector<4x16x16xf32>
    %c8 = arith.constant 8 : index
    %c0_32 = arith.constant 0 : index
    %c0_33 = arith.constant 0 : index
    %c0_34 = arith.constant 0 : index
    %57 = vector.load %arg3[%c8, %c0_32, %c0_33, %c0_34] : memref<9x4x1x1xf32, #tpu.memory_space<vmem>>, vector<1x4x1x1xf32>
    %58 = vector.shape_cast %57 : vector<1x4x1x1xf32> to vector<4x1x1xf32>
    %59 = vector.broadcast %58 : vector<4x1x1xf32> to vector<4x16x16xf32>
    %60 = arith.mulf %56, %59 : vector<4x16x16xf32>
    %61 = arith.addf %55, %60 : vector<4x16x16xf32>
    %c0_35 = arith.constant 0 : index
    %c0_36 = arith.constant 0 : index
    %c0_37 = arith.constant 0 : index
    %c0_38 = arith.constant 0 : index
    %62 = vector.load %arg7[%c0_35, %c0_36, %c0_37, %c0_38] : memref<1x4x16x16xf32, #tpu.memory_space<vmem>>, vector<1x4x16x16xf32>
    %63 = vector.shape_cast %62 : vector<1x4x16x16xf32> to vector<4x16x16xf32>
    %64 = vector.shape_cast %61 : vector<4x16x16xf32> to vector<1x4x16x16xf32>
    tpu.vector_store %arg7[%c0_35, %c0_36, %c0_37, %c0_38], %64 {strides = array<i32>} : memref<1x4x16x16xf32, #tpu.memory_space<vmem>>, vector<1x4x16x16xf32>,
    %c0_39 = arith.constant 0 : index
    %c0_40 = arith.constant 0 : index
    %c0_41 = arith.constant 0 : index
    %c0_42 = arith.constant 0 : index
    %65 = vector.load %arg2[%c0_39, %c0_40, %c0_41, %c0_42] : memref<1x4x16x16xf32, #tpu.memory_space<vmem>>, vector<1x4x16x16xf32>
    %66 = vector.shape_cast %65 : vector<1x4x16x16xf32> to vector<4x16x16xf32>
    %cst_43 = arith.constant 0.000000e+00 : f32
    %67 = vector.broadcast %cst_43 : f32 to vector<4x16x1xf32>
    %68 = tpu.concatenate %67, %66, %67 in 2 : vector<4x16x1xf32>, vector<4x16x16xf32>, vector<4x16x1xf32> -> vector<4x16x18xf32>
    %cst_44 = arith.constant 0.000000e+00 : f32
    %69 = vector.broadcast %cst_44 : f32 to vector<4x1x18xf32>
    %70 = tpu.concatenate %69, %68, %69 in 1 : vector<4x1x18xf32>, vector<4x16x18xf32>, vector<4x1x18xf32> -> vector<4x18x18xf32>
    %c0_45 = arith.constant 0 : index
    %c0_46 = arith.constant 0 : index
    %c0_47 = arith.constant 0 : index
    %71 = vector.load %arg6[%c0_45, %c0_46, %c0_47] : memref<4x1x1xf32, #tpu.memory_space<vmem>>, vector<4x1x1xf32>
    %72 = vector.extract_strided_slice %70 {offsets = [0, 0, 0], sizes = [4, 16, 16], strides = [1, 1, 1]} : vector<4x18x18xf32> to vector<4x16x16xf32>
    %c0_48 = arith.constant 0 : index
    %c0_49 = arith.constant 0 : index
    %c0_50 = arith.constant 0 : index
    %c0_51 = arith.constant 0 : index
    %73 = vector.load %arg5[%c0_48, %c0_49, %c0_50, %c0_51] : memref<9x4x1x1xf32, #tpu.memory_space<vmem>>, vector<1x4x1x1xf32>
    %74 = vector.shape_cast %73 : vector<1x4x1x1xf32> to vector<4x1x1xf32>
    %75 = vector.broadcast %74 : vector<4x1x1xf32> to vector<4x16x16xf32>
    %76 = arith.mulf %72, %75 : vector<4x16x16xf32>
    %77 = vector.broadcast %71 : vector<4x1x1xf32> to vector<4x16x16xf32>
    %78 = arith.addf %77, %76 : vector<4x16x16xf32>
    %79 = vector.extract_strided_slice %70 {offsets = [0, 0, 1], sizes = [4, 16, 16], strides = [1, 1, 1]} : vector<4x18x18xf32> to vector<4x16x16xf32>
    %c1_52 = arith.constant 1 : index
    %c0_53 = arith.constant 0 : index
    %c0_54 = arith.constant 0 : index
    %c0_55 = arith.constant 0 : index
    %80 = vector.load %arg5[%c1_52, %c0_53, %c0_54, %c0_55] : memref<9x4x1x1xf32, #tpu.memory_space<vmem>>, vector<1x4x1x1xf32>
    %81 = vector.shape_cast %80 : vector<1x4x1x1xf32> to vector<4x1x1xf32>
    %82 = vector.broadcast %81 : vector<4x1x1xf32> to vector<4x16x16xf32>
    %83 = arith.mulf %79, %82 : vector<4x16x16xf32>
    %84 = arith.addf %78, %83 : vector<4x16x16xf32>
    %85 = vector.extract_strided_slice %70 {offsets = [0, 0, 2], sizes = [4, 16, 16], strides = [1, 1, 1]} : vector<4x18x18xf32> to vector<4x16x16xf32>
    %c2_56 = arith.constant 2 : index
    %c0_57 = arith.constant 0 : index
    %c0_58 = arith.constant 0 : index
    %c0_59 = arith.constant 0 : index
    %86 = vector.load %arg5[%c2_56, %c0_57, %c0_58, %c0_59] : memref<9x4x1x1xf32, #tpu.memory_space<vmem>>, vector<1x4x1x1xf32>
    %87 = vector.shape_cast %86 : vector<1x4x1x1xf32> to vector<4x1x1xf32>
    %88 = vector.broadcast %87 : vector<4x1x1xf32> to vector<4x16x16xf32>
    %89 = arith.mulf %85, %88 : vector<4x16x16xf32>
    %90 = arith.addf %84, %89 : vector<4x16x16xf32>
    %91 = vector.extract_strided_slice %70 {offsets = [0, 1, 0], sizes = [4, 16, 16], strides = [1, 1, 1]} : vector<4x18x18xf32> to vector<4x16x16xf32>
    %c3_60 = arith.constant 3 : index
    %c0_61 = arith.constant 0 : index
    %c0_62 = arith.constant 0 : index
    %c0_63 = arith.constant 0 : index
    %92 = vector.load %arg5[%c3_60, %c0_61, %c0_62, %c0_63] : memref<9x4x1x1xf32, #tpu.memory_space<vmem>>, vector<1x4x1x1xf32>
    %93 = vector.shape_cast %92 : vector<1x4x1x1xf32> to vector<4x1x1xf32>
    %94 = vector.broadcast %93 : vector<4x1x1xf32> to vector<4x16x16xf32>
    %95 = arith.mulf %91, %94 : vector<4x16x16xf32>
    %96 = arith.addf %90, %95 : vector<4x16x16xf32>
    %97 = vector.extract_strided_slice %70 {offsets = [0, 1, 1], sizes = [4, 16, 16], strides = [1, 1, 1]} : vector<4x18x18xf32> to vector<4x16x16xf32>
    %c4_64 = arith.constant 4 : index
    %c0_65 = arith.constant 0 : index
    %c0_66 = arith.constant 0 : index
    %c0_67 = arith.constant 0 : index
    %98 = vector.load %arg5[%c4_64, %c0_65, %c0_66, %c0_67] : memref<9x4x1x1xf32, #tpu.memory_space<vmem>>, vector<1x4x1x1xf32>
    %99 = vector.shape_cast %98 : vector<1x4x1x1xf32> to vector<4x1x1xf32>
    %100 = vector.broadcast %99 : vector<4x1x1xf32> to vector<4x16x16xf32>
    %101 = arith.mulf %97, %100 : vector<4x16x16xf32>
    %102 = arith.addf %96, %101 : vector<4x16x16xf32>
    %103 = vector.extract_strided_slice %70 {offsets = [0, 1, 2], sizes = [4, 16, 16], strides = [1, 1, 1]} : vector<4x18x18xf32> to vector<4x16x16xf32>
    %c5_68 = arith.constant 5 : index
    %c0_69 = arith.constant 0 : index
    %c0_70 = arith.constant 0 : index
    %c0_71 = arith.constant 0 : index
    %104 = vector.load %arg5[%c5_68, %c0_69, %c0_70, %c0_71] : memref<9x4x1x1xf32, #tpu.memory_space<vmem>>, vector<1x4x1x1xf32>
    %105 = vector.shape_cast %104 : vector<1x4x1x1xf32> to vector<4x1x1xf32>
    %106 = vector.broadcast %105 : vector<4x1x1xf32> to vector<4x16x16xf32>
    %107 = arith.mulf %103, %106 : vector<4x16x16xf32>
    %108 = arith.addf %102, %107 : vector<4x16x16xf32>
    %109 = vector.extract_strided_slice %70 {offsets = [0, 2, 0], sizes = [4, 16, 16], strides = [1, 1, 1]} : vector<4x18x18xf32> to vector<4x16x16xf32>
    %c6_72 = arith.constant 6 : index
    %c0_73 = arith.constant 0 : index
    %c0_74 = arith.constant 0 : index
    %c0_75 = arith.constant 0 : index
    %110 = vector.load %arg5[%c6_72, %c0_73, %c0_74, %c0_75] : memref<9x4x1x1xf32, #tpu.memory_space<vmem>>, vector<1x4x1x1xf32>
    %111 = vector.shape_cast %110 : vector<1x4x1x1xf32> to vector<4x1x1xf32>
    %112 = vector.broadcast %111 : vector<4x1x1xf32> to vector<4x16x16xf32>
    %113 = arith.mulf %109, %112 : vector<4x16x16xf32>
    %114 = arith.addf %108, %113 : vector<4x16x16xf32>
    %115 = vector.extract_strided_slice %70 {offsets = [0, 2, 1], sizes = [4, 16, 16], strides = [1, 1, 1]} : vector<4x18x18xf32> to vector<4x16x16xf32>
    %c7_76 = arith.constant 7 : index
    %c0_77 = arith.constant 0 : index
    %c0_78 = arith.constant 0 : index
    %c0_79 = arith.constant 0 : index
    %116 = vector.load %arg5[%c7_76, %c0_77, %c0_78, %c0_79] : memref<9x4x1x1xf32, #tpu.memory_space<vmem>>, vector<1x4x1x1xf32>
    %117 = vector.shape_cast %116 : vector<1x4x1x1xf32> to vector<4x1x1xf32>
    %118 = vector.broadcast %117 : vector<4x1x1xf32> to vector<4x16x16xf32>
    %119 = arith.mulf %115, %118 : vector<4x16x16xf32>
    %120 = arith.addf %114, %119 : vector<4x16x16xf32>
    %121 = vector.extract_strided_slice %70 {offsets = [0, 2, 2], sizes = [4, 16, 16], strides = [1, 1, 1]} : vector<4x18x18xf32> to vector<4x16x16xf32>
    %c8_80 = arith.constant 8 : index
    %c0_81 = arith.constant 0 : index
    %c0_82 = arith.constant 0 : index
    %c0_83 = arith.constant 0 : index
    %122 = vector.load %arg5[%c8_80, %c0_81, %c0_82, %c0_83] : memref<9x4x1x1xf32, #tpu.memory_space<vmem>>, vector<1x4x1x1xf32>
    %123 = vector.shape_cast %122 : vector<1x4x1x1xf32> to vector<4x1x1xf32>
    %124 = vector.broadcast %123 : vector<4x1x1xf32> to vector<4x16x16xf32>
    %125 = arith.mulf %121, %124 : vector<4x16x16xf32>
    %126 = arith.addf %120, %125 : vector<4x16x16xf32>
    %c0_84 = arith.constant 0 : index
    %c0_85 = arith.constant 0 : index
    %c0_86 = arith.constant 0 : index
    %c0_87 = arith.constant 0 : index
    %127 = vector.load %arg8[%c0_84, %c0_85, %c0_86, %c0_87] : memref<1x4x16x16xf32, #tpu.memory_space<vmem>>, vector<1x4x16x16xf32>
    %128 = vector.shape_cast %127 : vector<1x4x16x16xf32> to vector<4x16x16xf32>
    %129 = vector.shape_cast %126 : vector<4x16x16xf32> to vector<1x4x16x16xf32>
    tpu.vector_store %arg8[%c0_84, %c0_85, %c0_86, %c0_87], %129 {strides = array<i32>} : memref<1x4x16x16xf32, #tpu.memory_space<vmem>>, vector<1x4x16x16xf32>,
    return
  }
  func.func @transform_0(%arg0: i32) -> (i32, i32, i32, i32) {
    %c0_i32 = arith.constant 0 : i32
    %c0_i32_0 = arith.constant 0 : i32
    %c0_i32_1 = arith.constant 0 : i32
    %c0_i32_2 = arith.constant 0 : i32
    return %arg0, %c0_i32, %c0_i32_0, %c0_i32_1 : i32, i32, i32, i32
  }
  func.func @transform_1(%arg0: i32) -> (i32, i32, i32, i32) {
    %c0_i32 = arith.constant 0 : i32
    %c0_i32_0 = arith.constant 0 : i32
    %c0_i32_1 = arith.constant 0 : i32
    %c0_i32_2 = arith.constant 0 : i32
    return %arg0, %c0_i32, %c0_i32_0, %c0_i32_1 : i32, i32, i32, i32
  }
  func.func @transform_2(%arg0: i32) -> (i32, i32, i32, i32) {
    %c0_i32 = arith.constant 0 : i32
    %c0_i32_0 = arith.constant 0 : i32
    %c0_i32_1 = arith.constant 0 : i32
    %c0_i32_2 = arith.constant 0 : i32
    %c0_i32_3 = arith.constant 0 : i32
    return %c0_i32, %c0_i32_0, %c0_i32_1, %c0_i32_2 : i32, i32, i32, i32
  }
  func.func @transform_3(%arg0: i32) -> (i32, i32, i32) {
    %c0_i32 = arith.constant 0 : i32
    %c0_i32_0 = arith.constant 0 : i32
    %c0_i32_1 = arith.constant 0 : i32
    %c0_i32_2 = arith.constant 0 : i32
    return %c0_i32, %c0_i32_0, %c0_i32_1 : i32, i32, i32
  }
  func.func @transform_4(%arg0: i32) -> (i32, i32, i32, i32) {
    %c0_i32 = arith.constant 0 : i32
    %c0_i32_0 = arith.constant 0 : i32
    %c0_i32_1 = arith.constant 0 : i32
    %c0_i32_2 = arith.constant 0 : i32
    %c0_i32_3 = arith.constant 0 : i32
    return %c0_i32, %c0_i32_0, %c0_i32_1, %c0_i32_2 : i32, i32, i32, i32
  }
  func.func @transform_5(%arg0: i32) -> (i32, i32, i32) {
    %c0_i32 = arith.constant 0 : i32
    %c0_i32_0 = arith.constant 0 : i32
    %c0_i32_1 = arith.constant 0 : i32
    %c0_i32_2 = arith.constant 0 : i32
    return %c0_i32, %c0_i32_0, %c0_i32_1 : i32, i32, i32
  }
  func.func @transform_6(%arg0: i32) -> (i32, i32, i32, i32) {
    %c0_i32 = arith.constant 0 : i32
    %c0_i32_0 = arith.constant 0 : i32
    %c0_i32_1 = arith.constant 0 : i32
    %c0_i32_2 = arith.constant 0 : i32
    return %arg0, %c0_i32, %c0_i32_0, %c0_i32_1 : i32, i32, i32, i32
  }
  func.func @transform_7(%arg0: i32) -> (i32, i32, i32, i32) {
    %c0_i32 = arith.constant 0 : i32
    %c0_i32_0 = arith.constant 0 : i32
    %c0_i32_1 = arith.constant 0 : i32
    %c0_i32_2 = arith.constant 0 : i32
    return %arg0, %c0_i32, %c0_i32_0, %c0_i32_1 : i32, i32, i32, i32
  }
}

module attributes {stable_mosaic.version = 11 : i64} {
  func.func @_spectral_kernel(%arg0: i32, %arg1: memref<2x8x128xf32, #tpu.memory_space<vmem>>, %arg2: memref<2x8x128xf32, #tpu.memory_space<vmem>>, %arg3: memref<8x8xf32, #tpu.memory_space<vmem>>, %arg4: memref<8x1xf32, #tpu.memory_space<vmem>>, %arg5: memref<8x8xf32, #tpu.memory_space<vmem>>, %arg6: memref<8x1xf32, #tpu.memory_space<vmem>>, %arg7: memref<8x8xf32, #tpu.memory_space<vmem>>, %arg8: memref<8x1xf32, #tpu.memory_space<vmem>>, %arg9: memref<8x8xf32, #tpu.memory_space<vmem>>, %arg10: memref<8x1xf32, #tpu.memory_space<vmem>>, %arg11: memref<2x8x128xf32, #tpu.memory_space<vmem>>) attributes {dimension_semantics = [#tpu.dimension_semantics<parallel>], iteration_bounds = array<i64: 2>, scalar_prefetch = 0 : i64, scratch_operands = 0 : i64, tpu.core_type = #tpu.core_type<tc>, window_params = [{transform_indices = @transform_0, window_bounds = array<i64: 2, 8, 128>}, {transform_indices = @transform_1, window_bounds = array<i64: 2, 8, 128>}, {pipeline_mode = #tpu.pipeline_mode<synchronous>, transform_indices = @transform_2, window_bounds = array<i64: 8, 8>}, {pipeline_mode = #tpu.pipeline_mode<synchronous>, transform_indices = @transform_3, window_bounds = array<i64: 8, 1>}, {pipeline_mode = #tpu.pipeline_mode<synchronous>, transform_indices = @transform_4, window_bounds = array<i64: 8, 8>}, {pipeline_mode = #tpu.pipeline_mode<synchronous>, transform_indices = @transform_5, window_bounds = array<i64: 8, 1>}, {pipeline_mode = #tpu.pipeline_mode<synchronous>, transform_indices = @transform_6, window_bounds = array<i64: 8, 8>}, {pipeline_mode = #tpu.pipeline_mode<synchronous>, transform_indices = @transform_7, window_bounds = array<i64: 8, 1>}, {pipeline_mode = #tpu.pipeline_mode<synchronous>, transform_indices = @transform_8, window_bounds = array<i64: 8, 8>}, {pipeline_mode = #tpu.pipeline_mode<synchronous>, transform_indices = @transform_9, window_bounds = array<i64: 8, 1>}, {transform_indices = @transform_10, window_bounds = array<i64: 2, 8, 128>}]} {
    %c0 = arith.constant 0 : index
    %c0_0 = arith.constant 0 : index
    %c0_1 = arith.constant 0 : index
    %0 = vector.load %arg1[%c0, %c0_0, %c0_1] : memref<2x8x128xf32, #tpu.memory_space<vmem>>, vector<1x8x128xf32>
    %1 = vector.shape_cast %0 : vector<1x8x128xf32> to vector<8x128xf32>
    %c0_2 = arith.constant 0 : index
    %c0_3 = arith.constant 0 : index
    %2 = vector.load %arg3[%c0_2, %c0_3] : memref<8x8xf32, #tpu.memory_space<vmem>>, vector<8x8xf32>
    %cst = arith.constant dense<0.000000e+00> : vector<8x128xf32>
    %3 = tpu.matmul %2, %1, %cst {dimension_numbers = #tpu.dot_dimension_numbers<[1], [0], [0], [1], [0, 0, 1, 1], [], []>} : vector<8x8xf32>, vector<8x128xf32>, vector<8x128xf32> -> vector<8x128xf32>
    %c0_4 = arith.constant 0 : index
    %c0_5 = arith.constant 0 : index
    %4 = vector.load %arg4[%c0_4, %c0_5] : memref<8x1xf32, #tpu.memory_space<vmem>>, vector<8x1xf32>
    %5 = vector.broadcast %4 : vector<8x1xf32> to vector<8x128xf32>
    %6 = arith.addf %3, %5 : vector<8x128xf32>
    %cst_6 = arith.constant 0.000000e+00 : f32
    %7 = vector.broadcast %cst_6 : f32 to vector<8x128xf32>
    %8 = arith.maximumf %6, %7 : vector<8x128xf32>
    %c0_7 = arith.constant 0 : index
    %c0_8 = arith.constant 0 : index
    %9 = vector.load %arg5[%c0_7, %c0_8] : memref<8x8xf32, #tpu.memory_space<vmem>>, vector<8x8xf32>
    %cst_9 = arith.constant dense<0.000000e+00> : vector<8x128xf32>
    %10 = tpu.matmul %9, %8, %cst_9 {dimension_numbers = #tpu.dot_dimension_numbers<[1], [0], [0], [1], [0, 0, 1, 1], [], []>} : vector<8x8xf32>, vector<8x128xf32>, vector<8x128xf32> -> vector<8x128xf32>
    %c0_10 = arith.constant 0 : index
    %c0_11 = arith.constant 0 : index
    %11 = vector.load %arg6[%c0_10, %c0_11] : memref<8x1xf32, #tpu.memory_space<vmem>>, vector<8x1xf32>
    %12 = vector.broadcast %11 : vector<8x1xf32> to vector<8x128xf32>
    %13 = arith.addf %10, %12 : vector<8x128xf32>
    %14 = arith.negf %13 : vector<8x128xf32>
    %15 = math.exp %14 : vector<8x128xf32>
    %cst_12 = arith.constant 1.000000e+00 : f32
    %16 = vector.broadcast %cst_12 : f32 to vector<8x128xf32>
    %17 = arith.addf %16, %15 : vector<8x128xf32>
    %18 = arith.divf %16, %17 : vector<8x128xf32>
    %c0_13 = arith.constant 0 : index
    %c0_14 = arith.constant 0 : index
    %c0_15 = arith.constant 0 : index
    %19 = vector.load %arg2[%c0_13, %c0_14, %c0_15] : memref<2x8x128xf32, #tpu.memory_space<vmem>>, vector<1x8x128xf32>
    %20 = vector.shape_cast %19 : vector<1x8x128xf32> to vector<8x128xf32>
    %21 = arith.mulf %18, %20 : vector<8x128xf32>
    %c0_16 = arith.constant 0 : index
    %c0_17 = arith.constant 0 : index
    %22 = vector.load %arg7[%c0_16, %c0_17] : memref<8x8xf32, #tpu.memory_space<vmem>>, vector<8x8xf32>
    %cst_18 = arith.constant dense<0.000000e+00> : vector<8x128xf32>
    %23 = tpu.matmul %22, %21, %cst_18 {dimension_numbers = #tpu.dot_dimension_numbers<[1], [0], [0], [1], [0, 0, 1, 1], [], []>} : vector<8x8xf32>, vector<8x128xf32>, vector<8x128xf32> -> vector<8x128xf32>
    %c0_19 = arith.constant 0 : index
    %c0_20 = arith.constant 0 : index
    %24 = vector.load %arg8[%c0_19, %c0_20] : memref<8x1xf32, #tpu.memory_space<vmem>>, vector<8x1xf32>
    %25 = vector.broadcast %24 : vector<8x1xf32> to vector<8x128xf32>
    %26 = arith.addf %23, %25 : vector<8x128xf32>
    %cst_21 = arith.constant 0.000000e+00 : f32
    %27 = vector.broadcast %cst_21 : f32 to vector<8x128xf32>
    %28 = arith.maximumf %26, %27 : vector<8x128xf32>
    %c0_22 = arith.constant 0 : index
    %c0_23 = arith.constant 0 : index
    %29 = vector.load %arg9[%c0_22, %c0_23] : memref<8x8xf32, #tpu.memory_space<vmem>>, vector<8x8xf32>
    %cst_24 = arith.constant dense<0.000000e+00> : vector<8x128xf32>
    %30 = tpu.matmul %29, %28, %cst_24 {dimension_numbers = #tpu.dot_dimension_numbers<[1], [0], [0], [1], [0, 0, 1, 1], [], []>} : vector<8x8xf32>, vector<8x128xf32>, vector<8x128xf32> -> vector<8x128xf32>
    %c0_25 = arith.constant 0 : index
    %c0_26 = arith.constant 0 : index
    %31 = vector.load %arg10[%c0_25, %c0_26] : memref<8x1xf32, #tpu.memory_space<vmem>>, vector<8x1xf32>
    %32 = vector.broadcast %31 : vector<8x1xf32> to vector<8x128xf32>
    %33 = arith.addf %30, %32 : vector<8x128xf32>
    %c0_27 = arith.constant 0 : index
    %c0_28 = arith.constant 0 : index
    %c0_29 = arith.constant 0 : index
    %34 = vector.load %arg11[%c0_27, %c0_28, %c0_29] : memref<2x8x128xf32, #tpu.memory_space<vmem>>, vector<1x8x128xf32>
    %35 = vector.shape_cast %34 : vector<1x8x128xf32> to vector<8x128xf32>
    %36 = vector.shape_cast %33 : vector<8x128xf32> to vector<1x8x128xf32>
    tpu.vector_store %arg11[%c0_27, %c0_28, %c0_29], %36 {strides = array<i32>} : memref<2x8x128xf32, #tpu.memory_space<vmem>>, vector<1x8x128xf32>,
    %c1 = arith.constant 1 : index
    %c0_30 = arith.constant 0 : index
    %c0_31 = arith.constant 0 : index
    %37 = vector.load %arg1[%c1, %c0_30, %c0_31] : memref<2x8x128xf32, #tpu.memory_space<vmem>>, vector<1x8x128xf32>
    %38 = vector.shape_cast %37 : vector<1x8x128xf32> to vector<8x128xf32>
    %c0_32 = arith.constant 0 : index
    %c0_33 = arith.constant 0 : index
    %39 = vector.load %arg3[%c0_32, %c0_33] : memref<8x8xf32, #tpu.memory_space<vmem>>, vector<8x8xf32>
    %cst_34 = arith.constant dense<0.000000e+00> : vector<8x128xf32>
    %40 = tpu.matmul %39, %38, %cst_34 {dimension_numbers = #tpu.dot_dimension_numbers<[1], [0], [0], [1], [0, 0, 1, 1], [], []>} : vector<8x8xf32>, vector<8x128xf32>, vector<8x128xf32> -> vector<8x128xf32>
    %c0_35 = arith.constant 0 : index
    %c0_36 = arith.constant 0 : index
    %41 = vector.load %arg4[%c0_35, %c0_36] : memref<8x1xf32, #tpu.memory_space<vmem>>, vector<8x1xf32>
    %42 = vector.broadcast %41 : vector<8x1xf32> to vector<8x128xf32>
    %43 = arith.addf %40, %42 : vector<8x128xf32>
    %cst_37 = arith.constant 0.000000e+00 : f32
    %44 = vector.broadcast %cst_37 : f32 to vector<8x128xf32>
    %45 = arith.maximumf %43, %44 : vector<8x128xf32>
    %c0_38 = arith.constant 0 : index
    %c0_39 = arith.constant 0 : index
    %46 = vector.load %arg5[%c0_38, %c0_39] : memref<8x8xf32, #tpu.memory_space<vmem>>, vector<8x8xf32>
    %cst_40 = arith.constant dense<0.000000e+00> : vector<8x128xf32>
    %47 = tpu.matmul %46, %45, %cst_40 {dimension_numbers = #tpu.dot_dimension_numbers<[1], [0], [0], [1], [0, 0, 1, 1], [], []>} : vector<8x8xf32>, vector<8x128xf32>, vector<8x128xf32> -> vector<8x128xf32>
    %c0_41 = arith.constant 0 : index
    %c0_42 = arith.constant 0 : index
    %48 = vector.load %arg6[%c0_41, %c0_42] : memref<8x1xf32, #tpu.memory_space<vmem>>, vector<8x1xf32>
    %49 = vector.broadcast %48 : vector<8x1xf32> to vector<8x128xf32>
    %50 = arith.addf %47, %49 : vector<8x128xf32>
    %51 = arith.negf %50 : vector<8x128xf32>
    %52 = math.exp %51 : vector<8x128xf32>
    %cst_43 = arith.constant 1.000000e+00 : f32
    %53 = vector.broadcast %cst_43 : f32 to vector<8x128xf32>
    %54 = arith.addf %53, %52 : vector<8x128xf32>
    %55 = arith.divf %53, %54 : vector<8x128xf32>
    %c1_44 = arith.constant 1 : index
    %c0_45 = arith.constant 0 : index
    %c0_46 = arith.constant 0 : index
    %56 = vector.load %arg2[%c1_44, %c0_45, %c0_46] : memref<2x8x128xf32, #tpu.memory_space<vmem>>, vector<1x8x128xf32>
    %57 = vector.shape_cast %56 : vector<1x8x128xf32> to vector<8x128xf32>
    %58 = arith.mulf %55, %57 : vector<8x128xf32>
    %c0_47 = arith.constant 0 : index
    %c0_48 = arith.constant 0 : index
    %59 = vector.load %arg7[%c0_47, %c0_48] : memref<8x8xf32, #tpu.memory_space<vmem>>, vector<8x8xf32>
    %cst_49 = arith.constant dense<0.000000e+00> : vector<8x128xf32>
    %60 = tpu.matmul %59, %58, %cst_49 {dimension_numbers = #tpu.dot_dimension_numbers<[1], [0], [0], [1], [0, 0, 1, 1], [], []>} : vector<8x8xf32>, vector<8x128xf32>, vector<8x128xf32> -> vector<8x128xf32>
    %c0_50 = arith.constant 0 : index
    %c0_51 = arith.constant 0 : index
    %61 = vector.load %arg8[%c0_50, %c0_51] : memref<8x1xf32, #tpu.memory_space<vmem>>, vector<8x1xf32>
    %62 = vector.broadcast %61 : vector<8x1xf32> to vector<8x128xf32>
    %63 = arith.addf %60, %62 : vector<8x128xf32>
    %cst_52 = arith.constant 0.000000e+00 : f32
    %64 = vector.broadcast %cst_52 : f32 to vector<8x128xf32>
    %65 = arith.maximumf %63, %64 : vector<8x128xf32>
    %c0_53 = arith.constant 0 : index
    %c0_54 = arith.constant 0 : index
    %66 = vector.load %arg9[%c0_53, %c0_54] : memref<8x8xf32, #tpu.memory_space<vmem>>, vector<8x8xf32>
    %cst_55 = arith.constant dense<0.000000e+00> : vector<8x128xf32>
    %67 = tpu.matmul %66, %65, %cst_55 {dimension_numbers = #tpu.dot_dimension_numbers<[1], [0], [0], [1], [0, 0, 1, 1], [], []>} : vector<8x8xf32>, vector<8x128xf32>, vector<8x128xf32> -> vector<8x128xf32>
    %c0_56 = arith.constant 0 : index
    %c0_57 = arith.constant 0 : index
    %68 = vector.load %arg10[%c0_56, %c0_57] : memref<8x1xf32, #tpu.memory_space<vmem>>, vector<8x1xf32>
    %69 = vector.broadcast %68 : vector<8x1xf32> to vector<8x128xf32>
    %70 = arith.addf %67, %69 : vector<8x128xf32>
    %c1_58 = arith.constant 1 : index
    %c0_59 = arith.constant 0 : index
    %c0_60 = arith.constant 0 : index
    %71 = vector.load %arg11[%c1_58, %c0_59, %c0_60] : memref<2x8x128xf32, #tpu.memory_space<vmem>>, vector<1x8x128xf32>
    %72 = vector.shape_cast %71 : vector<1x8x128xf32> to vector<8x128xf32>
    %73 = vector.shape_cast %70 : vector<8x128xf32> to vector<1x8x128xf32>
    tpu.vector_store %arg11[%c1_58, %c0_59, %c0_60], %73 {strides = array<i32>} : memref<2x8x128xf32, #tpu.memory_space<vmem>>, vector<1x8x128xf32>,
    return
  }
  func.func @transform_0(%arg0: i32) -> (i32, i32, i32) {
    %c0_i32 = arith.constant 0 : i32
    %c0_i32_0 = arith.constant 0 : i32
    %c0_i32_1 = arith.constant 0 : i32
    return %c0_i32, %c0_i32_0, %arg0 : i32, i32, i32
  }
  func.func @transform_1(%arg0: i32) -> (i32, i32, i32) {
    %c0_i32 = arith.constant 0 : i32
    %c0_i32_0 = arith.constant 0 : i32
    %c0_i32_1 = arith.constant 0 : i32
    return %c0_i32, %c0_i32_0, %arg0 : i32, i32, i32
  }
  func.func @transform_2(%arg0: i32) -> (i32, i32) {
    %c0_i32 = arith.constant 0 : i32
    %c0_i32_0 = arith.constant 0 : i32
    %c0_i32_1 = arith.constant 0 : i32
    return %c0_i32, %c0_i32_0 : i32, i32
  }
  func.func @transform_3(%arg0: i32) -> (i32, i32) {
    %c0_i32 = arith.constant 0 : i32
    %c0_i32_0 = arith.constant 0 : i32
    %c0_i32_1 = arith.constant 0 : i32
    return %c0_i32, %c0_i32_0 : i32, i32
  }
  func.func @transform_4(%arg0: i32) -> (i32, i32) {
    %c0_i32 = arith.constant 0 : i32
    %c0_i32_0 = arith.constant 0 : i32
    %c0_i32_1 = arith.constant 0 : i32
    return %c0_i32, %c0_i32_0 : i32, i32
  }
  func.func @transform_5(%arg0: i32) -> (i32, i32) {
    %c0_i32 = arith.constant 0 : i32
    %c0_i32_0 = arith.constant 0 : i32
    %c0_i32_1 = arith.constant 0 : i32
    return %c0_i32, %c0_i32_0 : i32, i32
  }
  func.func @transform_6(%arg0: i32) -> (i32, i32) {
    %c0_i32 = arith.constant 0 : i32
    %c0_i32_0 = arith.constant 0 : i32
    %c0_i32_1 = arith.constant 0 : i32
    return %c0_i32, %c0_i32_0 : i32, i32
  }
  func.func @transform_7(%arg0: i32) -> (i32, i32) {
    %c0_i32 = arith.constant 0 : i32
    %c0_i32_0 = arith.constant 0 : i32
    %c0_i32_1 = arith.constant 0 : i32
    return %c0_i32, %c0_i32_0 : i32, i32
  }
  func.func @transform_8(%arg0: i32) -> (i32, i32) {
    %c0_i32 = arith.constant 0 : i32
    %c0_i32_0 = arith.constant 0 : i32
    %c0_i32_1 = arith.constant 0 : i32
    return %c0_i32, %c0_i32_0 : i32, i32
  }
  func.func @transform_9(%arg0: i32) -> (i32, i32) {
    %c0_i32 = arith.constant 0 : i32
    %c0_i32_0 = arith.constant 0 : i32
    %c0_i32_1 = arith.constant 0 : i32
    return %c0_i32, %c0_i32_0 : i32, i32
  }
  func.func @transform_10(%arg0: i32) -> (i32, i32, i32) {
    %c0_i32 = arith.constant 0 : i32
    %c0_i32_0 = arith.constant 0 : i32
    %c0_i32_1 = arith.constant 0 : i32
    return %c0_i32, %c0_i32_0, %arg0 : i32, i32, i32
  }
}

module attributes {stable_mosaic.version = 11 : i64} {
  func.func @_filter_kernel(%arg0: i32, %arg1: memref<2x4x128xf32, #tpu.memory_space<vmem>>, %arg2: memref<2x4x128xf32, #tpu.memory_space<vmem>>, %arg3: memref<2x4x128xf32, #tpu.memory_space<vmem>>, %arg4: memref<2x8x128xf32, #tpu.memory_space<vmem>>, %arg5: memref<8x4xf32, #tpu.memory_space<vmem>>, %arg6: memref<8x1xf32, #tpu.memory_space<vmem>>, %arg7: memref<2x8x128xf32, #tpu.memory_space<vmem>>) attributes {dimension_semantics = [#tpu.dimension_semantics<parallel>], iteration_bounds = array<i64: 2>, scalar_prefetch = 0 : i64, scratch_operands = 0 : i64, tpu.core_type = #tpu.core_type<tc>, window_params = [{transform_indices = @transform_0, window_bounds = array<i64: 2, 4, 128>}, {transform_indices = @transform_1, window_bounds = array<i64: 2, 4, 128>}, {transform_indices = @transform_2, window_bounds = array<i64: 2, 4, 128>}, {transform_indices = @transform_3, window_bounds = array<i64: 2, 8, 128>}, {pipeline_mode = #tpu.pipeline_mode<synchronous>, transform_indices = @transform_4, window_bounds = array<i64: 8, 4>}, {pipeline_mode = #tpu.pipeline_mode<synchronous>, transform_indices = @transform_5, window_bounds = array<i64: 8, 1>}, {transform_indices = @transform_6, window_bounds = array<i64: 2, 8, 128>}]} {
    %c0 = arith.constant 0 : index
    %c0_0 = arith.constant 0 : index
    %c0_1 = arith.constant 0 : index
    %0 = vector.load %arg1[%c0, %c0_0, %c0_1] : memref<2x4x128xf32, #tpu.memory_space<vmem>>, vector<1x4x128xf32>
    %1 = vector.shape_cast %0 : vector<1x4x128xf32> to vector<4x128xf32>
    %c0_2 = arith.constant 0 : index
    %c0_3 = arith.constant 0 : index
    %c0_4 = arith.constant 0 : index
    %2 = vector.load %arg3[%c0_2, %c0_3, %c0_4] : memref<2x4x128xf32, #tpu.memory_space<vmem>>, vector<1x4x128xf32>
    %3 = vector.shape_cast %2 : vector<1x4x128xf32> to vector<4x128xf32>
    %4 = arith.addf %1, %3 : vector<4x128xf32>
    %c0_5 = arith.constant 0 : index
    %c0_6 = arith.constant 0 : index
    %c0_7 = arith.constant 0 : index
    %5 = vector.load %arg2[%c0_5, %c0_6, %c0_7] : memref<2x4x128xf32, #tpu.memory_space<vmem>>, vector<1x4x128xf32>
    %6 = vector.shape_cast %5 : vector<1x4x128xf32> to vector<4x128xf32>
    %7 = arith.addf %4, %6 : vector<4x128xf32>
    %c0_8 = arith.constant 0 : index
    %c0_9 = arith.constant 0 : index
    %8 = vector.load %arg5[%c0_8, %c0_9] : memref<8x4xf32, #tpu.memory_space<vmem>>, vector<8x4xf32>
    %cst = arith.constant dense<0.000000e+00> : vector<8x128xf32>
    %9 = tpu.matmul %8, %7, %cst {dimension_numbers = #tpu.dot_dimension_numbers<[1], [0], [0], [1], [0, 0, 1, 1], [], []>} : vector<8x4xf32>, vector<4x128xf32>, vector<8x128xf32> -> vector<8x128xf32>
    %c0_10 = arith.constant 0 : index
    %c0_11 = arith.constant 0 : index
    %10 = vector.load %arg6[%c0_10, %c0_11] : memref<8x1xf32, #tpu.memory_space<vmem>>, vector<8x1xf32>
    %11 = vector.broadcast %10 : vector<8x1xf32> to vector<8x128xf32>
    %12 = arith.addf %9, %11 : vector<8x128xf32>
    %c0_12 = arith.constant 0 : index
    %c0_13 = arith.constant 0 : index
    %c0_14 = arith.constant 0 : index
    %13 = vector.load %arg4[%c0_12, %c0_13, %c0_14] : memref<2x8x128xf32, #tpu.memory_space<vmem>>, vector<1x8x128xf32>
    %14 = vector.shape_cast %13 : vector<1x8x128xf32> to vector<8x128xf32>
    %15 = arith.mulf %12, %14 : vector<8x128xf32>
    %c0_15 = arith.constant 0 : index
    %c0_16 = arith.constant 0 : index
    %c0_17 = arith.constant 0 : index
    %16 = vector.load %arg7[%c0_15, %c0_16, %c0_17] : memref<2x8x128xf32, #tpu.memory_space<vmem>>, vector<1x8x128xf32>
    %17 = vector.shape_cast %16 : vector<1x8x128xf32> to vector<8x128xf32>
    %18 = vector.shape_cast %15 : vector<8x128xf32> to vector<1x8x128xf32>
    tpu.vector_store %arg7[%c0_15, %c0_16, %c0_17], %18 {strides = array<i32>} : memref<2x8x128xf32, #tpu.memory_space<vmem>>, vector<1x8x128xf32>,
    %c1 = arith.constant 1 : index
    %c0_18 = arith.constant 0 : index
    %c0_19 = arith.constant 0 : index
    %19 = vector.load %arg1[%c1, %c0_18, %c0_19] : memref<2x4x128xf32, #tpu.memory_space<vmem>>, vector<1x4x128xf32>
    %20 = vector.shape_cast %19 : vector<1x4x128xf32> to vector<4x128xf32>
    %c1_20 = arith.constant 1 : index
    %c0_21 = arith.constant 0 : index
    %c0_22 = arith.constant 0 : index
    %21 = vector.load %arg3[%c1_20, %c0_21, %c0_22] : memref<2x4x128xf32, #tpu.memory_space<vmem>>, vector<1x4x128xf32>
    %22 = vector.shape_cast %21 : vector<1x4x128xf32> to vector<4x128xf32>
    %23 = arith.addf %20, %22 : vector<4x128xf32>
    %c1_23 = arith.constant 1 : index
    %c0_24 = arith.constant 0 : index
    %c0_25 = arith.constant 0 : index
    %24 = vector.load %arg2[%c1_23, %c0_24, %c0_25] : memref<2x4x128xf32, #tpu.memory_space<vmem>>, vector<1x4x128xf32>
    %25 = vector.shape_cast %24 : vector<1x4x128xf32> to vector<4x128xf32>
    %26 = arith.addf %23, %25 : vector<4x128xf32>
    %c0_26 = arith.constant 0 : index
    %c0_27 = arith.constant 0 : index
    %27 = vector.load %arg5[%c0_26, %c0_27] : memref<8x4xf32, #tpu.memory_space<vmem>>, vector<8x4xf32>
    %cst_28 = arith.constant dense<0.000000e+00> : vector<8x128xf32>
    %28 = tpu.matmul %27, %26, %cst_28 {dimension_numbers = #tpu.dot_dimension_numbers<[1], [0], [0], [1], [0, 0, 1, 1], [], []>} : vector<8x4xf32>, vector<4x128xf32>, vector<8x128xf32> -> vector<8x128xf32>
    %c0_29 = arith.constant 0 : index
    %c0_30 = arith.constant 0 : index
    %29 = vector.load %arg6[%c0_29, %c0_30] : memref<8x1xf32, #tpu.memory_space<vmem>>, vector<8x1xf32>
    %30 = vector.broadcast %29 : vector<8x1xf32> to vector<8x128xf32>
    %31 = arith.addf %28, %30 : vector<8x128xf32>
    %c1_31 = arith.constant 1 : index
    %c0_32 = arith.constant 0 : index
    %c0_33 = arith.constant 0 : index
    %32 = vector.load %arg4[%c1_31, %c0_32, %c0_33] : memref<2x8x128xf32, #tpu.memory_space<vmem>>, vector<1x8x128xf32>
    %33 = vector.shape_cast %32 : vector<1x8x128xf32> to vector<8x128xf32>
    %34 = arith.mulf %31, %33 : vector<8x128xf32>
    %c1_34 = arith.constant 1 : index
    %c0_35 = arith.constant 0 : index
    %c0_36 = arith.constant 0 : index
    %35 = vector.load %arg7[%c1_34, %c0_35, %c0_36] : memref<2x8x128xf32, #tpu.memory_space<vmem>>, vector<1x8x128xf32>
    %36 = vector.shape_cast %35 : vector<1x8x128xf32> to vector<8x128xf32>
    %37 = vector.shape_cast %34 : vector<8x128xf32> to vector<1x8x128xf32>
    tpu.vector_store %arg7[%c1_34, %c0_35, %c0_36], %37 {strides = array<i32>} : memref<2x8x128xf32, #tpu.memory_space<vmem>>, vector<1x8x128xf32>,
    return
  }
  func.func @transform_0(%arg0: i32) -> (i32, i32, i32) {
    %c0_i32 = arith.constant 0 : i32
    %c0_i32_0 = arith.constant 0 : i32
    %c0_i32_1 = arith.constant 0 : i32
    return %c0_i32, %c0_i32_0, %arg0 : i32, i32, i32
  }
  func.func @transform_1(%arg0: i32) -> (i32, i32, i32) {
    %c0_i32 = arith.constant 0 : i32
    %c0_i32_0 = arith.constant 0 : i32
    %c0_i32_1 = arith.constant 0 : i32
    return %c0_i32, %c0_i32_0, %arg0 : i32, i32, i32
  }
  func.func @transform_2(%arg0: i32) -> (i32, i32, i32) {
    %c0_i32 = arith.constant 0 : i32
    %c0_i32_0 = arith.constant 0 : i32
    %c0_i32_1 = arith.constant 0 : i32
    return %c0_i32, %c0_i32_0, %arg0 : i32, i32, i32
  }
  func.func @transform_3(%arg0: i32) -> (i32, i32, i32) {
    %c0_i32 = arith.constant 0 : i32
    %c0_i32_0 = arith.constant 0 : i32
    %c0_i32_1 = arith.constant 0 : i32
    return %c0_i32, %c0_i32_0, %arg0 : i32, i32, i32
  }
  func.func @transform_4(%arg0: i32) -> (i32, i32) {
    %c0_i32 = arith.constant 0 : i32
    %c0_i32_0 = arith.constant 0 : i32
    %c0_i32_1 = arith.constant 0 : i32
    return %c0_i32, %c0_i32_0 : i32, i32
  }
  func.func @transform_5(%arg0: i32) -> (i32, i32) {
    %c0_i32 = arith.constant 0 : i32
    %c0_i32_0 = arith.constant 0 : i32
    %c0_i32_1 = arith.constant 0 : i32
    return %c0_i32, %c0_i32_0 : i32, i32
  }
  func.func @transform_6(%arg0: i32) -> (i32, i32, i32) {
    %c0_i32 = arith.constant 0 : i32
    %c0_i32_0 = arith.constant 0 : i32
    %c0_i32_1 = arith.constant 0 : i32
    return %c0_i32, %c0_i32_0, %arg0 : i32, i32, i32
  }
}

module attributes {stable_mosaic.version = 11 : i64} {
  func.func @_tail_kernel(%arg0: i32, %arg1: memref<1x4x16x16xf32, #tpu.memory_space<vmem>>, %arg2: memref<1x4x16x16xf32, #tpu.memory_space<vmem>>, %arg3: memref<9x4x1x1xf32, #tpu.memory_space<vmem>>, %arg4: memref<4x1x1xf32, #tpu.memory_space<vmem>>, %arg5: memref<4x4x1x1xf32, #tpu.memory_space<vmem>>, %arg6: memref<4x1x1xf32, #tpu.memory_space<vmem>>, %arg7: memref<1x4x16x16xf32, #tpu.memory_space<vmem>>) attributes {dimension_semantics = [#tpu.dimension_semantics<parallel>], iteration_bounds = array<i64: 2>, scalar_prefetch = 0 : i64, scratch_operands = 0 : i64, tpu.core_type = #tpu.core_type<tc>, window_params = [{transform_indices = @transform_0, window_bounds = array<i64: 1, 4, 16, 16>}, {transform_indices = @transform_1, window_bounds = array<i64: 1, 4, 16, 16>}, {pipeline_mode = #tpu.pipeline_mode<synchronous>, transform_indices = @transform_2, window_bounds = array<i64: 9, 4, 1, 1>}, {pipeline_mode = #tpu.pipeline_mode<synchronous>, transform_indices = @transform_3, window_bounds = array<i64: 4, 1, 1>}, {pipeline_mode = #tpu.pipeline_mode<synchronous>, transform_indices = @transform_4, window_bounds = array<i64: 4, 4, 1, 1>}, {pipeline_mode = #tpu.pipeline_mode<synchronous>, transform_indices = @transform_5, window_bounds = array<i64: 4, 1, 1>}, {transform_indices = @transform_6, window_bounds = array<i64: 1, 4, 16, 16>}]} {
    %c0 = arith.constant 0 : index
    %c0_0 = arith.constant 0 : index
    %c0_1 = arith.constant 0 : index
    %c0_2 = arith.constant 0 : index
    %0 = vector.load %arg1[%c0, %c0_0, %c0_1, %c0_2] : memref<1x4x16x16xf32, #tpu.memory_space<vmem>>, vector<1x4x16x16xf32>
    %1 = vector.shape_cast %0 : vector<1x4x16x16xf32> to vector<4x16x16xf32>
    %cst = arith.constant 0.000000e+00 : f32
    %2 = vector.broadcast %cst : f32 to vector<4x16x1xf32>
    %3 = tpu.concatenate %2, %1, %2 in 2 : vector<4x16x1xf32>, vector<4x16x16xf32>, vector<4x16x1xf32> -> vector<4x16x18xf32>
    %cst_3 = arith.constant 0.000000e+00 : f32
    %4 = vector.broadcast %cst_3 : f32 to vector<4x1x18xf32>
    %5 = tpu.concatenate %4, %3, %4 in 1 : vector<4x1x18xf32>, vector<4x16x18xf32>, vector<4x1x18xf32> -> vector<4x18x18xf32>
    %c0_4 = arith.constant 0 : index
    %c0_5 = arith.constant 0 : index
    %c0_6 = arith.constant 0 : index
    %6 = vector.load %arg4[%c0_4, %c0_5, %c0_6] : memref<4x1x1xf32, #tpu.memory_space<vmem>>, vector<4x1x1xf32>
    %7 = vector.extract_strided_slice %5 {offsets = [0, 0, 0], sizes = [4, 16, 16], strides = [1, 1, 1]} : vector<4x18x18xf32> to vector<4x16x16xf32>
    %c0_7 = arith.constant 0 : index
    %c0_8 = arith.constant 0 : index
    %c0_9 = arith.constant 0 : index
    %c0_10 = arith.constant 0 : index
    %8 = vector.load %arg3[%c0_7, %c0_8, %c0_9, %c0_10] : memref<9x4x1x1xf32, #tpu.memory_space<vmem>>, vector<1x4x1x1xf32>
    %9 = vector.shape_cast %8 : vector<1x4x1x1xf32> to vector<4x1x1xf32>
    %10 = vector.broadcast %9 : vector<4x1x1xf32> to vector<4x16x16xf32>
    %11 = arith.mulf %7, %10 : vector<4x16x16xf32>
    %12 = vector.broadcast %6 : vector<4x1x1xf32> to vector<4x16x16xf32>
    %13 = arith.addf %12, %11 : vector<4x16x16xf32>
    %14 = vector.extract_strided_slice %5 {offsets = [0, 0, 1], sizes = [4, 16, 16], strides = [1, 1, 1]} : vector<4x18x18xf32> to vector<4x16x16xf32>
    %c1 = arith.constant 1 : index
    %c0_11 = arith.constant 0 : index
    %c0_12 = arith.constant 0 : index
    %c0_13 = arith.constant 0 : index
    %15 = vector.load %arg3[%c1, %c0_11, %c0_12, %c0_13] : memref<9x4x1x1xf32, #tpu.memory_space<vmem>>, vector<1x4x1x1xf32>
    %16 = vector.shape_cast %15 : vector<1x4x1x1xf32> to vector<4x1x1xf32>
    %17 = vector.broadcast %16 : vector<4x1x1xf32> to vector<4x16x16xf32>
    %18 = arith.mulf %14, %17 : vector<4x16x16xf32>
    %19 = arith.addf %13, %18 : vector<4x16x16xf32>
    %20 = vector.extract_strided_slice %5 {offsets = [0, 0, 2], sizes = [4, 16, 16], strides = [1, 1, 1]} : vector<4x18x18xf32> to vector<4x16x16xf32>
    %c2 = arith.constant 2 : index
    %c0_14 = arith.constant 0 : index
    %c0_15 = arith.constant 0 : index
    %c0_16 = arith.constant 0 : index
    %21 = vector.load %arg3[%c2, %c0_14, %c0_15, %c0_16] : memref<9x4x1x1xf32, #tpu.memory_space<vmem>>, vector<1x4x1x1xf32>
    %22 = vector.shape_cast %21 : vector<1x4x1x1xf32> to vector<4x1x1xf32>
    %23 = vector.broadcast %22 : vector<4x1x1xf32> to vector<4x16x16xf32>
    %24 = arith.mulf %20, %23 : vector<4x16x16xf32>
    %25 = arith.addf %19, %24 : vector<4x16x16xf32>
    %26 = vector.extract_strided_slice %5 {offsets = [0, 1, 0], sizes = [4, 16, 16], strides = [1, 1, 1]} : vector<4x18x18xf32> to vector<4x16x16xf32>
    %c3 = arith.constant 3 : index
    %c0_17 = arith.constant 0 : index
    %c0_18 = arith.constant 0 : index
    %c0_19 = arith.constant 0 : index
    %27 = vector.load %arg3[%c3, %c0_17, %c0_18, %c0_19] : memref<9x4x1x1xf32, #tpu.memory_space<vmem>>, vector<1x4x1x1xf32>
    %28 = vector.shape_cast %27 : vector<1x4x1x1xf32> to vector<4x1x1xf32>
    %29 = vector.broadcast %28 : vector<4x1x1xf32> to vector<4x16x16xf32>
    %30 = arith.mulf %26, %29 : vector<4x16x16xf32>
    %31 = arith.addf %25, %30 : vector<4x16x16xf32>
    %32 = vector.extract_strided_slice %5 {offsets = [0, 1, 1], sizes = [4, 16, 16], strides = [1, 1, 1]} : vector<4x18x18xf32> to vector<4x16x16xf32>
    %c4 = arith.constant 4 : index
    %c0_20 = arith.constant 0 : index
    %c0_21 = arith.constant 0 : index
    %c0_22 = arith.constant 0 : index
    %33 = vector.load %arg3[%c4, %c0_20, %c0_21, %c0_22] : memref<9x4x1x1xf32, #tpu.memory_space<vmem>>, vector<1x4x1x1xf32>
    %34 = vector.shape_cast %33 : vector<1x4x1x1xf32> to vector<4x1x1xf32>
    %35 = vector.broadcast %34 : vector<4x1x1xf32> to vector<4x16x16xf32>
    %36 = arith.mulf %32, %35 : vector<4x16x16xf32>
    %37 = arith.addf %31, %36 : vector<4x16x16xf32>
    %38 = vector.extract_strided_slice %5 {offsets = [0, 1, 2], sizes = [4, 16, 16], strides = [1, 1, 1]} : vector<4x18x18xf32> to vector<4x16x16xf32>
    %c5 = arith.constant 5 : index
    %c0_23 = arith.constant 0 : index
    %c0_24 = arith.constant 0 : index
    %c0_25 = arith.constant 0 : index
    %39 = vector.load %arg3[%c5, %c0_23, %c0_24, %c0_25] : memref<9x4x1x1xf32, #tpu.memory_space<vmem>>, vector<1x4x1x1xf32>
    %40 = vector.shape_cast %39 : vector<1x4x1x1xf32> to vector<4x1x1xf32>
    %41 = vector.broadcast %40 : vector<4x1x1xf32> to vector<4x16x16xf32>
    %42 = arith.mulf %38, %41 : vector<4x16x16xf32>
    %43 = arith.addf %37, %42 : vector<4x16x16xf32>
    %44 = vector.extract_strided_slice %5 {offsets = [0, 2, 0], sizes = [4, 16, 16], strides = [1, 1, 1]} : vector<4x18x18xf32> to vector<4x16x16xf32>
    %c6 = arith.constant 6 : index
    %c0_26 = arith.constant 0 : index
    %c0_27 = arith.constant 0 : index
    %c0_28 = arith.constant 0 : index
    %45 = vector.load %arg3[%c6, %c0_26, %c0_27, %c0_28] : memref<9x4x1x1xf32, #tpu.memory_space<vmem>>, vector<1x4x1x1xf32>
    %46 = vector.shape_cast %45 : vector<1x4x1x1xf32> to vector<4x1x1xf32>
    %47 = vector.broadcast %46 : vector<4x1x1xf32> to vector<4x16x16xf32>
    %48 = arith.mulf %44, %47 : vector<4x16x16xf32>
    %49 = arith.addf %43, %48 : vector<4x16x16xf32>
    %50 = vector.extract_strided_slice %5 {offsets = [0, 2, 1], sizes = [4, 16, 16], strides = [1, 1, 1]} : vector<4x18x18xf32> to vector<4x16x16xf32>
    %c7 = arith.constant 7 : index
    %c0_29 = arith.constant 0 : index
    %c0_30 = arith.constant 0 : index
    %c0_31 = arith.constant 0 : index
    %51 = vector.load %arg3[%c7, %c0_29, %c0_30, %c0_31] : memref<9x4x1x1xf32, #tpu.memory_space<vmem>>, vector<1x4x1x1xf32>
    %52 = vector.shape_cast %51 : vector<1x4x1x1xf32> to vector<4x1x1xf32>
    %53 = vector.broadcast %52 : vector<4x1x1xf32> to vector<4x16x16xf32>
    %54 = arith.mulf %50, %53 : vector<4x16x16xf32>
    %55 = arith.addf %49, %54 : vector<4x16x16xf32>
    %56 = vector.extract_strided_slice %5 {offsets = [0, 2, 2], sizes = [4, 16, 16], strides = [1, 1, 1]} : vector<4x18x18xf32> to vector<4x16x16xf32>
    %c8 = arith.constant 8 : index
    %c0_32 = arith.constant 0 : index
    %c0_33 = arith.constant 0 : index
    %c0_34 = arith.constant 0 : index
    %57 = vector.load %arg3[%c8, %c0_32, %c0_33, %c0_34] : memref<9x4x1x1xf32, #tpu.memory_space<vmem>>, vector<1x4x1x1xf32>
    %58 = vector.shape_cast %57 : vector<1x4x1x1xf32> to vector<4x1x1xf32>
    %59 = vector.broadcast %58 : vector<4x1x1xf32> to vector<4x16x16xf32>
    %60 = arith.mulf %56, %59 : vector<4x16x16xf32>
    %61 = arith.addf %55, %60 : vector<4x16x16xf32>
    %cst_35 = arith.constant 0.707106769 : f32
    %62 = vector.broadcast %cst_35 : f32 to vector<4x16x16xf32>
    %63 = arith.mulf %61, %62 : vector<4x16x16xf32>
    %64 = math.absf %63 : vector<4x16x16xf32>
    %cst_36 = arith.constant 0.327591091 : f32
    %65 = vector.broadcast %cst_36 : f32 to vector<4x16x16xf32>
    %66 = arith.mulf %65, %64 : vector<4x16x16xf32>
    %cst_37 = arith.constant 1.000000e+00 : f32
    %67 = vector.broadcast %cst_37 : f32 to vector<4x16x16xf32>
    %68 = arith.addf %67, %66 : vector<4x16x16xf32>
    %cst_38 = arith.constant 1.000000e+00 : f32
    %69 = vector.broadcast %cst_38 : f32 to vector<4x16x16xf32>
    %70 = arith.divf %69, %68 : vector<4x16x16xf32>
    %cst_39 = arith.constant 1.06140542 : f32
    %71 = vector.broadcast %cst_39 : f32 to vector<4x16x16xf32>
    %72 = arith.mulf %70, %71 : vector<4x16x16xf32>
    %cst_40 = arith.constant -1.45315206 : f32
    %73 = vector.broadcast %cst_40 : f32 to vector<4x16x16xf32>
    %74 = arith.addf %73, %72 : vector<4x16x16xf32>
    %75 = arith.mulf %70, %74 : vector<4x16x16xf32>
    %cst_41 = arith.constant 1.42141378 : f32
    %76 = vector.broadcast %cst_41 : f32 to vector<4x16x16xf32>
    %77 = arith.addf %76, %75 : vector<4x16x16xf32>
    %78 = arith.mulf %70, %77 : vector<4x16x16xf32>
    %cst_42 = arith.constant -0.284496725 : f32
    %79 = vector.broadcast %cst_42 : f32 to vector<4x16x16xf32>
    %80 = arith.addf %79, %78 : vector<4x16x16xf32>
    %81 = arith.mulf %70, %80 : vector<4x16x16xf32>
    %cst_43 = arith.constant 0.254829586 : f32
    %82 = vector.broadcast %cst_43 : f32 to vector<4x16x16xf32>
    %83 = arith.addf %82, %81 : vector<4x16x16xf32>
    %84 = arith.mulf %70, %83 : vector<4x16x16xf32>
    %cst_44 = arith.constant 0.000000e+00 : f32
    %85 = vector.broadcast %cst_44 : f32 to vector<4x16x16xf32>
    %86 = arith.subf %85, %64 : vector<4x16x16xf32>
    %87 = arith.mulf %86, %64 : vector<4x16x16xf32>
    %88 = math.exp %87 : vector<4x16x16xf32>
    %89 = arith.mulf %84, %88 : vector<4x16x16xf32>
    %cst_45 = arith.constant 1.000000e+00 : f32
    %90 = vector.broadcast %cst_45 : f32 to vector<4x16x16xf32>
    %91 = arith.subf %90, %89 : vector<4x16x16xf32>
    %cst_46 = arith.constant 0.000000e+00 : f32
    %92 = vector.broadcast %cst_46 : f32 to vector<4x16x16xf32>
    %93 = arith.cmpf olt, %63, %92 : vector<4x16x16xf32>
    %cst_47 = arith.constant 0.000000e+00 : f32
    %94 = vector.broadcast %cst_47 : f32 to vector<4x16x16xf32>
    %95 = arith.subf %94, %91 : vector<4x16x16xf32>
    %96 = arith.select %93, %95, %91 : vector<4x16x16xi1>, vector<4x16x16xf32>
    %cst_48 = arith.constant 5.000000e-01 : f32
    %97 = vector.broadcast %cst_48 : f32 to vector<4x16x16xf32>
    %98 = arith.mulf %97, %61 : vector<4x16x16xf32>
    %cst_49 = arith.constant 1.000000e+00 : f32
    %99 = vector.broadcast %cst_49 : f32 to vector<4x16x16xf32>
    %100 = arith.addf %99, %96 : vector<4x16x16xf32>
    %101 = arith.mulf %98, %100 : vector<4x16x16xf32>
    %c0_50 = arith.constant 0 : index
    %c0_51 = arith.constant 0 : index
    %c0_52 = arith.constant 0 : index
    %102 = vector.load %arg6[%c0_50, %c0_51, %c0_52] : memref<4x1x1xf32, #tpu.memory_space<vmem>>, vector<4x1x1xf32>
    %c0_53 = arith.constant 0 : index
    %c0_54 = arith.constant 0 : index
    %c0_55 = arith.constant 0 : index
    %c0_56 = arith.constant 0 : index
    %103 = vector.load %arg5[%c0_53, %c0_54, %c0_55, %c0_56] : memref<4x4x1x1xf32, #tpu.memory_space<vmem>>, vector<1x4x1x1xf32>
    %104 = vector.shape_cast %103 : vector<1x4x1x1xf32> to vector<4x1x1xf32>
    %105 = vector.extract_strided_slice %101 {offsets = [0, 0, 0], sizes = [1, 16, 16], strides = [1, 1, 1]} : vector<4x16x16xf32> to vector<1x16x16xf32>
    %106 = vector.shape_cast %105 : vector<1x16x16xf32> to vector<16x16xf32>
    %107 = vector.shape_cast %106 : vector<16x16xf32> to vector<1x16x16xf32>
    %108 = vector.broadcast %104 : vector<4x1x1xf32> to vector<4x16x16xf32>
    %109 = vector.broadcast %107 : vector<1x16x16xf32> to vector<4x16x16xf32>
    %110 = arith.mulf %108, %109 : vector<4x16x16xf32>
    %111 = vector.broadcast %102 : vector<4x1x1xf32> to vector<4x16x16xf32>
    %112 = arith.addf %111, %110 : vector<4x16x16xf32>
    %c1_57 = arith.constant 1 : index
    %c0_58 = arith.constant 0 : index
    %c0_59 = arith.constant 0 : index
    %c0_60 = arith.constant 0 : index
    %113 = vector.load %arg5[%c1_57, %c0_58, %c0_59, %c0_60] : memref<4x4x1x1xf32, #tpu.memory_space<vmem>>, vector<1x4x1x1xf32>
    %114 = vector.shape_cast %113 : vector<1x4x1x1xf32> to vector<4x1x1xf32>
    %115 = vector.extract_strided_slice %101 {offsets = [1, 0, 0], sizes = [1, 16, 16], strides = [1, 1, 1]} : vector<4x16x16xf32> to vector<1x16x16xf32>
    %116 = vector.shape_cast %115 : vector<1x16x16xf32> to vector<16x16xf32>
    %117 = vector.shape_cast %116 : vector<16x16xf32> to vector<1x16x16xf32>
    %118 = vector.broadcast %114 : vector<4x1x1xf32> to vector<4x16x16xf32>
    %119 = vector.broadcast %117 : vector<1x16x16xf32> to vector<4x16x16xf32>
    %120 = arith.mulf %118, %119 : vector<4x16x16xf32>
    %121 = arith.addf %112, %120 : vector<4x16x16xf32>
    %c2_61 = arith.constant 2 : index
    %c0_62 = arith.constant 0 : index
    %c0_63 = arith.constant 0 : index
    %c0_64 = arith.constant 0 : index
    %122 = vector.load %arg5[%c2_61, %c0_62, %c0_63, %c0_64] : memref<4x4x1x1xf32, #tpu.memory_space<vmem>>, vector<1x4x1x1xf32>
    %123 = vector.shape_cast %122 : vector<1x4x1x1xf32> to vector<4x1x1xf32>
    %124 = vector.extract_strided_slice %101 {offsets = [2, 0, 0], sizes = [1, 16, 16], strides = [1, 1, 1]} : vector<4x16x16xf32> to vector<1x16x16xf32>
    %125 = vector.shape_cast %124 : vector<1x16x16xf32> to vector<16x16xf32>
    %126 = vector.shape_cast %125 : vector<16x16xf32> to vector<1x16x16xf32>
    %127 = vector.broadcast %123 : vector<4x1x1xf32> to vector<4x16x16xf32>
    %128 = vector.broadcast %126 : vector<1x16x16xf32> to vector<4x16x16xf32>
    %129 = arith.mulf %127, %128 : vector<4x16x16xf32>
    %130 = arith.addf %121, %129 : vector<4x16x16xf32>
    %c3_65 = arith.constant 3 : index
    %c0_66 = arith.constant 0 : index
    %c0_67 = arith.constant 0 : index
    %c0_68 = arith.constant 0 : index
    %131 = vector.load %arg5[%c3_65, %c0_66, %c0_67, %c0_68] : memref<4x4x1x1xf32, #tpu.memory_space<vmem>>, vector<1x4x1x1xf32>
    %132 = vector.shape_cast %131 : vector<1x4x1x1xf32> to vector<4x1x1xf32>
    %133 = vector.extract_strided_slice %101 {offsets = [3, 0, 0], sizes = [1, 16, 16], strides = [1, 1, 1]} : vector<4x16x16xf32> to vector<1x16x16xf32>
    %134 = vector.shape_cast %133 : vector<1x16x16xf32> to vector<16x16xf32>
    %135 = vector.shape_cast %134 : vector<16x16xf32> to vector<1x16x16xf32>
    %136 = vector.broadcast %132 : vector<4x1x1xf32> to vector<4x16x16xf32>
    %137 = vector.broadcast %135 : vector<1x16x16xf32> to vector<4x16x16xf32>
    %138 = arith.mulf %136, %137 : vector<4x16x16xf32>
    %139 = arith.addf %130, %138 : vector<4x16x16xf32>
    %c0_69 = arith.constant 0 : index
    %c0_70 = arith.constant 0 : index
    %c0_71 = arith.constant 0 : index
    %c0_72 = arith.constant 0 : index
    %140 = vector.load %arg2[%c0_69, %c0_70, %c0_71, %c0_72] : memref<1x4x16x16xf32, #tpu.memory_space<vmem>>, vector<1x4x16x16xf32>
    %141 = vector.shape_cast %140 : vector<1x4x16x16xf32> to vector<4x16x16xf32>
    %142 = arith.addf %139, %141 : vector<4x16x16xf32>
    %c0_73 = arith.constant 0 : index
    %c0_74 = arith.constant 0 : index
    %c0_75 = arith.constant 0 : index
    %c0_76 = arith.constant 0 : index
    %143 = vector.load %arg7[%c0_73, %c0_74, %c0_75, %c0_76] : memref<1x4x16x16xf32, #tpu.memory_space<vmem>>, vector<1x4x16x16xf32>
    %144 = vector.shape_cast %143 : vector<1x4x16x16xf32> to vector<4x16x16xf32>
    %145 = vector.shape_cast %142 : vector<4x16x16xf32> to vector<1x4x16x16xf32>
    tpu.vector_store %arg7[%c0_73, %c0_74, %c0_75, %c0_76], %145 {strides = array<i32>} : memref<1x4x16x16xf32, #tpu.memory_space<vmem>>, vector<1x4x16x16xf32>,
    return
  }
  func.func @transform_0(%arg0: i32) -> (i32, i32, i32, i32) {
    %c0_i32 = arith.constant 0 : i32
    %c0_i32_0 = arith.constant 0 : i32
    %c0_i32_1 = arith.constant 0 : i32
    %c0_i32_2 = arith.constant 0 : i32
    return %arg0, %c0_i32, %c0_i32_0, %c0_i32_1 : i32, i32, i32, i32
  }
  func.func @transform_1(%arg0: i32) -> (i32, i32, i32, i32) {
    %c0_i32 = arith.constant 0 : i32
    %c0_i32_0 = arith.constant 0 : i32
    %c0_i32_1 = arith.constant 0 : i32
    %c0_i32_2 = arith.constant 0 : i32
    return %arg0, %c0_i32, %c0_i32_0, %c0_i32_1 : i32, i32, i32, i32
  }
  func.func @transform_2(%arg0: i32) -> (i32, i32, i32, i32) {
    %c0_i32 = arith.constant 0 : i32
    %c0_i32_0 = arith.constant 0 : i32
    %c0_i32_1 = arith.constant 0 : i32
    %c0_i32_2 = arith.constant 0 : i32
    %c0_i32_3 = arith.constant 0 : i32
    return %c0_i32, %c0_i32_0, %c0_i32_1, %c0_i32_2 : i32, i32, i32, i32
  }
  func.func @transform_3(%arg0: i32) -> (i32, i32, i32) {
    %c0_i32 = arith.constant 0 : i32
    %c0_i32_0 = arith.constant 0 : i32
    %c0_i32_1 = arith.constant 0 : i32
    %c0_i32_2 = arith.constant 0 : i32
    return %c0_i32, %c0_i32_0, %c0_i32_1 : i32, i32, i32
  }
  func.func @transform_4(%arg0: i32) -> (i32, i32, i32, i32) {
    %c0_i32 = arith.constant 0 : i32
    %c0_i32_0 = arith.constant 0 : i32
    %c0_i32_1 = arith.constant 0 : i32
    %c0_i32_2 = arith.constant 0 : i32
    %c0_i32_3 = arith.constant 0 : i32
    return %c0_i32, %c0_i32_0, %c0_i32_1, %c0_i32_2 : i32, i32, i32, i32
  }
  func.func @transform_5(%arg0: i32) -> (i32, i32, i32) {
    %c0_i32 = arith.constant 0 : i32
    %c0_i32_0 = arith.constant 0 : i32
    %c0_i32_1 = arith.constant 0 : i32
    %c0_i32_2 = arith.constant 0 : i32
    return %c0_i32, %c0_i32_0, %c0_i32_1 : i32, i32, i32
  }
  func.func @transform_6(%arg0: i32) -> (i32, i32, i32, i32) {
    %c0_i32 = arith.constant 0 : i32
    %c0_i32_0 = arith.constant 0 : i32
    %c0_i32_1 = arith.constant 0 : i32
    %c0_i32_2 = arith.constant 0 : i32
    return %arg0, %c0_i32, %c0_i32_0, %c0_i32_1 : i32, i32, i32, i32
  }
}

module attributes {stable_mosaic.version = 11 : i64} {
  func.func @_cross_attn_kernel(%arg0: i32, %arg1: memref<2x8x128xf32, #tpu.memory_space<vmem>>, %arg2: memref<2x4x128xf32, #tpu.memory_space<vmem>>, %arg3: memref<8x8xf32, #tpu.memory_space<vmem>>, %arg4: memref<8x1xf32, #tpu.memory_space<vmem>>, %arg5: memref<16x4xf32, #tpu.memory_space<vmem>>, %arg6: memref<16x1xf32, #tpu.memory_space<vmem>>, %arg7: memref<4x4xf32, #tpu.memory_space<vmem>>, %arg8: memref<4x1xf32, #tpu.memory_space<vmem>>, %arg9: memref<4x4xf32, #tpu.memory_space<vmem>>, %arg10: memref<4x1xf32, #tpu.memory_space<vmem>>, %arg11: memref<2x4x128xf32, #tpu.memory_space<vmem>>) attributes {dimension_semantics = [#tpu.dimension_semantics<parallel>], iteration_bounds = array<i64: 2>, scalar_prefetch = 0 : i64, scratch_operands = 0 : i64, tpu.core_type = #tpu.core_type<tc>, window_params = [{transform_indices = @transform_0, window_bounds = array<i64: 2, 8, 128>}, {transform_indices = @transform_1, window_bounds = array<i64: 2, 4, 128>}, {pipeline_mode = #tpu.pipeline_mode<synchronous>, transform_indices = @transform_2, window_bounds = array<i64: 8, 8>}, {pipeline_mode = #tpu.pipeline_mode<synchronous>, transform_indices = @transform_3, window_bounds = array<i64: 8, 1>}, {pipeline_mode = #tpu.pipeline_mode<synchronous>, transform_indices = @transform_4, window_bounds = array<i64: 16, 4>}, {pipeline_mode = #tpu.pipeline_mode<synchronous>, transform_indices = @transform_5, window_bounds = array<i64: 16, 1>}, {pipeline_mode = #tpu.pipeline_mode<synchronous>, transform_indices = @transform_6, window_bounds = array<i64: 4, 4>}, {pipeline_mode = #tpu.pipeline_mode<synchronous>, transform_indices = @transform_7, window_bounds = array<i64: 4, 1>}, {pipeline_mode = #tpu.pipeline_mode<synchronous>, transform_indices = @transform_8, window_bounds = array<i64: 4, 4>}, {pipeline_mode = #tpu.pipeline_mode<synchronous>, transform_indices = @transform_9, window_bounds = array<i64: 4, 1>}, {transform_indices = @transform_10, window_bounds = array<i64: 2, 4, 128>}]} {
    %c0 = arith.constant 0 : index
    %c0_0 = arith.constant 0 : index
    %c0_1 = arith.constant 0 : index
    %0 = vector.load %arg1[%c0, %c0_0, %c0_1] : memref<2x8x128xf32, #tpu.memory_space<vmem>>, vector<1x8x128xf32>
    %1 = vector.shape_cast %0 : vector<1x8x128xf32> to vector<8x128xf32>
    %c0_2 = arith.constant 0 : index
    %c0_3 = arith.constant 0 : index
    %2 = vector.load %arg3[%c0_2, %c0_3] : memref<8x8xf32, #tpu.memory_space<vmem>>, vector<8x8xf32>
    %cst = arith.constant dense<0.000000e+00> : vector<8x128xf32>
    %3 = tpu.matmul %2, %1, %cst {dimension_numbers = #tpu.dot_dimension_numbers<[1], [0], [0], [1], [0, 0, 1, 1], [], []>} : vector<8x8xf32>, vector<8x128xf32>, vector<8x128xf32> -> vector<8x128xf32>
    %c0_4 = arith.constant 0 : index
    %c0_5 = arith.constant 0 : index
    %4 = vector.load %arg4[%c0_4, %c0_5] : memref<8x1xf32, #tpu.memory_space<vmem>>, vector<8x1xf32>
    %5 = vector.broadcast %4 : vector<8x1xf32> to vector<8x128xf32>
    %6 = arith.addf %3, %5 : vector<8x128xf32>
    %c0_6 = arith.constant 0 : index
    %c0_7 = arith.constant 0 : index
    %c0_8 = arith.constant 0 : index
    %7 = vector.load %arg2[%c0_6, %c0_7, %c0_8] : memref<2x4x128xf32, #tpu.memory_space<vmem>>, vector<1x4x128xf32>
    %8 = vector.shape_cast %7 : vector<1x4x128xf32> to vector<4x128xf32>
    %c0_9 = arith.constant 0 : index
    %c0_10 = arith.constant 0 : index
    %9 = vector.load %arg5[%c0_9, %c0_10] : memref<16x4xf32, #tpu.memory_space<vmem>>, vector<16x4xf32>
    %cst_11 = arith.constant dense<0.000000e+00> : vector<16x128xf32>
    %10 = tpu.matmul %9, %8, %cst_11 {dimension_numbers = #tpu.dot_dimension_numbers<[1], [0], [0], [1], [0, 0, 1, 1], [], []>} : vector<16x4xf32>, vector<4x128xf32>, vector<16x128xf32> -> vector<16x128xf32>
    %c0_12 = arith.constant 0 : index
    %c0_13 = arith.constant 0 : index
    %11 = vector.load %arg6[%c0_12, %c0_13] : memref<16x1xf32, #tpu.memory_space<vmem>>, vector<16x1xf32>
    %12 = vector.broadcast %11 : vector<16x1xf32> to vector<16x128xf32>
    %13 = arith.addf %10, %12 : vector<16x128xf32>
    %14 = vector.extract_strided_slice %6 {offsets = [0, 0], sizes = [4, 128], strides = [1, 1]} : vector<8x128xf32> to vector<4x128xf32>
    %15 = vector.extract_strided_slice %6 {offsets = [4, 0], sizes = [4, 128], strides = [1, 1]} : vector<8x128xf32> to vector<4x128xf32>
    %16 = vector.extract_strided_slice %13 {offsets = [0, 0], sizes = [4, 128], strides = [1, 1]} : vector<16x128xf32> to vector<4x128xf32>
    %17 = vector.extract_strided_slice %13 {offsets = [4, 0], sizes = [4, 128], strides = [1, 1]} : vector<16x128xf32> to vector<4x128xf32>
    %18 = vector.extract_strided_slice %13 {offsets = [8, 0], sizes = [4, 128], strides = [1, 1]} : vector<16x128xf32> to vector<4x128xf32>
    %19 = vector.extract_strided_slice %13 {offsets = [12, 0], sizes = [4, 128], strides = [1, 1]} : vector<16x128xf32> to vector<4x128xf32>
    %c1 = arith.constant 1 : index
    %c0_14 = arith.constant 0 : index
    %c0_15 = arith.constant 0 : index
    %20 = vector.load %arg1[%c1, %c0_14, %c0_15] : memref<2x8x128xf32, #tpu.memory_space<vmem>>, vector<1x8x128xf32>
    %21 = vector.shape_cast %20 : vector<1x8x128xf32> to vector<8x128xf32>
    %c0_16 = arith.constant 0 : index
    %c0_17 = arith.constant 0 : index
    %22 = vector.load %arg3[%c0_16, %c0_17] : memref<8x8xf32, #tpu.memory_space<vmem>>, vector<8x8xf32>
    %cst_18 = arith.constant dense<0.000000e+00> : vector<8x128xf32>
    %23 = tpu.matmul %22, %21, %cst_18 {dimension_numbers = #tpu.dot_dimension_numbers<[1], [0], [0], [1], [0, 0, 1, 1], [], []>} : vector<8x8xf32>, vector<8x128xf32>, vector<8x128xf32> -> vector<8x128xf32>
    %c0_19 = arith.constant 0 : index
    %c0_20 = arith.constant 0 : index
    %24 = vector.load %arg4[%c0_19, %c0_20] : memref<8x1xf32, #tpu.memory_space<vmem>>, vector<8x1xf32>
    %25 = vector.broadcast %24 : vector<8x1xf32> to vector<8x128xf32>
    %26 = arith.addf %23, %25 : vector<8x128xf32>
    %c1_21 = arith.constant 1 : index
    %c0_22 = arith.constant 0 : index
    %c0_23 = arith.constant 0 : index
    %27 = vector.load %arg2[%c1_21, %c0_22, %c0_23] : memref<2x4x128xf32, #tpu.memory_space<vmem>>, vector<1x4x128xf32>
    %28 = vector.shape_cast %27 : vector<1x4x128xf32> to vector<4x128xf32>
    %c0_24 = arith.constant 0 : index
    %c0_25 = arith.constant 0 : index
    %29 = vector.load %arg5[%c0_24, %c0_25] : memref<16x4xf32, #tpu.memory_space<vmem>>, vector<16x4xf32>
    %cst_26 = arith.constant dense<0.000000e+00> : vector<16x128xf32>
    %30 = tpu.matmul %29, %28, %cst_26 {dimension_numbers = #tpu.dot_dimension_numbers<[1], [0], [0], [1], [0, 0, 1, 1], [], []>} : vector<16x4xf32>, vector<4x128xf32>, vector<16x128xf32> -> vector<16x128xf32>
    %c0_27 = arith.constant 0 : index
    %c0_28 = arith.constant 0 : index
    %31 = vector.load %arg6[%c0_27, %c0_28] : memref<16x1xf32, #tpu.memory_space<vmem>>, vector<16x1xf32>
    %32 = vector.broadcast %31 : vector<16x1xf32> to vector<16x128xf32>
    %33 = arith.addf %30, %32 : vector<16x128xf32>
    %34 = vector.extract_strided_slice %26 {offsets = [0, 0], sizes = [4, 128], strides = [1, 1]} : vector<8x128xf32> to vector<4x128xf32>
    %35 = vector.extract_strided_slice %26 {offsets = [4, 0], sizes = [4, 128], strides = [1, 1]} : vector<8x128xf32> to vector<4x128xf32>
    %36 = vector.extract_strided_slice %33 {offsets = [0, 0], sizes = [4, 128], strides = [1, 1]} : vector<16x128xf32> to vector<4x128xf32>
    %37 = vector.extract_strided_slice %33 {offsets = [4, 0], sizes = [4, 128], strides = [1, 1]} : vector<16x128xf32> to vector<4x128xf32>
    %38 = vector.extract_strided_slice %33 {offsets = [8, 0], sizes = [4, 128], strides = [1, 1]} : vector<16x128xf32> to vector<4x128xf32>
    %39 = vector.extract_strided_slice %33 {offsets = [12, 0], sizes = [4, 128], strides = [1, 1]} : vector<16x128xf32> to vector<4x128xf32>
    %40 = arith.mulf %14, %16 : vector<4x128xf32>
    %cst_29 = arith.constant dense<0.000000e+00> : vector<128xf32>
    %41 = vector.multi_reduction <add>, %40, %cst_29 [0] : vector<4x128xf32> to vector<128xf32>
    %42 = vector.shape_cast %41 : vector<128xf32> to vector<1x128xf32>
    %cst_30 = arith.constant 5.000000e-01 : f32
    %43 = vector.broadcast %cst_30 : f32 to vector<1x128xf32>
    %44 = arith.mulf %42, %43 : vector<1x128xf32>
    %45 = arith.mulf %14, %36 : vector<4x128xf32>
    %cst_31 = arith.constant dense<0.000000e+00> : vector<128xf32>
    %46 = vector.multi_reduction <add>, %45, %cst_31 [0] : vector<4x128xf32> to vector<128xf32>
    %47 = vector.shape_cast %46 : vector<128xf32> to vector<1x128xf32>
    %cst_32 = arith.constant 5.000000e-01 : f32
    %48 = vector.broadcast %cst_32 : f32 to vector<1x128xf32>
    %49 = arith.mulf %47, %48 : vector<1x128xf32>
    %50 = arith.maximumf %44, %49 : vector<1x128xf32>
    %51 = arith.subf %44, %50 : vector<1x128xf32>
    %52 = math.exp %51 : vector<1x128xf32>
    %53 = arith.subf %49, %50 : vector<1x128xf32>
    %54 = math.exp %53 : vector<1x128xf32>
    %55 = arith.addf %52, %54 : vector<1x128xf32>
    %56 = vector.broadcast %52 : vector<1x128xf32> to vector<4x128xf32>
    %57 = arith.mulf %56, %17 : vector<4x128xf32>
    %58 = vector.broadcast %54 : vector<1x128xf32> to vector<4x128xf32>
    %59 = arith.mulf %58, %37 : vector<4x128xf32>
    %60 = arith.addf %57, %59 : vector<4x128xf32>
    %61 = vector.broadcast %55 : vector<1x128xf32> to vector<4x128xf32>
    %62 = arith.divf %60, %61 : vector<4x128xf32>
    %c0_33 = arith.constant 0 : index
    %c0_34 = arith.constant 0 : index
    %63 = vector.load %arg7[%c0_33, %c0_34] : memref<4x4xf32, #tpu.memory_space<vmem>>, vector<4x4xf32>
    %cst_35 = arith.constant dense<0.000000e+00> : vector<4x128xf32>
    %64 = tpu.matmul %63, %62, %cst_35 {dimension_numbers = #tpu.dot_dimension_numbers<[1], [0], [0], [1], [0, 0, 1, 1], [], []>} : vector<4x4xf32>, vector<4x128xf32>, vector<4x128xf32> -> vector<4x128xf32>
    %c0_36 = arith.constant 0 : index
    %c0_37 = arith.constant 0 : index
    %65 = vector.load %arg8[%c0_36, %c0_37] : memref<4x1xf32, #tpu.memory_space<vmem>>, vector<4x1xf32>
    %66 = vector.broadcast %65 : vector<4x1xf32> to vector<4x128xf32>
    %67 = arith.addf %64, %66 : vector<4x128xf32>
    %68 = arith.mulf %34, %16 : vector<4x128xf32>
    %cst_38 = arith.constant dense<0.000000e+00> : vector<128xf32>
    %69 = vector.multi_reduction <add>, %68, %cst_38 [0] : vector<4x128xf32> to vector<128xf32>
    %70 = vector.shape_cast %69 : vector<128xf32> to vector<1x128xf32>
    %cst_39 = arith.constant 5.000000e-01 : f32
    %71 = vector.broadcast %cst_39 : f32 to vector<1x128xf32>
    %72 = arith.mulf %70, %71 : vector<1x128xf32>
    %73 = arith.mulf %34, %36 : vector<4x128xf32>
    %cst_40 = arith.constant dense<0.000000e+00> : vector<128xf32>
    %74 = vector.multi_reduction <add>, %73, %cst_40 [0] : vector<4x128xf32> to vector<128xf32>
    %75 = vector.shape_cast %74 : vector<128xf32> to vector<1x128xf32>
    %cst_41 = arith.constant 5.000000e-01 : f32
    %76 = vector.broadcast %cst_41 : f32 to vector<1x128xf32>
    %77 = arith.mulf %75, %76 : vector<1x128xf32>
    %78 = arith.maximumf %72, %77 : vector<1x128xf32>
    %79 = arith.subf %72, %78 : vector<1x128xf32>
    %80 = math.exp %79 : vector<1x128xf32>
    %81 = arith.subf %77, %78 : vector<1x128xf32>
    %82 = math.exp %81 : vector<1x128xf32>
    %83 = arith.addf %80, %82 : vector<1x128xf32>
    %84 = vector.broadcast %80 : vector<1x128xf32> to vector<4x128xf32>
    %85 = arith.mulf %84, %17 : vector<4x128xf32>
    %86 = vector.broadcast %82 : vector<1x128xf32> to vector<4x128xf32>
    %87 = arith.mulf %86, %37 : vector<4x128xf32>
    %88 = arith.addf %85, %87 : vector<4x128xf32>
    %89 = vector.broadcast %83 : vector<1x128xf32> to vector<4x128xf32>
    %90 = arith.divf %88, %89 : vector<4x128xf32>
    %c0_42 = arith.constant 0 : index
    %c0_43 = arith.constant 0 : index
    %91 = vector.load %arg7[%c0_42, %c0_43] : memref<4x4xf32, #tpu.memory_space<vmem>>, vector<4x4xf32>
    %cst_44 = arith.constant dense<0.000000e+00> : vector<4x128xf32>
    %92 = tpu.matmul %91, %90, %cst_44 {dimension_numbers = #tpu.dot_dimension_numbers<[1], [0], [0], [1], [0, 0, 1, 1], [], []>} : vector<4x4xf32>, vector<4x128xf32>, vector<4x128xf32> -> vector<4x128xf32>
    %c0_45 = arith.constant 0 : index
    %c0_46 = arith.constant 0 : index
    %93 = vector.load %arg8[%c0_45, %c0_46] : memref<4x1xf32, #tpu.memory_space<vmem>>, vector<4x1xf32>
    %94 = vector.broadcast %93 : vector<4x1xf32> to vector<4x128xf32>
    %95 = arith.addf %92, %94 : vector<4x128xf32>
    %96 = arith.mulf %15, %18 : vector<4x128xf32>
    %cst_47 = arith.constant dense<0.000000e+00> : vector<128xf32>
    %97 = vector.multi_reduction <add>, %96, %cst_47 [0] : vector<4x128xf32> to vector<128xf32>
    %98 = vector.shape_cast %97 : vector<128xf32> to vector<1x128xf32>
    %cst_48 = arith.constant 5.000000e-01 : f32
    %99 = vector.broadcast %cst_48 : f32 to vector<1x128xf32>
    %100 = arith.mulf %98, %99 : vector<1x128xf32>
    %101 = arith.mulf %15, %38 : vector<4x128xf32>
    %cst_49 = arith.constant dense<0.000000e+00> : vector<128xf32>
    %102 = vector.multi_reduction <add>, %101, %cst_49 [0] : vector<4x128xf32> to vector<128xf32>
    %103 = vector.shape_cast %102 : vector<128xf32> to vector<1x128xf32>
    %cst_50 = arith.constant 5.000000e-01 : f32
    %104 = vector.broadcast %cst_50 : f32 to vector<1x128xf32>
    %105 = arith.mulf %103, %104 : vector<1x128xf32>
    %106 = arith.maximumf %100, %105 : vector<1x128xf32>
    %107 = arith.subf %100, %106 : vector<1x128xf32>
    %108 = math.exp %107 : vector<1x128xf32>
    %109 = arith.subf %105, %106 : vector<1x128xf32>
    %110 = math.exp %109 : vector<1x128xf32>
    %111 = arith.addf %108, %110 : vector<1x128xf32>
    %112 = vector.broadcast %108 : vector<1x128xf32> to vector<4x128xf32>
    %113 = arith.mulf %112, %19 : vector<4x128xf32>
    %114 = vector.broadcast %110 : vector<1x128xf32> to vector<4x128xf32>
    %115 = arith.mulf %114, %39 : vector<4x128xf32>
    %116 = arith.addf %113, %115 : vector<4x128xf32>
    %117 = vector.broadcast %111 : vector<1x128xf32> to vector<4x128xf32>
    %118 = arith.divf %116, %117 : vector<4x128xf32>
    %c0_51 = arith.constant 0 : index
    %c0_52 = arith.constant 0 : index
    %119 = vector.load %arg9[%c0_51, %c0_52] : memref<4x4xf32, #tpu.memory_space<vmem>>, vector<4x4xf32>
    %cst_53 = arith.constant dense<0.000000e+00> : vector<4x128xf32>
    %120 = tpu.matmul %119, %118, %cst_53 {dimension_numbers = #tpu.dot_dimension_numbers<[1], [0], [0], [1], [0, 0, 1, 1], [], []>} : vector<4x4xf32>, vector<4x128xf32>, vector<4x128xf32> -> vector<4x128xf32>
    %c0_54 = arith.constant 0 : index
    %c0_55 = arith.constant 0 : index
    %121 = vector.load %arg10[%c0_54, %c0_55] : memref<4x1xf32, #tpu.memory_space<vmem>>, vector<4x1xf32>
    %122 = vector.broadcast %121 : vector<4x1xf32> to vector<4x128xf32>
    %123 = arith.addf %120, %122 : vector<4x128xf32>
    %124 = arith.mulf %35, %18 : vector<4x128xf32>
    %cst_56 = arith.constant dense<0.000000e+00> : vector<128xf32>
    %125 = vector.multi_reduction <add>, %124, %cst_56 [0] : vector<4x128xf32> to vector<128xf32>
    %126 = vector.shape_cast %125 : vector<128xf32> to vector<1x128xf32>
    %cst_57 = arith.constant 5.000000e-01 : f32
    %127 = vector.broadcast %cst_57 : f32 to vector<1x128xf32>
    %128 = arith.mulf %126, %127 : vector<1x128xf32>
    %129 = arith.mulf %35, %38 : vector<4x128xf32>
    %cst_58 = arith.constant dense<0.000000e+00> : vector<128xf32>
    %130 = vector.multi_reduction <add>, %129, %cst_58 [0] : vector<4x128xf32> to vector<128xf32>
    %131 = vector.shape_cast %130 : vector<128xf32> to vector<1x128xf32>
    %cst_59 = arith.constant 5.000000e-01 : f32
    %132 = vector.broadcast %cst_59 : f32 to vector<1x128xf32>
    %133 = arith.mulf %131, %132 : vector<1x128xf32>
    %134 = arith.maximumf %128, %133 : vector<1x128xf32>
    %135 = arith.subf %128, %134 : vector<1x128xf32>
    %136 = math.exp %135 : vector<1x128xf32>
    %137 = arith.subf %133, %134 : vector<1x128xf32>
    %138 = math.exp %137 : vector<1x128xf32>
    %139 = arith.addf %136, %138 : vector<1x128xf32>
    %140 = vector.broadcast %136 : vector<1x128xf32> to vector<4x128xf32>
    %141 = arith.mulf %140, %19 : vector<4x128xf32>
    %142 = vector.broadcast %138 : vector<1x128xf32> to vector<4x128xf32>
    %143 = arith.mulf %142, %39 : vector<4x128xf32>
    %144 = arith.addf %141, %143 : vector<4x128xf32>
    %145 = vector.broadcast %139 : vector<1x128xf32> to vector<4x128xf32>
    %146 = arith.divf %144, %145 : vector<4x128xf32>
    %c0_60 = arith.constant 0 : index
    %c0_61 = arith.constant 0 : index
    %147 = vector.load %arg9[%c0_60, %c0_61] : memref<4x4xf32, #tpu.memory_space<vmem>>, vector<4x4xf32>
    %cst_62 = arith.constant dense<0.000000e+00> : vector<4x128xf32>
    %148 = tpu.matmul %147, %146, %cst_62 {dimension_numbers = #tpu.dot_dimension_numbers<[1], [0], [0], [1], [0, 0, 1, 1], [], []>} : vector<4x4xf32>, vector<4x128xf32>, vector<4x128xf32> -> vector<4x128xf32>
    %c0_63 = arith.constant 0 : index
    %c0_64 = arith.constant 0 : index
    %149 = vector.load %arg10[%c0_63, %c0_64] : memref<4x1xf32, #tpu.memory_space<vmem>>, vector<4x1xf32>
    %150 = vector.broadcast %149 : vector<4x1xf32> to vector<4x128xf32>
    %151 = arith.addf %148, %150 : vector<4x128xf32>
    %152 = arith.mulf %67, %67 : vector<4x128xf32>
    %153 = arith.mulf %123, %123 : vector<4x128xf32>
    %154 = arith.addf %152, %153 : vector<4x128xf32>
    %155 = math.sqrt %154 : vector<4x128xf32>
    %c0_65 = arith.constant 0 : index
    %c0_66 = arith.constant 0 : index
    %c0_67 = arith.constant 0 : index
    %156 = vector.load %arg11[%c0_65, %c0_66, %c0_67] : memref<2x4x128xf32, #tpu.memory_space<vmem>>, vector<1x4x128xf32>
    %157 = vector.shape_cast %156 : vector<1x4x128xf32> to vector<4x128xf32>
    %158 = vector.shape_cast %155 : vector<4x128xf32> to vector<1x4x128xf32>
    tpu.vector_store %arg11[%c0_65, %c0_66, %c0_67], %158 {strides = array<i32>} : memref<2x4x128xf32, #tpu.memory_space<vmem>>, vector<1x4x128xf32>,
    %159 = arith.mulf %95, %95 : vector<4x128xf32>
    %160 = arith.mulf %151, %151 : vector<4x128xf32>
    %161 = arith.addf %159, %160 : vector<4x128xf32>
    %162 = math.sqrt %161 : vector<4x128xf32>
    %c1_68 = arith.constant 1 : index
    %c0_69 = arith.constant 0 : index
    %c0_70 = arith.constant 0 : index
    %163 = vector.load %arg11[%c1_68, %c0_69, %c0_70] : memref<2x4x128xf32, #tpu.memory_space<vmem>>, vector<1x4x128xf32>
    %164 = vector.shape_cast %163 : vector<1x4x128xf32> to vector<4x128xf32>
    %165 = vector.shape_cast %162 : vector<4x128xf32> to vector<1x4x128xf32>
    tpu.vector_store %arg11[%c1_68, %c0_69, %c0_70], %165 {strides = array<i32>} : memref<2x4x128xf32, #tpu.memory_space<vmem>>, vector<1x4x128xf32>,
    return
  }
  func.func @transform_0(%arg0: i32) -> (i32, i32, i32) {
    %c0_i32 = arith.constant 0 : i32
    %c0_i32_0 = arith.constant 0 : i32
    %c0_i32_1 = arith.constant 0 : i32
    return %c0_i32, %c0_i32_0, %arg0 : i32, i32, i32
  }
  func.func @transform_1(%arg0: i32) -> (i32, i32, i32) {
    %c0_i32 = arith.constant 0 : i32
    %c0_i32_0 = arith.constant 0 : i32
    %c0_i32_1 = arith.constant 0 : i32
    return %c0_i32, %c0_i32_0, %arg0 : i32, i32, i32
  }
  func.func @transform_2(%arg0: i32) -> (i32, i32) {
    %c0_i32 = arith.constant 0 : i32
    %c0_i32_0 = arith.constant 0 : i32
    %c0_i32_1 = arith.constant 0 : i32
    return %c0_i32, %c0_i32_0 : i32, i32
  }
  func.func @transform_3(%arg0: i32) -> (i32, i32) {
    %c0_i32 = arith.constant 0 : i32
    %c0_i32_0 = arith.constant 0 : i32
    %c0_i32_1 = arith.constant 0 : i32
    return %c0_i32, %c0_i32_0 : i32, i32
  }
  func.func @transform_4(%arg0: i32) -> (i32, i32) {
    %c0_i32 = arith.constant 0 : i32
    %c0_i32_0 = arith.constant 0 : i32
    %c0_i32_1 = arith.constant 0 : i32
    return %c0_i32, %c0_i32_0 : i32, i32
  }
  func.func @transform_5(%arg0: i32) -> (i32, i32) {
    %c0_i32 = arith.constant 0 : i32
    %c0_i32_0 = arith.constant 0 : i32
    %c0_i32_1 = arith.constant 0 : i32
    return %c0_i32, %c0_i32_0 : i32, i32
  }
  func.func @transform_6(%arg0: i32) -> (i32, i32) {
    %c0_i32 = arith.constant 0 : i32
    %c0_i32_0 = arith.constant 0 : i32
    %c0_i32_1 = arith.constant 0 : i32
    return %c0_i32, %c0_i32_0 : i32, i32
  }
  func.func @transform_7(%arg0: i32) -> (i32, i32) {
    %c0_i32 = arith.constant 0 : i32
    %c0_i32_0 = arith.constant 0 : i32
    %c0_i32_1 = arith.constant 0 : i32
    return %c0_i32, %c0_i32_0 : i32, i32
  }
  func.func @transform_8(%arg0: i32) -> (i32, i32) {
    %c0_i32 = arith.constant 0 : i32
    %c0_i32_0 = arith.constant 0 : i32
    %c0_i32_1 = arith.constant 0 : i32
    return %c0_i32, %c0_i32_0 : i32, i32
  }
  func.func @transform_9(%arg0: i32) -> (i32, i32) {
    %c0_i32 = arith.constant 0 : i32
    %c0_i32_0 = arith.constant 0 : i32
    %c0_i32_1 = arith.constant 0 : i32
    return %c0_i32, %c0_i32_0 : i32, i32
  }
  func.func @transform_10(%arg0: i32) -> (i32, i32, i32) {
    %c0_i32 = arith.constant 0 : i32
    %c0_i32_0 = arith.constant 0 : i32
    %c0_i32_1 = arith.constant 0 : i32
    return %c0_i32, %c0_i32_0, %arg0 : i32, i32, i32
  }
}

</mosaic_0001>

<llo_original>
// kernel: fcfe_forward.6
$region0: #{fcfe_forward.6}
  #allocation0 [shape = 'u32[]', space=smem, size = 0x4, offset = 0x4, fixed_abs, tag = 'smem constant byte address 0x4 - core index']
  #allocation1 [shape = 'u32[144,128]{1,0:T(1,128)}', space=vmem, size = 0x12000, scoped, tag = 'internal scratch']
  %s0 = inlined_call_operand.vmem [shape: f32[2,4,256], index: 0, kind: input, shape index: {}]
  %s1 = inlined_call_operand.vmem [shape: f32[2,4,256], index: 1, kind: input, shape index: {}]
  %s2 = inlined_call_operand.vmem [shape: f32[4,4], index: 2, kind: input, shape index: {}]
  %s3 = inlined_call_operand.vmem [shape: f32[4,4], index: 3, kind: input, shape index: {}]
  %s4 = inlined_call_operand.vmem [shape: f32[4,1], index: 4, kind: input, shape index: {}]
  %s5 = inlined_call_operand.vmem [shape: f32[4,4], index: 5, kind: input, shape index: {}]
  %s6 = inlined_call_operand.vmem [shape: f32[4,1], index: 6, kind: input, shape index: {}]
  %s7 = inlined_call_operand.vmem [shape: f32[4,4], index: 7, kind: input, shape index: {}]
  %s8 = inlined_call_operand.vmem [shape: f32[4,1], index: 8, kind: input, shape index: {}]
  %s9 = inlined_call_operand.vmem [shape: f32[2,4,256], index: 9, kind: output, shape index: {0}]
  %s10 = inlined_call_operand.vmem [shape: f32[2,4,256], index: 10, kind: output, shape index: {1}]
  %s11 = inlined_call_operand.vmem [shape: f32[2,4,256], index: 11, kind: output, shape index: {2}]
  %s12 = inlined_call_operand.vmem [shape: f32[2,4,256], index: 12, kind: output, shape index: {3}]
  %13 = xla_tuple %s9, %s10, %s11, %s12
  %s14 = sld [smem:[#allocation0]]
  $region93: #{fcfe_forward.6} parent=0
    _
  %s16 = ssub.s32 1, %s14
  %s17 = scalar_select 0, %s16, %s14
  loop: start=0, step=1, limit=4
  $region2: #{fcfe_forward.6} parent=0 // loop_pre_header
    _
  $region3: #{fcfe_forward.6} parent=0 // loop_header
    %s19 = sphi 0, %s23
    %p20 = scmp.ge.s32.totalorder %s19, 4
    %s29 = sphi 0, %s31
    %s32 = sphi 0, %s29
    %s33 = sphi 0, %s32
    %s49 = sphi 0, %s33
    %s55 = sphi 0, %s57
    %s58 = sphi 0, %s55
    %s59 = sphi 0, %s58
    %s75 = sphi 0, %s59
    %s79 = sphi 0, %s79
    %s81 = sphi 0, %s79
    %s82 = sphi 0, %s81
    %s96 = sphi 0, %s82
    %s100 = sphi 0, %s100
    %s102 = sphi 0, %s100
    %s103 = sphi 0, %s102
    %s117 = sphi 0, %s103
    %s121 = sphi 0, %s121
    %s123 = sphi 0, %s121
    %s124 = sphi 0, %s123
    %s138 = sphi 0, %s124
    %s142 = sphi 0, %s142
    %s144 = sphi 0, %s142
    %s145 = sphi 0, %s144
    %s159 = sphi 0, %s145
    %s163 = sphi 0, %s163
    %s165 = sphi 0, %s163
    %s166 = sphi 0, %s165
    %s180 = sphi 0, %s166
    %s184 = sphi 0, %s184
    %s186 = sphi 0, %s184
    %s187 = sphi 0, %s186
    %s201 = sphi 0, %s187
    %s205 = sphi 0, %s205
    %s207 = sphi 0, %s205
    %s208 = sphi 0, %s207
    %s222 = sphi 0, %s208
    %s228 = sphi 0, %s230
    %s231 = sphi 0, %s228
    %s232 = sphi 0, %s231
    %s248 = sphi 0, %s232
    %s254 = sphi 0, %s256
    %s257 = sphi 0, %s254
    %s258 = sphi 0, %s257
    %s274 = sphi 0, %s258
    %s280 = sphi 0, %s282
    %s283 = sphi 0, %s280
    %s284 = sphi 0, %s283
    %s300 = sphi 0, %s284
    %s306 = sphi 0, %s308
    %s309 = sphi 0, %s306
    %s310 = sphi 0, %s309
    %s326 = sphi 0, %s310
  $region4: #{fcfe_forward.6} parent=0 // loop_header_branch
    %22 = sbr.rel (%p20) target = $region8
  $region5: #{fcfe_forward.6} parent=0 // loop_body
    %s24 = ssub.s32 %s19, 1
    %s25 = ssub.s32 %s19, 2
    %s26 = sadd.s32 %s19, 1
    %s27 = ssub.s32 %s19, %s26
    %p28 = scmp.eq.s32.totalorder %s27, 0
    %s30 = sadd.s32 %s29, 1
    %s31 = scalar_select %p28, %s29, %s30
    %p34 = pneg %p28
    %p35 = scmp.eq.s32.totalorder %s19, 1
    %p36 = por %p34, %p35
    %p37 = scmp.ne.s32.totalorder %s29, %s32
    %p38 = scmp.eq.s32.totalorder %s19, 0
    %p39 = por %p37, %p38
    %p40 = scmp.ne.s32.totalorder %s29, %s32
    %p41 = scmp.eq.s32.totalorder %s24, 1
    %p42 = por %p40, %p41
    %p43 = scmp.ne.s32.totalorder %s32, %s33
    %p44 = scmp.eq.s32.totalorder %s24, 0
    %p45 = por %p43, %p44
    %p46 = scmp.ne.s32.totalorder %s32, %s33
    %p47 = scmp.eq.s32.totalorder %s25, 1
    %p48 = por %p46, %p47
    %p50 = scmp.ne.s32.totalorder %s33, %s49
    %p51 = scmp.eq.s32.totalorder %s25, 0
    %p52 = por %p50, %p51
    %s53 = ssub.s32 %s19, %s26
    %p54 = scmp.eq.s32.totalorder %s53, 0
    %s56 = sadd.s32 %s55, 1
    %s57 = scalar_select %p54, %s55, %s56
    %p60 = pneg %p54
    %p61 = scmp.eq.s32.totalorder %s19, 1
    %p62 = por %p60, %p61
    %p63 = scmp.ne.s32.totalorder %s55, %s58
    %p64 = scmp.eq.s32.totalorder %s19, 0
    %p65 = por %p63, %p64
    %p66 = scmp.ne.s32.totalorder %s55, %s58
    %p67 = scmp.eq.s32.totalorder %s24, 1
    %p68 = por %p66, %p67
    %p69 = scmp.ne.s32.totalorder %s58, %s59
    %p70 = scmp.eq.s32.totalorder %s24, 0
    %p71 = por %p69, %p70
    %p72 = scmp.ne.s32.totalorder %s58, %s59
    %p73 = scmp.eq.s32.totalorder %s25, 1
    %p74 = por %p72, %p73
    %p76 = scmp.ne.s32.totalorder %s59, %s75
    %p77 = scmp.eq.s32.totalorder %s25, 0
    %p78 = por %p76, %p77
    %s80 = sadd.s32 %s79, 1
    %p83 = scmp.eq.s32.totalorder %s19, 1
    %p84 = scmp.ne.s32.totalorder %s79, %s81
    %p85 = scmp.eq.s32.totalorder %s19, 0
    %p86 = por %p84, %p85
    %p87 = scmp.ne.s32.totalorder %s79, %s81
    %p88 = scmp.eq.s32.totalorder %s24, 1
    %p89 = por %p87, %p88
    %p90 = scmp.ne.s32.totalorder %s81, %s82
    %p91 = scmp.eq.s32.totalorder %s24, 0
    %p92 = por %p90, %p91
    %p93 = scmp.ne.s32.totalorder %s81, %s82
    %p94 = scmp.eq.s32.totalorder %s25, 1
    %p95 = por %p93, %p94
    %p97 = scmp.ne.s32.totalorder %s82, %s96
    %p98 = scmp.eq.s32.totalorder %s25, 0
    %p99 = por %p97, %p98
    %s101 = sadd.s32 %s100, 1
    %p104 = scmp.eq.s32.totalorder %s19, 1
    %p105 = scmp.ne.s32.totalorder %s100, %s102
    %p106 = scmp.eq.s32.totalorder %s19, 0
    %p107 = por %p105, %p106
    %p108 = scmp.ne.s32.totalorder %s100, %s102
    %p109 = scmp.eq.s32.totalorder %s24, 1
    %p110 = por %p108, %p109
    %p111 = scmp.ne.s32.totalorder %s102, %s103
    %p112 = scmp.eq.s32.totalorder %s24, 0
    %p113 = por %p111, %p112
    %p114 = scmp.ne.s32.totalorder %s102, %s103
    %p115 = scmp.eq.s32.totalorder %s25, 1
    %p116 = por %p114, %p115
    %p118 = scmp.ne.s32.totalorder %s103, %s117
    %p119 = scmp.eq.s32.totalorder %s25, 0
    %p120 = por %p118, %p119
    %s122 = sadd.s32 %s121, 1
    %p125 = scmp.eq.s32.totalorder %s19, 1
    %p126 = scmp.ne.s32.totalorder %s121, %s123
    %p127 = scmp.eq.s32.totalorder %s19, 0
    %p128 = por %p126, %p127
    %p129 = scmp.ne.s32.totalorder %s121, %s123
    %p130 = scmp.eq.s32.totalorder %s24, 1
    %p131 = por %p129, %p130
    %p132 = scmp.ne.s32.totalorder %s123, %s124
    %p133 = scmp.eq.s32.totalorder %s24, 0
    %p134 = por %p132, %p133
    %p135 = scmp.ne.s32.totalorder %s123, %s124
    %p136 = scmp.eq.s32.totalorder %s25, 1
    %p137 = por %p135, %p136
    %p139 = scmp.ne.s32.totalorder %s124, %s138
    %p140 = scmp.eq.s32.totalorder %s25, 0
    %p141 = por %p139, %p140
    %s143 = sadd.s32 %s142, 1
    %p146 = scmp.eq.s32.totalorder %s19, 1
    %p147 = scmp.ne.s32.totalorder %s142, %s144
    %p148 = scmp.eq.s32.totalorder %s19, 0
    %p149 = por %p147, %p148
    %p150 = scmp.ne.s32.totalorder %s142, %s144
    %p151 = scmp.eq.s32.totalorder %s24, 1
    %p152 = por %p150, %p151
    %p153 = scmp.ne.s32.totalorder %s144, %s145
    %p154 = scmp.eq.s32.totalorder %s24, 0
    %p155 = por %p153, %p154
    %p156 = scmp.ne.s32.totalorder %s144, %s145
    %p157 = scmp.eq.s32.totalorder %s25, 1
    %p158 = por %p156, %p157
    %p160 = scmp.ne.s32.totalorder %s145, %s159
    %p161 = scmp.eq.s32.totalorder %s25, 0
    %p162 = por %p160, %p161
    %s164 = sadd.s32 %s163, 1
    %p167 = scmp.eq.s32.totalorder %s19, 1
    %p168 = scmp.ne.s32.totalorder %s163, %s165
    %p169 = scmp.eq.s32.totalorder %s19, 0
    %p170 = por %p168, %p169
    %p171 = scmp.ne.s32.totalorder %s163, %s165
    %p172 = scmp.eq.s32.totalorder %s24, 1
    %p173 = por %p171, %p172
    %p174 = scmp.ne.s32.totalorder %s165, %s166
    %p175 = scmp.eq.s32.totalorder %s24, 0
    %p176 = por %p174, %p175
    %p177 = scmp.ne.s32.totalorder %s165, %s166
    %p178 = scmp.eq.s32.totalorder %s25, 1
    %p179 = por %p177, %p178
    %p181 = scmp.ne.s32.totalorder %s166, %s180
    %p182 = scmp.eq.s32.totalorder %s25, 0
    %p183 = por %p181, %p182
    %s185 = sadd.s32 %s184, 1
    %p188 = scmp.eq.s32.totalorder %s19, 1
    %p189 = scmp.ne.s32.totalorder %s184, %s186
    %p190 = scmp.eq.s32.totalorder %s19, 0
    %p191 = por %p189, %p190
    %p192 = scmp.ne.s32.totalorder %s184, %s186
    %p193 = scmp.eq.s32.totalorder %s24, 1
    %p194 = por %p192, %p193
    %p195 = scmp.ne.s32.totalorder %s186, %s187
    %p196 = scmp.eq.s32.totalorder %s24, 0
    %p197 = por %p195, %p196
    %p198 = scmp.ne.s32.totalorder %s186, %s187
    %p199 = scmp.eq.s32.totalorder %s25, 1
    %p200 = por %p198, %p199
    %p202 = scmp.ne.s32.totalorder %s187, %s201
    %p203 = scmp.eq.s32.totalorder %s25, 0
    %p204 = por %p202, %p203
    %s206 = sadd.s32 %s205, 1
    %p209 = scmp.eq.s32.totalorder %s19, 1
    %p210 = scmp.ne.s32.totalorder %s205, %s207
    %p211 = scmp.eq.s32.totalorder %s19, 0
    %p212 = por %p210, %p211
    %p213 = scmp.ne.s32.totalorder %s205, %s207
    %p214 = scmp.eq.s32.totalorder %s24, 1
    %p215 = por %p213, %p214
    %p216 = scmp.ne.s32.totalorder %s207, %s208
    %p217 = scmp.eq.s32.totalorder %s24, 0
    %p218 = por %p216, %p217
    %p219 = scmp.ne.s32.totalorder %s207, %s208
    %p220 = scmp.eq.s32.totalorder %s25, 1
    %p221 = por %p219, %p220
    %p223 = scmp.ne.s32.totalorder %s208, %s222
    %p224 = scmp.eq.s32.totalorder %s25, 0
    %p225 = por %p223, %p224
    %s226 = ssub.s32 %s19, %s26
    %p227 = scmp.eq.s32.totalorder %s226, 0
    %s229 = sadd.s32 %s228, 1
    %s230 = scalar_select %p227, %s228, %s229
    %p233 = pneg %p227
    %p234 = scmp.eq.s32.totalorder %s19, 1
    %p235 = por %p233, %p234
    %p236 = scmp.ne.s32.totalorder %s228, %s231
    %p237 = scmp.eq.s32.totalorder %s19, 0
    %p238 = por %p236, %p237
    %p239 = scmp.ne.s32.totalorder %s228, %s231
    %p240 = scmp.eq.s32.totalorder %s24, 1
    %p241 = por %p239, %p240
    %p242 = scmp.ne.s32.totalorder %s231, %s232
    %p243 = scmp.eq.s32.totalorder %s24, 0
    %p244 = por %p242, %p243
    %p245 = scmp.ne.s32.totalorder %s231, %s232
    %p246 = scmp.eq.s32.totalorder %s25, 1
    %p247 = por %p245, %p246
    %p249 = scmp.ne.s32.totalorder %s232, %s248
    %p250 = scmp.eq.s32.totalorder %s25, 0
    %p251 = por %p249, %p250
    %s252 = ssub.s32 %s19, %s26
    %p253 = scmp.eq.s32.totalorder %s252, 0
    %s255 = sadd.s32 %s254, 1
    %s256 = scalar_select %p253, %s254, %s255
    %p259 = pneg %p253
    %p260 = scmp.eq.s32.totalorder %s19, 1
    %p261 = por %p259, %p260
    %p262 = scmp.ne.s32.totalorder %s254, %s257
    %p263 = scmp.eq.s32.totalorder %s19, 0
    %p264 = por %p262, %p263
    %p265 = scmp.ne.s32.totalorder %s254, %s257
    %p266 = scmp.eq.s32.totalorder %s24, 1
    %p267 = por %p265, %p266
    %p268 = scmp.ne.s32.totalorder %s257, %s258
    %p269 = scmp.eq.s32.totalorder %s24, 0
    %p270 = por %p268, %p269
    %p271 = scmp.ne.s32.totalorder %s257, %s258
    %p272 = scmp.eq.s32.totalorder %s25, 1
    %p273 = por %p271, %p272
    %p275 = scmp.ne.s32.totalorder %s258, %s274
    %p276 = scmp.eq.s32.totalorder %s25, 0
    %p277 = por %p275, %p276
    %s278 = ssub.s32 %s19, %s26
    %p279 = scmp.eq.s32.totalorder %s278, 0
    %s281 = sadd.s32 %s280, 1
    %s282 = scalar_select %p279, %s280, %s281
    %p285 = pneg %p279
    %p286 = scmp.eq.s32.totalorder %s19, 1
    %p287 = por %p285, %p286
    %p288 = scmp.ne.s32.totalorder %s280, %s283
    %p289 = scmp.eq.s32.totalorder %s19, 0
    %p290 = por %p288, %p289
    %p291 = scmp.ne.s32.totalorder %s280, %s283
    %p292 = scmp.eq.s32.totalorder %s24, 1
    %p293 = por %p291, %p292
    %p294 = scmp.ne.s32.totalorder %s283, %s284
    %p295 = scmp.eq.s32.totalorder %s24, 0
    %p296 = por %p294, %p295
    %p297 = scmp.ne.s32.totalorder %s283, %s284
    %p298 = scmp.eq.s32.totalorder %s25, 1
    %p299 = por %p297, %p298
    %p301 = scmp.ne.s32.totalorder %s284, %s300
    %p302 = scmp.eq.s32.totalorder %s25, 0
    %p303 = por %p301, %p302
    %s304 = ssub.s32 %s19, %s26
    %p305 = scmp.eq.s32.totalorder %s304, 0
    %s307 = sadd.s32 %s306, 1
    %s308 = scalar_select %p305, %s306, %s307
    %p311 = pneg %p305
    %p312 = scmp.eq.s32.totalorder %s19, 1
    %p313 = por %p311, %p312
    %p314 = scmp.ne.s32.totalorder %s306, %s309
    %p315 = scmp.eq.s32.totalorder %s19, 0
    %p316 = por %p314, %p315
    %p317 = scmp.ne.s32.totalorder %s306, %s309
    %p318 = scmp.eq.s32.totalorder %s24, 1
    %p319 = por %p317, %p318
    %p320 = scmp.ne.s32.totalorder %s309, %s310
    %p321 = scmp.eq.s32.totalorder %s24, 0
    %p322 = por %p320, %p321
    %p323 = scmp.ne.s32.totalorder %s309, %s310
    %p324 = scmp.eq.s32.totalorder %s25, 1
    %p325 = por %p323, %p324
    %p327 = scmp.ne.s32.totalorder %s310, %s326
    %p328 = scmp.eq.s32.totalorder %s25, 0
    %p329 = por %p327, %p328
    %p330 = scmp.le.s32.totalorder 1, %s19
    %p331 = scmp.lt.s32.totalorder %s19, 3
    %p332 = pnand %p330, %p331
    %p333 = pneg %p332
    // Predicated region
    $region9: #{fcfe_forward.6} parent=5 // pred_check
      _
    $region10: #{fcfe_forward.6} parent=5 // pred_check_branch
      %335 = sbr.rel (%p332) target = $region12
    $region11: #{fcfe_forward.6} parent=5 // pred_region
      %s336 = ssub.s32 %s19, 1
      // Predicated region
      $region13: #{fcfe_forward.6} parent=11 // pred_check
        %p337 = pneg %p92
      $region14: #{fcfe_forward.6} parent=11 // pred_check_branch
        %339 = sbr.rel (%p337) target = $region16
      $region15: #{fcfe_forward.6} parent=11 // pred_region
        _
      $region16: #{fcfe_forward.6} parent=11 // pred_fallthru
        _
      // Predicated region
      $region17: #{fcfe_forward.6} parent=11 // pred_check
        %p340 = pneg %p113
      $region18: #{fcfe_forward.6} parent=11 // pred_check_branch
        %342 = sbr.rel (%p340) target = $region20
      $region19: #{fcfe_forward.6} parent=11 // pred_region
        _
      $region20: #{fcfe_forward.6} parent=11 // pred_fallthru
        _
      // Predicated region
      $region21: #{fcfe_forward.6} parent=11 // pred_check
        %p343 = pneg %p134
      $region22: #{fcfe_forward.6} parent=11 // pred_check_branch
        %345 = sbr.rel (%p343) target = $region24
      $region23: #{fcfe_forward.6} parent=11 // pred_region
        _
      $region24: #{fcfe_forward.6} parent=11 // pred_fallthru
        _
      // Predicated region
      $region25: #{fcfe_forward.6} parent=11 // pred_check
        %p346 = pneg %p155
      $region26: #{fcfe_forward.6} parent=11 // pred_check_branch
        %348 = sbr.rel (%p346) target = $region28
      $region27: #{fcfe_forward.6} parent=11 // pred_region
        _
      $region28: #{fcfe_forward.6} parent=11 // pred_fallthru
        _
      // Predicated region
      $region29: #{fcfe_forward.6} parent=11 // pred_check
        %p349 = pneg %p176
      $region30: #{fcfe_forward.6} parent=11 // pred_check_branch
        %351 = sbr.rel (%p349) target = $region32
      $region31: #{fcfe_forward.6} parent=11 // pred_region
        _
      $region32: #{fcfe_forward.6} parent=11 // pred_fallthru
        _
      // Predicated region
      $region33: #{fcfe_forward.6} parent=11 // pred_check
        %p352 = pneg %p197
      $region34: #{fcfe_forward.6} parent=11 // pred_check_branch
        %354 = sbr.rel (%p352) target = $region36
      $region35: #{fcfe_forward.6} parent=11 // pred_region
        _
      $region36: #{fcfe_forward.6} parent=11 // pred_fallthru
        _
      // Predicated region
      $region37: #{fcfe_forward.6} parent=11 // pred_check
        %p355 = pneg %p218
      $region38: #{fcfe_forward.6} parent=11 // pred_check_branch
        %357 = sbr.rel (%p355) target = $region40
      $region39: #{fcfe_forward.6} parent=11 // pred_region
        _
      $region40: #{fcfe_forward.6} parent=11 // pred_fallthru
        _
    $region12: #{fcfe_forward.6} parent=5 // pred_fallthru
      _
    %p358 = scmp.lt.s32.totalorder %s19, 2
    // Predicated region
    $region41: #{fcfe_forward.6} parent=5 // pred_check
      %p359 = pneg %p358
    $region42: #{fcfe_forward.6} parent=5 // pred_check_branch
      %361 = sbr.rel (%p359) target = $region44
    $region43: #{fcfe_forward.6} parent=5 // pred_region
      // Predicated region
      $region45: #{fcfe_forward.6} parent=43 // pred_check
        %p362 = pneg %p39
      $region46: #{fcfe_forward.6} parent=43 // pred_check_branch
        %364 = sbr.rel (%p362) target = $region48
      $region47: #{fcfe_forward.6} parent=43 // pred_region
        %p365 = scmp.lt.s32.totalorder %s19, 1
        %s366 = scalar_select %p365, %s19, 1
        %s367 = smul.addr %s366, 2
        %s368 = smul.addr %s367, 4
        %s369 = scalar_lea.vmem %s0, %s368
      $region48: #{fcfe_forward.6} parent=43 // pred_fallthru
        _
      // Predicated region
      $region49: #{fcfe_forward.6} parent=43 // pred_check
        %p370 = pneg %p65
      $region50: #{fcfe_forward.6} parent=43 // pred_check_branch
        %372 = sbr.rel (%p370) target = $region52
      $region51: #{fcfe_forward.6} parent=43 // pred_region
        %p373 = scmp.lt.s32.totalorder %s19, 1
        %s374 = scalar_select %p373, %s19, 1
        %s375 = smul.addr %s374, 2
        %s376 = smul.addr %s375, 4
        %s377 = scalar_lea.vmem %s1, %s376
      $region52: #{fcfe_forward.6} parent=43 // pred_fallthru
        _
    $region44: #{fcfe_forward.6} parent=5 // pred_fallthru
      _
    %p378 = scmp.le.s32.totalorder 1, %s19
    %p379 = scmp.lt.s32.totalorder %s19, 3
    %p380 = pnand %p378, %p379
    %p381 = pneg %p380
    // Predicated region
    $region53: #{fcfe_forward.6} parent=5 // pred_check
      _
    $region54: #{fcfe_forward.6} parent=5 // pred_check_branch
      %383 = sbr.rel (%p380) target = $region56
    $region55: #{fcfe_forward.6} parent=5 // pred_region
      %s384 = ssub.s32 %s19, 1
      %p385 = scmp.lt.s32.totalorder %s24, 1
      %s386 = scalar_select %p385, %s24, 1
      %s387 = smul.addr %s386, 2
      %s388 = smul.addr %s387, 4
      %s389 = scalar_lea.vmem %s0, %s388
      %p390 = pneg %p45
      %p391 = pneg %p42
      %p392 = scmp.lt.s32.totalorder %s24, 1
      %s393 = scalar_select %p392, %s24, 1
      %s394 = smul.addr %s393, 2
      %s395 = smul.addr %s394, 4
      %s396 = scalar_lea.vmem %s1, %s395
      %p397 = pneg %p71
      %p398 = pneg %p68
      %p399 = pneg %p92
      %p400 = pneg %p89
      %p401 = pneg %p113
      %p402 = pneg %p110
      %p403 = pneg %p134
      %p404 = pneg %p131
      %p405 = pneg %p155
      %p406 = pneg %p152
      %p407 = pneg %p176
      %p408 = pneg %p173
      %p409 = pneg %p197
      %p410 = pneg %p194
      %p411 = pneg %p218
      %p412 = pneg %p215
      %p413 = pneg %p244
      %p414 = pneg %p241
      %p415 = scmp.lt.s32.totalorder %s24, 1
      %s416 = scalar_select %p415, %s24, 1
      %s417 = smul.addr %s416, 2
      %s418 = smul.addr %s417, 4
      %s419 = scalar_lea.vmem %s9, %s418
      %p420 = pneg %p270
      %p421 = pneg %p267
      %p422 = scmp.lt.s32.totalorder %s24, 1
      %s423 = scalar_select %p422, %s24, 1
      %s424 = smul.addr %s423, 2
      %s425 = smul.addr %s424, 4
      %s426 = scalar_lea.vmem %s10, %s425
      %p427 = pneg %p296
      %p428 = pneg %p293
      %p429 = scmp.lt.s32.totalorder %s24, 1
      %s430 = scalar_select %p429, %s24, 1
      %s431 = smul.addr %s430, 2
      %s432 = smul.addr %s431, 4
      %s433 = scalar_lea.vmem %s11, %s432
      %p434 = pneg %p322
      %p435 = pneg %p319
      %p436 = scmp.lt.s32.totalorder %s24, 1
      %s437 = scalar_select %p436, %s24, 1
      %s438 = smul.addr %s437, 2
      %s439 = smul.addr %s438, 4
      %s440 = scalar_lea.vmem %s12, %s439
      %p441 = scmp.lt.s32.totalorder %s24, 1
      %s442 = scalar_select %p441, %s24, 1
      %s443 = smul.addr %s442, 2
      %s444 = smul.addr %s443, 4
      %s445 = scalar_lea.vmem %s0, %s444
      %p446 = scmp.lt.s32.totalorder %s24, 1
      %s447 = scalar_select %p446, %s24, 1
      %s448 = smul.addr %s447, 2
      %s449 = smul.addr %s448, 4
      %s450 = scalar_lea.vmem %s1, %s449
      %p451 = scmp.lt.s32.totalorder %s24, 1
      %s452 = scalar_select %p451, %s24, 1
      %s453 = smul.addr %s452, 2
      %s454 = smul.addr %s453, 4
      %s455 = scalar_lea.vmem %s9, %s454
      %p456 = scmp.lt.s32.totalorder %s24, 1
      %s457 = scalar_select %p456, %s24, 1
      %s458 = smul.addr %s457, 2
      %s459 = smul.addr %s458, 4
      %s460 = scalar_lea.vmem %s10, %s459
      %p461 = scmp.lt.s32.totalorder %s24, 1
      %s462 = scalar_select %p461, %s24, 1
      %s463 = smul.addr %s462, 2
      %s464 = smul.addr %s463, 4
      %s465 = scalar_lea.vmem %s11, %s464
      %p466 = scmp.lt.s32.totalorder %s24, 1
      %s467 = scalar_select %p466, %s24, 1
      %s468 = smul.addr %s467, 2
      %s469 = smul.addr %s468, 4
      %s470 = scalar_lea.vmem %s12, %s469
      %v471 = vld [vmem:[%s445] sm:$0xff]
      %v473 = vcombine.high %v471, %v471
      %vm475 = vcmask 1043456
      %v476 = vsel %vm475, %v471, 0.0
      %v477 = vsel %vm475, %v473, 0.0
      %v478 = vadd.f32 %v476, %v477
      %479 = vadd.xlane.f32.xlu0 %v478
      %v480 = vpop.xlane.xlu0 %479
      %v481 = vrcp.pop 256.0
      %v482 = vmul.f32 %v480, %v481
      %v483 = vsel %vm475, %v482, 0.0
      %v484 = vrot.slane %v483, 4
      %v485 = vadd.f32 %v483, %v484
      %v486 = vrot.slane %v485, 2
      %v487 = vadd.f32 %v485, %v486
      %v488 = vrot.slane %v487, 1
      %v489 = vadd.f32 %v487, %v488
      %v490 = vrcp.pop 4.0
      %v491 = vmul.f32 %v489, %v490
      %v492 = vsub.f32 %v471, %v491
      %v493 = vmul.f32 %v492, %v492
      %v495 = vcombine.high %v493, %v493
      %v497 = vsel %vm475, %v493, 0.0
      %v498 = vsel %vm475, %v495, 0.0
      %v499 = vadd.f32 %v497, %v498
      %500 = vadd.xlane.f32.xlu0 %v499
      %v501 = vpop.xlane.xlu0 %500
      %v502 = vmul.f32 %v501, %v481
      %v503 = vsel %vm475, %v502, 0.0
      %v504 = vrot.slane %v503, 4
      %v505 = vadd.f32 %v503, %v504
      %v506 = vrot.slane %v505, 2
      %v507 = vadd.f32 %v505, %v506
      %v508 = vrot.slane %v507, 1
      %v509 = vadd.f32 %v507, %v508
      %v510 = vmul.f32 %v509, %v490
      %v511 = vadd.f32 %v510, 1e-05
      %v512 = vrsqrt.pop %v511
      %v513 = vmul.f32 %v492, %v512
      %v514 = vld [vmem:[%s450] sm:$0xff]
      %v516 = vcombine.high %v514, %v514
      %v518 = vsel %vm475, %v514, 0.0
      %v519 = vsel %vm475, %v516, 0.0
      %v520 = vadd.f32 %v518, %v519
      %521 = vadd.xlane.f32.xlu0 %v520
      %v522 = vpop.xlane.xlu0 %521
      %v523 = vmul.f32 %v522, %v481
      %v524 = vsel %vm475, %v523, 0.0
      %v525 = vrot.slane %v524, 4
      %v526 = vadd.f32 %v524, %v525
      %v527 = vrot.slane %v526, 2
      %v528 = vadd.f32 %v526, %v527
      %v529 = vrot.slane %v528, 1
      %v530 = vadd.f32 %v528, %v529
      %v531 = vmul.f32 %v530, %v490
      %v532 = vsub.f32 %v514, %v531
      %v533 = vmul.f32 %v532, %v532
      %v535 = vcombine.high %v533, %v533
      %v537 = vsel %vm475, %v533, 0.0
      %v538 = vsel %vm475, %v535, 0.0
      %v539 = vadd.f32 %v537, %v538
      %540 = vadd.xlane.f32.xlu0 %v539
      %v541 = vpop.xlane.xlu0 %540
      %v542 = vmul.f32 %v541, %v481
      %v543 = vsel %vm475, %v542, 0.0
      %v544 = vrot.slane %v543, 4
      %v545 = vadd.f32 %v543, %v544
      %v546 = vrot.slane %v545, 2
      %v547 = vadd.f32 %v545, %v546
      %v548 = vrot.slane %v547, 1
      %v549 = vadd.f32 %v547, %v548
      %v550 = vmul.f32 %v549, %v490
      %v551 = vadd.f32 %v550, 1e-05
      %v552 = vrsqrt.pop %v551
      %v553 = vmul.f32 %v532, %v552
      %554 = vst [vmem:[%s455] sm:$0xff] %v553
      %v555 = vld [vmem:[%s2] sm:$0xf]
      %v556 = vld [vmem:[%s3] sm:$0xf]
      %v558 = vcombine.high %v553, %v553
      %vm559 = vcmask 31744
      %v561 = vsel %vm559, %v556, 0
      %v563 = vsel %vm475, %v553, 0
      %v565 = vsel %vm475, %v558, 0
      %567 = vmatprep.subr.mxu0 %v565
      %568 = vmatpush1.msra.mxu0 %v563
      %569 = vmatprep.subr.mxu0 0.0
      %570 = vmatpush1.msra.mxu0 0.0
      %571 = vmatprep.subr.mxu0 0.0
      %572 = vmatpush1.msra.mxu0 0.0
      %573 = vmatprep.subr.mxu0 0.0
      %574 = vmatpush1.msra.mxu0 0.0
      %575 = vmatprep.subr.mxu0 0.0
      %576 = vmatpush1.msra.mxu0 0.0
      %577 = vmatprep.subr.mxu0 0.0
      %578 = vmatpush1.msra.mxu0 0.0
      %579 = vmatprep.subr.mxu0 0.0
      %580 = vmatpush1.msra.mxu0 0.0
      %581 = vmatprep.subr.mxu0 0.0
      %582 = vmatpush1.msra.mxu0 0.0
      %583 = vmatprep.subr.mxu0 0.0
      %584 = vmatpush1.msra.mxu0 0.0
      %585 = vmatprep.subr.mxu0 0.0
      %586 = vmatpush1.msra.mxu0 0.0
      %587 = vmatprep.subr.mxu0 0.0
      %588 = vmatpush1.msra.mxu0 0.0
      %589 = vmatprep.subr.mxu0 0.0
      %590 = vmatpush1.msra.mxu0 0.0
      %591 = vmatprep.subr.mxu0 0.0
      %592 = vmatpush1.msra.mxu0 0.0
      %593 = vmatprep.subr.mxu0 0.0
      %594 = vmatpush1.msra.mxu0 0.0
      %595 = vmatprep.subr.mxu0 0.0
      %596 = vmatpush1.msra.mxu0 0.0
      %597 = vmatprep.subr.mxu0 0.0
      %598 = vmatpush1.msra.mxu0 0.0
      %599 = vmatprep.subr.mxu0 0.0
      %600 = vmatpush1.msra.mxu0 0.0
      %601 = vmatprep.subr.mxu0 0.0
      %602 = vmatpush1.msra.mxu0 0.0
      %603 = vmatprep.subr.mxu0 0.0
      %604 = vmatpush1.msra.mxu0 0.0
      %605 = vmatprep.subr.mxu0 0.0
      %606 = vmatpush1.msra.mxu0 0.0
      %607 = vmatprep.subr.mxu0 0.0
      %608 = vmatpush1.msra.mxu0 0.0
      %609 = vmatprep.subr.mxu0 0.0
      %610 = vmatpush1.msra.mxu0 0.0
      %611 = vmatprep.subr.mxu0 0.0
      %612 = vmatpush1.msra.mxu0 0.0
      %613 = vmatprep.subr.mxu0 0.0
      %614 = vmatpush1.msra.mxu0 0.0
      %615 = vmatprep.subr.mxu0 0.0
      %616 = vmatpush1.msra.mxu0 0.0
      %617 = vmatprep.subr.mxu0 0.0
      %618 = vmatpush1.msra.mxu0 0.0
      %619 = vmatprep.subr.mxu0 0.0
      %620 = vmatpush1.msra.mxu0 0.0
      %621 = vmatprep.subr.mxu0 0.0
      %622 = vmatpush1.msra.mxu0 0.0
      %623 = vmatprep.subr.mxu0 0.0
      %624 = vmatpush1.msra.mxu0 0.0
      %625 = vmatprep.subr.mxu0 0.0
      %626 = vmatpush1.msra.mxu0 0.0
      %627 = vmatprep.subr.mxu0 0.0
      %628 = vmatpush1.msra.mxu0 0.0
      %629 = vmatprep.subr.mxu0 0.0
      %630 = vmatpush1.msra.mxu0 0.0
      %631 = vmatprep.mubr.f32.mxu0 0.0
      %632 = vmatmul.mubr.f32.gmra.mrb[0].mxu0 %v561
      %v633 = vpop.f32.mrb[0].mxu0
      %v634 = vadd.f32 0.0, %v633
      %v635 = vpop.f32.mrb[0].mxu0
      %v636 = vadd.f32 0.0, %v635
      %637 = vdwg.mxu0
      %v639 = vcombine.high %v513, %v513
      %v641 = vsel %vm559, %v555, 0
      %v643 = vsel %vm475, %v513, 0
      %v645 = vsel %vm475, %v639, 0
      %647 = vmatprep.subr.mxu0 %v645
      %648 = vmatpush1.msra.mxu0 %v643
      %649 = vmatprep.subr.mxu0 0.0
      %650 = vmatpush1.msra.mxu0 0.0
      %651 = vmatprep.subr.mxu0 0.0
      %652 = vmatpush1.msra.mxu0 0.0
      %653 = vmatprep.subr.mxu0 0.0
      %654 = vmatpush1.msra.mxu0 0.0
      %655 = vmatprep.subr.mxu0 0.0
      %656 = vmatpush1.msra.mxu0 0.0
      %657 = vmatprep.subr.mxu0 0.0
      %658 = vmatpush1.msra.mxu0 0.0
      %659 = vmatprep.subr.mxu0 0.0
      %660 = vmatpush1.msra.mxu0 0.0
      %661 = vmatprep.subr.mxu0 0.0
      %662 = vmatpush1.msra.mxu0 0.0
      %663 = vmatprep.subr.mxu0 0.0
      %664 = vmatpush1.msra.mxu0 0.0
      %665 = vmatprep.subr.mxu0 0.0
      %666 = vmatpush1.msra.mxu0 0.0
      %667 = vmatprep.subr.mxu0 0.0
      %668 = vmatpush1.msra.mxu0 0.0
      %669 = vmatprep.subr.mxu0 0.0
      %670 = vmatpush1.msra.mxu0 0.0
      %671 = vmatprep.subr.mxu0 0.0
      %672 = vmatpush1.msra.mxu0 0.0
      %673 = vmatprep.subr.mxu0 0.0
      %674 = vmatpush1.msra.mxu0 0.0
      %675 = vmatprep.subr.mxu0 0.0
      %676 = vmatpush1.msra.mxu0 0.0
      %677 = vmatprep.subr.mxu0 0.0
      %678 = vmatpush1.msra.mxu0 0.0
      %679 = vmatprep.subr.mxu0 0.0
      %680 = vmatpush1.msra.mxu0 0.0
      %681 = vmatprep.subr.mxu0 0.0
      %682 = vmatpush1.msra.mxu0 0.0
      %683 = vmatprep.subr.mxu0 0.0
      %684 = vmatpush1.msra.mxu0 0.0
      %685 = vmatprep.subr.mxu0 0.0
      %686 = vmatpush1.msra.mxu0 0.0
      %687 = vmatprep.subr.mxu0 0.0
      %688 = vmatpush1.msra.mxu0 0.0
      %689 = vmatprep.subr.mxu0 0.0
      %690 = vmatpush1.msra.mxu0 0.0
      %691 = vmatprep.subr.mxu0 0.0
      %692 = vmatpush1.msra.mxu0 0.0
      %693 = vmatprep.subr.mxu0 0.0
      %694 = vmatpush1.msra.mxu0 0.0
      %695 = vmatprep.subr.mxu0 0.0
      %696 = vmatpush1.msra.mxu0 0.0
      %697 = vmatprep.subr.mxu0 0.0
      %698 = vmatpush1.msra.mxu0 0.0
      %699 = vmatprep.subr.mxu0 0.0
      %700 = vmatpush1.msra.mxu0 0.0
      %701 = vmatprep.subr.mxu0 0.0
      %702 = vmatpush1.msra.mxu0 0.0
      %703 = vmatprep.subr.mxu0 0.0
      %704 = vmatpush1.msra.mxu0 0.0
      %705 = vmatprep.subr.mxu0 0.0
      %706 = vmatpush1.msra.mxu0 0.0
      %707 = vmatprep.subr.mxu0 0.0
      %708 = vmatpush1.msra.mxu0 0.0
      %709 = vmatprep.subr.mxu0 0.0
      %710 = vmatpush1.msra.mxu0 0.0
      %711 = vmatprep.mubr.f32.mxu0 0.0
      %712 = vmatmul.mubr.f32.gmra.mrb[0].mxu0 %v641
      %v713 = vpop.f32.mrb[0].mxu0
      %v714 = vadd.f32 %v634, %v713
      %v715 = vpop.f32.mrb[0].mxu0
      %v716 = vadd.f32 %v636, %v715
      %717 = vdwg.mxu0
      %v718 = vld [vmem:[%s4] sm:$0xf]
      %720 = vset.pattern.permute.xlu0 0
      %721 = vperm.xlu0 %720, %v718
      %v722 = vpop.permute.xlu0 %721
      %v724 = vadd.f32 %v714, %v722
      %v725 = vadd.f32 %v716, %v722
      %v728 = vcombine.low %v724, %v725
      %730 = vst [vmem:[%s460] sm:$0xff] %v728
      %v731 = vld [vmem:[%s5] sm:$0xf]
      %v732 = vld [vmem:[%s6] sm:$0xf]
      %734 = vset.pattern.permute.xlu0 0
      %735 = vperm.xlu0 %734, %v732
      %v736 = vpop.permute.xlu0 %735
      %v739 = vsel %vm559, %v731, 0
      %741 = vmatprep.subr.mxu0 %v565
      %742 = vmatpush1.msra.mxu0 %v563
      %743 = vmatprep.subr.mxu0 0.0
      %744 = vmatpush1.msra.mxu0 0.0
      %745 = vmatprep.subr.mxu0 0.0
      %746 = vmatpush1.msra.mxu0 0.0
      %747 = vmatprep.subr.mxu0 0.0
      %748 = vmatpush1.msra.mxu0 0.0
      %749 = vmatprep.subr.mxu0 0.0
      %750 = vmatpush1.msra.mxu0 0.0
      %751 = vmatprep.subr.mxu0 0.0
      %752 = vmatpush1.msra.mxu0 0.0
      %753 = vmatprep.subr.mxu0 0.0
      %754 = vmatpush1.msra.mxu0 0.0
      %755 = vmatprep.subr.mxu0 0.0
      %756 = vmatpush1.msra.mxu0 0.0
      %757 = vmatprep.subr.mxu0 0.0
      %758 = vmatpush1.msra.mxu0 0.0
      %759 = vmatprep.subr.mxu0 0.0
      %760 = vmatpush1.msra.mxu0 0.0
      %761 = vmatprep.subr.mxu0 0.0
      %762 = vmatpush1.msra.mxu0 0.0
      %763 = vmatprep.subr.mxu0 0.0
      %764 = vmatpush1.msra.mxu0 0.0
      %765 = vmatprep.subr.mxu0 0.0
      %766 = vmatpush1.msra.mxu0 0.0
      %767 = vmatprep.subr.mxu0 0.0
      %768 = vmatpush1.msra.mxu0 0.0
      %769 = vmatprep.subr.mxu0 0.0
      %770 = vmatpush1.msra.mxu0 0.0
      %771 = vmatprep.subr.mxu0 0.0
      %772 = vmatpush1.msra.mxu0 0.0
      %773 = vmatprep.subr.mxu0 0.0
      %774 = vmatpush1.msra.mxu0 0.0
      %775 = vmatprep.subr.mxu0 0.0
      %776 = vmatpush1.msra.mxu0 0.0
      %777 = vmatprep.subr.mxu0 0.0
      %778 = vmatpush1.msra.mxu0 0.0
      %779 = vmatprep.subr.mxu0 0.0
      %780 = vmatpush1.msra.mxu0 0.0
      %781 = vmatprep.subr.mxu0 0.0
      %782 = vmatpush1.msra.mxu0 0.0
      %783 = vmatprep.subr.mxu0 0.0
      %784 = vmatpush1.msra.mxu0 0.0
      %785 = vmatprep.subr.mxu0 0.0
      %786 = vmatpush1.msra.mxu0 0.0
      %787 = vmatprep.subr.mxu0 0.0
      %788 = vmatpush1.msra.mxu0 0.0
      %789 = vmatprep.subr.mxu0 0.0
      %790 = vmatpush1.msra.mxu0 0.0
      %791 = vmatprep.subr.mxu0 0.0
      %792 = vmatpush1.msra.mxu0 0.0
      %793 = vmatprep.subr.mxu0 0.0
      %794 = vmatpush1.msra.mxu0 0.0
      %795 = vmatprep.subr.mxu0 0.0
      %796 = vmatpush1.msra.mxu0 0.0
      %797 = vmatprep.subr.mxu0 0.0
      %798 = vmatpush1.msra.mxu0 0.0
      %799 = vmatprep.subr.mxu0 0.0
      %800 = vmatpush1.msra.mxu0 0.0
      %801 = vmatprep.subr.mxu0 0.0
      %802 = vmatpush1.msra.mxu0 0.0
      %803 = vmatprep.subr.mxu0 0.0
      %804 = vmatpush1.msra.mxu0 0.0
      %805 = vmatprep.mubr.f32.mxu0 0.0
      %806 = vmatmul.mubr.f32.gmra.mrb[0].mxu0 %v739
      %v807 = vpop.f32.mrb[0].mxu0
      %v808 = vadd.f32 %v736, %v807
      %v809 = vpop.f32.mrb[0].mxu0
      %v810 = vadd.f32 %v736, %v809
      %811 = vdwg.mxu0
      %v814 = vcombine.low %v808, %v810
      %816 = vst [vmem:[%s465] sm:$0xff] %v814
      %v817 = vld [vmem:[%s7] sm:$0xf]
      %v818 = vld [vmem:[%s8] sm:$0xf]
      %820 = vset.pattern.permute.xlu0 0
      %821 = vperm.xlu0 %820, %v818
      %v822 = vpop.permute.xlu0 %821
      %v825 = vsel %vm559, %v817, 0
      %827 = vmatprep.subr.mxu0 %v645
      %828 = vmatpush1.msra.mxu0 %v643
      %829 = vmatprep.subr.mxu0 0.0
      %830 = vmatpush1.msra.mxu0 0.0
      %831 = vmatprep.subr.mxu0 0.0
      %832 = vmatpush1.msra.mxu0 0.0
      %833 = vmatprep.subr.mxu0 0.0
      %834 = vmatpush1.msra.mxu0 0.0
      %835 = vmatprep.subr.mxu0 0.0
      %836 = vmatpush1.msra.mxu0 0.0
      %837 = vmatprep.subr.mxu0 0.0
      %838 = vmatpush1.msra.mxu0 0.0
      %839 = vmatprep.subr.mxu0 0.0
      %840 = vmatpush1.msra.mxu0 0.0
      %841 = vmatprep.subr.mxu0 0.0
      %842 = vmatpush1.msra.mxu0 0.0
      %843 = vmatprep.subr.mxu0 0.0
      %844 = vmatpush1.msra.mxu0 0.0
      %845 = vmatprep.subr.mxu0 0.0
      %846 = vmatpush1.msra.mxu0 0.0
      %847 = vmatprep.subr.mxu0 0.0
      %848 = vmatpush1.msra.mxu0 0.0
      %849 = vmatprep.subr.mxu0 0.0
      %850 = vmatpush1.msra.mxu0 0.0
      %851 = vmatprep.subr.mxu0 0.0
      %852 = vmatpush1.msra.mxu0 0.0
      %853 = vmatprep.subr.mxu0 0.0
      %854 = vmatpush1.msra.mxu0 0.0
      %855 = vmatprep.subr.mxu0 0.0
      %856 = vmatpush1.msra.mxu0 0.0
      %857 = vmatprep.subr.mxu0 0.0
      %858 = vmatpush1.msra.mxu0 0.0
      %859 = vmatprep.subr.mxu0 0.0
      %860 = vmatpush1.msra.mxu0 0.0
      %861 = vmatprep.subr.mxu0 0.0
      %862 = vmatpush1.msra.mxu0 0.0
      %863 = vmatprep.subr.mxu0 0.0
      %864 = vmatpush1.msra.mxu0 0.0
      %865 = vmatprep.subr.mxu0 0.0
      %866 = vmatpush1.msra.mxu0 0.0
      %867 = vmatprep.subr.mxu0 0.0
      %868 = vmatpush1.msra.mxu0 0.0
      %869 = vmatprep.subr.mxu0 0.0
      %870 = vmatpush1.msra.mxu0 0.0
      %871 = vmatprep.subr.mxu0 0.0
      %872 = vmatpush1.msra.mxu0 0.0
      %873 = vmatprep.subr.mxu0 0.0
      %874 = vmatpush1.msra.mxu0 0.0
      %875 = vmatprep.subr.mxu0 0.0
      %876 = vmatpush1.msra.mxu0 0.0
      %877 = vmatprep.subr.mxu0 0.0
      %878 = vmatpush1.msra.mxu0 0.0
      %879 = vmatprep.subr.mxu0 0.0
      %880 = vmatpush1.msra.mxu0 0.0
      %881 = vmatprep.subr.mxu0 0.0
      %882 = vmatpush1.msra.mxu0 0.0
      %883 = vmatprep.subr.mxu0 0.0
      %884 = vmatpush1.msra.mxu0 0.0
      %885 = vmatprep.subr.mxu0 0.0
      %886 = vmatpush1.msra.mxu0 0.0
      %887 = vmatprep.subr.mxu0 0.0
      %888 = vmatpush1.msra.mxu0 0.0
      %889 = vmatprep.subr.mxu0 0.0
      %890 = vmatpush1.msra.mxu0 0.0
      %891 = vmatprep.mubr.f32.mxu0 0.0
      %892 = vmatmul.mubr.f32.gmra.mrb[0].mxu0 %v825
      %v893 = vpop.f32.mrb[0].mxu0
      %v894 = vadd.f32 %v822, %v893
      %v895 = vpop.f32.mrb[0].mxu0
      %v896 = vadd.f32 %v822, %v895
      %897 = vdwg.mxu0
      %v900 = vcombine.low %v894, %v896
      %902 = vst [vmem:[%s470] sm:$0xff] %v900
      %p903 = scmp.lt.s32.totalorder %s24, 1
      %s904 = scalar_select %p903, %s24, 1
      %s905 = smul.addr %s904, 2
      %s906 = smul.addr %s905, 4
      %s907 = scalar_lea.vmem %s9, %s906
      %p908 = scmp.lt.s32.totalorder %s24, 1
      %s909 = scalar_select %p908, %s24, 1
      %s910 = smul.addr %s909, 2
      %s911 = smul.addr %s910, 4
      %s912 = scalar_lea.vmem %s10, %s911
      %p913 = scmp.lt.s32.totalorder %s24, 1
      %s914 = scalar_select %p913, %s24, 1
      %s915 = smul.addr %s914, 2
      %s916 = smul.addr %s915, 4
      %s917 = scalar_lea.vmem %s11, %s916
      %p918 = scmp.lt.s32.totalorder %s24, 1
      %s919 = scalar_select %p918, %s24, 1
      %s920 = smul.addr %s919, 2
      %s921 = smul.addr %s920, 4
      %s922 = scalar_lea.vmem %s12, %s921
      // Predicated region
      $region57: #{fcfe_forward.6} parent=55 // pred_check
        %p923 = pneg %p241
      $region58: #{fcfe_forward.6} parent=55 // pred_check_branch
        %925 = sbr.rel (%p923) target = $region60
      $region59: #{fcfe_forward.6} parent=55 // pred_region
        _
      $region60: #{fcfe_forward.6} parent=55 // pred_fallthru
        _
      // Predicated region
      $region61: #{fcfe_forward.6} parent=55 // pred_check
        %p926 = pneg %p267
      $region62: #{fcfe_forward.6} parent=55 // pred_check_branch
        %928 = sbr.rel (%p926) target = $region64
      $region63: #{fcfe_forward.6} parent=55 // pred_region
        _
      $region64: #{fcfe_forward.6} parent=55 // pred_fallthru
        _
      // Predicated region
      $region65: #{fcfe_forward.6} parent=55 // pred_check
        %p929 = pneg %p293
      $region66: #{fcfe_forward.6} parent=55 // pred_check_branch
        %931 = sbr.rel (%p929) target = $region68
      $region67: #{fcfe_forward.6} parent=55 // pred_region
        _
      $region68: #{fcfe_forward.6} parent=55 // pred_fallthru
        _
      // Predicated region
      $region69: #{fcfe_forward.6} parent=55 // pred_check
        %p932 = pneg %p319
      $region70: #{fcfe_forward.6} parent=55 // pred_check_branch
        %934 = sbr.rel (%p932) target = $region72
      $region71: #{fcfe_forward.6} parent=55 // pred_region
        _
      $region72: #{fcfe_forward.6} parent=55 // pred_fallthru
        _
    $region56: #{fcfe_forward.6} parent=5 // pred_fallthru
      _
    %p935 = scmp.le.s32.totalorder 2, %s19
    // Predicated region
    $region73: #{fcfe_forward.6} parent=5 // pred_check
      %p936 = pneg %p935
    $region74: #{fcfe_forward.6} parent=5 // pred_check_branch
      %938 = sbr.rel (%p936) target = $region76
    $region75: #{fcfe_forward.6} parent=5 // pred_region
      %s939 = ssub.s32 %s19, 2
      // Predicated region
      $region77: #{fcfe_forward.6} parent=75 // pred_check
        %p940 = pneg %p247
      $region78: #{fcfe_forward.6} parent=75 // pred_check_branch
        %942 = sbr.rel (%p940) target = $region80
      $region79: #{fcfe_forward.6} parent=75 // pred_region
        %p943 = scmp.lt.s32.totalorder %s25, 1
        %s944 = scalar_select %p943, %s25, 1
        %s945 = smul.addr %s944, 2
        %s946 = smul.addr %s945, 4
        %s947 = scalar_lea.vmem %s9, %s946
      $region80: #{fcfe_forward.6} parent=75 // pred_fallthru
        _
      // Predicated region
      $region81: #{fcfe_forward.6} parent=75 // pred_check
        %p948 = pneg %p273
      $region82: #{fcfe_forward.6} parent=75 // pred_check_branch
        %950 = sbr.rel (%p948) target = $region84
      $region83: #{fcfe_forward.6} parent=75 // pred_region
        %p951 = scmp.lt.s32.totalorder %s25, 1
        %s952 = scalar_select %p951, %s25, 1
        %s953 = smul.addr %s952, 2
        %s954 = smul.addr %s953, 4
        %s955 = scalar_lea.vmem %s10, %s954
      $region84: #{fcfe_forward.6} parent=75 // pred_fallthru
        _
      // Predicated region
      $region85: #{fcfe_forward.6} parent=75 // pred_check
        %p956 = pneg %p299
      $region86: #{fcfe_forward.6} parent=75 // pred_check_branch
        %958 = sbr.rel (%p956) target = $region88
      $region87: #{fcfe_forward.6} parent=75 // pred_region
        %p959 = scmp.lt.s32.totalorder %s25, 1
        %s960 = scalar_select %p959, %s25, 1
        %s961 = smul.addr %s960, 2
        %s962 = smul.addr %s961, 4
        %s963 = scalar_lea.vmem %s11, %s962
      $region88: #{fcfe_forward.6} parent=75 // pred_fallthru
        _
      // Predicated region
      $region89: #{fcfe_forward.6} parent=75 // pred_check
        %p964 = pneg %p325
      $region90: #{fcfe_forward.6} parent=75 // pred_check_branch
        %966 = sbr.rel (%p964) target = $region92
      $region91: #{fcfe_forward.6} parent=75 // pred_region
        %p967 = scmp.lt.s32.totalorder %s25, 1
        %s968 = scalar_select %p967, %s25, 1
        %s969 = smul.addr %s968, 2
        %s970 = smul.addr %s969, 4
        %s971 = scalar_lea.vmem %s12, %s970
      $region92: #{fcfe_forward.6} parent=75 // pred_fallthru
        _
    $region76: #{fcfe_forward.6} parent=5 // pred_fallthru
      _
  $region6: #{fcfe_forward.6} parent=0 // loop_footer
    %s23 = sadd.s32 1, %s19
  $region7: #{fcfe_forward.6} parent=0 // loop_footer_branch
    %18 = sbr.rel target = $region3
  $region8: #{fcfe_forward.6} parent=0 // loop_exit
    _

// kernel: fcfe_forward.7
$region0: #{fcfe_forward.7}
  #allocation0 [shape = 'u32[]', space=smem, size = 0x4, offset = 0x4, fixed_abs, tag = 'smem constant byte address 0x4 - core index']
  #allocation1 [shape = 'u32[144,128]{1,0:T(1,128)}', space=vmem, size = 0x12000, scoped, tag = 'internal scratch']
  %s0 = inlined_call_operand.vmem [shape: f32[2,4,16,16], index: 0, kind: input, shape index: {}]
  %s1 = inlined_call_operand.vmem [shape: f32[2,4,16,16], index: 1, kind: input, shape index: {}]
  %s2 = inlined_call_operand.vmem [shape: f32[9,4,1,1], index: 2, kind: input, shape index: {}]
  %s3 = inlined_call_operand.vmem [shape: f32[4,1,1], index: 3, kind: input, shape index: {}]
  %s4 = inlined_call_operand.vmem [shape: f32[9,4,1,1], index: 4, kind: input, shape index: {}]
  %s5 = inlined_call_operand.vmem [shape: f32[4,1,1], index: 5, kind: input, shape index: {}]
  %s6 = inlined_call_operand.vmem [shape: f32[2,4,16,16], index: 6, kind: output, shape index: {0}]
  %s7 = inlined_call_operand.vmem [shape: f32[2,4,16,16], index: 7, kind: output, shape index: {1}]
  %8 = xla_tuple %s6, %s7
  %s9 = sld [smem:[#allocation0]]
  $region65: #{fcfe_forward.7} parent=0
    _
  %s11 = ssub.s32 1, %s9
  %s12 = scalar_select 0, %s11, %s9
  loop: start=0, step=1, limit=4
  $region2: #{fcfe_forward.7} parent=0 // loop_pre_header
    _
  $region3: #{fcfe_forward.7} parent=0 // loop_header
    %s14 = sphi 0, %s18
    %p15 = scmp.ge.s32.totalorder %s14, 4
    %s24 = sphi 0, %s26
    %s27 = sphi 0, %s24
    %s28 = sphi 0, %s27
    %s44 = sphi 0, %s28
    %s50 = sphi 0, %s52
    %s53 = sphi 0, %s50
    %s54 = sphi 0, %s53
    %s70 = sphi 0, %s54
    %s74 = sphi 0, %s74
    %s76 = sphi 0, %s74
    %s77 = sphi 0, %s76
    %s91 = sphi 0, %s77
    %s95 = sphi 0, %s95
    %s97 = sphi 0, %s95
    %s98 = sphi 0, %s97
    %s112 = sphi 0, %s98
    %s116 = sphi 0, %s116
    %s118 = sphi 0, %s116
    %s119 = sphi 0, %s118
    %s133 = sphi 0, %s119
    %s137 = sphi 0, %s137
    %s139 = sphi 0, %s137
    %s140 = sphi 0, %s139
    %s154 = sphi 0, %s140
    %s160 = sphi 0, %s162
    %s163 = sphi 0, %s160
    %s164 = sphi 0, %s163
    %s180 = sphi 0, %s164
    %s186 = sphi 0, %s188
    %s189 = sphi 0, %s186
    %s190 = sphi 0, %s189
    %s206 = sphi 0, %s190
  $region4: #{fcfe_forward.7} parent=0 // loop_header_branch
    %17 = sbr.rel (%p15) target = $region8
  $region5: #{fcfe_forward.7} parent=0 // loop_body
    %s19 = ssub.s32 %s14, 1
    %s20 = ssub.s32 %s14, 2
    %s21 = sadd.s32 %s14, 1
    %s22 = ssub.s32 %s14, %s21
    %p23 = scmp.eq.s32.totalorder %s22, 0
    %s25 = sadd.s32 %s24, 1
    %s26 = scalar_select %p23, %s24, %s25
    %p29 = pneg %p23
    %p30 = scmp.eq.s32.totalorder %s14, 1
    %p31 = por %p29, %p30
    %p32 = scmp.ne.s32.totalorder %s24, %s27
    %p33 = scmp.eq.s32.totalorder %s14, 0
    %p34 = por %p32, %p33
    %p35 = scmp.ne.s32.totalorder %s24, %s27
    %p36 = scmp.eq.s32.totalorder %s19, 1
    %p37 = por %p35, %p36
    %p38 = scmp.ne.s32.totalorder %s27, %s28
    %p39 = scmp.eq.s32.totalorder %s19, 0
    %p40 = por %p38, %p39
    %p41 = scmp.ne.s32.totalorder %s27, %s28
    %p42 = scmp.eq.s32.totalorder %s20, 1
    %p43 = por %p41, %p42
    %p45 = scmp.ne.s32.totalorder %s28, %s44
    %p46 = scmp.eq.s32.totalorder %s20, 0
    %p47 = por %p45, %p46
    %s48 = ssub.s32 %s14, %s21
    %p49 = scmp.eq.s32.totalorder %s48, 0
    %s51 = sadd.s32 %s50, 1
    %s52 = scalar_select %p49, %s50, %s51
    %p55 = pneg %p49
    %p56 = scmp.eq.s32.totalorder %s14, 1
    %p57 = por %p55, %p56
    %p58 = scmp.ne.s32.totalorder %s50, %s53
    %p59 = scmp.eq.s32.totalorder %s14, 0
    %p60 = por %p58, %p59
    %p61 = scmp.ne.s32.totalorder %s50, %s53
    %p62 = scmp.eq.s32.totalorder %s19, 1
    %p63 = por %p61, %p62
    %p64 = scmp.ne.s32.totalorder %s53, %s54
    %p65 = scmp.eq.s32.totalorder %s19, 0
    %p66 = por %p64, %p65
    %p67 = scmp.ne.s32.totalorder %s53, %s54
    %p68 = scmp.eq.s32.totalorder %s20, 1
    %p69 = por %p67, %p68
    %p71 = scmp.ne.s32.totalorder %s54, %s70
    %p72 = scmp.eq.s32.totalorder %s20, 0
    %p73 = por %p71, %p72
    %s75 = sadd.s32 %s74, 1
    %p78 = scmp.eq.s32.totalorder %s14, 1
    %p79 = scmp.ne.s32.totalorder %s74, %s76
    %p80 = scmp.eq.s32.totalorder %s14, 0
    %p81 = por %p79, %p80
    %p82 = scmp.ne.s32.totalorder %s74, %s76
    %p83 = scmp.eq.s32.totalorder %s19, 1
    %p84 = por %p82, %p83
    %p85 = scmp.ne.s32.totalorder %s76, %s77
    %p86 = scmp.eq.s32.totalorder %s19, 0
    %p87 = por %p85, %p86
    %p88 = scmp.ne.s32.totalorder %s76, %s77
    %p89 = scmp.eq.s32.totalorder %s20, 1
    %p90 = por %p88, %p89
    %p92 = scmp.ne.s32.totalorder %s77, %s91
    %p93 = scmp.eq.s32.totalorder %s20, 0
    %p94 = por %p92, %p93
    %s96 = sadd.s32 %s95, 1
    %p99 = scmp.eq.s32.totalorder %s14, 1
    %p100 = scmp.ne.s32.totalorder %s95, %s97
    %p101 = scmp.eq.s32.totalorder %s14, 0
    %p102 = por %p100, %p101
    %p103 = scmp.ne.s32.totalorder %s95, %s97
    %p104 = scmp.eq.s32.totalorder %s19, 1
    %p105 = por %p103, %p104
    %p106 = scmp.ne.s32.totalorder %s97, %s98
    %p107 = scmp.eq.s32.totalorder %s19, 0
    %p108 = por %p106, %p107
    %p109 = scmp.ne.s32.totalorder %s97, %s98
    %p110 = scmp.eq.s32.totalorder %s20, 1
    %p111 = por %p109, %p110
    %p113 = scmp.ne.s32.totalorder %s98, %s112
    %p114 = scmp.eq.s32.totalorder %s20, 0
    %p115 = por %p113, %p114
    %s117 = sadd.s32 %s116, 1
    %p120 = scmp.eq.s32.totalorder %s14, 1
    %p121 = scmp.ne.s32.totalorder %s116, %s118
    %p122 = scmp.eq.s32.totalorder %s14, 0
    %p123 = por %p121, %p122
    %p124 = scmp.ne.s32.totalorder %s116, %s118
    %p125 = scmp.eq.s32.totalorder %s19, 1
    %p126 = por %p124, %p125
    %p127 = scmp.ne.s32.totalorder %s118, %s119
    %p128 = scmp.eq.s32.totalorder %s19, 0
    %p129 = por %p127, %p128
    %p130 = scmp.ne.s32.totalorder %s118, %s119
    %p131 = scmp.eq.s32.totalorder %s20, 1
    %p132 = por %p130, %p131
    %p134 = scmp.ne.s32.totalorder %s119, %s133
    %p135 = scmp.eq.s32.totalorder %s20, 0
    %p136 = por %p134, %p135
    %s138 = sadd.s32 %s137, 1
    %p141 = scmp.eq.s32.totalorder %s14, 1
    %p142 = scmp.ne.s32.totalorder %s137, %s139
    %p143 = scmp.eq.s32.totalorder %s14, 0
    %p144 = por %p142, %p143
    %p145 = scmp.ne.s32.totalorder %s137, %s139
    %p146 = scmp.eq.s32.totalorder %s19, 1
    %p147 = por %p145, %p146
    %p148 = scmp.ne.s32.totalorder %s139, %s140
    %p149 = scmp.eq.s32.totalorder %s19, 0
    %p150 = por %p148, %p149
    %p151 = scmp.ne.s32.totalorder %s139, %s140
    %p152 = scmp.eq.s32.totalorder %s20, 1
    %p153 = por %p151, %p152
    %p155 = scmp.ne.s32.totalorder %s140, %s154
    %p156 = scmp.eq.s32.totalorder %s20, 0
    %p157 = por %p155, %p156
    %s158 = ssub.s32 %s14, %s21
    %p159 = scmp.eq.s32.totalorder %s158, 0
    %s161 = sadd.s32 %s160, 1
    %s162 = scalar_select %p159, %s160, %s161
    %p165 = pneg %p159
    %p166 = scmp.eq.s32.totalorder %s14, 1
    %p167 = por %p165, %p166
    %p168 = scmp.ne.s32.totalorder %s160, %s163
    %p169 = scmp.eq.s32.totalorder %s14, 0
    %p170 = por %p168, %p169
    %p171 = scmp.ne.s32.totalorder %s160, %s163
    %p172 = scmp.eq.s32.totalorder %s19, 1
    %p173 = por %p171, %p172
    %p174 = scmp.ne.s32.totalorder %s163, %s164
    %p175 = scmp.eq.s32.totalorder %s19, 0
    %p176 = por %p174, %p175
    %p177 = scmp.ne.s32.totalorder %s163, %s164
    %p178 = scmp.eq.s32.totalorder %s20, 1
    %p179 = por %p177, %p178
    %p181 = scmp.ne.s32.totalorder %s164, %s180
    %p182 = scmp.eq.s32.totalorder %s20, 0
    %p183 = por %p181, %p182
    %s184 = ssub.s32 %s14, %s21
    %p185 = scmp.eq.s32.totalorder %s184, 0
    %s187 = sadd.s32 %s186, 1
    %s188 = scalar_select %p185, %s186, %s187
    %p191 = pneg %p185
    %p192 = scmp.eq.s32.totalorder %s14, 1
    %p193 = por %p191, %p192
    %p194 = scmp.ne.s32.totalorder %s186, %s189
    %p195 = scmp.eq.s32.totalorder %s14, 0
    %p196 = por %p194, %p195
    %p197 = scmp.ne.s32.totalorder %s186, %s189
    %p198 = scmp.eq.s32.totalorder %s19, 1
    %p199 = por %p197, %p198
    %p200 = scmp.ne.s32.totalorder %s189, %s190
    %p201 = scmp.eq.s32.totalorder %s19, 0
    %p202 = por %p200, %p201
    %p203 = scmp.ne.s32.totalorder %s189, %s190
    %p204 = scmp.eq.s32.totalorder %s20, 1
    %p205 = por %p203, %p204
    %p207 = scmp.ne.s32.totalorder %s190, %s206
    %p208 = scmp.eq.s32.totalorder %s20, 0
    %p209 = por %p207, %p208
    %p210 = scmp.le.s32.totalorder 1, %s14
    %p211 = scmp.lt.s32.totalorder %s14, 3
    %p212 = pnand %p210, %p211
    %p213 = pneg %p212
    // Predicated region
    $region9: #{fcfe_forward.7} parent=5 // pred_check
      _
    $region10: #{fcfe_forward.7} parent=5 // pred_check_branch
      %215 = sbr.rel (%p212) target = $region12
    $region11: #{fcfe_forward.7} parent=5 // pred_region
      %s216 = ssub.s32 %s14, 1
      // Predicated region
      $region13: #{fcfe_forward.7} parent=11 // pred_check
        %p217 = pneg %p87
      $region14: #{fcfe_forward.7} parent=11 // pred_check_branch
        %219 = sbr.rel (%p217) target = $region16
      $region15: #{fcfe_forward.7} parent=11 // pred_region
        _
      $region16: #{fcfe_forward.7} parent=11 // pred_fallthru
        _
      // Predicated region
      $region17: #{fcfe_forward.7} parent=11 // pred_check
        %p220 = pneg %p108
      $region18: #{fcfe_forward.7} parent=11 // pred_check_branch
        %222 = sbr.rel (%p220) target = $region20
      $region19: #{fcfe_forward.7} parent=11 // pred_region
        _
      $region20: #{fcfe_forward.7} parent=11 // pred_fallthru
        _
      // Predicated region
      $region21: #{fcfe_forward.7} parent=11 // pred_check
        %p223 = pneg %p129
      $region22: #{fcfe_forward.7} parent=11 // pred_check_branch
        %225 = sbr.rel (%p223) target = $region24
      $region23: #{fcfe_forward.7} parent=11 // pred_region
        _
      $region24: #{fcfe_forward.7} parent=11 // pred_fallthru
        _
      // Predicated region
      $region25: #{fcfe_forward.7} parent=11 // pred_check
        %p226 = pneg %p150
      $region26: #{fcfe_forward.7} parent=11 // pred_check_branch
        %228 = sbr.rel (%p226) target = $region28
      $region27: #{fcfe_forward.7} parent=11 // pred_region
        _
      $region28: #{fcfe_forward.7} parent=11 // pred_fallthru
        _
    $region12: #{fcfe_forward.7} parent=5 // pred_fallthru
      _
    %p229 = scmp.lt.s32.totalorder %s14, 2
    // Predicated region
    $region29: #{fcfe_forward.7} parent=5 // pred_check
      %p230 = pneg %p229
    $region30: #{fcfe_forward.7} parent=5 // pred_check_branch
      %232 = sbr.rel (%p230) target = $region32
    $region31: #{fcfe_forward.7} parent=5 // pred_region
      // Predicated region
      $region33: #{fcfe_forward.7} parent=31 // pred_check
        %p233 = pneg %p34
      $region34: #{fcfe_forward.7} parent=31 // pred_check_branch
        %235 = sbr.rel (%p233) target = $region36
      $region35: #{fcfe_forward.7} parent=31 // pred_region
        %p236 = scmp.lt.s32.totalorder %s14, 1
        %s237 = scalar_select %p236, %s14, 1
        %s238 = smul.addr %s237, 8
        %s239 = smul.addr %s238, 8
        %s240 = scalar_lea.vmem %s0, %s239
      $region36: #{fcfe_forward.7} parent=31 // pred_fallthru
        _
      // Predicated region
      $region37: #{fcfe_forward.7} parent=31 // pred_check
        %p241 = pneg %p60
      $region38: #{fcfe_forward.7} parent=31 // pred_check_branch
        %243 = sbr.rel (%p241) target = $region40
      $region39: #{fcfe_forward.7} parent=31 // pred_region
        %p244 = scmp.lt.s32.totalorder %s14, 1
        %s245 = scalar_select %p244, %s14, 1
        %s246 = smul.addr %s245, 8
        %s247 = smul.addr %s246, 8
        %s248 = scalar_lea.vmem %s1, %s247
      $region40: #{fcfe_forward.7} parent=31 // pred_fallthru
        _
    $region32: #{fcfe_forward.7} parent=5 // pred_fallthru
      _
    %p249 = scmp.le.s32.totalorder 1, %s14
    %p250 = scmp.lt.s32.totalorder %s14, 3
    %p251 = pnand %p249, %p250
    %p252 = pneg %p251
    // Predicated region
    $region41: #{fcfe_forward.7} parent=5 // pred_check
      _
    $region42: #{fcfe_forward.7} parent=5 // pred_check_branch
      %254 = sbr.rel (%p251) target = $region44
    $region43: #{fcfe_forward.7} parent=5 // pred_region
      %s255 = ssub.s32 %s14, 1
      %p256 = scmp.lt.s32.totalorder %s19, 1
      %s257 = scalar_select %p256, %s19, 1
      %s258 = smul.addr %s257, 8
      %s259 = smul.addr %s258, 8
      %s260 = scalar_lea.vmem %s0, %s259
      %p261 = pneg %p40
      %p262 = pneg %p37
      %p263 = scmp.lt.s32.totalorder %s19, 1
      %s264 = scalar_select %p263, %s19, 1
      %s265 = smul.addr %s264, 8
      %s266 = smul.addr %s265, 8
      %s267 = scalar_lea.vmem %s1, %s266
      %p268 = pneg %p66
      %p269 = pneg %p63
      %p270 = pneg %p87
      %p271 = pneg %p84
      %p272 = pneg %p108
      %p273 = pneg %p105
      %p274 = pneg %p129
      %p275 = pneg %p126
      %p276 = pneg %p150
      %p277 = pneg %p147
      %p278 = pneg %p176
      %p279 = pneg %p173
      %p280 = scmp.lt.s32.totalorder %s19, 1
      %s281 = scalar_select %p280, %s19, 1
      %s282 = smul.addr %s281, 8
      %s283 = smul.addr %s282, 8
      %s284 = scalar_lea.vmem %s6, %s283
      %p285 = pneg %p202
      %p286 = pneg %p199
      %p287 = scmp.lt.s32.totalorder %s19, 1
      %s288 = scalar_select %p287, %s19, 1
      %s289 = smul.addr %s288, 8
      %s290 = smul.addr %s289, 8
      %s291 = scalar_lea.vmem %s7, %s290
      %p292 = scmp.lt.s32.totalorder %s19, 1
      %s293 = scalar_select %p292, %s19, 1
      %s294 = smul.addr %s293, 8
      %s295 = smul.addr %s294, 8
      %s296 = scalar_lea.vmem %s0, %s295
      %p297 = scmp.lt.s32.totalorder %s19, 1
      %s298 = scalar_select %p297, %s19, 1
      %s299 = smul.addr %s298, 8
      %s300 = smul.addr %s299, 8
      %s301 = scalar_lea.vmem %s1, %s300
      %p302 = scmp.lt.s32.totalorder %s19, 1
      %s303 = scalar_select %p302, %s19, 1
      %s304 = smul.addr %s303, 8
      %s305 = smul.addr %s304, 8
      %s306 = scalar_lea.vmem %s6, %s305
      %p307 = scmp.lt.s32.totalorder %s19, 1
      %s308 = scalar_select %p307, %s19, 1
      %s309 = smul.addr %s308, 8
      %s310 = smul.addr %s309, 8
      %s311 = scalar_lea.vmem %s7, %s310
      %v312 = vld [vmem:[%s296] sm:$0xff]
      %v313 = vld [vmem:[%s296 + $0x8] sm:$0xff]
      %v314 = vld [vmem:[%s296 + $0x10] sm:$0xff]
      %v315 = vld [vmem:[%s296 + $0x18] sm:$0xff]
      %v316 = vld [vmem:[%s296 + $0x20] sm:$0xff]
      %v317 = vld [vmem:[%s296 + $0x28] sm:$0xff]
      %v318 = vld [vmem:[%s296 + $0x30] sm:$0xff]
      %v319 = vld [vmem:[%s296 + $0x38] sm:$0xff]
      %328 = vrot.lane.b32.xlu0 %v312, 1
      %v329 = vpop.permute.xlu0 %328
      %330 = vrot.lane.b32.xlu0 %v313, 1
      %v331 = vpop.permute.xlu0 %330
      %332 = vrot.lane.b32.xlu0 %v314, 1
      %v333 = vpop.permute.xlu0 %332
      %334 = vrot.lane.b32.xlu0 %v315, 1
      %v335 = vpop.permute.xlu0 %334
      %336 = vrot.lane.b32.xlu0 %v316, 1
      %v337 = vpop.permute.xlu0 %336
      %338 = vrot.lane.b32.xlu0 %v317, 1
      %v339 = vpop.permute.xlu0 %338
      %340 = vrot.lane.b32.xlu0 %v318, 1
      %v341 = vpop.permute.xlu0 %340
      %342 = vrot.lane.b32.xlu0 %v319, 1
      %v343 = vpop.permute.xlu0 %342
      %vm352 = vcmask 7168
      %v353 = vsel %vm352, 0.0, %v329
      %v354 = vsel %vm352, 0.0, %v331
      %v355 = vsel %vm352, 0.0, %v333
      %v356 = vsel %vm352, 0.0, %v335
      %v357 = vsel %vm352, 0.0, %v337
      %v358 = vsel %vm352, 0.0, %v339
      %v359 = vsel %vm352, 0.0, %v341
      %v360 = vsel %vm352, 0.0, %v343
      %vm361 = vcmask 138240
      %v362 = vsel %vm361, %v353, 0.0
      %v363 = vsel %vm361, %v354, 0.0
      %v364 = vsel %vm361, %v355, 0.0
      %v365 = vsel %vm361, %v356, 0.0
      %v366 = vsel %vm361, %v357, 0.0
      %v367 = vsel %vm361, %v358, 0.0
      %v368 = vsel %vm361, %v359, 0.0
      %v369 = vsel %vm361, %v360, 0.0
      %vm378 = vcmask 1040384
      %v379 = vrot.slane %v362, 7
      %v380 = vrot.slane %v363, 7
      %v381 = vsel %vm378, %v379, %v380
      %v382 = vrot.slane %v364, 7
      %v383 = vrot.slane %v365, 7
      %v384 = vsel %vm378, %v382, %v383
      %v385 = vrot.slane %v366, 7
      %v386 = vrot.slane %v367, 7
      %v387 = vsel %vm378, %v385, %v386
      %v388 = vrot.slane %v368, 7
      %v389 = vrot.slane %v369, 7
      %v390 = vsel %vm378, %v388, %v389
      %v403 = vsel %vm378, 0.0, %v379
      %v404 = vsel %vm378, 0.0, %v382
      %v405 = vsel %vm378, 0.0, %v385
      %v406 = vsel %vm378, 0.0, %v388
      %v407 = vsel %vm378, %v380, 0.0
      %v408 = vsel %vm378, %v383, 0.0
      %v409 = vsel %vm378, %v386, 0.0
      %v410 = vsel %vm378, %v389, 0.0
      %v411 = vld [vmem:[%s3] sm:$0x1]
      %v412 = vld [vmem:[%s3 + $0x1] sm:$0x1]
      %v413 = vld [vmem:[%s3 + $0x2] sm:$0x1]
      %v414 = vld [vmem:[%s3 + $0x3] sm:$0x1]
      %v415 = vld [vmem:[%s2] sm:$0x1]
      %v416 = vld [vmem:[%s2 + $0x1] sm:$0x1]
      %v417 = vld [vmem:[%s2 + $0x2] sm:$0x1]
      %v418 = vld [vmem:[%s2 + $0x3] sm:$0x1]
      %v423 = vlaneseq
      %v424 = vshrl.u32 %v423, 7
      %v425 = vsub.s32 0, %v424
      %v426 = vrot.slane %v415, %v425
      %v427 = vlaneseq
      %v428 = vshrl.u32 %v427, 7
      %v429 = vsub.s32 0, %v428
      %v430 = vrot.slane %v416, %v429
      %v431 = vlaneseq
      %v432 = vshrl.u32 %v431, 7
      %v433 = vsub.s32 0, %v432
      %v434 = vrot.slane %v417, %v433
      %v435 = vlaneseq
      %v436 = vshrl.u32 %v435, 7
      %v437 = vsub.s32 0, %v436
      %v438 = vrot.slane %v418, %v437
      %439 = vset.pattern.permute.xlu0 0
      %440 = vperm.xlu0 %439, %v426
      %v441 = vpop.permute.xlu0 %440
      %443 = vset.pattern.permute.xlu0 0
      %444 = vperm.xlu0 %443, %v430
      %v445 = vpop.permute.xlu0 %444
      %447 = vset.pattern.permute.xlu0 0
      %448 = vperm.xlu0 %447, %v434
      %v449 = vpop.permute.xlu0 %448
      %451 = vset.pattern.permute.xlu0 0
      %452 = vperm.xlu0 %451, %v438
      %v453 = vpop.permute.xlu0 %452
      %v455 = vmul.f32 %v403, %v441
      %v456 = vmul.f32 %v381, %v441
      %v457 = vmul.f32 %v404, %v445
      %v458 = vmul.f32 %v384, %v445
      %v459 = vmul.f32 %v405, %v449
      %v460 = vmul.f32 %v387, %v449
      %v461 = vmul.f32 %v406, %v453
      %v462 = vmul.f32 %v390, %v453
      %v467 = vlaneseq
      %v468 = vshrl.u32 %v467, 7
      %v469 = vsub.s32 0, %v468
      %v470 = vrot.slane %v411, %v469
      %v471 = vlaneseq
      %v472 = vshrl.u32 %v471, 7
      %v473 = vsub.s32 0, %v472
      %v474 = vrot.slane %v412, %v473
      %v475 = vlaneseq
      %v476 = vshrl.u32 %v475, 7
      %v477 = vsub.s32 0, %v476
      %v478 = vrot.slane %v413, %v477
      %v479 = vlaneseq
      %v480 = vshrl.u32 %v479, 7
      %v481 = vsub.s32 0, %v480
      %v482 = vrot.slane %v414, %v481
      %483 = vset.pattern.permute.xlu0 0
      %484 = vperm.xlu0 %483, %v470
      %v485 = vpop.permute.xlu0 %484
      %487 = vset.pattern.permute.xlu0 0
      %488 = vperm.xlu0 %487, %v474
      %v489 = vpop.permute.xlu0 %488
      %491 = vset.pattern.permute.xlu0 0
      %492 = vperm.xlu0 %491, %v478
      %v493 = vpop.permute.xlu0 %492
      %495 = vset.pattern.permute.xlu0 0
      %496 = vperm.xlu0 %495, %v482
      %v497 = vpop.permute.xlu0 %496
      %v499 = vadd.f32 %v485, %v455
      %v500 = vadd.f32 %v485, %v456
      %v501 = vadd.f32 %v489, %v457
      %v502 = vadd.f32 %v489, %v458
      %v503 = vadd.f32 %v493, %v459
      %v504 = vadd.f32 %v493, %v460
      %v505 = vadd.f32 %v497, %v461
      %v506 = vadd.f32 %v497, %v462
      %s507 = scalar_lea.vmem %s2, 4
      %v508 = vld [vmem:[%s507] sm:$0x1]
      %v509 = vld [vmem:[%s507 + $0x1] sm:$0x1]
      %v510 = vld [vmem:[%s507 + $0x2] sm:$0x1]
      %v511 = vld [vmem:[%s507 + $0x3] sm:$0x1]
      %v516 = vlaneseq
      %v517 = vshrl.u32 %v516, 7
      %v518 = vsub.s32 0, %v517
      %v519 = vrot.slane %v508, %v518
      %v520 = vlaneseq
      %v521 = vshrl.u32 %v520, 7
      %v522 = vsub.s32 0, %v521
      %v523 = vrot.slane %v509, %v522
      %v524 = vlaneseq
      %v525 = vshrl.u32 %v524, 7
      %v526 = vsub.s32 0, %v525
      %v527 = vrot.slane %v510, %v526
      %v528 = vlaneseq
      %v529 = vshrl.u32 %v528, 7
      %v530 = vsub.s32 0, %v529
      %v531 = vrot.slane %v511, %v530
      %532 = vset.pattern.permute.xlu0 0
      %533 = vperm.xlu0 %532, %v519
      %v534 = vpop.permute.xlu0 %533
      %536 = vset.pattern.permute.xlu0 0
      %537 = vperm.xlu0 %536, %v523
      %v538 = vpop.permute.xlu0 %537
      %540 = vset.pattern.permute.xlu0 0
      %541 = vperm.xlu0 %540, %v527
      %v542 = vpop.permute.xlu0 %541
      %544 = vset.pattern.permute.xlu0 0
      %545 = vperm.xlu0 %544, %v531
      %v546 = vpop.permute.xlu0 %545
      %v548 = vmul.f32 %v403, %v534
      %v549 = vmul.f32 %v381, %v534
      %v550 = vmul.f32 %v404, %v538
      %v551 = vmul.f32 %v384, %v538
      %v552 = vmul.f32 %v405, %v542
      %v553 = vmul.f32 %v387, %v542
      %v554 = vmul.f32 %v406, %v546
      %v555 = vmul.f32 %v390, %v546
      %564 = vrot.lane.b32.xlu0 %v548, 127
      %v565 = vpop.permute.xlu0 %564
      %566 = vrot.lane.b32.xlu0 %v549, 127
      %v567 = vpop.permute.xlu0 %566
      %568 = vrot.lane.b32.xlu0 %v550, 127
      %v569 = vpop.permute.xlu0 %568
      %570 = vrot.lane.b32.xlu0 %v551, 127
      %v571 = vpop.permute.xlu0 %570
      %572 = vrot.lane.b32.xlu0 %v552, 127
      %v573 = vpop.permute.xlu0 %572
      %574 = vrot.lane.b32.xlu0 %v553, 127
      %v575 = vpop.permute.xlu0 %574
      %576 = vrot.lane.b32.xlu0 %v554, 127
      %v577 = vpop.permute.xlu0 %576
      %578 = vrot.lane.b32.xlu0 %v555, 127
      %v579 = vpop.permute.xlu0 %578
      %v588 = vadd.f32 %v499, %v565
      %v589 = vadd.f32 %v500, %v567
      %v590 = vadd.f32 %v501, %v569
      %v591 = vadd.f32 %v502, %v571
      %v592 = vadd.f32 %v503, %v573
      %v593 = vadd.f32 %v504, %v575
      %v594 = vadd.f32 %v505, %v577
      %v595 = vadd.f32 %v506, %v579
      %s596 = scalar_lea.vmem %s2, 8
      %v597 = vld [vmem:[%s596] sm:$0x1]
      %v598 = vld [vmem:[%s596 + $0x1] sm:$0x1]
      %v599 = vld [vmem:[%s596 + $0x2] sm:$0x1]
      %v600 = vld [vmem:[%s596 + $0x3] sm:$0x1]
      %v605 = vlaneseq
      %v606 = vshrl.u32 %v605, 7
      %v607 = vsub.s32 0, %v606
      %v608 = vrot.slane %v597, %v607
      %v609 = vlaneseq
      %v610 = vshrl.u32 %v609, 7
      %v611 = vsub.s32 0, %v610
      %v612 = vrot.slane %v598, %v611
      %v613 = vlaneseq
      %v614 = vshrl.u32 %v613, 7
      %v615 = vsub.s32 0, %v614
      %v616 = vrot.slane %v599, %v615
      %v617 = vlaneseq
      %v618 = vshrl.u32 %v617, 7
      %v619 = vsub.s32 0, %v618
      %v620 = vrot.slane %v600, %v619
      %621 = vset.pattern.permute.xlu0 0
      %622 = vperm.xlu0 %621, %v608
      %v623 = vpop.permute.xlu0 %622
      %625 = vset.pattern.permute.xlu0 0
      %626 = vperm.xlu0 %625, %v612
      %v627 = vpop.permute.xlu0 %626
      %629 = vset.pattern.permute.xlu0 0
      %630 = vperm.xlu0 %629, %v616
      %v631 = vpop.permute.xlu0 %630
      %633 = vset.pattern.permute.xlu0 0
      %634 = vperm.xlu0 %633, %v620
      %v635 = vpop.permute.xlu0 %634
      %v637 = vmul.f32 %v403, %v623
      %v638 = vmul.f32 %v381, %v623
      %v639 = vmul.f32 %v404, %v627
      %v640 = vmul.f32 %v384, %v627
      %v641 = vmul.f32 %v405, %v631
      %v642 = vmul.f32 %v387, %v631
      %v643 = vmul.f32 %v406, %v635
      %v644 = vmul.f32 %v390, %v635
      %653 = vrot.lane.b32.xlu0 %v637, 126
      %v654 = vpop.permute.xlu0 %653
      %655 = vrot.lane.b32.xlu0 %v638, 126
      %v656 = vpop.permute.xlu0 %655
      %657 = vrot.lane.b32.xlu0 %v639, 126
      %v658 = vpop.permute.xlu0 %657
      %659 = vrot.lane.b32.xlu0 %v640, 126
      %v660 = vpop.permute.xlu0 %659
      %661 = vrot.lane.b32.xlu0 %v641, 126
      %v662 = vpop.permute.xlu0 %661
      %663 = vrot.lane.b32.xlu0 %v642, 126
      %v664 = vpop.permute.xlu0 %663
      %665 = vrot.lane.b32.xlu0 %v643, 126
      %v666 = vpop.permute.xlu0 %665
      %667 = vrot.lane.b32.xlu0 %v644, 126
      %v668 = vpop.permute.xlu0 %667
      %v677 = vadd.f32 %v588, %v654
      %v678 = vadd.f32 %v589, %v656
      %v679 = vadd.f32 %v590, %v658
      %v680 = vadd.f32 %v591, %v660
      %v681 = vadd.f32 %v592, %v662
      %v682 = vadd.f32 %v593, %v664
      %v683 = vadd.f32 %v594, %v666
      %v684 = vadd.f32 %v595, %v668
      %s685 = scalar_lea.vmem %s2, 12
      %v686 = vld [vmem:[%s685] sm:$0x1]
      %v687 = vld [vmem:[%s685 + $0x1] sm:$0x1]
      %v688 = vld [vmem:[%s685 + $0x2] sm:$0x1]
      %v689 = vld [vmem:[%s685 + $0x3] sm:$0x1]
      %v694 = vlaneseq
      %v695 = vshrl.u32 %v694, 7
      %v696 = vsub.s32 0, %v695
      %v697 = vrot.slane %v686, %v696
      %v698 = vlaneseq
      %v699 = vshrl.u32 %v698, 7
      %v700 = vsub.s32 0, %v699
      %v701 = vrot.slane %v687, %v700
      %v702 = vlaneseq
      %v703 = vshrl.u32 %v702, 7
      %v704 = vsub.s32 0, %v703
      %v705 = vrot.slane %v688, %v704
      %v706 = vlaneseq
      %v707 = vshrl.u32 %v706, 7
      %v708 = vsub.s32 0, %v707
      %v709 = vrot.slane %v689, %v708
      %710 = vset.pattern.permute.xlu0 0
      %711 = vperm.xlu0 %710, %v697
      %v712 = vpop.permute.xlu0 %711
      %714 = vset.pattern.permute.xlu0 0
      %715 = vperm.xlu0 %714, %v701
      %v716 = vpop.permute.xlu0 %715
      %718 = vset.pattern.permute.xlu0 0
      %719 = vperm.xlu0 %718, %v705
      %v720 = vpop.permute.xlu0 %719
      %722 = vset.pattern.permute.xlu0 0
      %723 = vperm.xlu0 %722, %v709
      %v724 = vpop.permute.xlu0 %723
      %v726 = vmul.f32 %v403, %v712
      %v727 = vmul.f32 %v381, %v712
      %v728 = vmul.f32 %v407, %v712
      %v729 = vmul.f32 %v404, %v716
      %v730 = vmul.f32 %v384, %v716
      %v731 = vmul.f32 %v408, %v716
      %v732 = vmul.f32 %v405, %v720
      %v733 = vmul.f32 %v387, %v720
      %v734 = vmul.f32 %v409, %v720
      %v735 = vmul.f32 %v406, %v724
      %v736 = vmul.f32 %v390, %v724
      %v737 = vmul.f32 %v410, %v724
      %vm750 = vcmask 1046528
      %v751 = vrot.slane %v726, 1
      %v752 = vrot.slane %v727, 1
      %v753 = vsel %vm750, %v751, %v752
      %v754 = vrot.slane %v728, 1
      %v755 = vsel %vm750, %v752, %v754
      %v756 = vrot.slane %v729, 1
      %v757 = vrot.slane %v730, 1
      %v758 = vsel %vm750, %v756, %v757
      %v759 = vrot.slane %v731, 1
      %v760 = vsel %vm750, %v757, %v759
      %v761 = vrot.slane %v732, 1
      %v762 = vrot.slane %v733, 1
      %v763 = vsel %vm750, %v761, %v762
      %v764 = vrot.slane %v734, 1
      %v765 = vsel %vm750, %v762, %v764
      %v766 = vrot.slane %v735, 1
      %v767 = vrot.slane %v736, 1
      %v768 = vsel %vm750, %v766, %v767
      %v769 = vrot.slane %v737, 1
      %v770 = vsel %vm750, %v767, %v769
      %v779 = vadd.f32 %v677, %v753
      %v780 = vadd.f32 %v678, %v755
      %v781 = vadd.f32 %v679, %v758
      %v782 = vadd.f32 %v680, %v760
      %v783 = vadd.f32 %v681, %v763
      %v784 = vadd.f32 %v682, %v765
      %v785 = vadd.f32 %v683, %v768
      %v786 = vadd.f32 %v684, %v770
      %s787 = scalar_lea.vmem %s2, 16
      %v788 = vld [vmem:[%s787] sm:$0x1]
      %v789 = vld [vmem:[%s787 + $0x1] sm:$0x1]
      %v790 = vld [vmem:[%s787 + $0x2] sm:$0x1]
      %v791 = vld [vmem:[%s787 + $0x3] sm:$0x1]
      %v796 = vlaneseq
      %v797 = vshrl.u32 %v796, 7
      %v798 = vsub.s32 0, %v797
      %v799 = vrot.slane %v788, %v798
      %v800 = vlaneseq
      %v801 = vshrl.u32 %v800, 7
      %v802 = vsub.s32 0, %v801
      %v803 = vrot.slane %v789, %v802
      %v804 = vlaneseq
      %v805 = vshrl.u32 %v804, 7
      %v806 = vsub.s32 0, %v805
      %v807 = vrot.slane %v790, %v806
      %v808 = vlaneseq
      %v809 = vshrl.u32 %v808, 7
      %v810 = vsub.s32 0, %v809
      %v811 = vrot.slane %v791, %v810
      %812 = vset.pattern.permute.xlu0 0
      %813 = vperm.xlu0 %812, %v799
      %v814 = vpop.permute.xlu0 %813
      %816 = vset.pattern.permute.xlu0 0
      %817 = vperm.xlu0 %816, %v803
      %v818 = vpop.permute.xlu0 %817
      %820 = vset.pattern.permute.xlu0 0
      %821 = vperm.xlu0 %820, %v807
      %v822 = vpop.permute.xlu0 %821
      %824 = vset.pattern.permute.xlu0 0
      %825 = vperm.xlu0 %824, %v811
      %v826 = vpop.permute.xlu0 %825
      %v828 = vmul.f32 %v403, %v814
      %v829 = vmul.f32 %v381, %v814
      %v830 = vmul.f32 %v407, %v814
      %v831 = vmul.f32 %v404, %v818
      %v832 = vmul.f32 %v384, %v818
      %v833 = vmul.f32 %v408, %v818
      %v834 = vmul.f32 %v405, %v822
      %v835 = vmul.f32 %v387, %v822
      %v836 = vmul.f32 %v409, %v822
      %v837 = vmul.f32 %v406, %v826
      %v838 = vmul.f32 %v390, %v826
      %v839 = vmul.f32 %v410, %v826
      %v852 = vrot.slane %v828, 1
      %v853 = vrot.slane %v829, 1
      %v854 = vsel %vm750, %v852, %v853
      %v855 = vrot.slane %v830, 1
      %v856 = vsel %vm750, %v853, %v855
      %v857 = vrot.slane %v831, 1
      %v858 = vrot.slane %v832, 1
      %v859 = vsel %vm750, %v857, %v858
      %v860 = vrot.slane %v833, 1
      %v861 = vsel %vm750, %v858, %v860
      %v862 = vrot.slane %v834, 1
      %v863 = vrot.slane %v835, 1
      %v864 = vsel %vm750, %v862, %v863
      %v865 = vrot.slane %v836, 1
      %v866 = vsel %vm750, %v863, %v865
      %v867 = vrot.slane %v837, 1
      %v868 = vrot.slane %v838, 1
      %v869 = vsel %vm750, %v867, %v868
      %v870 = vrot.slane %v839, 1
      %v871 = vsel %vm750, %v868, %v870
      %872 = vrot.lane.b32.xlu0 %v854, 127
      %v873 = vpop.permute.xlu0 %872
      %874 = vrot.lane.b32.xlu0 %v856, 127
      %v875 = vpop.permute.xlu0 %874
      %876 = vrot.lane.b32.xlu0 %v859, 127
      %v877 = vpop.permute.xlu0 %876
      %878 = vrot.lane.b32.xlu0 %v861, 127
      %v879 = vpop.permute.xlu0 %878
      %880 = vrot.lane.b32.xlu0 %v864, 127
      %v881 = vpop.permute.xlu0 %880
      %882 = vrot.lane.b32.xlu0 %v866, 127
      %v883 = vpop.permute.xlu0 %882
      %884 = vrot.lane.b32.xlu0 %v869, 127
      %v885 = vpop.permute.xlu0 %884
      %886 = vrot.lane.b32.xlu0 %v871, 127
      %v887 = vpop.permute.xlu0 %886
      %v896 = vadd.f32 %v779, %v873
      %v897 = vadd.f32 %v780, %v875
      %v898 = vadd.f32 %v781, %v877
      %v899 = vadd.f32 %v782, %v879
      %v900 = vadd.f32 %v783, %v881
      %v901 = vadd.f32 %v784, %v883
      %v902 = vadd.f32 %v785, %v885
      %v903 = vadd.f32 %v786, %v887
      %s904 = scalar_lea.vmem %s2, 20
      %v905 = vld [vmem:[%s904] sm:$0x1]
      %v906 = vld [vmem:[%s904 + $0x1] sm:$0x1]
      %v907 = vld [vmem:[%s904 + $0x2] sm:$0x1]
      %v908 = vld [vmem:[%s904 + $0x3] sm:$0x1]
      %v913 = vlaneseq
      %v914 = vshrl.u32 %v913, 7
      %v915 = vsub.s32 0, %v914
      %v916 = vrot.slane %v905, %v915
      %v917 = vlaneseq
      %v918 = vshrl.u32 %v917, 7
      %v919 = vsub.s32 0, %v918
      %v920 = vrot.slane %v906, %v919
      %v921 = vlaneseq
      %v922 = vshrl.u32 %v921, 7
      %v923 = vsub.s32 0, %v922
      %v924 = vrot.slane %v907, %v923
      %v925 = vlaneseq
      %v926 = vshrl.u32 %v925, 7
      %v927 = vsub.s32 0, %v926
      %v928 = vrot.slane %v908, %v927
      %929 = vset.pattern.permute.xlu0 0
      %930 = vperm.xlu0 %929, %v916
      %v931 = vpop.permute.xlu0 %930
      %933 = vset.pattern.permute.xlu0 0
      %934 = vperm.xlu0 %933, %v920
      %v935 = vpop.permute.xlu0 %934
      %937 = vset.pattern.permute.xlu0 0
      %938 = vperm.xlu0 %937, %v924
      %v939 = vpop.permute.xlu0 %938
      %941 = vset.pattern.permute.xlu0 0
      %942 = vperm.xlu0 %941, %v928
      %v943 = vpop.permute.xlu0 %942
      %v945 = vmul.f32 %v403, %v931
      %v946 = vmul.f32 %v381, %v931
      %v947 = vmul.f32 %v407, %v931
      %v948 = vmul.f32 %v404, %v935
      %v949 = vmul.f32 %v384, %v935
      %v950 = vmul.f32 %v408, %v935
      %v951 = vmul.f32 %v405, %v939
      %v952 = vmul.f32 %v387, %v939
      %v953 = vmul.f32 %v409, %v939
      %v954 = vmul.f32 %v406, %v943
      %v955 = vmul.f32 %v390, %v943
      %v956 = vmul.f32 %v410, %v943
      %v969 = vrot.slane %v945, 1
      %v970 = vrot.slane %v946, 1
      %v971 = vsel %vm750, %v969, %v970
      %v972 = vrot.slane %v947, 1
      %v973 = vsel %vm750, %v970, %v972
      %v974 = vrot.slane %v948, 1
      %v975 = vrot.slane %v949, 1
      %v976 = vsel %vm750, %v974, %v975
      %v977 = vrot.slane %v950, 1
      %v978 = vsel %vm750, %v975, %v977
      %v979 = vrot.slane %v951, 1
      %v980 = vrot.slane %v952, 1
      %v981 = vsel %vm750, %v979, %v980
      %v982 = vrot.slane %v953, 1
      %v983 = vsel %vm750, %v980, %v982
      %v984 = vrot.slane %v954, 1
      %v985 = vrot.slane %v955, 1
      %v986 = vsel %vm750, %v984, %v985
      %v987 = vrot.slane %v956, 1
      %v988 = vsel %vm750, %v985, %v987
      %989 = vrot.lane.b32.xlu0 %v971, 126
      %v990 = vpop.permute.xlu0 %989
      %991 = vrot.lane.b32.xlu0 %v973, 126
      %v992 = vpop.permute.xlu0 %991
      %993 = vrot.lane.b32.xlu0 %v976, 126
      %v994 = vpop.permute.xlu0 %993
      %995 = vrot.lane.b32.xlu0 %v978, 126
      %v996 = vpop.permute.xlu0 %995
      %997 = vrot.lane.b32.xlu0 %v981, 126
      %v998 = vpop.permute.xlu0 %997
      %999 = vrot.lane.b32.xlu0 %v983, 126
      %v1000 = vpop.permute.xlu0 %999
      %1001 = vrot.lane.b32.xlu0 %v986, 126
      %v1002 = vpop.permute.xlu0 %1001
      %1003 = vrot.lane.b32.xlu0 %v988, 126
      %v1004 = vpop.permute.xlu0 %1003
      %v1013 = vadd.f32 %v896, %v990
      %v1014 = vadd.f32 %v897, %v992
      %v1015 = vadd.f32 %v898, %v994
      %v1016 = vadd.f32 %v899, %v996
      %v1017 = vadd.f32 %v900, %v998
      %v1018 = vadd.f32 %v901, %v1000
      %v1019 = vadd.f32 %v902, %v1002
      %v1020 = vadd.f32 %v903, %v1004
      %s1021 = scalar_lea.vmem %s2, 24
      %v1022 = vld [vmem:[%s1021] sm:$0x1]
      %v1023 = vld [vmem:[%s1021 + $0x1] sm:$0x1]
      %v1024 = vld [vmem:[%s1021 + $0x2] sm:$0x1]
      %v1025 = vld [vmem:[%s1021 + $0x3] sm:$0x1]
      %v1030 = vlaneseq
      %v1031 = vshrl.u32 %v1030, 7
      %v1032 = vsub.s32 0, %v1031
      %v1033 = vrot.slane %v1022, %v1032
      %v1034 = vlaneseq
      %v1035 = vshrl.u32 %v1034, 7
      %v1036 = vsub.s32 0, %v1035
      %v1037 = vrot.slane %v1023, %v1036
      %v1038 = vlaneseq
      %v1039 = vshrl.u32 %v1038, 7
      %v1040 = vsub.s32 0, %v1039
      %v1041 = vrot.slane %v1024, %v1040
      %v1042 = vlaneseq
      %v1043 = vshrl.u32 %v1042, 7
      %v1044 = vsub.s32 0, %v1043
      %v1045 = vrot.slane %v1025, %v1044
      %1046 = vset.pattern.permute.xlu0 0
      %1047 = vperm.xlu0 %1046, %v1033
      %v1048 = vpop.permute.xlu0 %1047
      %1050 = vset.pattern.permute.xlu0 0
      %1051 = vperm.xlu0 %1050, %v1037
      %v1052 = vpop.permute.xlu0 %1051
      %1054 = vset.pattern.permute.xlu0 0
      %1055 = vperm.xlu0 %1054, %v1041
      %v1056 = vpop.permute.xlu0 %1055
      %1058 = vset.pattern.permute.xlu0 0
      %1059 = vperm.xlu0 %1058, %v1045
      %v1060 = vpop.permute.xlu0 %1059
      %v1062 = vmul.f32 %v403, %v1048
      %v1063 = vmul.f32 %v381, %v1048
      %v1064 = vmul.f32 %v407, %v1048
      %v1065 = vmul.f32 %v404, %v1052
      %v1066 = vmul.f32 %v384, %v1052
      %v1067 = vmul.f32 %v408, %v1052
      %v1068 = vmul.f32 %v405, %v1056
      %v1069 = vmul.f32 %v387, %v1056
      %v1070 = vmul.f32 %v409, %v1056
      %v1071 = vmul.f32 %v406, %v1060
      %v1072 = vmul.f32 %v390, %v1060
      %v1073 = vmul.f32 %v410, %v1060
      %vm1086 = vcmask 1045504
      %v1087 = vrot.slane %v1062, 2
      %v1088 = vrot.slane %v1063, 2
      %v1089 = vsel %vm1086, %v1087, %v1088
      %v1090 = vrot.slane %v1064, 2
      %v1091 = vsel %vm1086, %v1088, %v1090
      %v1092 = vrot.slane %v1065, 2
      %v1093 = vrot.slane %v1066, 2
      %v1094 = vsel %vm1086, %v1092, %v1093
      %v1095 = vrot.slane %v1067, 2
      %v1096 = vsel %vm1086, %v1093, %v1095
      %v1097 = vrot.slane %v1068, 2
      %v1098 = vrot.slane %v1069, 2
      %v1099 = vsel %vm1086, %v1097, %v1098
      %v1100 = vrot.slane %v1070, 2
      %v1101 = vsel %vm1086, %v1098, %v1100
      %v1102 = vrot.slane %v1071, 2
      %v1103 = vrot.slane %v1072, 2
      %v1104 = vsel %vm1086, %v1102, %v1103
      %v1105 = vrot.slane %v1073, 2
      %v1106 = vsel %vm1086, %v1103, %v1105
      %v1115 = vadd.f32 %v1013, %v1089
      %v1116 = vadd.f32 %v1014, %v1091
      %v1117 = vadd.f32 %v1015, %v1094
      %v1118 = vadd.f32 %v1016, %v1096
      %v1119 = vadd.f32 %v1017, %v1099
      %v1120 = vadd.f32 %v1018, %v1101
      %v1121 = vadd.f32 %v1019, %v1104
      %v1122 = vadd.f32 %v1020, %v1106
      %s1123 = scalar_lea.vmem %s2, 28
      %v1124 = vld [vmem:[%s1123] sm:$0x1]
      %v1125 = vld [vmem:[%s1123 + $0x1] sm:$0x1]
      %v1126 = vld [vmem:[%s1123 + $0x2] sm:$0x1]
      %v1127 = vld [vmem:[%s1123 + $0x3] sm:$0x1]
      %v1132 = vlaneseq
      %v1133 = vshrl.u32 %v1132, 7
      %v1134 = vsub.s32 0, %v1133
      %v1135 = vrot.slane %v1124, %v1134
      %v1136 = vlaneseq
      %v1137 = vshrl.u32 %v1136, 7
      %v1138 = vsub.s32 0, %v1137
      %v1139 = vrot.slane %v1125, %v1138
      %v1140 = vlaneseq
      %v1141 = vshrl.u32 %v1140, 7
      %v1142 = vsub.s32 0, %v1141
      %v1143 = vrot.slane %v1126, %v1142
      %v1144 = vlaneseq
      %v1145 = vshrl.u32 %v1144, 7
      %v1146 = vsub.s32 0, %v1145
      %v1147 = vrot.slane %v1127, %v1146
      %1148 = vset.pattern.permute.xlu0 0
      %1149 = vperm.xlu0 %1148, %v1135
      %v1150 = vpop.permute.xlu0 %1149
      %1152 = vset.pattern.permute.xlu0 0
      %1153 = vperm.xlu0 %1152, %v1139
      %v1154 = vpop.permute.xlu0 %1153
      %1156 = vset.pattern.permute.xlu0 0
      %1157 = vperm.xlu0 %1156, %v1143
      %v1158 = vpop.permute.xlu0 %1157
      %1160 = vset.pattern.permute.xlu0 0
      %1161 = vperm.xlu0 %1160, %v1147
      %v1162 = vpop.permute.xlu0 %1161
      %v1164 = vmul.f32 %v403, %v1150
      %v1165 = vmul.f32 %v381, %v1150
      %v1166 = vmul.f32 %v407, %v1150
      %v1167 = vmul.f32 %v404, %v1154
      %v1168 = vmul.f32 %v384, %v1154
      %v1169 = vmul.f32 %v408, %v1154
      %v1170 = vmul.f32 %v405, %v1158
      %v1171 = vmul.f32 %v387, %v1158
      %v1172 = vmul.f32 %v409, %v1158
      %v1173 = vmul.f32 %v406, %v1162
      %v1174 = vmul.f32 %v390, %v1162
      %v1175 = vmul.f32 %v410, %v1162
      %v1188 = vrot.slane %v1164, 2
      %v1189 = vrot.slane %v1165, 2
      %v1190 = vsel %vm1086, %v1188, %v1189
      %v1191 = vrot.slane %v1166, 2
      %v1192 = vsel %vm1086, %v1189, %v1191
      %v1193 = vrot.slane %v1167, 2
      %v1194 = vrot.slane %v1168, 2
      %v1195 = vsel %vm1086, %v1193, %v1194
      %v1196 = vrot.slane %v1169, 2
      %v1197 = vsel %vm1086, %v1194, %v1196
      %v1198 = vrot.slane %v1170, 2
      %v1199 = vrot.slane %v1171, 2
      %v1200 = vsel %vm1086, %v1198, %v1199
      %v1201 = vrot.slane %v1172, 2
      %v1202 = vsel %vm1086, %v1199, %v1201
      %v1203 = vrot.slane %v1173, 2
      %v1204 = vrot.slane %v1174, 2
      %v1205 = vsel %vm1086, %v1203, %v1204
      %v1206 = vrot.slane %v1175, 2
      %v1207 = vsel %vm1086, %v1204, %v1206
      %1208 = vrot.lane.b32.xlu0 %v1190, 127
      %v1209 = vpop.permute.xlu0 %1208
      %1210 = vrot.lane.b32.xlu0 %v1192, 127
      %v1211 = vpop.permute.xlu0 %1210
      %1212 = vrot.lane.b32.xlu0 %v1195, 127
      %v1213 = vpop.permute.xlu0 %1212
      %1214 = vrot.lane.b32.xlu0 %v1197, 127
      %v1215 = vpop.permute.xlu0 %1214
      %1216 = vrot.lane.b32.xlu0 %v1200, 127
      %v1217 = vpop.permute.xlu0 %1216
      %1218 = vrot.lane.b32.xlu0 %v1202, 127
      %v1219 = vpop.permute.xlu0 %1218
      %1220 = vrot.lane.b32.xlu0 %v1205, 127
      %v1221 = vpop.permute.xlu0 %1220
      %1222 = vrot.lane.b32.xlu0 %v1207, 127
      %v1223 = vpop.permute.xlu0 %1222
      %v1232 = vadd.f32 %v1115, %v1209
      %v1233 = vadd.f32 %v1116, %v1211
      %v1234 = vadd.f32 %v1117, %v1213
      %v1235 = vadd.f32 %v1118, %v1215
      %v1236 = vadd.f32 %v1119, %v1217
      %v1237 = vadd.f32 %v1120, %v1219
      %v1238 = vadd.f32 %v1121, %v1221
      %v1239 = vadd.f32 %v1122, %v1223
      %s1240 = scalar_lea.vmem %s2, 32
      %v1241 = vld [vmem:[%s1240] sm:$0x1]
      %v1242 = vld [vmem:[%s1240 + $0x1] sm:$0x1]
      %v1243 = vld [vmem:[%s1240 + $0x2] sm:$0x1]
      %v1244 = vld [vmem:[%s1240 + $0x3] sm:$0x1]
      %v1249 = vlaneseq
      %v1250 = vshrl.u32 %v1249, 7
      %v1251 = vsub.s32 0, %v1250
      %v1252 = vrot.slane %v1241, %v1251
      %v1253 = vlaneseq
      %v1254 = vshrl.u32 %v1253, 7
      %v1255 = vsub.s32 0, %v1254
      %v1256 = vrot.slane %v1242, %v1255
      %v1257 = vlaneseq
      %v1258 = vshrl.u32 %v1257, 7
      %v1259 = vsub.s32 0, %v1258
      %v1260 = vrot.slane %v1243, %v1259
      %v1261 = vlaneseq
      %v1262 = vshrl.u32 %v1261, 7
      %v1263 = vsub.s32 0, %v1262
      %v1264 = vrot.slane %v1244, %v1263
      %1265 = vset.pattern.permute.xlu0 0
      %1266 = vperm.xlu0 %1265, %v1252
      %v1267 = vpop.permute.xlu0 %1266
      %1269 = vset.pattern.permute.xlu0 0
      %1270 = vperm.xlu0 %1269, %v1256
      %v1271 = vpop.permute.xlu0 %1270
      %1273 = vset.pattern.permute.xlu0 0
      %1274 = vperm.xlu0 %1273, %v1260
      %v1275 = vpop.permute.xlu0 %1274
      %1277 = vset.pattern.permute.xlu0 0
      %1278 = vperm.xlu0 %1277, %v1264
      %v1279 = vpop.permute.xlu0 %1278
      %v1281 = vmul.f32 %v403, %v1267
      %v1282 = vmul.f32 %v381, %v1267
      %v1283 = vmul.f32 %v407, %v1267
      %v1284 = vmul.f32 %v404, %v1271
      %v1285 = vmul.f32 %v384, %v1271
      %v1286 = vmul.f32 %v408, %v1271
      %v1287 = vmul.f32 %v405, %v1275
      %v1288 = vmul.f32 %v387, %v1275
      %v1289 = vmul.f32 %v409, %v1275
      %v1290 = vmul.f32 %v406, %v1279
      %v1291 = vmul.f32 %v390, %v1279
      %v1292 = vmul.f32 %v410, %v1279
      %v1305 = vrot.slane %v1281, 2
      %v1306 = vrot.slane %v1282, 2
      %v1307 = vsel %vm1086, %v1305, %v1306
      %v1308 = vrot.slane %v1283, 2
      %v1309 = vsel %vm1086, %v1306, %v1308
      %v1310 = vrot.slane %v1284, 2
      %v1311 = vrot.slane %v1285, 2
      %v1312 = vsel %vm1086, %v1310, %v1311
      %v1313 = vrot.slane %v1286, 2
      %v1314 = vsel %vm1086, %v1311, %v1313
      %v1315 = vrot.slane %v1287, 2
      %v1316 = vrot.slane %v1288, 2
      %v1317 = vsel %vm1086, %v1315, %v1316
      %v1318 = vrot.slane %v1289, 2
      %v1319 = vsel %vm1086, %v1316, %v1318
      %v1320 = vrot.slane %v1290, 2
      %v1321 = vrot.slane %v1291, 2
      %v1322 = vsel %vm1086, %v1320, %v1321
      %v1323 = vrot.slane %v1292, 2
      %v1324 = vsel %vm1086, %v1321, %v1323
      %1325 = vrot.lane.b32.xlu0 %v1307, 126
      %v1326 = vpop.permute.xlu0 %1325
      %1327 = vrot.lane.b32.xlu0 %v1309, 126
      %v1328 = vpop.permute.xlu0 %1327
      %1329 = vrot.lane.b32.xlu0 %v1312, 126
      %v1330 = vpop.permute.xlu0 %1329
      %1331 = vrot.lane.b32.xlu0 %v1314, 126
      %v1332 = vpop.permute.xlu0 %1331
      %1333 = vrot.lane.b32.xlu0 %v1317, 126
      %v1334 = vpop.permute.xlu0 %1333
      %1335 = vrot.lane.b32.xlu0 %v1319, 126
      %v1336 = vpop.permute.xlu0 %1335
      %1337 = vrot.lane.b32.xlu0 %v1322, 126
      %v1338 = vpop.permute.xlu0 %1337
      %1339 = vrot.lane.b32.xlu0 %v1324, 126
      %v1340 = vpop.permute.xlu0 %1339
      %v1349 = vadd.f32 %v1232, %v1326
      %v1350 = vadd.f32 %v1233, %v1328
      %v1351 = vadd.f32 %v1234, %v1330
      %v1352 = vadd.f32 %v1235, %v1332
      %v1353 = vadd.f32 %v1236, %v1334
      %v1354 = vadd.f32 %v1237, %v1336
      %v1355 = vadd.f32 %v1238, %v1338
      %v1356 = vadd.f32 %v1239, %v1340
      %vm1357 = vcmask 130048
      %1358 = vst.msk [vmem:[%s306] sm:$0xff] %vm1357, %v1349
      %1359 = vst.msk [vmem:[%s306 + $0x8] sm:$0xff] %vm1357, %v1350
      %1360 = vst.msk [vmem:[%s306 + $0x10] sm:$0xff] %vm1357, %v1351
      %1361 = vst.msk [vmem:[%s306 + $0x18] sm:$0xff] %vm1357, %v1352
      %1362 = vst.msk [vmem:[%s306 + $0x20] sm:$0xff] %vm1357, %v1353
      %1363 = vst.msk [vmem:[%s306 + $0x28] sm:$0xff] %vm1357, %v1354
      %1364 = vst.msk [vmem:[%s306 + $0x30] sm:$0xff] %vm1357, %v1355
      %1365 = vst.msk [vmem:[%s306 + $0x38] sm:$0xff] %vm1357, %v1356
      %v1366 = vld [vmem:[%s301] sm:$0xff]
      %v1367 = vld [vmem:[%s301 + $0x8] sm:$0xff]
      %v1368 = vld [vmem:[%s301 + $0x10] sm:$0xff]
      %v1369 = vld [vmem:[%s301 + $0x18] sm:$0xff]
      %v1370 = vld [vmem:[%s301 + $0x20] sm:$0xff]
      %v1371 = vld [vmem:[%s301 + $0x28] sm:$0xff]
      %v1372 = vld [vmem:[%s301 + $0x30] sm:$0xff]
      %v1373 = vld [vmem:[%s301 + $0x38] sm:$0xff]
      %1382 = vrot.lane.b32.xlu0 %v1366, 1
      %v1383 = vpop.permute.xlu0 %1382
      %1384 = vrot.lane.b32.xlu0 %v1367, 1
      %v1385 = vpop.permute.xlu0 %1384
      %1386 = vrot.lane.b32.xlu0 %v1368, 1
      %v1387 = vpop.permute.xlu0 %1386
      %1388 = vrot.lane.b32.xlu0 %v1369, 1
      %v1389 = vpop.permute.xlu0 %1388
      %1390 = vrot.lane.b32.xlu0 %v1370, 1
      %v1391 = vpop.permute.xlu0 %1390
      %1392 = vrot.lane.b32.xlu0 %v1371, 1
      %v1393 = vpop.permute.xlu0 %1392
      %1394 = vrot.lane.b32.xlu0 %v1372, 1
      %v1395 = vpop.permute.xlu0 %1394
      %1396 = vrot.lane.b32.xlu0 %v1373, 1
      %v1397 = vpop.permute.xlu0 %1396
      %v1406 = vsel %vm352, 0.0, %v1383
      %v1407 = vsel %vm352, 0.0, %v1385
      %v1408 = vsel %vm352, 0.0, %v1387
      %v1409 = vsel %vm352, 0.0, %v1389
      %v1410 = vsel %vm352, 0.0, %v1391
      %v1411 = vsel %vm352, 0.0, %v1393
      %v1412 = vsel %vm352, 0.0, %v1395
      %v1413 = vsel %vm352, 0.0, %v1397
      %v1414 = vsel %vm361, %v1406, 0.0
      %v1415 = vsel %vm361, %v1407, 0.0
      %v1416 = vsel %vm361, %v1408, 0.0
      %v1417 = vsel %vm361, %v1409, 0.0
      %v1418 = vsel %vm361, %v1410, 0.0
      %v1419 = vsel %vm361, %v1411, 0.0
      %v1420 = vsel %vm361, %v1412, 0.0
      %v1421 = vsel %vm361, %v1413, 0.0
      %v1430 = vrot.slane %v1414, 7
      %v1431 = vrot.slane %v1415, 7
      %v1432 = vsel %vm378, %v1430, %v1431
      %v1433 = vrot.slane %v1416, 7
      %v1434 = vrot.slane %v1417, 7
      %v1435 = vsel %vm378, %v1433, %v1434
      %v1436 = vrot.slane %v1418, 7
      %v1437 = vrot.slane %v1419, 7
      %v1438 = vsel %vm378, %v1436, %v1437
      %v1439 = vrot.slane %v1420, 7
      %v1440 = vrot.slane %v1421, 7
      %v1441 = vsel %vm378, %v1439, %v1440
      %v1454 = vsel %vm378, 0.0, %v1430
      %v1455 = vsel %vm378, 0.0, %v1433
      %v1456 = vsel %vm378, 0.0, %v1436
      %v1457 = vsel %vm378, 0.0, %v1439
      %v1458 = vsel %vm378, %v1431, 0.0
      %v1459 = vsel %vm378, %v1434, 0.0
      %v1460 = vsel %vm378, %v1437, 0.0
      %v1461 = vsel %vm378, %v1440, 0.0
      %v1462 = vld [vmem:[%s5] sm:$0x1]
      %v1463 = vld [vmem:[%s5 + $0x1] sm:$0x1]
      %v1464 = vld [vmem:[%s5 + $0x2] sm:$0x1]
      %v1465 = vld [vmem:[%s5 + $0x3] sm:$0x1]
      %v1466 = vld [vmem:[%s4] sm:$0x1]
      %v1467 = vld [vmem:[%s4 + $0x1] sm:$0x1]
      %v1468 = vld [vmem:[%s4 + $0x2] sm:$0x1]
      %v1469 = vld [vmem:[%s4 + $0x3] sm:$0x1]
      %v1474 = vlaneseq
      %v1475 = vshrl.u32 %v1474, 7
      %v1476 = vsub.s32 0, %v1475
      %v1477 = vrot.slane %v1466, %v1476
      %v1478 = vlaneseq
      %v1479 = vshrl.u32 %v1478, 7
      %v1480 = vsub.s32 0, %v1479
      %v1481 = vrot.slane %v1467, %v1480
      %v1482 = vlaneseq
      %v1483 = vshrl.u32 %v1482, 7
      %v1484 = vsub.s32 0, %v1483
      %v1485 = vrot.slane %v1468, %v1484
      %v1486 = vlaneseq
      %v1487 = vshrl.u32 %v1486, 7
      %v1488 = vsub.s32 0, %v1487
      %v1489 = vrot.slane %v1469, %v1488
      %1490 = vset.pattern.permute.xlu0 0
      %1491 = vperm.xlu0 %1490, %v1477
      %v1492 = vpop.permute.xlu0 %1491
      %1494 = vset.pattern.permute.xlu0 0
      %1495 = vperm.xlu0 %1494, %v1481
      %v1496 = vpop.permute.xlu0 %1495
      %1498 = vset.pattern.permute.xlu0 0
      %1499 = vperm.xlu0 %1498, %v1485
      %v1500 = vpop.permute.xlu0 %1499
      %1502 = vset.pattern.permute.xlu0 0
      %1503 = vperm.xlu0 %1502, %v1489
      %v1504 = vpop.permute.xlu0 %1503
      %v1506 = vmul.f32 %v1454, %v1492
      %v1507 = vmul.f32 %v1432, %v1492
      %v1508 = vmul.f32 %v1455, %v1496
      %v1509 = vmul.f32 %v1435, %v1496
      %v1510 = vmul.f32 %v1456, %v1500
      %v1511 = vmul.f32 %v1438, %v1500
      %v1512 = vmul.f32 %v1457, %v1504
      %v1513 = vmul.f32 %v1441, %v1504
      %v1518 = vlaneseq
      %v1519 = vshrl.u32 %v1518, 7
      %v1520 = vsub.s32 0, %v1519
      %v1521 = vrot.slane %v1462, %v1520
      %v1522 = vlaneseq
      %v1523 = vshrl.u32 %v1522, 7
      %v1524 = vsub.s32 0, %v1523
      %v1525 = vrot.slane %v1463, %v1524
      %v1526 = vlaneseq
      %v1527 = vshrl.u32 %v1526, 7
      %v1528 = vsub.s32 0, %v1527
      %v1529 = vrot.slane %v1464, %v1528
      %v1530 = vlaneseq
      %v1531 = vshrl.u32 %v1530, 7
      %v1532 = vsub.s32 0, %v1531
      %v1533 = vrot.slane %v1465, %v1532
      %1534 = vset.pattern.permute.xlu0 0
      %1535 = vperm.xlu0 %1534, %v1521
      %v1536 = vpop.permute.xlu0 %1535
      %1538 = vset.pattern.permute.xlu0 0
      %1539 = vperm.xlu0 %1538, %v1525
      %v1540 = vpop.permute.xlu0 %1539
      %1542 = vset.pattern.permute.xlu0 0
      %1543 = vperm.xlu0 %1542, %v1529
      %v1544 = vpop.permute.xlu0 %1543
      %1546 = vset.pattern.permute.xlu0 0
      %1547 = vperm.xlu0 %1546, %v1533
      %v1548 = vpop.permute.xlu0 %1547
      %v1550 = vadd.f32 %v1536, %v1506
      %v1551 = vadd.f32 %v1536, %v1507
      %v1552 = vadd.f32 %v1540, %v1508
      %v1553 = vadd.f32 %v1540, %v1509
      %v1554 = vadd.f32 %v1544, %v1510
      %v1555 = vadd.f32 %v1544, %v1511
      %v1556 = vadd.f32 %v1548, %v1512
      %v1557 = vadd.f32 %v1548, %v1513
      %s1558 = scalar_lea.vmem %s4, 4
      %v1559 = vld [vmem:[%s1558] sm:$0x1]
      %v1560 = vld [vmem:[%s1558 + $0x1] sm:$0x1]
      %v1561 = vld [vmem:[%s1558 + $0x2] sm:$0x1]
      %v1562 = vld [vmem:[%s1558 + $0x3] sm:$0x1]
      %v1567 = vlaneseq
      %v1568 = vshrl.u32 %v1567, 7
      %v1569 = vsub.s32 0, %v1568
      %v1570 = vrot.slane %v1559, %v1569
      %v1571 = vlaneseq
      %v1572 = vshrl.u32 %v1571, 7
      %v1573 = vsub.s32 0, %v1572
      %v1574 = vrot.slane %v1560, %v1573
      %v1575 = vlaneseq
      %v1576 = vshrl.u32 %v1575, 7
      %v1577 = vsub.s32 0, %v1576
      %v1578 = vrot.slane %v1561, %v1577
      %v1579 = vlaneseq
      %v1580 = vshrl.u32 %v1579, 7
      %v1581 = vsub.s32 0, %v1580
      %v1582 = vrot.slane %v1562, %v1581
      %1583 = vset.pattern.permute.xlu0 0
      %1584 = vperm.xlu0 %1583, %v1570
      %v1585 = vpop.permute.xlu0 %1584
      %1587 = vset.pattern.permute.xlu0 0
      %1588 = vperm.xlu0 %1587, %v1574
      %v1589 = vpop.permute.xlu0 %1588
      %1591 = vset.pattern.permute.xlu0 0
      %1592 = vperm.xlu0 %1591, %v1578
      %v1593 = vpop.permute.xlu0 %1592
      %1595 = vset.pattern.permute.xlu0 0
      %1596 = vperm.xlu0 %1595, %v1582
      %v1597 = vpop.permute.xlu0 %1596
      %v1599 = vmul.f32 %v1454, %v1585
      %v1600 = vmul.f32 %v1432, %v1585
      %v1601 = vmul.f32 %v1455, %v1589
      %v1602 = vmul.f32 %v1435, %v1589
      %v1603 = vmul.f32 %v1456, %v1593
      %v1604 = vmul.f32 %v1438, %v1593
      %v1605 = vmul.f32 %v1457, %v1597
      %v1606 = vmul.f32 %v1441, %v1597
      %1615 = vrot.lane.b32.xlu0 %v1599, 127
      %v1616 = vpop.permute.xlu0 %1615
      %1617 = vrot.lane.b32.xlu0 %v1600, 127
      %v1618 = vpop.permute.xlu0 %1617
      %1619 = vrot.lane.b32.xlu0 %v1601, 127
      %v1620 = vpop.permute.xlu0 %1619
      %1621 = vrot.lane.b32.xlu0 %v1602, 127
      %v1622 = vpop.permute.xlu0 %1621
      %1623 = vrot.lane.b32.xlu0 %v1603, 127
      %v1624 = vpop.permute.xlu0 %1623
      %1625 = vrot.lane.b32.xlu0 %v1604, 127
      %v1626 = vpop.permute.xlu0 %1625
      %1627 = vrot.lane.b32.xlu0 %v1605, 127
      %v1628 = vpop.permute.xlu0 %1627
      %1629 = vrot.lane.b32.xlu0 %v1606, 127
      %v1630 = vpop.permute.xlu0 %1629
      %v1639 = vadd.f32 %v1550, %v1616
      %v1640 = vadd.f32 %v1551, %v1618
      %v1641 = vadd.f32 %v1552, %v1620
      %v1642 = vadd.f32 %v1553, %v1622
      %v1643 = vadd.f32 %v1554, %v1624
      %v1644 = vadd.f32 %v1555, %v1626
      %v1645 = vadd.f32 %v1556, %v1628
      %v1646 = vadd.f32 %v1557, %v1630
      %s1647 = scalar_lea.vmem %s4, 8
      %v1648 = vld [vmem:[%s1647] sm:$0x1]
      %v1649 = vld [vmem:[%s1647 + $0x1] sm:$0x1]
      %v1650 = vld [vmem:[%s1647 + $0x2] sm:$0x1]
      %v1651 = vld [vmem:[%s1647 + $0x3] sm:$0x1]
      %v1656 = vlaneseq
      %v1657 = vshrl.u32 %v1656, 7
      %v1658 = vsub.s32 0, %v1657
      %v1659 = vrot.slane %v1648, %v1658
      %v1660 = vlaneseq
      %v1661 = vshrl.u32 %v1660, 7
      %v1662 = vsub.s32 0, %v1661
      %v1663 = vrot.slane %v1649, %v1662
      %v1664 = vlaneseq
      %v1665 = vshrl.u32 %v1664, 7
      %v1666 = vsub.s32 0, %v1665
      %v1667 = vrot.slane %v1650, %v1666
      %v1668 = vlaneseq
      %v1669 = vshrl.u32 %v1668, 7
      %v1670 = vsub.s32 0, %v1669
      %v1671 = vrot.slane %v1651, %v1670
      %1672 = vset.pattern.permute.xlu0 0
      %1673 = vperm.xlu0 %1672, %v1659
      %v1674 = vpop.permute.xlu0 %1673
      %1676 = vset.pattern.permute.xlu0 0
      %1677 = vperm.xlu0 %1676, %v1663
      %v1678 = vpop.permute.xlu0 %1677
      %1680 = vset.pattern.permute.xlu0 0
      %1681 = vperm.xlu0 %1680, %v1667
      %v1682 = vpop.permute.xlu0 %1681
      %1684 = vset.pattern.permute.xlu0 0
      %1685 = vperm.xlu0 %1684, %v1671
      %v1686 = vpop.permute.xlu0 %1685
      %v1688 = vmul.f32 %v1454, %v1674
      %v1689 = vmul.f32 %v1432, %v1674
      %v1690 = vmul.f32 %v1455, %v1678
      %v1691 = vmul.f32 %v1435, %v1678
      %v1692 = vmul.f32 %v1456, %v1682
      %v1693 = vmul.f32 %v1438, %v1682
      %v1694 = vmul.f32 %v1457, %v1686
      %v1695 = vmul.f32 %v1441, %v1686
      %1704 = vrot.lane.b32.xlu0 %v1688, 126
      %v1705 = vpop.permute.xlu0 %1704
      %1706 = vrot.lane.b32.xlu0 %v1689, 126
      %v1707 = vpop.permute.xlu0 %1706
      %1708 = vrot.lane.b32.xlu0 %v1690, 126
      %v1709 = vpop.permute.xlu0 %1708
      %1710 = vrot.lane.b32.xlu0 %v1691, 126
      %v1711 = vpop.permute.xlu0 %1710
      %1712 = vrot.lane.b32.xlu0 %v1692, 126
      %v1713 = vpop.permute.xlu0 %1712
      %1714 = vrot.lane.b32.xlu0 %v1693, 126
      %v1715 = vpop.permute.xlu0 %1714
      %1716 = vrot.lane.b32.xlu0 %v1694, 126
      %v1717 = vpop.permute.xlu0 %1716
      %1718 = vrot.lane.b32.xlu0 %v1695, 126
      %v1719 = vpop.permute.xlu0 %1718
      %v1728 = vadd.f32 %v1639, %v1705
      %v1729 = vadd.f32 %v1640, %v1707
      %v1730 = vadd.f32 %v1641, %v1709
      %v1731 = vadd.f32 %v1642, %v1711
      %v1732 = vadd.f32 %v1643, %v1713
      %v1733 = vadd.f32 %v1644, %v1715
      %v1734 = vadd.f32 %v1645, %v1717
      %v1735 = vadd.f32 %v1646, %v1719
      %s1736 = scalar_lea.vmem %s4, 12
      %v1737 = vld [vmem:[%s1736] sm:$0x1]
      %v1738 = vld [vmem:[%s1736 + $0x1] sm:$0x1]
      %v1739 = vld [vmem:[%s1736 + $0x2] sm:$0x1]
      %v1740 = vld [vmem:[%s1736 + $0x3] sm:$0x1]
      %v1745 = vlaneseq
      %v1746 = vshrl.u32 %v1745, 7
      %v1747 = vsub.s32 0, %v1746
      %v1748 = vrot.slane %v1737, %v1747
      %v1749 = vlaneseq
      %v1750 = vshrl.u32 %v1749, 7
      %v1751 = vsub.s32 0, %v1750
      %v1752 = vrot.slane %v1738, %v1751
      %v1753 = vlaneseq
      %v1754 = vshrl.u32 %v1753, 7
      %v1755 = vsub.s32 0, %v1754
      %v1756 = vrot.slane %v1739, %v1755
      %v1757 = vlaneseq
      %v1758 = vshrl.u32 %v1757, 7
      %v1759 = vsub.s32 0, %v1758
      %v1760 = vrot.slane %v1740, %v1759
      %1761 = vset.pattern.permute.xlu0 0
      %1762 = vperm.xlu0 %1761, %v1748
      %v1763 = vpop.permute.xlu0 %1762
      %1765 = vset.pattern.permute.xlu0 0
      %1766 = vperm.xlu0 %1765, %v1752
      %v1767 = vpop.permute.xlu0 %1766
      %1769 = vset.pattern.permute.xlu0 0
      %1770 = vperm.xlu0 %1769, %v1756
      %v1771 = vpop.permute.xlu0 %1770
      %1773 = vset.pattern.permute.xlu0 0
      %1774 = vperm.xlu0 %1773, %v1760
      %v1775 = vpop.permute.xlu0 %1774
      %v1777 = vmul.f32 %v1454, %v1763
      %v1778 = vmul.f32 %v1432, %v1763
      %v1779 = vmul.f32 %v1458, %v1763
      %v1780 = vmul.f32 %v1455, %v1767
      %v1781 = vmul.f32 %v1435, %v1767
      %v1782 = vmul.f32 %v1459, %v1767
      %v1783 = vmul.f32 %v1456, %v1771
      %v1784 = vmul.f32 %v1438, %v1771
      %v1785 = vmul.f32 %v1460, %v1771
      %v1786 = vmul.f32 %v1457, %v1775
      %v1787 = vmul.f32 %v1441, %v1775
      %v1788 = vmul.f32 %v1461, %v1775
      %v1801 = vrot.slane %v1777, 1
      %v1802 = vrot.slane %v1778, 1
      %v1803 = vsel %vm750, %v1801, %v1802
      %v1804 = vrot.slane %v1779, 1
      %v1805 = vsel %vm750, %v1802, %v1804
      %v1806 = vrot.slane %v1780, 1
      %v1807 = vrot.slane %v1781, 1
      %v1808 = vsel %vm750, %v1806, %v1807
      %v1809 = vrot.slane %v1782, 1
      %v1810 = vsel %vm750, %v1807, %v1809
      %v1811 = vrot.slane %v1783, 1
      %v1812 = vrot.slane %v1784, 1
      %v1813 = vsel %vm750, %v1811, %v1812
      %v1814 = vrot.slane %v1785, 1
      %v1815 = vsel %vm750, %v1812, %v1814
      %v1816 = vrot.slane %v1786, 1
      %v1817 = vrot.slane %v1787, 1
      %v1818 = vsel %vm750, %v1816, %v1817
      %v1819 = vrot.slane %v1788, 1
      %v1820 = vsel %vm750, %v1817, %v1819
      %v1829 = vadd.f32 %v1728, %v1803
      %v1830 = vadd.f32 %v1729, %v1805
      %v1831 = vadd.f32 %v1730, %v1808
      %v1832 = vadd.f32 %v1731, %v1810
      %v1833 = vadd.f32 %v1732, %v1813
      %v1834 = vadd.f32 %v1733, %v1815
      %v1835 = vadd.f32 %v1734, %v1818
      %v1836 = vadd.f32 %v1735, %v1820
      %s1837 = scalar_lea.vmem %s4, 16
      %v1838 = vld [vmem:[%s1837] sm:$0x1]
      %v1839 = vld [vmem:[%s1837 + $0x1] sm:$0x1]
      %v1840 = vld [vmem:[%s1837 + $0x2] sm:$0x1]
      %v1841 = vld [vmem:[%s1837 + $0x3] sm:$0x1]
      %v1846 = vlaneseq
      %v1847 = vshrl.u32 %v1846, 7
      %v1848 = vsub.s32 0, %v1847
      %v1849 = vrot.slane %v1838, %v1848
      %v1850 = vlaneseq
      %v1851 = vshrl.u32 %v1850, 7
      %v1852 = vsub.s32 0, %v1851
      %v1853 = vrot.slane %v1839, %v1852
      %v1854 = vlaneseq
      %v1855 = vshrl.u32 %v1854, 7
      %v1856 = vsub.s32 0, %v1855
      %v1857 = vrot.slane %v1840, %v1856
      %v1858 = vlaneseq
      %v1859 = vshrl.u32 %v1858, 7
      %v1860 = vsub.s32 0, %v1859
      %v1861 = vrot.slane %v1841, %v1860
      %1862 = vset.pattern.permute.xlu0 0
      %1863 = vperm.xlu0 %1862, %v1849
      %v1864 = vpop.permute.xlu0 %1863
      %1866 = vset.pattern.permute.xlu0 0
      %1867 = vperm.xlu0 %1866, %v1853
      %v1868 = vpop.permute.xlu0 %1867
      %1870 = vset.pattern.permute.xlu0 0
      %1871 = vperm.xlu0 %1870, %v1857
      %v1872 = vpop.permute.xlu0 %1871
      %1874 = vset.pattern.permute.xlu0 0
      %1875 = vperm.xlu0 %1874, %v1861
      %v1876 = vpop.permute.xlu0 %1875
      %v1878 = vmul.f32 %v1454, %v1864
      %v1879 = vmul.f32 %v1432, %v1864
      %v1880 = vmul.f32 %v1458, %v1864
      %v1881 = vmul.f32 %v1455, %v1868
      %v1882 = vmul.f32 %v1435, %v1868
      %v1883 = vmul.f32 %v1459, %v1868
      %v1884 = vmul.f32 %v1456, %v1872
      %v1885 = vmul.f32 %v1438, %v1872
      %v1886 = vmul.f32 %v1460, %v1872
      %v1887 = vmul.f32 %v1457, %v1876
      %v1888 = vmul.f32 %v1441, %v1876
      %v1889 = vmul.f32 %v1461, %v1876
      %v1902 = vrot.slane %v1878, 1
      %v1903 = vrot.slane %v1879, 1
      %v1904 = vsel %vm750, %v1902, %v1903
      %v1905 = vrot.slane %v1880, 1
      %v1906 = vsel %vm750, %v1903, %v1905
      %v1907 = vrot.slane %v1881, 1
      %v1908 = vrot.slane %v1882, 1
      %v1909 = vsel %vm750, %v1907, %v1908
      %v1910 = vrot.slane %v1883, 1
      %v1911 = vsel %vm750, %v1908, %v1910
      %v1912 = vrot.slane %v1884, 1
      %v1913 = vrot.slane %v1885, 1
      %v1914 = vsel %vm750, %v1912, %v1913
      %v1915 = vrot.slane %v1886, 1
      %v1916 = vsel %vm750, %v1913, %v1915
      %v1917 = vrot.slane %v1887, 1
      %v1918 = vrot.slane %v1888, 1
      %v1919 = vsel %vm750, %v1917, %v1918
      %v1920 = vrot.slane %v1889, 1
      %v1921 = vsel %vm750, %v1918, %v1920
      %1922 = vrot.lane.b32.xlu0 %v1904, 127
      %v1923 = vpop.permute.xlu0 %1922
      %1924 = vrot.lane.b32.xlu0 %v1906, 127
      %v1925 = vpop.permute.xlu0 %1924
      %1926 = vrot.lane.b32.xlu0 %v1909, 127
      %v1927 = vpop.permute.xlu0 %1926
      %1928 = vrot.lane.b32.xlu0 %v1911, 127
      %v1929 = vpop.permute.xlu0 %1928
      %1930 = vrot.lane.b32.xlu0 %v1914, 127
      %v1931 = vpop.permute.xlu0 %1930
      %1932 = vrot.lane.b32.xlu0 %v1916, 127
      %v1933 = vpop.permute.xlu0 %1932
      %1934 = vrot.lane.b32.xlu0 %v1919, 127
      %v1935 = vpop.permute.xlu0 %1934
      %1936 = vrot.lane.b32.xlu0 %v1921, 127
      %v1937 = vpop.permute.xlu0 %1936
      %v1946 = vadd.f32 %v1829, %v1923
      %v1947 = vadd.f32 %v1830, %v1925
      %v1948 = vadd.f32 %v1831, %v1927
      %v1949 = vadd.f32 %v1832, %v1929
      %v1950 = vadd.f32 %v1833, %v1931
      %v1951 = vadd.f32 %v1834, %v1933
      %v1952 = vadd.f32 %v1835, %v1935
      %v1953 = vadd.f32 %v1836, %v1937
      %s1954 = scalar_lea.vmem %s4, 20
      %v1955 = vld [vmem:[%s1954] sm:$0x1]
      %v1956 = vld [vmem:[%s1954 + $0x1] sm:$0x1]
      %v1957 = vld [vmem:[%s1954 + $0x2] sm:$0x1]
      %v1958 = vld [vmem:[%s1954 + $0x3] sm:$0x1]
      %v1963 = vlaneseq
      %v1964 = vshrl.u32 %v1963, 7
      %v1965 = vsub.s32 0, %v1964
      %v1966 = vrot.slane %v1955, %v1965
      %v1967 = vlaneseq
      %v1968 = vshrl.u32 %v1967, 7
      %v1969 = vsub.s32 0, %v1968
      %v1970 = vrot.slane %v1956, %v1969
      %v1971 = vlaneseq
      %v1972 = vshrl.u32 %v1971, 7
      %v1973 = vsub.s32 0, %v1972
      %v1974 = vrot.slane %v1957, %v1973
      %v1975 = vlaneseq
      %v1976 = vshrl.u32 %v1975, 7
      %v1977 = vsub.s32 0, %v1976
      %v1978 = vrot.slane %v1958, %v1977
      %1979 = vset.pattern.permute.xlu0 0
      %1980 = vperm.xlu0 %1979, %v1966
      %v1981 = vpop.permute.xlu0 %1980
      %1983 = vset.pattern.permute.xlu0 0
      %1984 = vperm.xlu0 %1983, %v1970
      %v1985 = vpop.permute.xlu0 %1984
      %1987 = vset.pattern.permute.xlu0 0
      %1988 = vperm.xlu0 %1987, %v1974
      %v1989 = vpop.permute.xlu0 %1988
      %1991 = vset.pattern.permute.xlu0 0
      %1992 = vperm.xlu0 %1991, %v1978
      %v1993 = vpop.permute.xlu0 %1992
      %v1995 = vmul.f32 %v1454, %v1981
      %v1996 = vmul.f32 %v1432, %v1981
      %v1997 = vmul.f32 %v1458, %v1981
      %v1998 = vmul.f32 %v1455, %v1985
      %v1999 = vmul.f32 %v1435, %v1985
      %v2000 = vmul.f32 %v1459, %v1985
      %v2001 = vmul.f32 %v1456, %v1989
      %v2002 = vmul.f32 %v1438, %v1989
      %v2003 = vmul.f32 %v1460, %v1989
      %v2004 = vmul.f32 %v1457, %v1993
      %v2005 = vmul.f32 %v1441, %v1993
      %v2006 = vmul.f32 %v1461, %v1993
      %v2019 = vrot.slane %v1995, 1
      %v2020 = vrot.slane %v1996, 1
      %v2021 = vsel %vm750, %v2019, %v2020
      %v2022 = vrot.slane %v1997, 1
      %v2023 = vsel %vm750, %v2020, %v2022
      %v2024 = vrot.slane %v1998, 1
      %v2025 = vrot.slane %v1999, 1
      %v2026 = vsel %vm750, %v2024, %v2025
      %v2027 = vrot.slane %v2000, 1
      %v2028 = vsel %vm750, %v2025, %v2027
      %v2029 = vrot.slane %v2001, 1
      %v2030 = vrot.slane %v2002, 1
      %v2031 = vsel %vm750, %v2029, %v2030
      %v2032 = vrot.slane %v2003, 1
      %v2033 = vsel %vm750, %v2030, %v2032
      %v2034 = vrot.slane %v2004, 1
      %v2035 = vrot.slane %v2005, 1
      %v2036 = vsel %vm750, %v2034, %v2035
      %v2037 = vrot.slane %v2006, 1
      %v2038 = vsel %vm750, %v2035, %v2037
      %2039 = vrot.lane.b32.xlu0 %v2021, 126
      %v2040 = vpop.permute.xlu0 %2039
      %2041 = vrot.lane.b32.xlu0 %v2023, 126
      %v2042 = vpop.permute.xlu0 %2041
      %2043 = vrot.lane.b32.xlu0 %v2026, 126
      %v2044 = vpop.permute.xlu0 %2043
      %2045 = vrot.lane.b32.xlu0 %v2028, 126
      %v2046 = vpop.permute.xlu0 %2045
      %2047 = vrot.lane.b32.xlu0 %v2031, 126
      %v2048 = vpop.permute.xlu0 %2047
      %2049 = vrot.lane.b32.xlu0 %v2033, 126
      %v2050 = vpop.permute.xlu0 %2049
      %2051 = vrot.lane.b32.xlu0 %v2036, 126
      %v2052 = vpop.permute.xlu0 %2051
      %2053 = vrot.lane.b32.xlu0 %v2038, 126
      %v2054 = vpop.permute.xlu0 %2053
      %v2063 = vadd.f32 %v1946, %v2040
      %v2064 = vadd.f32 %v1947, %v2042
      %v2065 = vadd.f32 %v1948, %v2044
      %v2066 = vadd.f32 %v1949, %v2046
      %v2067 = vadd.f32 %v1950, %v2048
      %v2068 = vadd.f32 %v1951, %v2050
      %v2069 = vadd.f32 %v1952, %v2052
      %v2070 = vadd.f32 %v1953, %v2054
      %s2071 = scalar_lea.vmem %s4, 24
      %v2072 = vld [vmem:[%s2071] sm:$0x1]
      %v2073 = vld [vmem:[%s2071 + $0x1] sm:$0x1]
      %v2074 = vld [vmem:[%s2071 + $0x2] sm:$0x1]
      %v2075 = vld [vmem:[%s2071 + $0x3] sm:$0x1]
      %v2080 = vlaneseq
      %v2081 = vshrl.u32 %v2080, 7
      %v2082 = vsub.s32 0, %v2081
      %v2083 = vrot.slane %v2072, %v2082
      %v2084 = vlaneseq
      %v2085 = vshrl.u32 %v2084, 7
      %v2086 = vsub.s32 0, %v2085
      %v2087 = vrot.slane %v2073, %v2086
      %v2088 = vlaneseq
      %v2089 = vshrl.u32 %v2088, 7
      %v2090 = vsub.s32 0, %v2089
      %v2091 = vrot.slane %v2074, %v2090
      %v2092 = vlaneseq
      %v2093 = vshrl.u32 %v2092, 7
      %v2094 = vsub.s32 0, %v2093
      %v2095 = vrot.slane %v2075, %v2094
      %2096 = vset.pattern.permute.xlu0 0
      %2097 = vperm.xlu0 %2096, %v2083
      %v2098 = vpop.permute.xlu0 %2097
      %2100 = vset.pattern.permute.xlu0 0
      %2101 = vperm.xlu0 %2100, %v2087
      %v2102 = vpop.permute.xlu0 %2101
      %2104 = vset.pattern.permute.xlu0 0
      %2105 = vperm.xlu0 %2104, %v2091
      %v2106 = vpop.permute.xlu0 %2105
      %2108 = vset.pattern.permute.xlu0 0
      %2109 = vperm.xlu0 %2108, %v2095
      %v2110 = vpop.permute.xlu0 %2109
      %v2112 = vmul.f32 %v1454, %v2098
      %v2113 = vmul.f32 %v1432, %v2098
      %v2114 = vmul.f32 %v1458, %v2098
      %v2115 = vmul.f32 %v1455, %v2102
      %v2116 = vmul.f32 %v1435, %v2102
      %v2117 = vmul.f32 %v1459, %v2102
      %v2118 = vmul.f32 %v1456, %v2106
      %v2119 = vmul.f32 %v1438, %v2106
      %v2120 = vmul.f32 %v1460, %v2106
      %v2121 = vmul.f32 %v1457, %v2110
      %v2122 = vmul.f32 %v1441, %v2110
      %v2123 = vmul.f32 %v1461, %v2110
      %v2136 = vrot.slane %v2112, 2
      %v2137 = vrot.slane %v2113, 2
      %v2138 = vsel %vm1086, %v2136, %v2137
      %v2139 = vrot.slane %v2114, 2
      %v2140 = vsel %vm1086, %v2137, %v2139
      %v2141 = vrot.slane %v2115, 2
      %v2142 = vrot.slane %v2116, 2
      %v2143 = vsel %vm1086, %v2141, %v2142
      %v2144 = vrot.slane %v2117, 2
      %v2145 = vsel %vm1086, %v2142, %v2144
      %v2146 = vrot.slane %v2118, 2
      %v2147 = vrot.slane %v2119, 2
      %v2148 = vsel %vm1086, %v2146, %v2147
      %v2149 = vrot.slane %v2120, 2
      %v2150 = vsel %vm1086, %v2147, %v2149
      %v2151 = vrot.slane %v2121, 2
      %v2152 = vrot.slane %v2122, 2
      %v2153 = vsel %vm1086, %v2151, %v2152
      %v2154 = vrot.slane %v2123, 2
      %v2155 = vsel %vm1086, %v2152, %v2154
      %v2164 = vadd.f32 %v2063, %v2138
      %v2165 = vadd.f32 %v2064, %v2140
      %v2166 = vadd.f32 %v2065, %v2143
      %v2167 = vadd.f32 %v2066, %v2145
      %v2168 = vadd.f32 %v2067, %v2148
      %v2169 = vadd.f32 %v2068, %v2150
      %v2170 = vadd.f32 %v2069, %v2153
      %v2171 = vadd.f32 %v2070, %v2155
      %s2172 = scalar_lea.vmem %s4, 28
      %v2173 = vld [vmem:[%s2172] sm:$0x1]
      %v2174 = vld [vmem:[%s2172 + $0x1] sm:$0x1]
      %v2175 = vld [vmem:[%s2172 + $0x2] sm:$0x1]
      %v2176 = vld [vmem:[%s2172 + $0x3] sm:$0x1]
      %v2181 = vlaneseq
      %v2182 = vshrl.u32 %v2181, 7
      %v2183 = vsub.s32 0, %v2182
      %v2184 = vrot.slane %v2173, %v2183
      %v2185 = vlaneseq
      %v2186 = vshrl.u32 %v2185, 7
      %v2187 = vsub.s32 0, %v2186
      %v2188 = vrot.slane %v2174, %v2187
      %v2189 = vlaneseq
      %v2190 = vshrl.u32 %v2189, 7
      %v2191 = vsub.s32 0, %v2190
      %v2192 = vrot.slane %v2175, %v2191
      %v2193 = vlaneseq
      %v2194 = vshrl.u32 %v2193, 7
      %v2195 = vsub.s32 0, %v2194
      %v2196 = vrot.slane %v2176, %v2195
      %2197 = vset.pattern.permute.xlu0 0
      %2198 = vperm.xlu0 %2197, %v2184
      %v2199 = vpop.permute.xlu0 %2198
      %2201 = vset.pattern.permute.xlu0 0
      %2202 = vperm.xlu0 %2201, %v2188
      %v2203 = vpop.permute.xlu0 %2202
      %2205 = vset.pattern.permute.xlu0 0
      %2206 = vperm.xlu0 %2205, %v2192
      %v2207 = vpop.permute.xlu0 %2206
      %2209 = vset.pattern.permute.xlu0 0
      %2210 = vperm.xlu0 %2209, %v2196
      %v2211 = vpop.permute.xlu0 %2210
      %v2213 = vmul.f32 %v1454, %v2199
      %v2214 = vmul.f32 %v1432, %v2199
      %v2215 = vmul.f32 %v1458, %v2199
      %v2216 = vmul.f32 %v1455, %v2203
      %v2217 = vmul.f32 %v1435, %v2203
      %v2218 = vmul.f32 %v1459, %v2203
      %v2219 = vmul.f32 %v1456, %v2207
      %v2220 = vmul.f32 %v1438, %v2207
      %v2221 = vmul.f32 %v1460, %v2207
      %v2222 = vmul.f32 %v1457, %v2211
      %v2223 = vmul.f32 %v1441, %v2211
      %v2224 = vmul.f32 %v1461, %v2211
      %v2237 = vrot.slane %v2213, 2
      %v2238 = vrot.slane %v2214, 2
      %v2239 = vsel %vm1086, %v2237, %v2238
      %v2240 = vrot.slane %v2215, 2
      %v2241 = vsel %vm1086, %v2238, %v2240
      %v2242 = vrot.slane %v2216, 2
      %v2243 = vrot.slane %v2217, 2
      %v2244 = vsel %vm1086, %v2242, %v2243
      %v2245 = vrot.slane %v2218, 2
      %v2246 = vsel %vm1086, %v2243, %v2245
      %v2247 = vrot.slane %v2219, 2
      %v2248 = vrot.slane %v2220, 2
      %v2249 = vsel %vm1086, %v2247, %v2248
      %v2250 = vrot.slane %v2221, 2
      %v2251 = vsel %vm1086, %v2248, %v2250
      %v2252 = vrot.slane %v2222, 2
      %v2253 = vrot.slane %v2223, 2
      %v2254 = vsel %vm1086, %v2252, %v2253
      %v2255 = vrot.slane %v2224, 2
      %v2256 = vsel %vm1086, %v2253, %v2255
      %2257 = vrot.lane.b32.xlu0 %v2239, 127
      %v2258 = vpop.permute.xlu0 %2257
      %2259 = vrot.lane.b32.xlu0 %v2241, 127
      %v2260 = vpop.permute.xlu0 %2259
      %2261 = vrot.lane.b32.xlu0 %v2244, 127
      %v2262 = vpop.permute.xlu0 %2261
      %2263 = vrot.lane.b32.xlu0 %v2246, 127
      %v2264 = vpop.permute.xlu0 %2263
      %2265 = vrot.lane.b32.xlu0 %v2249, 127
      %v2266 = vpop.permute.xlu0 %2265
      %2267 = vrot.lane.b32.xlu0 %v2251, 127
      %v2268 = vpop.permute.xlu0 %2267
      %2269 = vrot.lane.b32.xlu0 %v2254, 127
      %v2270 = vpop.permute.xlu0 %2269
      %2271 = vrot.lane.b32.xlu0 %v2256, 127
      %v2272 = vpop.permute.xlu0 %2271
      %v2281 = vadd.f32 %v2164, %v2258
      %v2282 = vadd.f32 %v2165, %v2260
      %v2283 = vadd.f32 %v2166, %v2262
      %v2284 = vadd.f32 %v2167, %v2264
      %v2285 = vadd.f32 %v2168, %v2266
      %v2286 = vadd.f32 %v2169, %v2268
      %v2287 = vadd.f32 %v2170, %v2270
      %v2288 = vadd.f32 %v2171, %v2272
      %s2289 = scalar_lea.vmem %s4, 32
      %v2290 = vld [vmem:[%s2289] sm:$0x1]
      %v2291 = vld [vmem:[%s2289 + $0x1] sm:$0x1]
      %v2292 = vld [vmem:[%s2289 + $0x2] sm:$0x1]
      %v2293 = vld [vmem:[%s2289 + $0x3] sm:$0x1]
      %v2298 = vlaneseq
      %v2299 = vshrl.u32 %v2298, 7
      %v2300 = vsub.s32 0, %v2299
      %v2301 = vrot.slane %v2290, %v2300
      %v2302 = vlaneseq
      %v2303 = vshrl.u32 %v2302, 7
      %v2304 = vsub.s32 0, %v2303
      %v2305 = vrot.slane %v2291, %v2304
      %v2306 = vlaneseq
      %v2307 = vshrl.u32 %v2306, 7
      %v2308 = vsub.s32 0, %v2307
      %v2309 = vrot.slane %v2292, %v2308
      %v2310 = vlaneseq
      %v2311 = vshrl.u32 %v2310, 7
      %v2312 = vsub.s32 0, %v2311
      %v2313 = vrot.slane %v2293, %v2312
      %2314 = vset.pattern.permute.xlu0 0
      %2315 = vperm.xlu0 %2314, %v2301
      %v2316 = vpop.permute.xlu0 %2315
      %2318 = vset.pattern.permute.xlu0 0
      %2319 = vperm.xlu0 %2318, %v2305
      %v2320 = vpop.permute.xlu0 %2319
      %2322 = vset.pattern.permute.xlu0 0
      %2323 = vperm.xlu0 %2322, %v2309
      %v2324 = vpop.permute.xlu0 %2323
      %2326 = vset.pattern.permute.xlu0 0
      %2327 = vperm.xlu0 %2326, %v2313
      %v2328 = vpop.permute.xlu0 %2327
      %v2330 = vmul.f32 %v1454, %v2316
      %v2331 = vmul.f32 %v1432, %v2316
      %v2332 = vmul.f32 %v1458, %v2316
      %v2333 = vmul.f32 %v1455, %v2320
      %v2334 = vmul.f32 %v1435, %v2320
      %v2335 = vmul.f32 %v1459, %v2320
      %v2336 = vmul.f32 %v1456, %v2324
      %v2337 = vmul.f32 %v1438, %v2324
      %v2338 = vmul.f32 %v1460, %v2324
      %v2339 = vmul.f32 %v1457, %v2328
      %v2340 = vmul.f32 %v1441, %v2328
      %v2341 = vmul.f32 %v1461, %v2328
      %v2354 = vrot.slane %v2330, 2
      %v2355 = vrot.slane %v2331, 2
      %v2356 = vsel %vm1086, %v2354, %v2355
      %v2357 = vrot.slane %v2332, 2
      %v2358 = vsel %vm1086, %v2355, %v2357
      %v2359 = vrot.slane %v2333, 2
      %v2360 = vrot.slane %v2334, 2
      %v2361 = vsel %vm1086, %v2359, %v2360
      %v2362 = vrot.slane %v2335, 2
      %v2363 = vsel %vm1086, %v2360, %v2362
      %v2364 = vrot.slane %v2336, 2
      %v2365 = vrot.slane %v2337, 2
      %v2366 = vsel %vm1086, %v2364, %v2365
      %v2367 = vrot.slane %v2338, 2
      %v2368 = vsel %vm1086, %v2365, %v2367
      %v2369 = vrot.slane %v2339, 2
      %v2370 = vrot.slane %v2340, 2
      %v2371 = vsel %vm1086, %v2369, %v2370
      %v2372 = vrot.slane %v2341, 2
      %v2373 = vsel %vm1086, %v2370, %v2372
      %2374 = vrot.lane.b32.xlu0 %v2356, 126
      %v2375 = vpop.permute.xlu0 %2374
      %2376 = vrot.lane.b32.xlu0 %v2358, 126
      %v2377 = vpop.permute.xlu0 %2376
      %2378 = vrot.lane.b32.xlu0 %v2361, 126
      %v2379 = vpop.permute.xlu0 %2378
      %2380 = vrot.lane.b32.xlu0 %v2363, 126
      %v2381 = vpop.permute.xlu0 %2380
      %2382 = vrot.lane.b32.xlu0 %v2366, 126
      %v2383 = vpop.permute.xlu0 %2382
      %2384 = vrot.lane.b32.xlu0 %v2368, 126
      %v2385 = vpop.permute.xlu0 %2384
      %2386 = vrot.lane.b32.xlu0 %v2371, 126
      %v2387 = vpop.permute.xlu0 %2386
      %2388 = vrot.lane.b32.xlu0 %v2373, 126
      %v2389 = vpop.permute.xlu0 %2388
      %v2398 = vadd.f32 %v2281, %v2375
      %v2399 = vadd.f32 %v2282, %v2377
      %v2400 = vadd.f32 %v2283, %v2379
      %v2401 = vadd.f32 %v2284, %v2381
      %v2402 = vadd.f32 %v2285, %v2383
      %v2403 = vadd.f32 %v2286, %v2385
      %v2404 = vadd.f32 %v2287, %v2387
      %v2405 = vadd.f32 %v2288, %v2389
      %2406 = vst.msk [vmem:[%s311] sm:$0xff] %vm1357, %v2398
      %2407 = vst.msk [vmem:[%s311 + $0x8] sm:$0xff] %vm1357, %v2399
      %2408 = vst.msk [vmem:[%s311 + $0x10] sm:$0xff] %vm1357, %v2400
      %2409 = vst.msk [vmem:[%s311 + $0x18] sm:$0xff] %vm1357, %v2401
      %2410 = vst.msk [vmem:[%s311 + $0x20] sm:$0xff] %vm1357, %v2402
      %2411 = vst.msk [vmem:[%s311 + $0x28] sm:$0xff] %vm1357, %v2403
      %2412 = vst.msk [vmem:[%s311 + $0x30] sm:$0xff] %vm1357, %v2404
      %2413 = vst.msk [vmem:[%s311 + $0x38] sm:$0xff] %vm1357, %v2405
      %p2414 = scmp.lt.s32.totalorder %s19, 1
      %s2415 = scalar_select %p2414, %s19, 1
      %s2416 = smul.addr %s2415, 8
      %s2417 = smul.addr %s2416, 8
      %s2418 = scalar_lea.vmem %s6, %s2417
      %p2419 = scmp.lt.s32.totalorder %s19, 1
      %s2420 = scalar_select %p2419, %s19, 1
      %s2421 = smul.addr %s2420, 8
      %s2422 = smul.addr %s2421, 8
      %s2423 = scalar_lea.vmem %s7, %s2422
      // Predicated region
      $region45: #{fcfe_forward.7} parent=43 // pred_check
        %p2424 = pneg %p173
      $region46: #{fcfe_forward.7} parent=43 // pred_check_branch
        %2426 = sbr.rel (%p2424) target = $region48
      $region47: #{fcfe_forward.7} parent=43 // pred_region
        _
      $region48: #{fcfe_forward.7} parent=43 // pred_fallthru
        _
      // Predicated region
      $region49: #{fcfe_forward.7} parent=43 // pred_check
        %p2427 = pneg %p199
      $region50: #{fcfe_forward.7} parent=43 // pred_check_branch
        %2429 = sbr.rel (%p2427) target = $region52
      $region51: #{fcfe_forward.7} parent=43 // pred_region
        _
      $region52: #{fcfe_forward.7} parent=43 // pred_fallthru
        _
    $region44: #{fcfe_forward.7} parent=5 // pred_fallthru
      _
    %p2430 = scmp.le.s32.totalorder 2, %s14
    // Predicated region
    $region53: #{fcfe_forward.7} parent=5 // pred_check
      %p2431 = pneg %p2430
    $region54: #{fcfe_forward.7} parent=5 // pred_check_branch
      %2433 = sbr.rel (%p2431) target = $region56
    $region55: #{fcfe_forward.7} parent=5 // pred_region
      %s2434 = ssub.s32 %s14, 2
      // Predicated region
      $region57: #{fcfe_forward.7} parent=55 // pred_check
        %p2435 = pneg %p179
      $region58: #{fcfe_forward.7} parent=55 // pred_check_branch
        %2437 = sbr.rel (%p2435) target = $region60
      $region59: #{fcfe_forward.7} parent=55 // pred_region
        %p2438 = scmp.lt.s32.totalorder %s20, 1
        %s2439 = scalar_select %p2438, %s20, 1
        %s2440 = smul.addr %s2439, 8
        %s2441 = smul.addr %s2440, 8
        %s2442 = scalar_lea.vmem %s6, %s2441
      $region60: #{fcfe_forward.7} parent=55 // pred_fallthru
        _
      // Predicated region
      $region61: #{fcfe_forward.7} parent=55 // pred_check
        %p2443 = pneg %p205
      $region62: #{fcfe_forward.7} parent=55 // pred_check_branch
        %2445 = sbr.rel (%p2443) target = $region64
      $region63: #{fcfe_forward.7} parent=55 // pred_region
        %p2446 = scmp.lt.s32.totalorder %s20, 1
        %s2447 = scalar_select %p2446, %s20, 1
        %s2448 = smul.addr %s2447, 8
        %s2449 = smul.addr %s2448, 8
        %s2450 = scalar_lea.vmem %s7, %s2449
      $region64: #{fcfe_forward.7} parent=55 // pred_fallthru
        _
    $region56: #{fcfe_forward.7} parent=5 // pred_fallthru
      _
  $region6: #{fcfe_forward.7} parent=0 // loop_footer
    %s18 = sadd.s32 1, %s14
  $region7: #{fcfe_forward.7} parent=0 // loop_footer_branch
    %13 = sbr.rel target = $region3
  $region8: #{fcfe_forward.7} parent=0 // loop_exit
    _

// kernel: fcfe_forward.8
$region0: #{fcfe_forward.8}
  #allocation0 [shape = 'u32[]', space=smem, size = 0x4, offset = 0x4, fixed_abs, tag = 'smem constant byte address 0x4 - core index']
  #allocation1 [shape = 'u32[144,128]{1,0:T(1,128)}', space=vmem, size = 0x12000, scoped, tag = 'internal scratch']
  %s0 = inlined_call_operand.vmem [shape: f32[2,8,256], index: 0, kind: input, shape index: {}]
  %s1 = inlined_call_operand.vmem [shape: f32[2,8,256], index: 1, kind: input, shape index: {}]
  %s2 = inlined_call_operand.vmem [shape: f32[8,8], index: 2, kind: input, shape index: {}]
  %s3 = inlined_call_operand.vmem [shape: f32[8,1], index: 3, kind: input, shape index: {}]
  %s4 = inlined_call_operand.vmem [shape: f32[8,8], index: 4, kind: input, shape index: {}]
  %s5 = inlined_call_operand.vmem [shape: f32[8,1], index: 5, kind: input, shape index: {}]
  %s6 = inlined_call_operand.vmem [shape: f32[8,8], index: 6, kind: input, shape index: {}]
  %s7 = inlined_call_operand.vmem [shape: f32[8,1], index: 7, kind: input, shape index: {}]
  %s8 = inlined_call_operand.vmem [shape: f32[8,8], index: 8, kind: input, shape index: {}]
  %s9 = inlined_call_operand.vmem [shape: f32[8,1], index: 9, kind: input, shape index: {}]
  %s10 = inlined_call_operand.vmem [shape: f32[2,8,256], index: 10, kind: output, shape index: {}]
  %s11 = sld [smem:[#allocation0]]
  $region183: #{fcfe_forward.8} parent=0
    _
  %s13 = ssub.s32 1, %s11
  %s14 = scalar_select 0, %s13, %s11
  $region1: #{fcfe_forward.8} parent=0
    #allocation2 [shape = 'u8[16384]{0}', space=vmem, size = 0x4000, scoped, tag = 'input window, operand 0']
    #allocation3 [shape = 'u8[16384]{0}', space=vmem, size = 0x4000, scoped, tag = 'input window, operand 1']
    #allocation4 [shape = 'u8[16384]{0}', space=vmem, size = 0x4000, scoped, tag = 'output window, operand 0']
    loop: start=0, step=1, limit=4
    $region2: #{fcfe_forward.8} parent=1 // loop_pre_header
      _
    $region3: #{fcfe_forward.8} parent=1 // loop_header
      %s16 = sphi 0, %s20
      %p17 = scmp.ge.s32.totalorder %s16, 4
      %s26 = sphi 0, %s28
      %s29 = sphi 0, %s26
      %s30 = sphi 0, %s29
      %s46 = sphi 0, %s30
      %s52 = sphi 0, %s54
      %s55 = sphi 0, %s52
      %s56 = sphi 0, %s55
      %s72 = sphi 0, %s56
      %s76 = sphi 0, %s76
      %s78 = sphi 0, %s76
      %s79 = sphi 0, %s78
      %s93 = sphi 0, %s79
      %s97 = sphi 0, %s97
      %s99 = sphi 0, %s97
      %s100 = sphi 0, %s99
      %s114 = sphi 0, %s100
      %s118 = sphi 0, %s118
      %s120 = sphi 0, %s118
      %s121 = sphi 0, %s120
      %s135 = sphi 0, %s121
      %s139 = sphi 0, %s139
      %s141 = sphi 0, %s139
      %s142 = sphi 0, %s141
      %s156 = sphi 0, %s142
      %s160 = sphi 0, %s160
      %s162 = sphi 0, %s160
      %s163 = sphi 0, %s162
      %s177 = sphi 0, %s163
      %s181 = sphi 0, %s181
      %s183 = sphi 0, %s181
      %s184 = sphi 0, %s183
      %s198 = sphi 0, %s184
      %s202 = sphi 0, %s202
      %s204 = sphi 0, %s202
      %s205 = sphi 0, %s204
      %s219 = sphi 0, %s205
      %s223 = sphi 0, %s223
      %s225 = sphi 0, %s223
      %s226 = sphi 0, %s225
      %s240 = sphi 0, %s226
      %s246 = sphi 0, %s248
      %s249 = sphi 0, %s246
      %s250 = sphi 0, %s249
      %s266 = sphi 0, %s250
    $region4: #{fcfe_forward.8} parent=1 // loop_header_branch
      %19 = sbr.rel (%p17) target = $region8
    $region5: #{fcfe_forward.8} parent=1 // loop_body
      %s21 = ssub.s32 %s16, 1
      %s22 = ssub.s32 %s16, 2
      %s23 = sadd.s32 %s16, 1
      %s24 = ssub.s32 %s16, %s23
      %p25 = scmp.eq.s32.totalorder %s24, 0
      %s27 = sadd.s32 %s26, 1
      %s28 = scalar_select %p25, %s26, %s27
      %p31 = pneg %p25
      %p32 = scmp.eq.s32.totalorder %s16, 1
      %p33 = por %p31, %p32
      %p34 = scmp.ne.s32.totalorder %s26, %s29
      %p35 = scmp.eq.s32.totalorder %s16, 0
      %p36 = por %p34, %p35
      %p37 = scmp.ne.s32.totalorder %s26, %s29
      %p38 = scmp.eq.s32.totalorder %s21, 1
      %p39 = por %p37, %p38
      %p40 = scmp.ne.s32.totalorder %s29, %s30
      %p41 = scmp.eq.s32.totalorder %s21, 0
      %p42 = por %p40, %p41
      %p43 = scmp.ne.s32.totalorder %s29, %s30
      %p44 = scmp.eq.s32.totalorder %s22, 1
      %p45 = por %p43, %p44
      %p47 = scmp.ne.s32.totalorder %s30, %s46
      %p48 = scmp.eq.s32.totalorder %s22, 0
      %p49 = por %p47, %p48
      %s50 = ssub.s32 %s16, %s23
      %p51 = scmp.eq.s32.totalorder %s50, 0
      %s53 = sadd.s32 %s52, 1
      %s54 = scalar_select %p51, %s52, %s53
      %p57 = pneg %p51
      %p58 = scmp.eq.s32.totalorder %s16, 1
      %p59 = por %p57, %p58
      %p60 = scmp.ne.s32.totalorder %s52, %s55
      %p61 = scmp.eq.s32.totalorder %s16, 0
      %p62 = por %p60, %p61
      %p63 = scmp.ne.s32.totalorder %s52, %s55
      %p64 = scmp.eq.s32.totalorder %s21, 1
      %p65 = por %p63, %p64
      %p66 = scmp.ne.s32.totalorder %s55, %s56
      %p67 = scmp.eq.s32.totalorder %s21, 0
      %p68 = por %p66, %p67
      %p69 = scmp.ne.s32.totalorder %s55, %s56
      %p70 = scmp.eq.s32.totalorder %s22, 1
      %p71 = por %p69, %p70
      %p73 = scmp.ne.s32.totalorder %s56, %s72
      %p74 = scmp.eq.s32.totalorder %s22, 0
      %p75 = por %p73, %p74
      %s77 = sadd.s32 %s76, 1
      %p80 = scmp.eq.s32.totalorder %s16, 1
      %p81 = scmp.ne.s32.totalorder %s76, %s78
      %p82 = scmp.eq.s32.totalorder %s16, 0
      %p83 = por %p81, %p82
      %p84 = scmp.ne.s32.totalorder %s76, %s78
      %p85 = scmp.eq.s32.totalorder %s21, 1
      %p86 = por %p84, %p85
      %p87 = scmp.ne.s32.totalorder %s78, %s79
      %p88 = scmp.eq.s32.totalorder %s21, 0
      %p89 = por %p87, %p88
      %p90 = scmp.ne.s32.totalorder %s78, %s79
      %p91 = scmp.eq.s32.totalorder %s22, 1
      %p92 = por %p90, %p91
      %p94 = scmp.ne.s32.totalorder %s79, %s93
      %p95 = scmp.eq.s32.totalorder %s22, 0
      %p96 = por %p94, %p95
      %s98 = sadd.s32 %s97, 1
      %p101 = scmp.eq.s32.totalorder %s16, 1
      %p102 = scmp.ne.s32.totalorder %s97, %s99
      %p103 = scmp.eq.s32.totalorder %s16, 0
      %p104 = por %p102, %p103
      %p105 = scmp.ne.s32.totalorder %s97, %s99
      %p106 = scmp.eq.s32.totalorder %s21, 1
      %p107 = por %p105, %p106
      %p108 = scmp.ne.s32.totalorder %s99, %s100
      %p109 = scmp.eq.s32.totalorder %s21, 0
      %p110 = por %p108, %p109
      %p111 = scmp.ne.s32.totalorder %s99, %s100
      %p112 = scmp.eq.s32.totalorder %s22, 1
      %p113 = por %p111, %p112
      %p115 = scmp.ne.s32.totalorder %s100, %s114
      %p116 = scmp.eq.s32.totalorder %s22, 0
      %p117 = por %p115, %p116
      %s119 = sadd.s32 %s118, 1
      %p122 = scmp.eq.s32.totalorder %s16, 1
      %p123 = scmp.ne.s32.totalorder %s118, %s120
      %p124 = scmp.eq.s32.totalorder %s16, 0
      %p125 = por %p123, %p124
      %p126 = scmp.ne.s32.totalorder %s118, %s120
      %p127 = scmp.eq.s32.totalorder %s21, 1
      %p128 = por %p126, %p127
      %p129 = scmp.ne.s32.totalorder %s120, %s121
      %p130 = scmp.eq.s32.totalorder %s21, 0
      %p131 = por %p129, %p130
      %p132 = scmp.ne.s32.totalorder %s120, %s121
      %p133 = scmp.eq.s32.totalorder %s22, 1
      %p134 = por %p132, %p133
      %p136 = scmp.ne.s32.totalorder %s121, %s135
      %p137 = scmp.eq.s32.totalorder %s22, 0
      %p138 = por %p136, %p137
      %s140 = sadd.s32 %s139, 1
      %p143 = scmp.eq.s32.totalorder %s16, 1
      %p144 = scmp.ne.s32.totalorder %s139, %s141
      %p145 = scmp.eq.s32.totalorder %s16, 0
      %p146 = por %p144, %p145
      %p147 = scmp.ne.s32.totalorder %s139, %s141
      %p148 = scmp.eq.s32.totalorder %s21, 1
      %p149 = por %p147, %p148
      %p150 = scmp.ne.s32.totalorder %s141, %s142
      %p151 = scmp.eq.s32.totalorder %s21, 0
      %p152 = por %p150, %p151
      %p153 = scmp.ne.s32.totalorder %s141, %s142
      %p154 = scmp.eq.s32.totalorder %s22, 1
      %p155 = por %p153, %p154
      %p157 = scmp.ne.s32.totalorder %s142, %s156
      %p158 = scmp.eq.s32.totalorder %s22, 0
      %p159 = por %p157, %p158
      %s161 = sadd.s32 %s160, 1
      %p164 = scmp.eq.s32.totalorder %s16, 1
      %p165 = scmp.ne.s32.totalorder %s160, %s162
      %p166 = scmp.eq.s32.totalorder %s16, 0
      %p167 = por %p165, %p166
      %p168 = scmp.ne.s32.totalorder %s160, %s162
      %p169 = scmp.eq.s32.totalorder %s21, 1
      %p170 = por %p168, %p169
      %p171 = scmp.ne.s32.totalorder %s162, %s163
      %p172 = scmp.eq.s32.totalorder %s21, 0
      %p173 = por %p171, %p172
      %p174 = scmp.ne.s32.totalorder %s162, %s163
      %p175 = scmp.eq.s32.totalorder %s22, 1
      %p176 = por %p174, %p175
      %p178 = scmp.ne.s32.totalorder %s163, %s177
      %p179 = scmp.eq.s32.totalorder %s22, 0
      %p180 = por %p178, %p179
      %s182 = sadd.s32 %s181, 1
      %p185 = scmp.eq.s32.totalorder %s16, 1
      %p186 = scmp.ne.s32.totalorder %s181, %s183
      %p187 = scmp.eq.s32.totalorder %s16, 0
      %p188 = por %p186, %p187
      %p189 = scmp.ne.s32.totalorder %s181, %s183
      %p190 = scmp.eq.s32.totalorder %s21, 1
      %p191 = por %p189, %p190
      %p192 = scmp.ne.s32.totalorder %s183, %s184
      %p193 = scmp.eq.s32.totalorder %s21, 0
      %p194 = por %p192, %p193
      %p195 = scmp.ne.s32.totalorder %s183, %s184
      %p196 = scmp.eq.s32.totalorder %s22, 1
      %p197 = por %p195, %p196
      %p199 = scmp.ne.s32.totalorder %s184, %s198
      %p200 = scmp.eq.s32.totalorder %s22, 0
      %p201 = por %p199, %p200
      %s203 = sadd.s32 %s202, 1
      %p206 = scmp.eq.s32.totalorder %s16, 1
      %p207 = scmp.ne.s32.totalorder %s202, %s204
      %p208 = scmp.eq.s32.totalorder %s16, 0
      %p209 = por %p207, %p208
      %p210 = scmp.ne.s32.totalorder %s202, %s204
      %p211 = scmp.eq.s32.totalorder %s21, 1
      %p212 = por %p210, %p211
      %p213 = scmp.ne.s32.totalorder %s204, %s205
      %p214 = scmp.eq.s32.totalorder %s21, 0
      %p215 = por %p213, %p214
      %p216 = scmp.ne.s32.totalorder %s204, %s205
      %p217 = scmp.eq.s32.totalorder %s22, 1
      %p218 = por %p216, %p217
      %p220 = scmp.ne.s32.totalorder %s205, %s219
      %p221 = scmp.eq.s32.totalorder %s22, 0
      %p222 = por %p220, %p221
      %s224 = sadd.s32 %s223, 1
      %p227 = scmp.eq.s32.totalorder %s16, 1
      %p228 = scmp.ne.s32.totalorder %s223, %s225
      %p229 = scmp.eq.s32.totalorder %s16, 0
      %p230 = por %p228, %p229
      %p231 = scmp.ne.s32.totalorder %s223, %s225
      %p232 = scmp.eq.s32.totalorder %s21, 1
      %p233 = por %p231, %p232
      %p234 = scmp.ne.s32.totalorder %s225, %s226
      %p235 = scmp.eq.s32.totalorder %s21, 0
      %p236 = por %p234, %p235
      %p237 = scmp.ne.s32.totalorder %s225, %s226
      %p238 = scmp.eq.s32.totalorder %s22, 1
      %p239 = por %p237, %p238
      %p241 = scmp.ne.s32.totalorder %s226, %s240
      %p242 = scmp.eq.s32.totalorder %s22, 0
      %p243 = por %p241, %p242
      %s244 = ssub.s32 %s16, %s23
      %p245 = scmp.eq.s32.totalorder %s244, 0
      %s247 = sadd.s32 %s246, 1
      %s248 = scalar_select %p245, %s246, %s247
      %p251 = pneg %p245
      %p252 = scmp.eq.s32.totalorder %s16, 1
      %p253 = por %p251, %p252
      %p254 = scmp.ne.s32.totalorder %s246, %s249
      %p255 = scmp.eq.s32.totalorder %s16, 0
      %p256 = por %p254, %p255
      %p257 = scmp.ne.s32.totalorder %s246, %s249
      %p258 = scmp.eq.s32.totalorder %s21, 1
      %p259 = por %p257, %p258
      %p260 = scmp.ne.s32.totalorder %s249, %s250
      %p261 = scmp.eq.s32.totalorder %s21, 0
      %p262 = por %p260, %p261
      %p263 = scmp.ne.s32.totalorder %s249, %s250
      %p264 = scmp.eq.s32.totalorder %s22, 1
      %p265 = por %p263, %p264
      %p267 = scmp.ne.s32.totalorder %s250, %s266
      %p268 = scmp.eq.s32.totalorder %s22, 0
      %p269 = por %p267, %p268
      %p270 = scmp.le.s32.totalorder 1, %s16
      %p271 = scmp.lt.s32.totalorder %s16, 3
      %p272 = pnand %p270, %p271
      %p273 = pneg %p272
      // Predicated region
      $region9: #{fcfe_forward.8} parent=5 // pred_check
        _
      $region10: #{fcfe_forward.8} parent=5 // pred_check_branch
        %275 = sbr.rel (%p272) target = $region12
      $region11: #{fcfe_forward.8} parent=5 // pred_region
        %s276 = ssub.s32 %s16, 1
        // Predicated region
        $region13: #{fcfe_forward.8} parent=11 // pred_check
          %p277 = pneg %p89
        $region14: #{fcfe_forward.8} parent=11 // pred_check_branch
          %279 = sbr.rel (%p277) target = $region16
        $region15: #{fcfe_forward.8} parent=11 // pred_region
          _
        $region16: #{fcfe_forward.8} parent=11 // pred_fallthru
          _
        // Predicated region
        $region17: #{fcfe_forward.8} parent=11 // pred_check
          %p280 = pneg %p110
        $region18: #{fcfe_forward.8} parent=11 // pred_check_branch
          %282 = sbr.rel (%p280) target = $region20
        $region19: #{fcfe_forward.8} parent=11 // pred_region
          _
        $region20: #{fcfe_forward.8} parent=11 // pred_fallthru
          _
        // Predicated region
        $region21: #{fcfe_forward.8} parent=11 // pred_check
          %p283 = pneg %p131
        $region22: #{fcfe_forward.8} parent=11 // pred_check_branch
          %285 = sbr.rel (%p283) target = $region24
        $region23: #{fcfe_forward.8} parent=11 // pred_region
          _
        $region24: #{fcfe_forward.8} parent=11 // pred_fallthru
          _
        // Predicated region
        $region25: #{fcfe_forward.8} parent=11 // pred_check
          %p286 = pneg %p152
        $region26: #{fcfe_forward.8} parent=11 // pred_check_branch
          %288 = sbr.rel (%p286) target = $region28
        $region27: #{fcfe_forward.8} parent=11 // pred_region
          _
        $region28: #{fcfe_forward.8} parent=11 // pred_fallthru
          _
        // Predicated region
        $region29: #{fcfe_forward.8} parent=11 // pred_check
          %p289 = pneg %p173
        $region30: #{fcfe_forward.8} parent=11 // pred_check_branch
          %291 = sbr.rel (%p289) target = $region32
        $region31: #{fcfe_forward.8} parent=11 // pred_region
          _
        $region32: #{fcfe_forward.8} parent=11 // pred_fallthru
          _
        // Predicated region
        $region33: #{fcfe_forward.8} parent=11 // pred_check
          %p292 = pneg %p194
        $region34: #{fcfe_forward.8} parent=11 // pred_check_branch
          %294 = sbr.rel (%p292) target = $region36
        $region35: #{fcfe_forward.8} parent=11 // pred_region
          _
        $region36: #{fcfe_forward.8} parent=11 // pred_fallthru
          _
        // Predicated region
        $region37: #{fcfe_forward.8} parent=11 // pred_check
          %p295 = pneg %p215
        $region38: #{fcfe_forward.8} parent=11 // pred_check_branch
          %297 = sbr.rel (%p295) target = $region40
        $region39: #{fcfe_forward.8} parent=11 // pred_region
          _
        $region40: #{fcfe_forward.8} parent=11 // pred_fallthru
          _
        // Predicated region
        $region41: #{fcfe_forward.8} parent=11 // pred_check
          %p298 = pneg %p236
        $region42: #{fcfe_forward.8} parent=11 // pred_check_branch
          %300 = sbr.rel (%p298) target = $region44
        $region43: #{fcfe_forward.8} parent=11 // pred_region
          _
        $region44: #{fcfe_forward.8} parent=11 // pred_fallthru
          _
      $region12: #{fcfe_forward.8} parent=5 // pred_fallthru
        _
      %p301 = scmp.lt.s32.totalorder %s16, 2
      // Predicated region
      $region45: #{fcfe_forward.8} parent=5 // pred_check
        %p302 = pneg %p301
      $region46: #{fcfe_forward.8} parent=5 // pred_check_branch
        %304 = sbr.rel (%p302) target = $region48
      $region47: #{fcfe_forward.8} parent=5 // pred_region
        // Predicated region
        $region49: #{fcfe_forward.8} parent=47 // pred_check
          %p305 = pneg %p36
        $region50: #{fcfe_forward.8} parent=47 // pred_check_branch
          %307 = sbr.rel (%p305) target = $region52
        $region51: #{fcfe_forward.8} parent=47 // pred_region
          %s308 = sand.u32 %s26, 1
          %s309 = sand.u32 %s26, 1
          %s310 = smul.addr %s309, 16
          %s311 = scalar_lea.vmem [#allocation2], %s310
          %s312 = smul.addr %s16, 8
          %s313 = scalar_lea.vmem %s0, %s312
          // Predicated region
          $region53: #{fcfe_forward.8} parent=51 // pred_check
            _
          $region54: #{fcfe_forward.8} parent=51 // pred_check_branch
            %315 = sbr.rel (0) target = $region56
          $region55: #{fcfe_forward.8} parent=51 // pred_region
            // Predicated region
            $region57: #{fcfe_forward.8} parent=55 // pred_check
              _
            $region58: #{fcfe_forward.8} parent=55 // pred_check_branch
              %317 = sbr.rel (0) target = $region60
            $region59: #{fcfe_forward.8} parent=55 // pred_region
              // Predicated region
              $region72: #{fcfe_forward.8} parent=59 // pred_check
                _
              $region73: #{fcfe_forward.8} parent=59 // pred_check_branch
                %334 = sbr.rel (0) target = $region75
              $region74: #{fcfe_forward.8} parent=59 // pred_region
                loop: start=0, step=1, limit=1
                $region76: #{fcfe_forward.8} parent=74 // loop_pre_header
                  _
                $region77: #{fcfe_forward.8} parent=74 // loop_header
                  %s336 = sphi 0, %s340
                  %p337 = scmp.ge.s32.totalorder %s336, 1
                  %s341 = sphi %s313, %s313
                  %s342 = sphi %s311, %s311
                $region78: #{fcfe_forward.8} parent=74 // loop_header_branch
                  %339 = sbr.rel (%p337) target = $region82
                $region79: #{fcfe_forward.8} parent=74 // loop_body
                  %v343 = vld [vmem:[%s341] sm:$0xff]
                  %344 = vst [vmem:[%s342] sm:$0xff] %v343
                  %v345 = vld [vmem:[%s341 + $0x10] sm:$0xff]
                  %346 = vst [vmem:[%s342 + $0x8] sm:$0xff] %v345
                $region80: #{fcfe_forward.8} parent=74 // loop_footer
                  %s340 = sadd.s32 1, %s336
                $region81: #{fcfe_forward.8} parent=74 // loop_footer_branch
                  %335 = sbr.rel target = $region77
                $region82: #{fcfe_forward.8} parent=74 // loop_exit
                  _
              $region75: #{fcfe_forward.8} parent=59 // pred_fallthru
                _
              // Predicated region
              $region83: #{fcfe_forward.8} parent=59 // pred_check
                _
              $region84: #{fcfe_forward.8} parent=59 // pred_check_branch
                %348 = sbr.rel target = $region86
              $region85: #{fcfe_forward.8} parent=59 // pred_region
                _
              $region86: #{fcfe_forward.8} parent=59 // pred_fallthru
                _
            $region60: #{fcfe_forward.8} parent=55 // pred_fallthru
              _
            // Predicated region
            $region61: #{fcfe_forward.8} parent=55 // pred_check
              _
            $region62: #{fcfe_forward.8} parent=55 // pred_check_branch
              %319 = sbr.rel target = $region64
            $region63: #{fcfe_forward.8} parent=55 // pred_region
              loop: start=0, step=1, limit=1
              $region65: #{fcfe_forward.8} parent=63 // loop_pre_header
                _
              $region66: #{fcfe_forward.8} parent=63 // loop_header
                %s322 = sphi 0, %s326
                %p323 = scmp.ge.s32.totalorder %s322, 1
                %s327 = sphi %s313, %s313
                %s328 = sphi %s311, %s311
              $region67: #{fcfe_forward.8} parent=63 // loop_header_branch
                %325 = sbr.rel (%p323) target = $region71
              $region68: #{fcfe_forward.8} parent=63 // loop_body
                %v329 = vld [vmem:[%s327] sm:$0xff]
                %330 = vst [vmem:[%s328] sm:$0xff] %v329
                %v331 = vld [vmem:[%s327 + $0x10] sm:$0xff]
                %332 = vst [vmem:[%s328 + $0x8] sm:$0xff] %v331
              $region69: #{fcfe_forward.8} parent=63 // loop_footer
                %s326 = sadd.s32 1, %s322
              $region70: #{fcfe_forward.8} parent=63 // loop_footer_branch
                %321 = sbr.rel target = $region66
              $region71: #{fcfe_forward.8} parent=63 // loop_exit
                _
            $region64: #{fcfe_forward.8} parent=55 // pred_fallthru
              _
          $region56: #{fcfe_forward.8} parent=51 // pred_fallthru
            _
          %349 = vnop
        $region52: #{fcfe_forward.8} parent=47 // pred_fallthru
          _
        // Predicated region
        $region87: #{fcfe_forward.8} parent=47 // pred_check
          %p350 = pneg %p62
        $region88: #{fcfe_forward.8} parent=47 // pred_check_branch
          %352 = sbr.rel (%p350) target = $region90
        $region89: #{fcfe_forward.8} parent=47 // pred_region
          %s353 = sand.u32 %s52, 1
          %s354 = sand.u32 %s52, 1
          %s355 = smul.addr %s354, 16
          %s356 = scalar_lea.vmem [#allocation3], %s355
          %s357 = smul.addr %s16, 8
          %s358 = scalar_lea.vmem %s1, %s357
          // Predicated region
          $region91: #{fcfe_forward.8} parent=89 // pred_check
            _
          $region92: #{fcfe_forward.8} parent=89 // pred_check_branch
            %360 = sbr.rel (0) target = $region94
          $region93: #{fcfe_forward.8} parent=89 // pred_region
            // Predicated region
            $region95: #{fcfe_forward.8} parent=93 // pred_check
              _
            $region96: #{fcfe_forward.8} parent=93 // pred_check_branch
              %362 = sbr.rel (0) target = $region98
            $region97: #{fcfe_forward.8} parent=93 // pred_region
              // Predicated region
              $region110: #{fcfe_forward.8} parent=97 // pred_check
                _
              $region111: #{fcfe_forward.8} parent=97 // pred_check_branch
                %379 = sbr.rel (0) target = $region113
              $region112: #{fcfe_forward.8} parent=97 // pred_region
                loop: start=0, step=1, limit=1
                $region114: #{fcfe_forward.8} parent=112 // loop_pre_header
                  _
                $region115: #{fcfe_forward.8} parent=112 // loop_header
                  %s381 = sphi 0, %s385
                  %p382 = scmp.ge.s32.totalorder %s381, 1
                  %s386 = sphi %s358, %s358
                  %s387 = sphi %s356, %s356
                $region116: #{fcfe_forward.8} parent=112 // loop_header_branch
                  %384 = sbr.rel (%p382) target = $region120
                $region117: #{fcfe_forward.8} parent=112 // loop_body
                  %v388 = vld [vmem:[%s386] sm:$0xff]
                  %389 = vst [vmem:[%s387] sm:$0xff] %v388
                  %v390 = vld [vmem:[%s386 + $0x10] sm:$0xff]
                  %391 = vst [vmem:[%s387 + $0x8] sm:$0xff] %v390
                $region118: #{fcfe_forward.8} parent=112 // loop_footer
                  %s385 = sadd.s32 1, %s381
                $region119: #{fcfe_forward.8} parent=112 // loop_footer_branch
                  %380 = sbr.rel target = $region115
                $region120: #{fcfe_forward.8} parent=112 // loop_exit
                  _
              $region113: #{fcfe_forward.8} parent=97 // pred_fallthru
                _
              // Predicated region
              $region121: #{fcfe_forward.8} parent=97 // pred_check
                _
              $region122: #{fcfe_forward.8} parent=97 // pred_check_branch
                %393 = sbr.rel target = $region124
              $region123: #{fcfe_forward.8} parent=97 // pred_region
                _
              $region124: #{fcfe_forward.8} parent=97 // pred_fallthru
                _
            $region98: #{fcfe_forward.8} parent=93 // pred_fallthru
              _
            // Predicated region
            $region99: #{fcfe_forward.8} parent=93 // pred_check
              _
            $region100: #{fcfe_forward.8} parent=93 // pred_check_branch
              %364 = sbr.rel target = $region102
            $region101: #{fcfe_forward.8} parent=93 // pred_region
              loop: start=0, step=1, limit=1
              $region103: #{fcfe_forward.8} parent=101 // loop_pre_header
                _
              $region104: #{fcfe_forward.8} parent=101 // loop_header
                %s367 = sphi 0, %s371
                %p368 = scmp.ge.s32.totalorder %s367, 1
                %s372 = sphi %s358, %s358
                %s373 = sphi %s356, %s356
              $region105: #{fcfe_forward.8} parent=101 // loop_header_branch
                %370 = sbr.rel (%p368) target = $region109
              $region106: #{fcfe_forward.8} parent=101 // loop_body
                %v374 = vld [vmem:[%s372] sm:$0xff]
                %375 = vst [vmem:[%s373] sm:$0xff] %v374
                %v376 = vld [vmem:[%s372 + $0x10] sm:$0xff]
                %377 = vst [vmem:[%s373 + $0x8] sm:$0xff] %v376
              $region107: #{fcfe_forward.8} parent=101 // loop_footer
                %s371 = sadd.s32 1, %s367
              $region108: #{fcfe_forward.8} parent=101 // loop_footer_branch
                %366 = sbr.rel target = $region104
              $region109: #{fcfe_forward.8} parent=101 // loop_exit
                _
            $region102: #{fcfe_forward.8} parent=93 // pred_fallthru
              _
          $region94: #{fcfe_forward.8} parent=89 // pred_fallthru
            _
          %394 = vnop
        $region90: #{fcfe_forward.8} parent=47 // pred_fallthru
          _
      $region48: #{fcfe_forward.8} parent=5 // pred_fallthru
        _
      %p395 = scmp.le.s32.totalorder 1, %s16
      %p396 = scmp.lt.s32.totalorder %s16, 3
      %p397 = pnand %p395, %p396
      %p398 = pneg %p397
      // Predicated region
      $region125: #{fcfe_forward.8} parent=5 // pred_check
        _
      $region126: #{fcfe_forward.8} parent=5 // pred_check_branch
        %400 = sbr.rel (%p397) target = $region128
      $region127: #{fcfe_forward.8} parent=5 // pred_region
        %s401 = ssub.s32 %s16, 1
        %s402 = sand.u32 %s29, 1
        %s403 = sand.u32 %s29, 1
        %s404 = smul.addr %s403, 16
        %s405 = scalar_lea.vmem [#allocation2], %s404
        // Predicated region
        $region129: #{fcfe_forward.8} parent=127 // pred_check
          %p406 = pneg %p42
        $region130: #{fcfe_forward.8} parent=127 // pred_check_branch
          %408 = sbr.rel (%p406) target = $region132
        $region131: #{fcfe_forward.8} parent=127 // pred_region
          _
        $region132: #{fcfe_forward.8} parent=127 // pred_fallthru
          _
        %s409 = sand.u32 %s55, 1
        %s410 = sand.u32 %s55, 1
        %s411 = smul.addr %s410, 16
        %s412 = scalar_lea.vmem [#allocation3], %s411
        // Predicated region
        $region133: #{fcfe_forward.8} parent=127 // pred_check
          %p413 = pneg %p68
        $region134: #{fcfe_forward.8} parent=127 // pred_check_branch
          %415 = sbr.rel (%p413) target = $region136
        $region135: #{fcfe_forward.8} parent=127 // pred_region
          _
        $region136: #{fcfe_forward.8} parent=127 // pred_fallthru
          _
        %s416 = sand.u32 %s29, 1
        %s417 = sand.u32 %s29, 1
        %s418 = smul.addr %s417, 16
        %s419 = scalar_lea.vmem [#allocation2], %s418
        %p420 = pneg %p42
        %p421 = pneg %p39
        %s422 = sand.u32 %s55, 1
        %s423 = sand.u32 %s55, 1
        %s424 = smul.addr %s423, 16
        %s425 = scalar_lea.vmem [#allocation3], %s424
        %p426 = pneg %p68
        %p427 = pneg %p65
        %p428 = pneg %p89
        %p429 = pneg %p86
        %p430 = pneg %p110
        %p431 = pneg %p107
        %p432 = pneg %p131
        %p433 = pneg %p128
        %p434 = pneg %p152
        %p435 = pneg %p149
        %p436 = pneg %p173
        %p437 = pneg %p170
        %p438 = pneg %p194
        %p439 = pneg %p191
        %p440 = pneg %p215
        %p441 = pneg %p212
        %p442 = pneg %p236
        %p443 = pneg %p233
        %p444 = pneg %p262
        %p445 = pneg %p259
        %s446 = sand.u32 %s249, 1
        %s447 = sand.u32 %s249, 1
        %s448 = smul.addr %s447, 16
        %s449 = scalar_lea.vmem [#allocation4], %s448
        %v450 = vld [vmem:[%s405] sm:$0xff]
        %v451 = vld [vmem:[%s2] sm:$0xff]
        %v452 = vld [vmem:[%s3] sm:$0xff]
        %454 = vset.pattern.permute.xlu0 0
        %455 = vperm.xlu0 %454, %v452
        %v456 = vpop.permute.xlu0 %455
        %vm458 = vcmask 64512
        %v460 = vsel %vm458, %v451, 0
        %462 = vmatprep.subr.mxu0 0.0
        %463 = vmatpush1.msra.mxu0 %v450
        %464 = vmatprep.subr.mxu0 0.0
        %465 = vmatpush1.msra.mxu0 0.0
        %466 = vmatprep.subr.mxu0 0.0
        %467 = vmatpush1.msra.mxu0 0.0
        %468 = vmatprep.subr.mxu0 0.0
        %469 = vmatpush1.msra.mxu0 0.0
        %470 = vmatprep.subr.mxu0 0.0
        %471 = vmatpush1.msra.mxu0 0.0
        %472 = vmatprep.subr.mxu0 0.0
        %473 = vmatpush1.msra.mxu0 0.0
        %474 = vmatprep.subr.mxu0 0.0
        %475 = vmatpush1.msra.mxu0 0.0
        %476 = vmatprep.subr.mxu0 0.0
        %477 = vmatpush1.msra.mxu0 0.0
        %478 = vmatprep.subr.mxu0 0.0
        %479 = vmatpush1.msra.mxu0 0.0
        %480 = vmatprep.subr.mxu0 0.0
        %481 = vmatpush1.msra.mxu0 0.0
        %482 = vmatprep.subr.mxu0 0.0
        %483 = vmatpush1.msra.mxu0 0.0
        %484 = vmatprep.subr.mxu0 0.0
        %485 = vmatpush1.msra.mxu0 0.0
        %486 = vmatprep.subr.mxu0 0.0
        %487 = vmatpush1.msra.mxu0 0.0
        %488 = vmatprep.subr.mxu0 0.0
        %489 = vmatpush1.msra.mxu0 0.0
        %490 = vmatprep.subr.mxu0 0.0
        %491 = vmatpush1.msra.mxu0 0.0
        %492 = vmatprep.subr.mxu0 0.0
        %493 = vmatpush1.msra.mxu0 0.0
        %494 = vmatprep.subr.mxu0 0.0
        %495 = vmatpush1.msra.mxu0 0.0
        %496 = vmatprep.subr.mxu0 0.0
        %497 = vmatpush1.msra.mxu0 0.0
        %498 = vmatprep.subr.mxu0 0.0
        %499 = vmatpush1.msra.mxu0 0.0
        %500 = vmatprep.subr.mxu0 0.0
        %501 = vmatpush1.msra.mxu0 0.0
        %502 = vmatprep.subr.mxu0 0.0
        %503 = vmatpush1.msra.mxu0 0.0
        %504 = vmatprep.subr.mxu0 0.0
        %505 = vmatpush1.msra.mxu0 0.0
        %506 = vmatprep.subr.mxu0 0.0
        %507 = vmatpush1.msra.mxu0 0.0
        %508 = vmatprep.subr.mxu0 0.0
        %509 = vmatpush1.msra.mxu0 0.0
        %510 = vmatprep.subr.mxu0 0.0
        %511 = vmatpush1.msra.mxu0 0.0
        %512 = vmatprep.subr.mxu0 0.0
        %513 = vmatpush1.msra.mxu0 0.0
        %514 = vmatprep.subr.mxu0 0.0
        %515 = vmatpush1.msra.mxu0 0.0
        %516 = vmatprep.subr.mxu0 0.0
        %517 = vmatpush1.msra.mxu0 0.0
        %518 = vmatprep.subr.mxu0 0.0
        %519 = vmatpush1.msra.mxu0 0.0
        %520 = vmatprep.subr.mxu0 0.0
        %521 = vmatpush1.msra.mxu0 0.0
        %522 = vmatprep.subr.mxu0 0.0
        %523 = vmatpush1.msra.mxu0 0.0
        %524 = vmatprep.subr.mxu0 0.0
        %525 = vmatpush1.msra.mxu0 0.0
        %526 = vmatprep.mubr.f32.mxu0 0.0
        %527 = vmatmul.mubr.f32.gmra.mrb[0].mxu0 %v460
        %v528 = vpop.f32.mrb[0].mxu0
        %v529 = vadd.f32 %v456, %v528
        %v530 = vpop.f32.mrb[0].mxu0
        %531 = vdwg.mxu0
        %v532 = vmax.f32 %v529, 0.0
        %v533 = vld [vmem:[%s4] sm:$0xff]
        %v534 = vld [vmem:[%s5] sm:$0xff]
        %536 = vset.pattern.permute.xlu0 0
        %537 = vperm.xlu0 %536, %v534
        %v538 = vpop.permute.xlu0 %537
        %v541 = vsel %vm458, %v533, 0
        %543 = vmatprep.subr.mxu0 0.0
        %544 = vmatpush1.msra.mxu0 %v532
        %545 = vmatprep.subr.mxu0 0.0
        %546 = vmatpush1.msra.mxu0 0.0
        %547 = vmatprep.subr.mxu0 0.0
        %548 = vmatpush1.msra.mxu0 0.0
        %549 = vmatprep.subr.mxu0 0.0
        %550 = vmatpush1.msra.mxu0 0.0
        %551 = vmatprep.subr.mxu0 0.0
        %552 = vmatpush1.msra.mxu0 0.0
        %553 = vmatprep.subr.mxu0 0.0
        %554 = vmatpush1.msra.mxu0 0.0
        %555 = vmatprep.subr.mxu0 0.0
        %556 = vmatpush1.msra.mxu0 0.0
        %557 = vmatprep.subr.mxu0 0.0
        %558 = vmatpush1.msra.mxu0 0.0
        %559 = vmatprep.subr.mxu0 0.0
        %560 = vmatpush1.msra.mxu0 0.0
        %561 = vmatprep.subr.mxu0 0.0
        %562 = vmatpush1.msra.mxu0 0.0
        %563 = vmatprep.subr.mxu0 0.0
        %564 = vmatpush1.msra.mxu0 0.0
        %565 = vmatprep.subr.mxu0 0.0
        %566 = vmatpush1.msra.mxu0 0.0
        %567 = vmatprep.subr.mxu0 0.0
        %568 = vmatpush1.msra.mxu0 0.0
        %569 = vmatprep.subr.mxu0 0.0
        %570 = vmatpush1.msra.mxu0 0.0
        %571 = vmatprep.subr.mxu0 0.0
        %572 = vmatpush1.msra.mxu0 0.0
        %573 = vmatprep.subr.mxu0 0.0
        %574 = vmatpush1.msra.mxu0 0.0
        %575 = vmatprep.subr.mxu0 0.0
        %576 = vmatpush1.msra.mxu0 0.0
        %577 = vmatprep.subr.mxu0 0.0
        %578 = vmatpush1.msra.mxu0 0.0
        %579 = vmatprep.subr.mxu0 0.0
        %580 = vmatpush1.msra.mxu0 0.0
        %581 = vmatprep.subr.mxu0 0.0
        %582 = vmatpush1.msra.mxu0 0.0
        %583 = vmatprep.subr.mxu0 0.0
        %584 = vmatpush1.msra.mxu0 0.0
        %585 = vmatprep.subr.mxu0 0.0
        %586 = vmatpush1.msra.mxu0 0.0
        %587 = vmatprep.subr.mxu0 0.0
        %588 = vmatpush1.msra.mxu0 0.0
        %589 = vmatprep.subr.mxu0 0.0
        %590 = vmatpush1.msra.mxu0 0.0
        %591 = vmatprep.subr.mxu0 0.0
        %592 = vmatpush1.msra.mxu0 0.0
        %593 = vmatprep.subr.mxu0 0.0
        %594 = vmatpush1.msra.mxu0 0.0
        %595 = vmatprep.subr.mxu0 0.0
        %596 = vmatpush1.msra.mxu0 0.0
        %597 = vmatprep.subr.mxu0 0.0
        %598 = vmatpush1.msra.mxu0 0.0
        %599 = vmatprep.subr.mxu0 0.0
        %600 = vmatpush1.msra.mxu0 0.0
        %601 = vmatprep.subr.mxu0 0.0
        %602 = vmatpush1.msra.mxu0 0.0
        %603 = vmatprep.subr.mxu0 0.0
        %604 = vmatpush1.msra.mxu0 0.0
        %605 = vmatprep.subr.mxu0 0.0
        %606 = vmatpush1.msra.mxu0 0.0
        %607 = vmatprep.mubr.f32.mxu0 0.0
        %608 = vmatmul.mubr.f32.gmra.mrb[0].mxu0 %v541
        %v609 = vpop.f32.mrb[0].mxu0
        %v610 = vadd.f32 %v538, %v609
        %v611 = vpop.f32.mrb[0].mxu0
        %612 = vdwg.mxu0
        %v613 = vxor.u32 %v610, 2147483648
        %v614 = vmul.f32 %v613, 1.442695
        %v615 = vpow.pop %v614
        %v616 = vadd.f32 %v615, 1.0
        %v617 = vrcp.pop %v616
        %v618 = vmul.f32 1.0, %v617
        %v619 = vld [vmem:[%s412] sm:$0xff]
        %v620 = vmul.f32 %v618, %v619
        %v621 = vld [vmem:[%s6] sm:$0xff]
        %v622 = vld [vmem:[%s7] sm:$0xff]
        %624 = vset.pattern.permute.xlu0 0
        %625 = vperm.xlu0 %624, %v622
        %v626 = vpop.permute.xlu0 %625
        %v629 = vsel %vm458, %v621, 0
        %631 = vmatprep.subr.mxu0 0.0
        %632 = vmatpush1.msra.mxu0 %v620
        %633 = vmatprep.subr.mxu0 0.0
        %634 = vmatpush1.msra.mxu0 0.0
        %635 = vmatprep.subr.mxu0 0.0
        %636 = vmatpush1.msra.mxu0 0.0
        %637 = vmatprep.subr.mxu0 0.0
        %638 = vmatpush1.msra.mxu0 0.0
        %639 = vmatprep.subr.mxu0 0.0
        %640 = vmatpush1.msra.mxu0 0.0
        %641 = vmatprep.subr.mxu0 0.0
        %642 = vmatpush1.msra.mxu0 0.0
        %643 = vmatprep.subr.mxu0 0.0
        %644 = vmatpush1.msra.mxu0 0.0
        %645 = vmatprep.subr.mxu0 0.0
        %646 = vmatpush1.msra.mxu0 0.0
        %647 = vmatprep.subr.mxu0 0.0
        %648 = vmatpush1.msra.mxu0 0.0
        %649 = vmatprep.subr.mxu0 0.0
        %650 = vmatpush1.msra.mxu0 0.0
        %651 = vmatprep.subr.mxu0 0.0
        %652 = vmatpush1.msra.mxu0 0.0
        %653 = vmatprep.subr.mxu0 0.0
        %654 = vmatpush1.msra.mxu0 0.0
        %655 = vmatprep.subr.mxu0 0.0
        %656 = vmatpush1.msra.mxu0 0.0
        %657 = vmatprep.subr.mxu0 0.0
        %658 = vmatpush1.msra.mxu0 0.0
        %659 = vmatprep.subr.mxu0 0.0
        %660 = vmatpush1.msra.mxu0 0.0
        %661 = vmatprep.subr.mxu0 0.0
        %662 = vmatpush1.msra.mxu0 0.0
        %663 = vmatprep.subr.mxu0 0.0
        %664 = vmatpush1.msra.mxu0 0.0
        %665 = vmatprep.subr.mxu0 0.0
        %666 = vmatpush1.msra.mxu0 0.0
        %667 = vmatprep.subr.mxu0 0.0
        %668 = vmatpush1.msra.mxu0 0.0
        %669 = vmatprep.subr.mxu0 0.0
        %670 = vmatpush1.msra.mxu0 0.0
        %671 = vmatprep.subr.mxu0 0.0
        %672 = vmatpush1.msra.mxu0 0.0
        %673 = vmatprep.subr.mxu0 0.0
        %674 = vmatpush1.msra.mxu0 0.0
        %675 = vmatprep.subr.mxu0 0.0
        %676 = vmatpush1.msra.mxu0 0.0
        %677 = vmatprep.subr.mxu0 0.0
        %678 = vmatpush1.msra.mxu0 0.0
        %679 = vmatprep.subr.mxu0 0.0
        %680 = vmatpush1.msra.mxu0 0.0
        %681 = vmatprep.subr.mxu0 0.0
        %682 = vmatpush1.msra.mxu0 0.0
        %683 = vmatprep.subr.mxu0 0.0
        %684 = vmatpush1.msra.mxu0 0.0
        %685 = vmatprep.subr.mxu0 0.0
        %686 = vmatpush1.msra.mxu0 0.0
        %687 = vmatprep.subr.mxu0 0.0
        %688 = vmatpush1.msra.mxu0 0.0
        %689 = vmatprep.subr.mxu0 0.0
        %690 = vmatpush1.msra.mxu0 0.0
        %691 = vmatprep.subr.mxu0 0.0
        %692 = vmatpush1.msra.mxu0 0.0
        %693 = vmatprep.subr.mxu0 0.0
        %694 = vmatpush1.msra.mxu0 0.0
        %695 = vmatprep.mubr.f32.mxu0 0.0
        %696 = vmatmul.mubr.f32.gmra.mrb[0].mxu0 %v629
        %v697 = vpop.f32.mrb[0].mxu0
        %v698 = vadd.f32 %v626, %v697
        %v699 = vpop.f32.mrb[0].mxu0
        %700 = vdwg.mxu0
        %v701 = vmax.f32 %v698, 0.0
        %v702 = vld [vmem:[%s8] sm:$0xff]
        %v703 = vld [vmem:[%s9] sm:$0xff]
        %705 = vset.pattern.permute.xlu0 0
        %706 = vperm.xlu0 %705, %v703
        %v707 = vpop.permute.xlu0 %706
        %v710 = vsel %vm458, %v702, 0
        %712 = vmatprep.subr.mxu0 0.0
        %713 = vmatpush1.msra.mxu0 %v701
        %714 = vmatprep.subr.mxu0 0.0
        %715 = vmatpush1.msra.mxu0 0.0
        %716 = vmatprep.subr.mxu0 0.0
        %717 = vmatpush1.msra.mxu0 0.0
        %718 = vmatprep.subr.mxu0 0.0
        %719 = vmatpush1.msra.mxu0 0.0
        %720 = vmatprep.subr.mxu0 0.0
        %721 = vmatpush1.msra.mxu0 0.0
        %722 = vmatprep.subr.mxu0 0.0
        %723 = vmatpush1.msra.mxu0 0.0
        %724 = vmatprep.subr.mxu0 0.0
        %725 = vmatpush1.msra.mxu0 0.0
        %726 = vmatprep.subr.mxu0 0.0
        %727 = vmatpush1.msra.mxu0 0.0
        %728 = vmatprep.subr.mxu0 0.0
        %729 = vmatpush1.msra.mxu0 0.0
        %730 = vmatprep.subr.mxu0 0.0
        %731 = vmatpush1.msra.mxu0 0.0
        %732 = vmatprep.subr.mxu0 0.0
        %733 = vmatpush1.msra.mxu0 0.0
        %734 = vmatprep.subr.mxu0 0.0
        %735 = vmatpush1.msra.mxu0 0.0
        %736 = vmatprep.subr.mxu0 0.0
        %737 = vmatpush1.msra.mxu0 0.0
        %738 = vmatprep.subr.mxu0 0.0
        %739 = vmatpush1.msra.mxu0 0.0
        %740 = vmatprep.subr.mxu0 0.0
        %741 = vmatpush1.msra.mxu0 0.0
        %742 = vmatprep.subr.mxu0 0.0
        %743 = vmatpush1.msra.mxu0 0.0
        %744 = vmatprep.subr.mxu0 0.0
        %745 = vmatpush1.msra.mxu0 0.0
        %746 = vmatprep.subr.mxu0 0.0
        %747 = vmatpush1.msra.mxu0 0.0
        %748 = vmatprep.subr.mxu0 0.0
        %749 = vmatpush1.msra.mxu0 0.0
        %750 = vmatprep.subr.mxu0 0.0
        %751 = vmatpush1.msra.mxu0 0.0
        %752 = vmatprep.subr.mxu0 0.0
        %753 = vmatpush1.msra.mxu0 0.0
        %754 = vmatprep.subr.mxu0 0.0
        %755 = vmatpush1.msra.mxu0 0.0
        %756 = vmatprep.subr.mxu0 0.0
        %757 = vmatpush1.msra.mxu0 0.0
        %758 = vmatprep.subr.mxu0 0.0
        %759 = vmatpush1.msra.mxu0 0.0
        %760 = vmatprep.subr.mxu0 0.0
        %761 = vmatpush1.msra.mxu0 0.0
        %762 = vmatprep.subr.mxu0 0.0
        %763 = vmatpush1.msra.mxu0 0.0
        %764 = vmatprep.subr.mxu0 0.0
        %765 = vmatpush1.msra.mxu0 0.0
        %766 = vmatprep.subr.mxu0 0.0
        %767 = vmatpush1.msra.mxu0 0.0
        %768 = vmatprep.subr.mxu0 0.0
        %769 = vmatpush1.msra.mxu0 0.0
        %770 = vmatprep.subr.mxu0 0.0
        %771 = vmatpush1.msra.mxu0 0.0
        %772 = vmatprep.subr.mxu0 0.0
        %773 = vmatpush1.msra.mxu0 0.0
        %774 = vmatprep.subr.mxu0 0.0
        %775 = vmatpush1.msra.mxu0 0.0
        %776 = vmatprep.mubr.f32.mxu0 0.0
        %777 = vmatmul.mubr.f32.gmra.mrb[0].mxu0 %v710
        %v778 = vpop.f32.mrb[0].mxu0
        %v779 = vadd.f32 %v707, %v778
        %v780 = vpop.f32.mrb[0].mxu0
        %781 = vdwg.mxu0
        %782 = vst [vmem:[%s449] sm:$0xff] %v779
        %s783 = scalar_lea.vmem %s405, 8 [#allocation2]
        %v784 = vld [vmem:[%s783] sm:$0xff]
        %v785 = vld [vmem:[%s2] sm:$0xff]
        %v786 = vld [vmem:[%s3] sm:$0xff]
        %788 = vset.pattern.permute.xlu0 0
        %789 = vperm.xlu0 %788, %v786
        %v790 = vpop.permute.xlu0 %789
        %v793 = vsel %vm458, %v785, 0
        %795 = vmatprep.subr.mxu0 0.0
        %796 = vmatpush1.msra.mxu0 %v784
        %797 = vmatprep.subr.mxu0 0.0
        %798 = vmatpush1.msra.mxu0 0.0
        %799 = vmatprep.subr.mxu0 0.0
        %800 = vmatpush1.msra.mxu0 0.0
        %801 = vmatprep.subr.mxu0 0.0
        %802 = vmatpush1.msra.mxu0 0.0
        %803 = vmatprep.subr.mxu0 0.0
        %804 = vmatpush1.msra.mxu0 0.0
        %805 = vmatprep.subr.mxu0 0.0
        %806 = vmatpush1.msra.mxu0 0.0
        %807 = vmatprep.subr.mxu0 0.0
        %808 = vmatpush1.msra.mxu0 0.0
        %809 = vmatprep.subr.mxu0 0.0
        %810 = vmatpush1.msra.mxu0 0.0
        %811 = vmatprep.subr.mxu0 0.0
        %812 = vmatpush1.msra.mxu0 0.0
        %813 = vmatprep.subr.mxu0 0.0
        %814 = vmatpush1.msra.mxu0 0.0
        %815 = vmatprep.subr.mxu0 0.0
        %816 = vmatpush1.msra.mxu0 0.0
        %817 = vmatprep.subr.mxu0 0.0
        %818 = vmatpush1.msra.mxu0 0.0
        %819 = vmatprep.subr.mxu0 0.0
        %820 = vmatpush1.msra.mxu0 0.0
        %821 = vmatprep.subr.mxu0 0.0
        %822 = vmatpush1.msra.mxu0 0.0
        %823 = vmatprep.subr.mxu0 0.0
        %824 = vmatpush1.msra.mxu0 0.0
        %825 = vmatprep.subr.mxu0 0.0
        %826 = vmatpush1.msra.mxu0 0.0
        %827 = vmatprep.subr.mxu0 0.0
        %828 = vmatpush1.msra.mxu0 0.0
        %829 = vmatprep.subr.mxu0 0.0
        %830 = vmatpush1.msra.mxu0 0.0
        %831 = vmatprep.subr.mxu0 0.0
        %832 = vmatpush1.msra.mxu0 0.0
        %833 = vmatprep.subr.mxu0 0.0
        %834 = vmatpush1.msra.mxu0 0.0
        %835 = vmatprep.subr.mxu0 0.0
        %836 = vmatpush1.msra.mxu0 0.0
        %837 = vmatprep.subr.mxu0 0.0
        %838 = vmatpush1.msra.mxu0 0.0
        %839 = vmatprep.subr.mxu0 0.0
        %840 = vmatpush1.msra.mxu0 0.0
        %841 = vmatprep.subr.mxu0 0.0
        %842 = vmatpush1.msra.mxu0 0.0
        %843 = vmatprep.subr.mxu0 0.0
        %844 = vmatpush1.msra.mxu0 0.0
        %845 = vmatprep.subr.mxu0 0.0
        %846 = vmatpush1.msra.mxu0 0.0
        %847 = vmatprep.subr.mxu0 0.0
        %848 = vmatpush1.msra.mxu0 0.0
        %849 = vmatprep.subr.mxu0 0.0
        %850 = vmatpush1.msra.mxu0 0.0
        %851 = vmatprep.subr.mxu0 0.0
        %852 = vmatpush1.msra.mxu0 0.0
        %853 = vmatprep.subr.mxu0 0.0
        %854 = vmatpush1.msra.mxu0 0.0
        %855 = vmatprep.subr.mxu0 0.0
        %856 = vmatpush1.msra.mxu0 0.0
        %857 = vmatprep.subr.mxu0 0.0
        %858 = vmatpush1.msra.mxu0 0.0
        %859 = vmatprep.mubr.f32.mxu0 0.0
        %860 = vmatmul.mubr.f32.gmra.mrb[0].mxu0 %v793
        %v861 = vpop.f32.mrb[0].mxu0
        %v862 = vadd.f32 %v790, %v861
        %v863 = vpop.f32.mrb[0].mxu0
        %864 = vdwg.mxu0
        %v865 = vmax.f32 %v862, 0.0
        %v866 = vld [vmem:[%s4] sm:$0xff]
        %v867 = vld [vmem:[%s5] sm:$0xff]
        %869 = vset.pattern.permute.xlu0 0
        %870 = vperm.xlu0 %869, %v867
        %v871 = vpop.permute.xlu0 %870
        %v874 = vsel %vm458, %v866, 0
        %876 = vmatprep.subr.mxu0 0.0
        %877 = vmatpush1.msra.mxu0 %v865
        %878 = vmatprep.subr.mxu0 0.0
        %879 = vmatpush1.msra.mxu0 0.0
        %880 = vmatprep.subr.mxu0 0.0
        %881 = vmatpush1.msra.mxu0 0.0
        %882 = vmatprep.subr.mxu0 0.0
        %883 = vmatpush1.msra.mxu0 0.0
        %884 = vmatprep.subr.mxu0 0.0
        %885 = vmatpush1.msra.mxu0 0.0
        %886 = vmatprep.subr.mxu0 0.0
        %887 = vmatpush1.msra.mxu0 0.0
        %888 = vmatprep.subr.mxu0 0.0
        %889 = vmatpush1.msra.mxu0 0.0
        %890 = vmatprep.subr.mxu0 0.0
        %891 = vmatpush1.msra.mxu0 0.0
        %892 = vmatprep.subr.mxu0 0.0
        %893 = vmatpush1.msra.mxu0 0.0
        %894 = vmatprep.subr.mxu0 0.0
        %895 = vmatpush1.msra.mxu0 0.0
        %896 = vmatprep.subr.mxu0 0.0
        %897 = vmatpush1.msra.mxu0 0.0
        %898 = vmatprep.subr.mxu0 0.0
        %899 = vmatpush1.msra.mxu0 0.0
        %900 = vmatprep.subr.mxu0 0.0
        %901 = vmatpush1.msra.mxu0 0.0
        %902 = vmatprep.subr.mxu0 0.0
        %903 = vmatpush1.msra.mxu0 0.0
        %904 = vmatprep.subr.mxu0 0.0
        %905 = vmatpush1.msra.mxu0 0.0
        %906 = vmatprep.subr.mxu0 0.0
        %907 = vmatpush1.msra.mxu0 0.0
        %908 = vmatprep.subr.mxu0 0.0
        %909 = vmatpush1.msra.mxu0 0.0
        %910 = vmatprep.subr.mxu0 0.0
        %911 = vmatpush1.msra.mxu0 0.0
        %912 = vmatprep.subr.mxu0 0.0
        %913 = vmatpush1.msra.mxu0 0.0
        %914 = vmatprep.subr.mxu0 0.0
        %915 = vmatpush1.msra.mxu0 0.0
        %916 = vmatprep.subr.mxu0 0.0
        %917 = vmatpush1.msra.mxu0 0.0
        %918 = vmatprep.subr.mxu0 0.0
        %919 = vmatpush1.msra.mxu0 0.0
        %920 = vmatprep.subr.mxu0 0.0
        %921 = vmatpush1.msra.mxu0 0.0
        %922 = vmatprep.subr.mxu0 0.0
        %923 = vmatpush1.msra.mxu0 0.0
        %924 = vmatprep.subr.mxu0 0.0
        %925 = vmatpush1.msra.mxu0 0.0
        %926 = vmatprep.subr.mxu0 0.0
        %927 = vmatpush1.msra.mxu0 0.0
        %928 = vmatprep.subr.mxu0 0.0
        %929 = vmatpush1.msra.mxu0 0.0
        %930 = vmatprep.subr.mxu0 0.0
        %931 = vmatpush1.msra.mxu0 0.0
        %932 = vmatprep.subr.mxu0 0.0
        %933 = vmatpush1.msra.mxu0 0.0
        %934 = vmatprep.subr.mxu0 0.0
        %935 = vmatpush1.msra.mxu0 0.0
        %936 = vmatprep.subr.mxu0 0.0
        %937 = vmatpush1.msra.mxu0 0.0
        %938 = vmatprep.subr.mxu0 0.0
        %939 = vmatpush1.msra.mxu0 0.0
        %940 = vmatprep.mubr.f32.mxu0 0.0
        %941 = vmatmul.mubr.f32.gmra.mrb[0].mxu0 %v874
        %v942 = vpop.f32.mrb[0].mxu0
        %v943 = vadd.f32 %v871, %v942
        %v944 = vpop.f32.mrb[0].mxu0
        %945 = vdwg.mxu0
        %v946 = vxor.u32 %v943, 2147483648
        %v947 = vmul.f32 %v946, 1.442695
        %v948 = vpow.pop %v947
        %v949 = vadd.f32 %v948, 1.0
        %v950 = vrcp.pop %v949
        %v951 = vmul.f32 1.0, %v950
        %s952 = scalar_lea.vmem %s412, 8 [#allocation3]
        %v953 = vld [vmem:[%s952] sm:$0xff]
        %v954 = vmul.f32 %v951, %v953
        %v955 = vld [vmem:[%s6] sm:$0xff]
        %v956 = vld [vmem:[%s7] sm:$0xff]
        %958 = vset.pattern.permute.xlu0 0
        %959 = vperm.xlu0 %958, %v956
        %v960 = vpop.permute.xlu0 %959
        %v963 = vsel %vm458, %v955, 0
        %965 = vmatprep.subr.mxu0 0.0
        %966 = vmatpush1.msra.mxu0 %v954
        %967 = vmatprep.subr.mxu0 0.0
        %968 = vmatpush1.msra.mxu0 0.0
        %969 = vmatprep.subr.mxu0 0.0
        %970 = vmatpush1.msra.mxu0 0.0
        %971 = vmatprep.subr.mxu0 0.0
        %972 = vmatpush1.msra.mxu0 0.0
        %973 = vmatprep.subr.mxu0 0.0
        %974 = vmatpush1.msra.mxu0 0.0
        %975 = vmatprep.subr.mxu0 0.0
        %976 = vmatpush1.msra.mxu0 0.0
        %977 = vmatprep.subr.mxu0 0.0
        %978 = vmatpush1.msra.mxu0 0.0
        %979 = vmatprep.subr.mxu0 0.0
        %980 = vmatpush1.msra.mxu0 0.0
        %981 = vmatprep.subr.mxu0 0.0
        %982 = vmatpush1.msra.mxu0 0.0
        %983 = vmatprep.subr.mxu0 0.0
        %984 = vmatpush1.msra.mxu0 0.0
        %985 = vmatprep.subr.mxu0 0.0
        %986 = vmatpush1.msra.mxu0 0.0
        %987 = vmatprep.subr.mxu0 0.0
        %988 = vmatpush1.msra.mxu0 0.0
        %989 = vmatprep.subr.mxu0 0.0
        %990 = vmatpush1.msra.mxu0 0.0
        %991 = vmatprep.subr.mxu0 0.0
        %992 = vmatpush1.msra.mxu0 0.0
        %993 = vmatprep.subr.mxu0 0.0
        %994 = vmatpush1.msra.mxu0 0.0
        %995 = vmatprep.subr.mxu0 0.0
        %996 = vmatpush1.msra.mxu0 0.0
        %997 = vmatprep.subr.mxu0 0.0
        %998 = vmatpush1.msra.mxu0 0.0
        %999 = vmatprep.subr.mxu0 0.0
        %1000 = vmatpush1.msra.mxu0 0.0
        %1001 = vmatprep.subr.mxu0 0.0
        %1002 = vmatpush1.msra.mxu0 0.0
        %1003 = vmatprep.subr.mxu0 0.0
        %1004 = vmatpush1.msra.mxu0 0.0
        %1005 = vmatprep.subr.mxu0 0.0
        %1006 = vmatpush1.msra.mxu0 0.0
        %1007 = vmatprep.subr.mxu0 0.0
        %1008 = vmatpush1.msra.mxu0 0.0
        %1009 = vmatprep.subr.mxu0 0.0
        %1010 = vmatpush1.msra.mxu0 0.0
        %1011 = vmatprep.subr.mxu0 0.0
        %1012 = vmatpush1.msra.mxu0 0.0
        %1013 = vmatprep.subr.mxu0 0.0
        %1014 = vmatpush1.msra.mxu0 0.0
        %1015 = vmatprep.subr.mxu0 0.0
        %1016 = vmatpush1.msra.mxu0 0.0
        %1017 = vmatprep.subr.mxu0 0.0
        %1018 = vmatpush1.msra.mxu0 0.0
        %1019 = vmatprep.subr.mxu0 0.0
        %1020 = vmatpush1.msra.mxu0 0.0
        %1021 = vmatprep.subr.mxu0 0.0
        %1022 = vmatpush1.msra.mxu0 0.0
        %1023 = vmatprep.subr.mxu0 0.0
        %1024 = vmatpush1.msra.mxu0 0.0
        %1025 = vmatprep.subr.mxu0 0.0
        %1026 = vmatpush1.msra.mxu0 0.0
        %1027 = vmatprep.subr.mxu0 0.0
        %1028 = vmatpush1.msra.mxu0 0.0
        %1029 = vmatprep.mubr.f32.mxu0 0.0
        %1030 = vmatmul.mubr.f32.gmra.mrb[0].mxu0 %v963
        %v1031 = vpop.f32.mrb[0].mxu0
        %v1032 = vadd.f32 %v960, %v1031
        %v1033 = vpop.f32.mrb[0].mxu0
        %1034 = vdwg.mxu0
        %v1035 = vmax.f32 %v1032, 0.0
        %v1036 = vld [vmem:[%s8] sm:$0xff]
        %v1037 = vld [vmem:[%s9] sm:$0xff]
        %1039 = vset.pattern.permute.xlu0 0
        %1040 = vperm.xlu0 %1039, %v1037
        %v1041 = vpop.permute.xlu0 %1040
        %v1044 = vsel %vm458, %v1036, 0
        %1046 = vmatprep.subr.mxu0 0.0
        %1047 = vmatpush1.msra.mxu0 %v1035
        %1048 = vmatprep.subr.mxu0 0.0
        %1049 = vmatpush1.msra.mxu0 0.0
        %1050 = vmatprep.subr.mxu0 0.0
        %1051 = vmatpush1.msra.mxu0 0.0
        %1052 = vmatprep.subr.mxu0 0.0
        %1053 = vmatpush1.msra.mxu0 0.0
        %1054 = vmatprep.subr.mxu0 0.0
        %1055 = vmatpush1.msra.mxu0 0.0
        %1056 = vmatprep.subr.mxu0 0.0
        %1057 = vmatpush1.msra.mxu0 0.0
        %1058 = vmatprep.subr.mxu0 0.0
        %1059 = vmatpush1.msra.mxu0 0.0
        %1060 = vmatprep.subr.mxu0 0.0
        %1061 = vmatpush1.msra.mxu0 0.0
        %1062 = vmatprep.subr.mxu0 0.0
        %1063 = vmatpush1.msra.mxu0 0.0
        %1064 = vmatprep.subr.mxu0 0.0
        %1065 = vmatpush1.msra.mxu0 0.0
        %1066 = vmatprep.subr.mxu0 0.0
        %1067 = vmatpush1.msra.mxu0 0.0
        %1068 = vmatprep.subr.mxu0 0.0
        %1069 = vmatpush1.msra.mxu0 0.0
        %1070 = vmatprep.subr.mxu0 0.0
        %1071 = vmatpush1.msra.mxu0 0.0
        %1072 = vmatprep.subr.mxu0 0.0
        %1073 = vmatpush1.msra.mxu0 0.0
        %1074 = vmatprep.subr.mxu0 0.0
        %1075 = vmatpush1.msra.mxu0 0.0
        %1076 = vmatprep.subr.mxu0 0.0
        %1077 = vmatpush1.msra.mxu0 0.0
        %1078 = vmatprep.subr.mxu0 0.0
        %1079 = vmatpush1.msra.mxu0 0.0
        %1080 = vmatprep.subr.mxu0 0.0
        %1081 = vmatpush1.msra.mxu0 0.0
        %1082 = vmatprep.subr.mxu0 0.0
        %1083 = vmatpush1.msra.mxu0 0.0
        %1084 = vmatprep.subr.mxu0 0.0
        %1085 = vmatpush1.msra.mxu0 0.0
        %1086 = vmatprep.subr.mxu0 0.0
        %1087 = vmatpush1.msra.mxu0 0.0
        %1088 = vmatprep.subr.mxu0 0.0
        %1089 = vmatpush1.msra.mxu0 0.0
        %1090 = vmatprep.subr.mxu0 0.0
        %1091 = vmatpush1.msra.mxu0 0.0
        %1092 = vmatprep.subr.mxu0 0.0
        %1093 = vmatpush1.msra.mxu0 0.0
        %1094 = vmatprep.subr.mxu0 0.0
        %1095 = vmatpush1.msra.mxu0 0.0
        %1096 = vmatprep.subr.mxu0 0.0
        %1097 = vmatpush1.msra.mxu0 0.0
        %1098 = vmatprep.subr.mxu0 0.0
        %1099 = vmatpush1.msra.mxu0 0.0
        %1100 = vmatprep.subr.mxu0 0.0
        %1101 = vmatpush1.msra.mxu0 0.0
        %1102 = vmatprep.subr.mxu0 0.0
        %1103 = vmatpush1.msra.mxu0 0.0
        %1104 = vmatprep.subr.mxu0 0.0
        %1105 = vmatpush1.msra.mxu0 0.0
        %1106 = vmatprep.subr.mxu0 0.0
        %1107 = vmatpush1.msra.mxu0 0.0
        %1108 = vmatprep.subr.mxu0 0.0
        %1109 = vmatpush1.msra.mxu0 0.0
        %1110 = vmatprep.mubr.f32.mxu0 0.0
        %1111 = vmatmul.mubr.f32.gmra.mrb[0].mxu0 %v1044
        %v1112 = vpop.f32.mrb[0].mxu0
        %v1113 = vadd.f32 %v1041, %v1112
        %v1114 = vpop.f32.mrb[0].mxu0
        %1115 = vdwg.mxu0
        %s1116 = scalar_lea.vmem %s449, 8 [#allocation4]
        %1117 = vst [vmem:[%s1116] sm:$0xff] %v1113
        %s1118 = sand.u32 %s249, 1
        %s1119 = sand.u32 %s249, 1
        %s1120 = smul.addr %s1119, 16
        %s1121 = scalar_lea.vmem [#allocation4], %s1120
        // Predicated region
        $region137: #{fcfe_forward.8} parent=127 // pred_check
          %p1122 = pneg %p259
        $region138: #{fcfe_forward.8} parent=127 // pred_check_branch
          %1124 = sbr.rel (%p1122) target = $region140
        $region139: #{fcfe_forward.8} parent=127 // pred_region
          %s1125 = smul.addr %s21, 8
          %s1126 = scalar_lea.vmem %s10, %s1125
          // Predicated region
          $region141: #{fcfe_forward.8} parent=139 // pred_check
            _
          $region142: #{fcfe_forward.8} parent=139 // pred_check_branch
            %1128 = sbr.rel (0) target = $region144
          $region143: #{fcfe_forward.8} parent=139 // pred_region
            // Predicated region
            $region145: #{fcfe_forward.8} parent=143 // pred_check
              _
            $region146: #{fcfe_forward.8} parent=143 // pred_check_branch
              %1130 = sbr.rel (0) target = $region148
            $region147: #{fcfe_forward.8} parent=143 // pred_region
              // Predicated region
              $region160: #{fcfe_forward.8} parent=147 // pred_check
                _
              $region161: #{fcfe_forward.8} parent=147 // pred_check_branch
                %1147 = sbr.rel (0) target = $region163
              $region162: #{fcfe_forward.8} parent=147 // pred_region
                loop: start=0, step=1, limit=1
                $region164: #{fcfe_forward.8} parent=162 // loop_pre_header
                  _
                $region165: #{fcfe_forward.8} parent=162 // loop_header
                  %s1149 = sphi 0, %s1153
                  %p1150 = scmp.ge.s32.totalorder %s1149, 1
                  %s1154 = sphi %s1121, %s1121
                  %s1155 = sphi %s1126, %s1126
                $region166: #{fcfe_forward.8} parent=162 // loop_header_branch
                  %1152 = sbr.rel (%p1150) target = $region170
                $region167: #{fcfe_forward.8} parent=162 // loop_body
                  %v1156 = vld [vmem:[%s1154] sm:$0xff]
                  %1157 = vst [vmem:[%s1155] sm:$0xff] %v1156
                  %v1158 = vld [vmem:[%s1154 + $0x8] sm:$0xff]
                  %1159 = vst [vmem:[%s1155 + $0x10] sm:$0xff] %v1158
                $region168: #{fcfe_forward.8} parent=162 // loop_footer
                  %s1153 = sadd.s32 1, %s1149
                $region169: #{fcfe_forward.8} parent=162 // loop_footer_branch
                  %1148 = sbr.rel target = $region165
                $region170: #{fcfe_forward.8} parent=162 // loop_exit
                  _
              $region163: #{fcfe_forward.8} parent=147 // pred_fallthru
                _
              // Predicated region
              $region171: #{fcfe_forward.8} parent=147 // pred_check
                _
              $region172: #{fcfe_forward.8} parent=147 // pred_check_branch
                %1161 = sbr.rel target = $region174
              $region173: #{fcfe_forward.8} parent=147 // pred_region
                _
              $region174: #{fcfe_forward.8} parent=147 // pred_fallthru
                _
            $region148: #{fcfe_forward.8} parent=143 // pred_fallthru
              _
            // Predicated region
            $region149: #{fcfe_forward.8} parent=143 // pred_check
              _
            $region150: #{fcfe_forward.8} parent=143 // pred_check_branch
              %1132 = sbr.rel target = $region152
            $region151: #{fcfe_forward.8} parent=143 // pred_region
              loop: start=0, step=1, limit=1
              $region153: #{fcfe_forward.8} parent=151 // loop_pre_header
                _
              $region154: #{fcfe_forward.8} parent=151 // loop_header
                %s1135 = sphi 0, %s1139
                %p1136 = scmp.ge.s32.totalorder %s1135, 1
                %s1140 = sphi %s1121, %s1121
                %s1141 = sphi %s1126, %s1126
              $region155: #{fcfe_forward.8} parent=151 // loop_header_branch
                %1138 = sbr.rel (%p1136) target = $region159
              $region156: #{fcfe_forward.8} parent=151 // loop_body
                %v1142 = vld [vmem:[%s1140] sm:$0xff]
                %1143 = vst [vmem:[%s1141] sm:$0xff] %v1142
                %v1144 = vld [vmem:[%s1140 + $0x8] sm:$0xff]
                %1145 = vst [vmem:[%s1141 + $0x10] sm:$0xff] %v1144
              $region157: #{fcfe_forward.8} parent=151 // loop_footer
                %s1139 = sadd.s32 1, %s1135
              $region158: #{fcfe_forward.8} parent=151 // loop_footer_branch
                %1134 = sbr.rel target = $region154
              $region159: #{fcfe_forward.8} parent=151 // loop_exit
                _
            $region152: #{fcfe_forward.8} parent=143 // pred_fallthru
              _
          $region144: #{fcfe_forward.8} parent=139 // pred_fallthru
            _
          %1162 = vnop
        $region140: #{fcfe_forward.8} parent=127 // pred_fallthru
          _
      $region128: #{fcfe_forward.8} parent=5 // pred_fallthru
        _
      %p1163 = scmp.le.s32.totalorder 2, %s16
      // Predicated region
      $region175: #{fcfe_forward.8} parent=5 // pred_check
        %p1164 = pneg %p1163
      $region176: #{fcfe_forward.8} parent=5 // pred_check_branch
        %1166 = sbr.rel (%p1164) target = $region178
      $region177: #{fcfe_forward.8} parent=5 // pred_region
        %s1167 = ssub.s32 %s16, 2
        // Predicated region
        $region179: #{fcfe_forward.8} parent=177 // pred_check
          %p1168 = pneg %p265
        $region180: #{fcfe_forward.8} parent=177 // pred_check_branch
          %1170 = sbr.rel (%p1168) target = $region182
        $region181: #{fcfe_forward.8} parent=177 // pred_region
          %s1171 = sand.u32 %s250, 1
          %s1172 = sand.u32 %s250, 1
          %s1173 = smul.addr %s1172, 16
          %s1174 = scalar_lea.vmem [#allocation4], %s1173
        $region182: #{fcfe_forward.8} parent=177 // pred_fallthru
          _
      $region178: #{fcfe_forward.8} parent=5 // pred_fallthru
        _
    $region6: #{fcfe_forward.8} parent=1 // loop_footer
      %s20 = sadd.s32 1, %s16
    $region7: #{fcfe_forward.8} parent=1 // loop_footer_branch
      %15 = sbr.rel target = $region3
    $region8: #{fcfe_forward.8} parent=1 // loop_exit
      _

// kernel: fcfe_forward.9
$region0: #{fcfe_forward.9}
  #allocation0 [shape = 'u32[]', space=smem, size = 0x4, offset = 0x4, fixed_abs, tag = 'smem constant byte address 0x4 - core index']
  #allocation1 [shape = 'u32[144,128]{1,0:T(1,128)}', space=vmem, size = 0x12000, scoped, tag = 'internal scratch']
  %s0 = inlined_call_operand.vmem [shape: f32[2,4,256], index: 0, kind: input, shape index: {}]
  %s1 = inlined_call_operand.vmem [shape: f32[2,4,256], index: 1, kind: input, shape index: {}]
  %s2 = inlined_call_operand.vmem [shape: f32[2,4,256], index: 2, kind: input, shape index: {}]
  %s3 = inlined_call_operand.vmem [shape: f32[2,8,256], index: 3, kind: input, shape index: {}]
  %s4 = inlined_call_operand.vmem [shape: f32[8,4], index: 4, kind: input, shape index: {}]
  %s5 = inlined_call_operand.vmem [shape: f32[8,1], index: 5, kind: input, shape index: {}]
  %s6 = inlined_call_operand.vmem [shape: f32[2,8,256], index: 6, kind: output, shape index: {}]
  %s7 = sld [smem:[#allocation0]]
  $region252: #{fcfe_forward.9} parent=0
    _
  %s9 = ssub.s32 1, %s7
  %s10 = scalar_select 0, %s9, %s7
  $region1: #{fcfe_forward.9} parent=0
    #allocation2 [shape = 'u8[8192]{0}', space=vmem, size = 0x2000, scoped, tag = 'input window, operand 0']
    #allocation3 [shape = 'u8[8192]{0}', space=vmem, size = 0x2000, scoped, tag = 'input window, operand 1']
    #allocation4 [shape = 'u8[8192]{0}', space=vmem, size = 0x2000, scoped, tag = 'input window, operand 2']
    #allocation5 [shape = 'u8[16384]{0}', space=vmem, size = 0x4000, scoped, tag = 'input window, operand 3']
    #allocation6 [shape = 'u8[16384]{0}', space=vmem, size = 0x4000, scoped, tag = 'output window, operand 0']
    loop: start=0, step=1, limit=4
    $region2: #{fcfe_forward.9} parent=1 // loop_pre_header
      _
    $region3: #{fcfe_forward.9} parent=1 // loop_header
      %s12 = sphi 0, %s16
      %p13 = scmp.ge.s32.totalorder %s12, 4
      %s22 = sphi 0, %s24
      %s25 = sphi 0, %s22
      %s26 = sphi 0, %s25
      %s42 = sphi 0, %s26
      %s48 = sphi 0, %s50
      %s51 = sphi 0, %s48
      %s52 = sphi 0, %s51
      %s68 = sphi 0, %s52
      %s74 = sphi 0, %s76
      %s77 = sphi 0, %s74
      %s78 = sphi 0, %s77
      %s94 = sphi 0, %s78
      %s100 = sphi 0, %s102
      %s103 = sphi 0, %s100
      %s104 = sphi 0, %s103
      %s120 = sphi 0, %s104
      %s124 = sphi 0, %s124
      %s126 = sphi 0, %s124
      %s127 = sphi 0, %s126
      %s141 = sphi 0, %s127
      %s145 = sphi 0, %s145
      %s147 = sphi 0, %s145
      %s148 = sphi 0, %s147
      %s162 = sphi 0, %s148
      %s168 = sphi 0, %s170
      %s171 = sphi 0, %s168
      %s172 = sphi 0, %s171
      %s188 = sphi 0, %s172
    $region4: #{fcfe_forward.9} parent=1 // loop_header_branch
      %15 = sbr.rel (%p13) target = $region8
    $region5: #{fcfe_forward.9} parent=1 // loop_body
      %s17 = ssub.s32 %s12, 1
      %s18 = ssub.s32 %s12, 2
      %s19 = sadd.s32 %s12, 1
      %s20 = ssub.s32 %s12, %s19
      %p21 = scmp.eq.s32.totalorder %s20, 0
      %s23 = sadd.s32 %s22, 1
      %s24 = scalar_select %p21, %s22, %s23
      %p27 = pneg %p21
      %p28 = scmp.eq.s32.totalorder %s12, 1
      %p29 = por %p27, %p28
      %p30 = scmp.ne.s32.totalorder %s22, %s25
      %p31 = scmp.eq.s32.totalorder %s12, 0
      %p32 = por %p30, %p31
      %p33 = scmp.ne.s32.totalorder %s22, %s25
      %p34 = scmp.eq.s32.totalorder %s17, 1
      %p35 = por %p33, %p34
      %p36 = scmp.ne.s32.totalorder %s25, %s26
      %p37 = scmp.eq.s32.totalorder %s17, 0
      %p38 = por %p36, %p37
      %p39 = scmp.ne.s32.totalorder %s25, %s26
      %p40 = scmp.eq.s32.totalorder %s18, 1
      %p41 = por %p39, %p40
      %p43 = scmp.ne.s32.totalorder %s26, %s42
      %p44 = scmp.eq.s32.totalorder %s18, 0
      %p45 = por %p43, %p44
      %s46 = ssub.s32 %s12, %s19
      %p47 = scmp.eq.s32.totalorder %s46, 0
      %s49 = sadd.s32 %s48, 1
      %s50 = scalar_select %p47, %s48, %s49
      %p53 = pneg %p47
      %p54 = scmp.eq.s32.totalorder %s12, 1
      %p55 = por %p53, %p54
      %p56 = scmp.ne.s32.totalorder %s48, %s51
      %p57 = scmp.eq.s32.totalorder %s12, 0
      %p58 = por %p56, %p57
      %p59 = scmp.ne.s32.totalorder %s48, %s51
      %p60 = scmp.eq.s32.totalorder %s17, 1
      %p61 = por %p59, %p60
      %p62 = scmp.ne.s32.totalorder %s51, %s52
      %p63 = scmp.eq.s32.totalorder %s17, 0
      %p64 = por %p62, %p63
      %p65 = scmp.ne.s32.totalorder %s51, %s52
      %p66 = scmp.eq.s32.totalorder %s18, 1
      %p67 = por %p65, %p66
      %p69 = scmp.ne.s32.totalorder %s52, %s68
      %p70 = scmp.eq.s32.totalorder %s18, 0
      %p71 = por %p69, %p70
      %s72 = ssub.s32 %s12, %s19
      %p73 = scmp.eq.s32.totalorder %s72, 0
      %s75 = sadd.s32 %s74, 1
      %s76 = scalar_select %p73, %s74, %s75
      %p79 = pneg %p73
      %p80 = scmp.eq.s32.totalorder %s12, 1
      %p81 = por %p79, %p80
      %p82 = scmp.ne.s32.totalorder %s74, %s77
      %p83 = scmp.eq.s32.totalorder %s12, 0
      %p84 = por %p82, %p83
      %p85 = scmp.ne.s32.totalorder %s74, %s77
      %p86 = scmp.eq.s32.totalorder %s17, 1
      %p87 = por %p85, %p86
      %p88 = scmp.ne.s32.totalorder %s77, %s78
      %p89 = scmp.eq.s32.totalorder %s17, 0
      %p90 = por %p88, %p89
      %p91 = scmp.ne.s32.totalorder %s77, %s78
      %p92 = scmp.eq.s32.totalorder %s18, 1
      %p93 = por %p91, %p92
      %p95 = scmp.ne.s32.totalorder %s78, %s94
      %p96 = scmp.eq.s32.totalorder %s18, 0
      %p97 = por %p95, %p96
      %s98 = ssub.s32 %s12, %s19
      %p99 = scmp.eq.s32.totalorder %s98, 0
      %s101 = sadd.s32 %s100, 1
      %s102 = scalar_select %p99, %s100, %s101
      %p105 = pneg %p99
      %p106 = scmp.eq.s32.totalorder %s12, 1
      %p107 = por %p105, %p106
      %p108 = scmp.ne.s32.totalorder %s100, %s103
      %p109 = scmp.eq.s32.totalorder %s12, 0
      %p110 = por %p108, %p109
      %p111 = scmp.ne.s32.totalorder %s100, %s103
      %p112 = scmp.eq.s32.totalorder %s17, 1
      %p113 = por %p111, %p112
      %p114 = scmp.ne.s32.totalorder %s103, %s104
      %p115 = scmp.eq.s32.totalorder %s17, 0
      %p116 = por %p114, %p115
      %p117 = scmp.ne.s32.totalorder %s103, %s104
      %p118 = scmp.eq.s32.totalorder %s18, 1
      %p119 = por %p117, %p118
      %p121 = scmp.ne.s32.totalorder %s104, %s120
      %p122 = scmp.eq.s32.totalorder %s18, 0
      %p123 = por %p121, %p122
      %s125 = sadd.s32 %s124, 1
      %p128 = scmp.eq.s32.totalorder %s12, 1
      %p129 = scmp.ne.s32.totalorder %s124, %s126
      %p130 = scmp.eq.s32.totalorder %s12, 0
      %p131 = por %p129, %p130
      %p132 = scmp.ne.s32.totalorder %s124, %s126
      %p133 = scmp.eq.s32.totalorder %s17, 1
      %p134 = por %p132, %p133
      %p135 = scmp.ne.s32.totalorder %s126, %s127
      %p136 = scmp.eq.s32.totalorder %s17, 0
      %p137 = por %p135, %p136
      %p138 = scmp.ne.s32.totalorder %s126, %s127
      %p139 = scmp.eq.s32.totalorder %s18, 1
      %p140 = por %p138, %p139
      %p142 = scmp.ne.s32.totalorder %s127, %s141
      %p143 = scmp.eq.s32.totalorder %s18, 0
      %p144 = por %p142, %p143
      %s146 = sadd.s32 %s145, 1
      %p149 = scmp.eq.s32.totalorder %s12, 1
      %p150 = scmp.ne.s32.totalorder %s145, %s147
      %p151 = scmp.eq.s32.totalorder %s12, 0
      %p152 = por %p150, %p151
      %p153 = scmp.ne.s32.totalorder %s145, %s147
      %p154 = scmp.eq.s32.totalorder %s17, 1
      %p155 = por %p153, %p154
      %p156 = scmp.ne.s32.totalorder %s147, %s148
      %p157 = scmp.eq.s32.totalorder %s17, 0
      %p158 = por %p156, %p157
      %p159 = scmp.ne.s32.totalorder %s147, %s148
      %p160 = scmp.eq.s32.totalorder %s18, 1
      %p161 = por %p159, %p160
      %p163 = scmp.ne.s32.totalorder %s148, %s162
      %p164 = scmp.eq.s32.totalorder %s18, 0
      %p165 = por %p163, %p164
      %s166 = ssub.s32 %s12, %s19
      %p167 = scmp.eq.s32.totalorder %s166, 0
      %s169 = sadd.s32 %s168, 1
      %s170 = scalar_select %p167, %s168, %s169
      %p173 = pneg %p167
      %p174 = scmp.eq.s32.totalorder %s12, 1
      %p175 = por %p173, %p174
      %p176 = scmp.ne.s32.totalorder %s168, %s171
      %p177 = scmp.eq.s32.totalorder %s12, 0
      %p178 = por %p176, %p177
      %p179 = scmp.ne.s32.totalorder %s168, %s171
      %p180 = scmp.eq.s32.totalorder %s17, 1
      %p181 = por %p179, %p180
      %p182 = scmp.ne.s32.totalorder %s171, %s172
      %p183 = scmp.eq.s32.totalorder %s17, 0
      %p184 = por %p182, %p183
      %p185 = scmp.ne.s32.totalorder %s171, %s172
      %p186 = scmp.eq.s32.totalorder %s18, 1
      %p187 = por %p185, %p186
      %p189 = scmp.ne.s32.totalorder %s172, %s188
      %p190 = scmp.eq.s32.totalorder %s18, 0
      %p191 = por %p189, %p190
      %p192 = scmp.le.s32.totalorder 1, %s12
      %p193 = scmp.lt.s32.totalorder %s12, 3
      %p194 = pnand %p192, %p193
      %p195 = pneg %p194
      // Predicated region
      $region9: #{fcfe_forward.9} parent=5 // pred_check
        _
      $region10: #{fcfe_forward.9} parent=5 // pred_check_branch
        %197 = sbr.rel (%p194) target = $region12
      $region11: #{fcfe_forward.9} parent=5 // pred_region
        %s198 = ssub.s32 %s12, 1
        // Predicated region
        $region13: #{fcfe_forward.9} parent=11 // pred_check
          %p199 = pneg %p137
        $region14: #{fcfe_forward.9} parent=11 // pred_check_branch
          %201 = sbr.rel (%p199) target = $region16
        $region15: #{fcfe_forward.9} parent=11 // pred_region
          _
        $region16: #{fcfe_forward.9} parent=11 // pred_fallthru
          _
        // Predicated region
        $region17: #{fcfe_forward.9} parent=11 // pred_check
          %p202 = pneg %p158
        $region18: #{fcfe_forward.9} parent=11 // pred_check_branch
          %204 = sbr.rel (%p202) target = $region20
        $region19: #{fcfe_forward.9} parent=11 // pred_region
          _
        $region20: #{fcfe_forward.9} parent=11 // pred_fallthru
          _
      $region12: #{fcfe_forward.9} parent=5 // pred_fallthru
        _
      %p205 = scmp.lt.s32.totalorder %s12, 2
      // Predicated region
      $region21: #{fcfe_forward.9} parent=5 // pred_check
        %p206 = pneg %p205
      $region22: #{fcfe_forward.9} parent=5 // pred_check_branch
        %208 = sbr.rel (%p206) target = $region24
      $region23: #{fcfe_forward.9} parent=5 // pred_region
        // Predicated region
        $region25: #{fcfe_forward.9} parent=23 // pred_check
          %p209 = pneg %p32
        $region26: #{fcfe_forward.9} parent=23 // pred_check_branch
          %211 = sbr.rel (%p209) target = $region28
        $region27: #{fcfe_forward.9} parent=23 // pred_region
          %s212 = sand.u32 %s22, 1
          %s213 = sand.u32 %s22, 1
          %s214 = smul.addr %s213, 8
          %s215 = scalar_lea.vmem [#allocation2], %s214
          %s216 = smul.addr %s12, 4
          %s217 = scalar_lea.vmem %s0, %s216
          // Predicated region
          $region29: #{fcfe_forward.9} parent=27 // pred_check
            _
          $region30: #{fcfe_forward.9} parent=27 // pred_check_branch
            %219 = sbr.rel (0) target = $region32
          $region31: #{fcfe_forward.9} parent=27 // pred_region
            // Predicated region
            $region33: #{fcfe_forward.9} parent=31 // pred_check
              _
            $region34: #{fcfe_forward.9} parent=31 // pred_check_branch
              %221 = sbr.rel target = $region36
            $region35: #{fcfe_forward.9} parent=31 // pred_region
              // Predicated region
              $region48: #{fcfe_forward.9} parent=35 // pred_check
                _
              $region49: #{fcfe_forward.9} parent=35 // pred_check_branch
                %238 = sbr.rel (0) target = $region51
              $region50: #{fcfe_forward.9} parent=35 // pred_region
                loop: start=0, step=1, limit=1
                $region52: #{fcfe_forward.9} parent=50 // loop_pre_header
                  _
                $region53: #{fcfe_forward.9} parent=50 // loop_header
                  %s240 = sphi 0, %s244
                  %p241 = scmp.ge.s32.totalorder %s240, 1
                  %s245 = sphi %s217, %s217
                  %s246 = sphi %s215, %s215
                $region54: #{fcfe_forward.9} parent=50 // loop_header_branch
                  %243 = sbr.rel (%p241) target = $region58
                $region55: #{fcfe_forward.9} parent=50 // loop_body
                  _
                $region56: #{fcfe_forward.9} parent=50 // loop_footer
                  %s244 = sadd.s32 1, %s240
                $region57: #{fcfe_forward.9} parent=50 // loop_footer_branch
                  %239 = sbr.rel target = $region53
                $region58: #{fcfe_forward.9} parent=50 // loop_exit
                  _
                loop: start=0, step=1, limit=1
                $region59: #{fcfe_forward.9} parent=50 // loop_pre_header
                  _
                $region60: #{fcfe_forward.9} parent=50 // loop_header
                  %s249 = sphi 0, %s253
                  %p250 = scmp.ge.s32.totalorder %s249, 1
                  %s254 = sphi %s217, %s217
                  %s255 = sphi %s215, %s215
                $region61: #{fcfe_forward.9} parent=50 // loop_header_branch
                  %252 = sbr.rel (%p250) target = $region65
                $region62: #{fcfe_forward.9} parent=50 // loop_body
                  %v256 = vld [vmem:[%s254] sm:$0xf]
                  %257 = vst [vmem:[%s255] sm:$0xf] %v256
                  %v258 = vld [vmem:[%s254 + $0x8] sm:$0xf]
                  %259 = vst [vmem:[%s255 + $0x4] sm:$0xf] %v258
                $region63: #{fcfe_forward.9} parent=50 // loop_footer
                  %s253 = sadd.s32 1, %s249
                $region64: #{fcfe_forward.9} parent=50 // loop_footer_branch
                  %248 = sbr.rel target = $region60
                $region65: #{fcfe_forward.9} parent=50 // loop_exit
                  _
              $region51: #{fcfe_forward.9} parent=35 // pred_fallthru
                _
            $region36: #{fcfe_forward.9} parent=31 // pred_fallthru
              _
            // Predicated region
            $region37: #{fcfe_forward.9} parent=31 // pred_check
              _
            $region38: #{fcfe_forward.9} parent=31 // pred_check_branch
              %223 = sbr.rel (0) target = $region40
            $region39: #{fcfe_forward.9} parent=31 // pred_region
              loop: start=0, step=1, limit=1
              $region41: #{fcfe_forward.9} parent=39 // loop_pre_header
                _
              $region42: #{fcfe_forward.9} parent=39 // loop_header
                %s226 = sphi 0, %s230
                %p227 = scmp.ge.s32.totalorder %s226, 1
                %s231 = sphi %s217, %s217
                %s232 = sphi %s215, %s215
              $region43: #{fcfe_forward.9} parent=39 // loop_header_branch
                %229 = sbr.rel (%p227) target = $region47
              $region44: #{fcfe_forward.9} parent=39 // loop_body
                %v233 = vld [vmem:[%s231] sm:$0xf]
                %234 = vst [vmem:[%s232] sm:$0xf] %v233
                %v235 = vld [vmem:[%s231 + $0x8] sm:$0xf]
                %236 = vst [vmem:[%s232 + $0x4] sm:$0xf] %v235
              $region45: #{fcfe_forward.9} parent=39 // loop_footer
                %s230 = sadd.s32 1, %s226
              $region46: #{fcfe_forward.9} parent=39 // loop_footer_branch
                %225 = sbr.rel target = $region42
              $region47: #{fcfe_forward.9} parent=39 // loop_exit
                _
            $region40: #{fcfe_forward.9} parent=31 // pred_fallthru
              _
          $region32: #{fcfe_forward.9} parent=27 // pred_fallthru
            _
          %260 = vnop
        $region28: #{fcfe_forward.9} parent=23 // pred_fallthru
          _
        // Predicated region
        $region66: #{fcfe_forward.9} parent=23 // pred_check
          %p261 = pneg %p58
        $region67: #{fcfe_forward.9} parent=23 // pred_check_branch
          %263 = sbr.rel (%p261) target = $region69
        $region68: #{fcfe_forward.9} parent=23 // pred_region
          %s264 = sand.u32 %s48, 1
          %s265 = sand.u32 %s48, 1
          %s266 = smul.addr %s265, 8
          %s267 = scalar_lea.vmem [#allocation3], %s266
          %s268 = smul.addr %s12, 4
          %s269 = scalar_lea.vmem %s1, %s268
          // Predicated region
          $region70: #{fcfe_forward.9} parent=68 // pred_check
            _
          $region71: #{fcfe_forward.9} parent=68 // pred_check_branch
            %271 = sbr.rel (0) target = $region73
          $region72: #{fcfe_forward.9} parent=68 // pred_region
            // Predicated region
            $region74: #{fcfe_forward.9} parent=72 // pred_check
              _
            $region75: #{fcfe_forward.9} parent=72 // pred_check_branch
              %273 = sbr.rel target = $region77
            $region76: #{fcfe_forward.9} parent=72 // pred_region
              // Predicated region
              $region89: #{fcfe_forward.9} parent=76 // pred_check
                _
              $region90: #{fcfe_forward.9} parent=76 // pred_check_branch
                %290 = sbr.rel (0) target = $region92
              $region91: #{fcfe_forward.9} parent=76 // pred_region
                loop: start=0, step=1, limit=1
                $region93: #{fcfe_forward.9} parent=91 // loop_pre_header
                  _
                $region94: #{fcfe_forward.9} parent=91 // loop_header
                  %s292 = sphi 0, %s296
                  %p293 = scmp.ge.s32.totalorder %s292, 1
                  %s297 = sphi %s269, %s269
                  %s298 = sphi %s267, %s267
                $region95: #{fcfe_forward.9} parent=91 // loop_header_branch
                  %295 = sbr.rel (%p293) target = $region99
                $region96: #{fcfe_forward.9} parent=91 // loop_body
                  _
                $region97: #{fcfe_forward.9} parent=91 // loop_footer
                  %s296 = sadd.s32 1, %s292
                $region98: #{fcfe_forward.9} parent=91 // loop_footer_branch
                  %291 = sbr.rel target = $region94
                $region99: #{fcfe_forward.9} parent=91 // loop_exit
                  _
                loop: start=0, step=1, limit=1
                $region100: #{fcfe_forward.9} parent=91 // loop_pre_header
                  _
                $region101: #{fcfe_forward.9} parent=91 // loop_header
                  %s301 = sphi 0, %s305
                  %p302 = scmp.ge.s32.totalorder %s301, 1
                  %s306 = sphi %s269, %s269
                  %s307 = sphi %s267, %s267
                $region102: #{fcfe_forward.9} parent=91 // loop_header_branch
                  %304 = sbr.rel (%p302) target = $region106
                $region103: #{fcfe_forward.9} parent=91 // loop_body
                  %v308 = vld [vmem:[%s306] sm:$0xf]
                  %309 = vst [vmem:[%s307] sm:$0xf] %v308
                  %v310 = vld [vmem:[%s306 + $0x8] sm:$0xf]
                  %311 = vst [vmem:[%s307 + $0x4] sm:$0xf] %v310
                $region104: #{fcfe_forward.9} parent=91 // loop_footer
                  %s305 = sadd.s32 1, %s301
                $region105: #{fcfe_forward.9} parent=91 // loop_footer_branch
                  %300 = sbr.rel target = $region101
                $region106: #{fcfe_forward.9} parent=91 // loop_exit
                  _
              $region92: #{fcfe_forward.9} parent=76 // pred_fallthru
                _
            $region77: #{fcfe_forward.9} parent=72 // pred_fallthru
              _
            // Predicated region
            $region78: #{fcfe_forward.9} parent=72 // pred_check
              _
            $region79: #{fcfe_forward.9} parent=72 // pred_check_branch
              %275 = sbr.rel (0) target = $region81
            $region80: #{fcfe_forward.9} parent=72 // pred_region
              loop: start=0, step=1, limit=1
              $region82: #{fcfe_forward.9} parent=80 // loop_pre_header
                _
              $region83: #{fcfe_forward.9} parent=80 // loop_header
                %s278 = sphi 0, %s282
                %p279 = scmp.ge.s32.totalorder %s278, 1
                %s283 = sphi %s269, %s269
                %s284 = sphi %s267, %s267
              $region84: #{fcfe_forward.9} parent=80 // loop_header_branch
                %281 = sbr.rel (%p279) target = $region88
              $region85: #{fcfe_forward.9} parent=80 // loop_body
                %v285 = vld [vmem:[%s283] sm:$0xf]
                %286 = vst [vmem:[%s284] sm:$0xf] %v285
                %v287 = vld [vmem:[%s283 + $0x8] sm:$0xf]
                %288 = vst [vmem:[%s284 + $0x4] sm:$0xf] %v287
              $region86: #{fcfe_forward.9} parent=80 // loop_footer
                %s282 = sadd.s32 1, %s278
              $region87: #{fcfe_forward.9} parent=80 // loop_footer_branch
                %277 = sbr.rel target = $region83
              $region88: #{fcfe_forward.9} parent=80 // loop_exit
                _
            $region81: #{fcfe_forward.9} parent=72 // pred_fallthru
              _
          $region73: #{fcfe_forward.9} parent=68 // pred_fallthru
            _
          %312 = vnop
        $region69: #{fcfe_forward.9} parent=23 // pred_fallthru
          _
        // Predicated region
        $region107: #{fcfe_forward.9} parent=23 // pred_check
          %p313 = pneg %p84
        $region108: #{fcfe_forward.9} parent=23 // pred_check_branch
          %315 = sbr.rel (%p313) target = $region110
        $region109: #{fcfe_forward.9} parent=23 // pred_region
          %s316 = sand.u32 %s74, 1
          %s317 = sand.u32 %s74, 1
          %s318 = smul.addr %s317, 8
          %s319 = scalar_lea.vmem [#allocation4], %s318
          %s320 = smul.addr %s12, 4
          %s321 = scalar_lea.vmem %s2, %s320
          // Predicated region
          $region111: #{fcfe_forward.9} parent=109 // pred_check
            _
          $region112: #{fcfe_forward.9} parent=109 // pred_check_branch
            %323 = sbr.rel (0) target = $region114
          $region113: #{fcfe_forward.9} parent=109 // pred_region
            // Predicated region
            $region115: #{fcfe_forward.9} parent=113 // pred_check
              _
            $region116: #{fcfe_forward.9} parent=113 // pred_check_branch
              %325 = sbr.rel target = $region118
            $region117: #{fcfe_forward.9} parent=113 // pred_region
              // Predicated region
              $region130: #{fcfe_forward.9} parent=117 // pred_check
                _
              $region131: #{fcfe_forward.9} parent=117 // pred_check_branch
                %342 = sbr.rel (0) target = $region133
              $region132: #{fcfe_forward.9} parent=117 // pred_region
                loop: start=0, step=1, limit=1
                $region134: #{fcfe_forward.9} parent=132 // loop_pre_header
                  _
                $region135: #{fcfe_forward.9} parent=132 // loop_header
                  %s344 = sphi 0, %s348
                  %p345 = scmp.ge.s32.totalorder %s344, 1
                  %s349 = sphi %s321, %s321
                  %s350 = sphi %s319, %s319
                $region136: #{fcfe_forward.9} parent=132 // loop_header_branch
                  %347 = sbr.rel (%p345) target = $region140
                $region137: #{fcfe_forward.9} parent=132 // loop_body
                  _
                $region138: #{fcfe_forward.9} parent=132 // loop_footer
                  %s348 = sadd.s32 1, %s344
                $region139: #{fcfe_forward.9} parent=132 // loop_footer_branch
                  %343 = sbr.rel target = $region135
                $region140: #{fcfe_forward.9} parent=132 // loop_exit
                  _
                loop: start=0, step=1, limit=1
                $region141: #{fcfe_forward.9} parent=132 // loop_pre_header
                  _
                $region142: #{fcfe_forward.9} parent=132 // loop_header
                  %s353 = sphi 0, %s357
                  %p354 = scmp.ge.s32.totalorder %s353, 1
                  %s358 = sphi %s321, %s321
                  %s359 = sphi %s319, %s319
                $region143: #{fcfe_forward.9} parent=132 // loop_header_branch
                  %356 = sbr.rel (%p354) target = $region147
                $region144: #{fcfe_forward.9} parent=132 // loop_body
                  %v360 = vld [vmem:[%s358] sm:$0xf]
                  %361 = vst [vmem:[%s359] sm:$0xf] %v360
                  %v362 = vld [vmem:[%s358 + $0x8] sm:$0xf]
                  %363 = vst [vmem:[%s359 + $0x4] sm:$0xf] %v362
                $region145: #{fcfe_forward.9} parent=132 // loop_footer
                  %s357 = sadd.s32 1, %s353
                $region146: #{fcfe_forward.9} parent=132 // loop_footer_branch
                  %352 = sbr.rel target = $region142
                $region147: #{fcfe_forward.9} parent=132 // loop_exit
                  _
              $region133: #{fcfe_forward.9} parent=117 // pred_fallthru
                _
            $region118: #{fcfe_forward.9} parent=113 // pred_fallthru
              _
            // Predicated region
            $region119: #{fcfe_forward.9} parent=113 // pred_check
              _
            $region120: #{fcfe_forward.9} parent=113 // pred_check_branch
              %327 = sbr.rel (0) target = $region122
            $region121: #{fcfe_forward.9} parent=113 // pred_region
              loop: start=0, step=1, limit=1
              $region123: #{fcfe_forward.9} parent=121 // loop_pre_header
                _
              $region124: #{fcfe_forward.9} parent=121 // loop_header
                %s330 = sphi 0, %s334
                %p331 = scmp.ge.s32.totalorder %s330, 1
                %s335 = sphi %s321, %s321
                %s336 = sphi %s319, %s319
              $region125: #{fcfe_forward.9} parent=121 // loop_header_branch
                %333 = sbr.rel (%p331) target = $region129
              $region126: #{fcfe_forward.9} parent=121 // loop_body
                %v337 = vld [vmem:[%s335] sm:$0xf]
                %338 = vst [vmem:[%s336] sm:$0xf] %v337
                %v339 = vld [vmem:[%s335 + $0x8] sm:$0xf]
                %340 = vst [vmem:[%s336 + $0x4] sm:$0xf] %v339
              $region127: #{fcfe_forward.9} parent=121 // loop_footer
                %s334 = sadd.s32 1, %s330
              $region128: #{fcfe_forward.9} parent=121 // loop_footer_branch
                %329 = sbr.rel target = $region124
              $region129: #{fcfe_forward.9} parent=121 // loop_exit
                _
            $region122: #{fcfe_forward.9} parent=113 // pred_fallthru
              _
          $region114: #{fcfe_forward.9} parent=109 // pred_fallthru
            _
          %364 = vnop
        $region110: #{fcfe_forward.9} parent=23 // pred_fallthru
          _
        // Predicated region
        $region148: #{fcfe_forward.9} parent=23 // pred_check
          %p365 = pneg %p110
        $region149: #{fcfe_forward.9} parent=23 // pred_check_branch
          %367 = sbr.rel (%p365) target = $region151
        $region150: #{fcfe_forward.9} parent=23 // pred_region
          %s368 = sand.u32 %s100, 1
          %s369 = sand.u32 %s100, 1
          %s370 = smul.addr %s369, 16
          %s371 = scalar_lea.vmem [#allocation5], %s370
          %s372 = smul.addr %s12, 8
          %s373 = scalar_lea.vmem %s3, %s372
          // Predicated region
          $region152: #{fcfe_forward.9} parent=150 // pred_check
            _
          $region153: #{fcfe_forward.9} parent=150 // pred_check_branch
            %375 = sbr.rel (0) target = $region155
          $region154: #{fcfe_forward.9} parent=150 // pred_region
            // Predicated region
            $region156: #{fcfe_forward.9} parent=154 // pred_check
              _
            $region157: #{fcfe_forward.9} parent=154 // pred_check_branch
              %377 = sbr.rel (0) target = $region159
            $region158: #{fcfe_forward.9} parent=154 // pred_region
              // Predicated region
              $region171: #{fcfe_forward.9} parent=158 // pred_check
                _
              $region172: #{fcfe_forward.9} parent=158 // pred_check_branch
                %394 = sbr.rel (0) target = $region174
              $region173: #{fcfe_forward.9} parent=158 // pred_region
                loop: start=0, step=1, limit=1
                $region175: #{fcfe_forward.9} parent=173 // loop_pre_header
                  _
                $region176: #{fcfe_forward.9} parent=173 // loop_header
                  %s396 = sphi 0, %s400
                  %p397 = scmp.ge.s32.totalorder %s396, 1
                  %s401 = sphi %s373, %s373
                  %s402 = sphi %s371, %s371
                $region177: #{fcfe_forward.9} parent=173 // loop_header_branch
                  %399 = sbr.rel (%p397) target = $region181
                $region178: #{fcfe_forward.9} parent=173 // loop_body
                  %v403 = vld [vmem:[%s401] sm:$0xff]
                  %404 = vst [vmem:[%s402] sm:$0xff] %v403
                  %v405 = vld [vmem:[%s401 + $0x10] sm:$0xff]
                  %406 = vst [vmem:[%s402 + $0x8] sm:$0xff] %v405
                $region179: #{fcfe_forward.9} parent=173 // loop_footer
                  %s400 = sadd.s32 1, %s396
                $region180: #{fcfe_forward.9} parent=173 // loop_footer_branch
                  %395 = sbr.rel target = $region176
                $region181: #{fcfe_forward.9} parent=173 // loop_exit
                  _
              $region174: #{fcfe_forward.9} parent=158 // pred_fallthru
                _
              // Predicated region
              $region182: #{fcfe_forward.9} parent=158 // pred_check
                _
              $region183: #{fcfe_forward.9} parent=158 // pred_check_branch
                %408 = sbr.rel target = $region185
              $region184: #{fcfe_forward.9} parent=158 // pred_region
                _
              $region185: #{fcfe_forward.9} parent=158 // pred_fallthru
                _
            $region159: #{fcfe_forward.9} parent=154 // pred_fallthru
              _
            // Predicated region
            $region160: #{fcfe_forward.9} parent=154 // pred_check
              _
            $region161: #{fcfe_forward.9} parent=154 // pred_check_branch
              %379 = sbr.rel target = $region163
            $region162: #{fcfe_forward.9} parent=154 // pred_region
              loop: start=0, step=1, limit=1
              $region164: #{fcfe_forward.9} parent=162 // loop_pre_header
                _
              $region165: #{fcfe_forward.9} parent=162 // loop_header
                %s382 = sphi 0, %s386
                %p383 = scmp.ge.s32.totalorder %s382, 1
                %s387 = sphi %s373, %s373
                %s388 = sphi %s371, %s371
              $region166: #{fcfe_forward.9} parent=162 // loop_header_branch
                %385 = sbr.rel (%p383) target = $region170
              $region167: #{fcfe_forward.9} parent=162 // loop_body
                %v389 = vld [vmem:[%s387] sm:$0xff]
                %390 = vst [vmem:[%s388] sm:$0xff] %v389
                %v391 = vld [vmem:[%s387 + $0x10] sm:$0xff]
                %392 = vst [vmem:[%s388 + $0x8] sm:$0xff] %v391
              $region168: #{fcfe_forward.9} parent=162 // loop_footer
                %s386 = sadd.s32 1, %s382
              $region169: #{fcfe_forward.9} parent=162 // loop_footer_branch
                %381 = sbr.rel target = $region165
              $region170: #{fcfe_forward.9} parent=162 // loop_exit
                _
            $region163: #{fcfe_forward.9} parent=154 // pred_fallthru
              _
          $region155: #{fcfe_forward.9} parent=150 // pred_fallthru
            _
          %409 = vnop
        $region151: #{fcfe_forward.9} parent=23 // pred_fallthru
          _
      $region24: #{fcfe_forward.9} parent=5 // pred_fallthru
        _
      %p410 = scmp.le.s32.totalorder 1, %s12
      %p411 = scmp.lt.s32.totalorder %s12, 3
      %p412 = pnand %p410, %p411
      %p413 = pneg %p412
      // Predicated region
      $region186: #{fcfe_forward.9} parent=5 // pred_check
        _
      $region187: #{fcfe_forward.9} parent=5 // pred_check_branch
        %415 = sbr.rel (%p412) target = $region189
      $region188: #{fcfe_forward.9} parent=5 // pred_region
        %s416 = ssub.s32 %s12, 1
        %s417 = sand.u32 %s25, 1
        %s418 = sand.u32 %s25, 1
        %s419 = smul.addr %s418, 8
        %s420 = scalar_lea.vmem [#allocation2], %s419
        // Predicated region
        $region190: #{fcfe_forward.9} parent=188 // pred_check
          %p421 = pneg %p38
        $region191: #{fcfe_forward.9} parent=188 // pred_check_branch
          %423 = sbr.rel (%p421) target = $region193
        $region192: #{fcfe_forward.9} parent=188 // pred_region
          _
        $region193: #{fcfe_forward.9} parent=188 // pred_fallthru
          _
        %s424 = sand.u32 %s51, 1
        %s425 = sand.u32 %s51, 1
        %s426 = smul.addr %s425, 8
        %s427 = scalar_lea.vmem [#allocation3], %s426
        // Predicated region
        $region194: #{fcfe_forward.9} parent=188 // pred_check
          %p428 = pneg %p64
        $region195: #{fcfe_forward.9} parent=188 // pred_check_branch
          %430 = sbr.rel (%p428) target = $region197
        $region196: #{fcfe_forward.9} parent=188 // pred_region
          _
        $region197: #{fcfe_forward.9} parent=188 // pred_fallthru
          _
        %s431 = sand.u32 %s77, 1
        %s432 = sand.u32 %s77, 1
        %s433 = smul.addr %s432, 8
        %s434 = scalar_lea.vmem [#allocation4], %s433
        // Predicated region
        $region198: #{fcfe_forward.9} parent=188 // pred_check
          %p435 = pneg %p90
        $region199: #{fcfe_forward.9} parent=188 // pred_check_branch
          %437 = sbr.rel (%p435) target = $region201
        $region200: #{fcfe_forward.9} parent=188 // pred_region
          _
        $region201: #{fcfe_forward.9} parent=188 // pred_fallthru
          _
        %s438 = sand.u32 %s103, 1
        %s439 = sand.u32 %s103, 1
        %s440 = smul.addr %s439, 16
        %s441 = scalar_lea.vmem [#allocation5], %s440
        // Predicated region
        $region202: #{fcfe_forward.9} parent=188 // pred_check
          %p442 = pneg %p116
        $region203: #{fcfe_forward.9} parent=188 // pred_check_branch
          %444 = sbr.rel (%p442) target = $region205
        $region204: #{fcfe_forward.9} parent=188 // pred_region
          _
        $region205: #{fcfe_forward.9} parent=188 // pred_fallthru
          _
        %s445 = sand.u32 %s25, 1
        %s446 = sand.u32 %s25, 1
        %s447 = smul.addr %s446, 8
        %s448 = scalar_lea.vmem [#allocation2], %s447
        %p449 = pneg %p38
        %p450 = pneg %p35
        %s451 = sand.u32 %s51, 1
        %s452 = sand.u32 %s51, 1
        %s453 = smul.addr %s452, 8
        %s454 = scalar_lea.vmem [#allocation3], %s453
        %p455 = pneg %p64
        %p456 = pneg %p61
        %s457 = sand.u32 %s77, 1
        %s458 = sand.u32 %s77, 1
        %s459 = smul.addr %s458, 8
        %s460 = scalar_lea.vmem [#allocation4], %s459
        %p461 = pneg %p90
        %p462 = pneg %p87
        %s463 = sand.u32 %s103, 1
        %s464 = sand.u32 %s103, 1
        %s465 = smul.addr %s464, 16
        %s466 = scalar_lea.vmem [#allocation5], %s465
        %p467 = pneg %p116
        %p468 = pneg %p113
        %p469 = pneg %p137
        %p470 = pneg %p134
        %p471 = pneg %p158
        %p472 = pneg %p155
        %p473 = pneg %p184
        %p474 = pneg %p181
        %s475 = sand.u32 %s171, 1
        %s476 = sand.u32 %s171, 1
        %s477 = smul.addr %s476, 16
        %s478 = scalar_lea.vmem [#allocation6], %s477
        %v479 = vld [vmem:[%s420] sm:$0xf]
        %v480 = vld [vmem:[%s434] sm:$0xf]
        %v481 = vadd.f32 %v479, %v480
        %v482 = vld [vmem:[%s427] sm:$0xf]
        %v483 = vadd.f32 %v481, %v482
        %v484 = vld [vmem:[%s4] sm:$0xff]
        %v485 = vld [vmem:[%s5] sm:$0xff]
        %487 = vset.pattern.permute.xlu0 0
        %488 = vperm.xlu0 %487, %v485
        %v489 = vpop.permute.xlu0 %488
        %vm491 = vcmask 31744
        %v493 = vsel %vm491, %v484, 0
        %vm495 = vcmask 1043456
        %v497 = vsel %vm495, %v483, 0
        %499 = vmatprep.subr.mxu0 0.0
        %500 = vmatpush1.msra.mxu0 %v497
        %501 = vmatprep.subr.mxu0 0.0
        %502 = vmatpush1.msra.mxu0 0.0
        %503 = vmatprep.subr.mxu0 0.0
        %504 = vmatpush1.msra.mxu0 0.0
        %505 = vmatprep.subr.mxu0 0.0
        %506 = vmatpush1.msra.mxu0 0.0
        %507 = vmatprep.subr.mxu0 0.0
        %508 = vmatpush1.msra.mxu0 0.0
        %509 = vmatprep.subr.mxu0 0.0
        %510 = vmatpush1.msra.mxu0 0.0
        %511 = vmatprep.subr.mxu0 0.0
        %512 = vmatpush1.msra.mxu0 0.0
        %513 = vmatprep.subr.mxu0 0.0
        %514 = vmatpush1.msra.mxu0 0.0
        %515 = vmatprep.subr.mxu0 0.0
        %516 = vmatpush1.msra.mxu0 0.0
        %517 = vmatprep.subr.mxu0 0.0
        %518 = vmatpush1.msra.mxu0 0.0
        %519 = vmatprep.subr.mxu0 0.0
        %520 = vmatpush1.msra.mxu0 0.0
        %521 = vmatprep.subr.mxu0 0.0
        %522 = vmatpush1.msra.mxu0 0.0
        %523 = vmatprep.subr.mxu0 0.0
        %524 = vmatpush1.msra.mxu0 0.0
        %525 = vmatprep.subr.mxu0 0.0
        %526 = vmatpush1.msra.mxu0 0.0
        %527 = vmatprep.subr.mxu0 0.0
        %528 = vmatpush1.msra.mxu0 0.0
        %529 = vmatprep.subr.mxu0 0.0
        %530 = vmatpush1.msra.mxu0 0.0
        %531 = vmatprep.subr.mxu0 0.0
        %532 = vmatpush1.msra.mxu0 0.0
        %533 = vmatprep.subr.mxu0 0.0
        %534 = vmatpush1.msra.mxu0 0.0
        %535 = vmatprep.subr.mxu0 0.0
        %536 = vmatpush1.msra.mxu0 0.0
        %537 = vmatprep.subr.mxu0 0.0
        %538 = vmatpush1.msra.mxu0 0.0
        %539 = vmatprep.subr.mxu0 0.0
        %540 = vmatpush1.msra.mxu0 0.0
        %541 = vmatprep.subr.mxu0 0.0
        %542 = vmatpush1.msra.mxu0 0.0
        %543 = vmatprep.subr.mxu0 0.0
        %544 = vmatpush1.msra.mxu0 0.0
        %545 = vmatprep.subr.mxu0 0.0
        %546 = vmatpush1.msra.mxu0 0.0
        %547 = vmatprep.subr.mxu0 0.0
        %548 = vmatpush1.msra.mxu0 0.0
        %549 = vmatprep.subr.mxu0 0.0
        %550 = vmatpush1.msra.mxu0 0.0
        %551 = vmatprep.subr.mxu0 0.0
        %552 = vmatpush1.msra.mxu0 0.0
        %553 = vmatprep.subr.mxu0 0.0
        %554 = vmatpush1.msra.mxu0 0.0
        %555 = vmatprep.subr.mxu0 0.0
        %556 = vmatpush1.msra.mxu0 0.0
        %557 = vmatprep.subr.mxu0 0.0
        %558 = vmatpush1.msra.mxu0 0.0
        %559 = vmatprep.subr.mxu0 0.0
        %560 = vmatpush1.msra.mxu0 0.0
        %561 = vmatprep.subr.mxu0 0.0
        %562 = vmatpush1.msra.mxu0 0.0
        %563 = vmatprep.mubr.f32.mxu0 0.0
        %564 = vmatmul.mubr.f32.gmra.mrb[0].mxu0 %v493
        %v565 = vpop.f32.mrb[0].mxu0
        %v566 = vadd.f32 %v489, %v565
        %v567 = vpop.f32.mrb[0].mxu0
        %568 = vdwg.mxu0
        %v569 = vld [vmem:[%s441] sm:$0xff]
        %v570 = vmul.f32 %v566, %v569
        %571 = vst [vmem:[%s478] sm:$0xff] %v570
        %s572 = scalar_lea.vmem %s420, 4 [#allocation2]
        %v573 = vld [vmem:[%s572] sm:$0xf]
        %s574 = scalar_lea.vmem %s434, 4 [#allocation4]
        %v575 = vld [vmem:[%s574] sm:$0xf]
        %v576 = vadd.f32 %v573, %v575
        %s577 = scalar_lea.vmem %s427, 4 [#allocation3]
        %v578 = vld [vmem:[%s577] sm:$0xf]
        %v579 = vadd.f32 %v576, %v578
        %v580 = vld [vmem:[%s4] sm:$0xff]
        %v581 = vld [vmem:[%s5] sm:$0xff]
        %583 = vset.pattern.permute.xlu0 0
        %584 = vperm.xlu0 %583, %v581
        %v585 = vpop.permute.xlu0 %584
        %v588 = vsel %vm491, %v580, 0
        %v591 = vsel %vm495, %v579, 0
        %593 = vmatprep.subr.mxu0 0.0
        %594 = vmatpush1.msra.mxu0 %v591
        %595 = vmatprep.subr.mxu0 0.0
        %596 = vmatpush1.msra.mxu0 0.0
        %597 = vmatprep.subr.mxu0 0.0
        %598 = vmatpush1.msra.mxu0 0.0
        %599 = vmatprep.subr.mxu0 0.0
        %600 = vmatpush1.msra.mxu0 0.0
        %601 = vmatprep.subr.mxu0 0.0
        %602 = vmatpush1.msra.mxu0 0.0
        %603 = vmatprep.subr.mxu0 0.0
        %604 = vmatpush1.msra.mxu0 0.0
        %605 = vmatprep.subr.mxu0 0.0
        %606 = vmatpush1.msra.mxu0 0.0
        %607 = vmatprep.subr.mxu0 0.0
        %608 = vmatpush1.msra.mxu0 0.0
        %609 = vmatprep.subr.mxu0 0.0
        %610 = vmatpush1.msra.mxu0 0.0
        %611 = vmatprep.subr.mxu0 0.0
        %612 = vmatpush1.msra.mxu0 0.0
        %613 = vmatprep.subr.mxu0 0.0
        %614 = vmatpush1.msra.mxu0 0.0
        %615 = vmatprep.subr.mxu0 0.0
        %616 = vmatpush1.msra.mxu0 0.0
        %617 = vmatprep.subr.mxu0 0.0
        %618 = vmatpush1.msra.mxu0 0.0
        %619 = vmatprep.subr.mxu0 0.0
        %620 = vmatpush1.msra.mxu0 0.0
        %621 = vmatprep.subr.mxu0 0.0
        %622 = vmatpush1.msra.mxu0 0.0
        %623 = vmatprep.subr.mxu0 0.0
        %624 = vmatpush1.msra.mxu0 0.0
        %625 = vmatprep.subr.mxu0 0.0
        %626 = vmatpush1.msra.mxu0 0.0
        %627 = vmatprep.subr.mxu0 0.0
        %628 = vmatpush1.msra.mxu0 0.0
        %629 = vmatprep.subr.mxu0 0.0
        %630 = vmatpush1.msra.mxu0 0.0
        %631 = vmatprep.subr.mxu0 0.0
        %632 = vmatpush1.msra.mxu0 0.0
        %633 = vmatprep.subr.mxu0 0.0
        %634 = vmatpush1.msra.mxu0 0.0
        %635 = vmatprep.subr.mxu0 0.0
        %636 = vmatpush1.msra.mxu0 0.0
        %637 = vmatprep.subr.mxu0 0.0
        %638 = vmatpush1.msra.mxu0 0.0
        %639 = vmatprep.subr.mxu0 0.0
        %640 = vmatpush1.msra.mxu0 0.0
        %641 = vmatprep.subr.mxu0 0.0
        %642 = vmatpush1.msra.mxu0 0.0
        %643 = vmatprep.subr.mxu0 0.0
        %644 = vmatpush1.msra.mxu0 0.0
        %645 = vmatprep.subr.mxu0 0.0
        %646 = vmatpush1.msra.mxu0 0.0
        %647 = vmatprep.subr.mxu0 0.0
        %648 = vmatpush1.msra.mxu0 0.0
        %649 = vmatprep.subr.mxu0 0.0
        %650 = vmatpush1.msra.mxu0 0.0
        %651 = vmatprep.subr.mxu0 0.0
        %652 = vmatpush1.msra.mxu0 0.0
        %653 = vmatprep.subr.mxu0 0.0
        %654 = vmatpush1.msra.mxu0 0.0
        %655 = vmatprep.subr.mxu0 0.0
        %656 = vmatpush1.msra.mxu0 0.0
        %657 = vmatprep.mubr.f32.mxu0 0.0
        %658 = vmatmul.mubr.f32.gmra.mrb[0].mxu0 %v588
        %v659 = vpop.f32.mrb[0].mxu0
        %v660 = vadd.f32 %v585, %v659
        %v661 = vpop.f32.mrb[0].mxu0
        %662 = vdwg.mxu0
        %s663 = scalar_lea.vmem %s441, 8 [#allocation5]
        %v664 = vld [vmem:[%s663] sm:$0xff]
        %v665 = vmul.f32 %v660, %v664
        %s666 = scalar_lea.vmem %s478, 8 [#allocation6]
        %667 = vst [vmem:[%s666] sm:$0xff] %v665
        %s668 = sand.u32 %s171, 1
        %s669 = sand.u32 %s171, 1
        %s670 = smul.addr %s669, 16
        %s671 = scalar_lea.vmem [#allocation6], %s670
        // Predicated region
        $region206: #{fcfe_forward.9} parent=188 // pred_check
          %p672 = pneg %p181
        $region207: #{fcfe_forward.9} parent=188 // pred_check_branch
          %674 = sbr.rel (%p672) target = $region209
        $region208: #{fcfe_forward.9} parent=188 // pred_region
          %s675 = smul.addr %s17, 8
          %s676 = scalar_lea.vmem %s6, %s675
          // Predicated region
          $region210: #{fcfe_forward.9} parent=208 // pred_check
            _
          $region211: #{fcfe_forward.9} parent=208 // pred_check_branch
            %678 = sbr.rel (0) target = $region213
          $region212: #{fcfe_forward.9} parent=208 // pred_region
            // Predicated region
            $region214: #{fcfe_forward.9} parent=212 // pred_check
              _
            $region215: #{fcfe_forward.9} parent=212 // pred_check_branch
              %680 = sbr.rel (0) target = $region217
            $region216: #{fcfe_forward.9} parent=212 // pred_region
              // Predicated region
              $region229: #{fcfe_forward.9} parent=216 // pred_check
                _
              $region230: #{fcfe_forward.9} parent=216 // pred_check_branch
                %697 = sbr.rel (0) target = $region232
              $region231: #{fcfe_forward.9} parent=216 // pred_region
                loop: start=0, step=1, limit=1
                $region233: #{fcfe_forward.9} parent=231 // loop_pre_header
                  _
                $region234: #{fcfe_forward.9} parent=231 // loop_header
                  %s699 = sphi 0, %s703
                  %p700 = scmp.ge.s32.totalorder %s699, 1
                  %s704 = sphi %s671, %s671
                  %s705 = sphi %s676, %s676
                $region235: #{fcfe_forward.9} parent=231 // loop_header_branch
                  %702 = sbr.rel (%p700) target = $region239
                $region236: #{fcfe_forward.9} parent=231 // loop_body
                  %v706 = vld [vmem:[%s704] sm:$0xff]
                  %707 = vst [vmem:[%s705] sm:$0xff] %v706
                  %v708 = vld [vmem:[%s704 + $0x8] sm:$0xff]
                  %709 = vst [vmem:[%s705 + $0x10] sm:$0xff] %v708
                $region237: #{fcfe_forward.9} parent=231 // loop_footer
                  %s703 = sadd.s32 1, %s699
                $region238: #{fcfe_forward.9} parent=231 // loop_footer_branch
                  %698 = sbr.rel target = $region234
                $region239: #{fcfe_forward.9} parent=231 // loop_exit
                  _
              $region232: #{fcfe_forward.9} parent=216 // pred_fallthru
                _
              // Predicated region
              $region240: #{fcfe_forward.9} parent=216 // pred_check
                _
              $region241: #{fcfe_forward.9} parent=216 // pred_check_branch
                %711 = sbr.rel target = $region243
              $region242: #{fcfe_forward.9} parent=216 // pred_region
                _
              $region243: #{fcfe_forward.9} parent=216 // pred_fallthru
                _
            $region217: #{fcfe_forward.9} parent=212 // pred_fallthru
              _
            // Predicated region
            $region218: #{fcfe_forward.9} parent=212 // pred_check
              _
            $region219: #{fcfe_forward.9} parent=212 // pred_check_branch
              %682 = sbr.rel target = $region221
            $region220: #{fcfe_forward.9} parent=212 // pred_region
              loop: start=0, step=1, limit=1
              $region222: #{fcfe_forward.9} parent=220 // loop_pre_header
                _
              $region223: #{fcfe_forward.9} parent=220 // loop_header
                %s685 = sphi 0, %s689
                %p686 = scmp.ge.s32.totalorder %s685, 1
                %s690 = sphi %s671, %s671
                %s691 = sphi %s676, %s676
              $region224: #{fcfe_forward.9} parent=220 // loop_header_branch
                %688 = sbr.rel (%p686) target = $region228
              $region225: #{fcfe_forward.9} parent=220 // loop_body
                %v692 = vld [vmem:[%s690] sm:$0xff]
                %693 = vst [vmem:[%s691] sm:$0xff] %v692
                %v694 = vld [vmem:[%s690 + $0x8] sm:$0xff]
                %695 = vst [vmem:[%s691 + $0x10] sm:$0xff] %v694
              $region226: #{fcfe_forward.9} parent=220 // loop_footer
                %s689 = sadd.s32 1, %s685
              $region227: #{fcfe_forward.9} parent=220 // loop_footer_branch
                %684 = sbr.rel target = $region223
              $region228: #{fcfe_forward.9} parent=220 // loop_exit
                _
            $region221: #{fcfe_forward.9} parent=212 // pred_fallthru
              _
          $region213: #{fcfe_forward.9} parent=208 // pred_fallthru
            _
          %712 = vnop
        $region209: #{fcfe_forward.9} parent=188 // pred_fallthru
          _
      $region189: #{fcfe_forward.9} parent=5 // pred_fallthru
        _
      %p713 = scmp.le.s32.totalorder 2, %s12
      // Predicated region
      $region244: #{fcfe_forward.9} parent=5 // pred_check
        %p714 = pneg %p713
      $region245: #{fcfe_forward.9} parent=5 // pred_check_branch
        %716 = sbr.rel (%p714) target = $region247
      $region246: #{fcfe_forward.9} parent=5 // pred_region
        %s717 = ssub.s32 %s12, 2
        // Predicated region
        $region248: #{fcfe_forward.9} parent=246 // pred_check
          %p718 = pneg %p187
        $region249: #{fcfe_forward.9} parent=246 // pred_check_branch
          %720 = sbr.rel (%p718) target = $region251
        $region250: #{fcfe_forward.9} parent=246 // pred_region
          %s721 = sand.u32 %s172, 1
          %s722 = sand.u32 %s172, 1
          %s723 = smul.addr %s722, 16
          %s724 = scalar_lea.vmem [#allocation6], %s723
        $region251: #{fcfe_forward.9} parent=246 // pred_fallthru
          _
      $region247: #{fcfe_forward.9} parent=5 // pred_fallthru
        _
    $region6: #{fcfe_forward.9} parent=1 // loop_footer
      %s16 = sadd.s32 1, %s12
    $region7: #{fcfe_forward.9} parent=1 // loop_footer_branch
      %11 = sbr.rel target = $region3
    $region8: #{fcfe_forward.9} parent=1 // loop_exit
      _

// kernel: fcfe_forward.10
$region0: #{fcfe_forward.10}
  #allocation0 [shape = 'u32[]', space=smem, size = 0x4, offset = 0x4, fixed_abs, tag = 'smem constant byte address 0x4 - core index']
  #allocation1 [shape = 'u32[144,128]{1,0:T(1,128)}', space=vmem, size = 0x12000, scoped, tag = 'internal scratch']
  %s0 = inlined_call_operand.vmem [shape: f32[2,8,256], index: 0, kind: input, shape index: {}]
  %s1 = inlined_call_operand.vmem [shape: f32[2,4,256], index: 1, kind: input, shape index: {}]
  %s2 = inlined_call_operand.vmem [shape: f32[8,8], index: 2, kind: input, shape index: {}]
  %s3 = inlined_call_operand.vmem [shape: f32[8,1], index: 3, kind: input, shape index: {}]
  %s4 = inlined_call_operand.vmem [shape: f32[16,4], index: 4, kind: input, shape index: {}]
  %s5 = inlined_call_operand.vmem [shape: f32[16,1], index: 5, kind: input, shape index: {}]
  %s6 = inlined_call_operand.vmem [shape: f32[4,4], index: 6, kind: input, shape index: {}]
  %s7 = inlined_call_operand.vmem [shape: f32[4,1], index: 7, kind: input, shape index: {}]
  %s8 = inlined_call_operand.vmem [shape: f32[4,4], index: 8, kind: input, shape index: {}]
  %s9 = inlined_call_operand.vmem [shape: f32[4,1], index: 9, kind: input, shape index: {}]
  %s10 = inlined_call_operand.vmem [shape: f32[2,4,256], index: 10, kind: output, shape index: {}]
  %s11 = sld [smem:[#allocation0]]
  $region189: #{fcfe_forward.10} parent=0
    _
  %s13 = ssub.s32 1, %s11
  %s14 = scalar_select 0, %s13, %s11
  $region1: #{fcfe_forward.10} parent=0
    #allocation2 [shape = 'u8[16384]{0}', space=vmem, size = 0x4000, scoped, tag = 'input window, operand 0']
    #allocation3 [shape = 'u8[8192]{0}', space=vmem, size = 0x2000, scoped, tag = 'input window, operand 1']
    #allocation4 [shape = 'u8[8192]{0}', space=vmem, size = 0x2000, scoped, tag = 'output window, operand 0']
    loop: start=0, step=1, limit=4
    $region2: #{fcfe_forward.10} parent=1 // loop_pre_header
      _
    $region3: #{fcfe_forward.10} parent=1 // loop_header
      %s16 = sphi 0, %s20
      %p17 = scmp.ge.s32.totalorder %s16, 4
      %s26 = sphi 0, %s28
      %s29 = sphi 0, %s26
      %s30 = sphi 0, %s29
      %s46 = sphi 0, %s30
      %s52 = sphi 0, %s54
      %s55 = sphi 0, %s52
      %s56 = sphi 0, %s55
      %s72 = sphi 0, %s56
      %s76 = sphi 0, %s76
      %s78 = sphi 0, %s76
      %s79 = sphi 0, %s78
      %s93 = sphi 0, %s79
      %s97 = sphi 0, %s97
      %s99 = sphi 0, %s97
      %s100 = sphi 0, %s99
      %s114 = sphi 0, %s100
      %s118 = sphi 0, %s118
      %s120 = sphi 0, %s118
      %s121 = sphi 0, %s120
      %s135 = sphi 0, %s121
      %s139 = sphi 0, %s139
      %s141 = sphi 0, %s139
      %s142 = sphi 0, %s141
      %s156 = sphi 0, %s142
      %s160 = sphi 0, %s160
      %s162 = sphi 0, %s160
      %s163 = sphi 0, %s162
      %s177 = sphi 0, %s163
      %s181 = sphi 0, %s181
      %s183 = sphi 0, %s181
      %s184 = sphi 0, %s183
      %s198 = sphi 0, %s184
      %s202 = sphi 0, %s202
      %s204 = sphi 0, %s202
      %s205 = sphi 0, %s204
      %s219 = sphi 0, %s205
      %s223 = sphi 0, %s223
      %s225 = sphi 0, %s223
      %s226 = sphi 0, %s225
      %s240 = sphi 0, %s226
      %s246 = sphi 0, %s248
      %s249 = sphi 0, %s246
      %s250 = sphi 0, %s249
      %s266 = sphi 0, %s250
    $region4: #{fcfe_forward.10} parent=1 // loop_header_branch
      %19 = sbr.rel (%p17) target = $region8
    $region5: #{fcfe_forward.10} parent=1 // loop_body
      %s21 = ssub.s32 %s16, 1
      %s22 = ssub.s32 %s16, 2
      %s23 = sadd.s32 %s16, 1
      %s24 = ssub.s32 %s16, %s23
      %p25 = scmp.eq.s32.totalorder %s24, 0
      %s27 = sadd.s32 %s26, 1
      %s28 = scalar_select %p25, %s26, %s27
      %p31 = pneg %p25
      %p32 = scmp.eq.s32.totalorder %s16, 1
      %p33 = por %p31, %p32
      %p34 = scmp.ne.s32.totalorder %s26, %s29
      %p35 = scmp.eq.s32.totalorder %s16, 0
      %p36 = por %p34, %p35
      %p37 = scmp.ne.s32.totalorder %s26, %s29
      %p38 = scmp.eq.s32.totalorder %s21, 1
      %p39 = por %p37, %p38
      %p40 = scmp.ne.s32.totalorder %s29, %s30
      %p41 = scmp.eq.s32.totalorder %s21, 0
      %p42 = por %p40, %p41
      %p43 = scmp.ne.s32.totalorder %s29, %s30
      %p44 = scmp.eq.s32.totalorder %s22, 1
      %p45 = por %p43, %p44
      %p47 = scmp.ne.s32.totalorder %s30, %s46
      %p48 = scmp.eq.s32.totalorder %s22, 0
      %p49 = por %p47, %p48
      %s50 = ssub.s32 %s16, %s23
      %p51 = scmp.eq.s32.totalorder %s50, 0
      %s53 = sadd.s32 %s52, 1
      %s54 = scalar_select %p51, %s52, %s53
      %p57 = pneg %p51
      %p58 = scmp.eq.s32.totalorder %s16, 1
      %p59 = por %p57, %p58
      %p60 = scmp.ne.s32.totalorder %s52, %s55
      %p61 = scmp.eq.s32.totalorder %s16, 0
      %p62 = por %p60, %p61
      %p63 = scmp.ne.s32.totalorder %s52, %s55
      %p64 = scmp.eq.s32.totalorder %s21, 1
      %p65 = por %p63, %p64
      %p66 = scmp.ne.s32.totalorder %s55, %s56
      %p67 = scmp.eq.s32.totalorder %s21, 0
      %p68 = por %p66, %p67
      %p69 = scmp.ne.s32.totalorder %s55, %s56
      %p70 = scmp.eq.s32.totalorder %s22, 1
      %p71 = por %p69, %p70
      %p73 = scmp.ne.s32.totalorder %s56, %s72
      %p74 = scmp.eq.s32.totalorder %s22, 0
      %p75 = por %p73, %p74
      %s77 = sadd.s32 %s76, 1
      %p80 = scmp.eq.s32.totalorder %s16, 1
      %p81 = scmp.ne.s32.totalorder %s76, %s78
      %p82 = scmp.eq.s32.totalorder %s16, 0
      %p83 = por %p81, %p82
      %p84 = scmp.ne.s32.totalorder %s76, %s78
      %p85 = scmp.eq.s32.totalorder %s21, 1
      %p86 = por %p84, %p85
      %p87 = scmp.ne.s32.totalorder %s78, %s79
      %p88 = scmp.eq.s32.totalorder %s21, 0
      %p89 = por %p87, %p88
      %p90 = scmp.ne.s32.totalorder %s78, %s79
      %p91 = scmp.eq.s32.totalorder %s22, 1
      %p92 = por %p90, %p91
      %p94 = scmp.ne.s32.totalorder %s79, %s93
      %p95 = scmp.eq.s32.totalorder %s22, 0
      %p96 = por %p94, %p95
      %s98 = sadd.s32 %s97, 1
      %p101 = scmp.eq.s32.totalorder %s16, 1
      %p102 = scmp.ne.s32.totalorder %s97, %s99
      %p103 = scmp.eq.s32.totalorder %s16, 0
      %p104 = por %p102, %p103
      %p105 = scmp.ne.s32.totalorder %s97, %s99
      %p106 = scmp.eq.s32.totalorder %s21, 1
      %p107 = por %p105, %p106
      %p108 = scmp.ne.s32.totalorder %s99, %s100
      %p109 = scmp.eq.s32.totalorder %s21, 0
      %p110 = por %p108, %p109
      %p111 = scmp.ne.s32.totalorder %s99, %s100
      %p112 = scmp.eq.s32.totalorder %s22, 1
      %p113 = por %p111, %p112
      %p115 = scmp.ne.s32.totalorder %s100, %s114
      %p116 = scmp.eq.s32.totalorder %s22, 0
      %p117 = por %p115, %p116
      %s119 = sadd.s32 %s118, 1
      %p122 = scmp.eq.s32.totalorder %s16, 1
      %p123 = scmp.ne.s32.totalorder %s118, %s120
      %p124 = scmp.eq.s32.totalorder %s16, 0
      %p125 = por %p123, %p124
      %p126 = scmp.ne.s32.totalorder %s118, %s120
      %p127 = scmp.eq.s32.totalorder %s21, 1
      %p128 = por %p126, %p127
      %p129 = scmp.ne.s32.totalorder %s120, %s121
      %p130 = scmp.eq.s32.totalorder %s21, 0
      %p131 = por %p129, %p130
      %p132 = scmp.ne.s32.totalorder %s120, %s121
      %p133 = scmp.eq.s32.totalorder %s22, 1
      %p134 = por %p132, %p133
      %p136 = scmp.ne.s32.totalorder %s121, %s135
      %p137 = scmp.eq.s32.totalorder %s22, 0
      %p138 = por %p136, %p137
      %s140 = sadd.s32 %s139, 1
      %p143 = scmp.eq.s32.totalorder %s16, 1
      %p144 = scmp.ne.s32.totalorder %s139, %s141
      %p145 = scmp.eq.s32.totalorder %s16, 0
      %p146 = por %p144, %p145
      %p147 = scmp.ne.s32.totalorder %s139, %s141
      %p148 = scmp.eq.s32.totalorder %s21, 1
      %p149 = por %p147, %p148
      %p150 = scmp.ne.s32.totalorder %s141, %s142
      %p151 = scmp.eq.s32.totalorder %s21, 0
      %p152 = por %p150, %p151
      %p153 = scmp.ne.s32.totalorder %s141, %s142
      %p154 = scmp.eq.s32.totalorder %s22, 1
      %p155 = por %p153, %p154
      %p157 = scmp.ne.s32.totalorder %s142, %s156
      %p158 = scmp.eq.s32.totalorder %s22, 0
      %p159 = por %p157, %p158
      %s161 = sadd.s32 %s160, 1
      %p164 = scmp.eq.s32.totalorder %s16, 1
      %p165 = scmp.ne.s32.totalorder %s160, %s162
      %p166 = scmp.eq.s32.totalorder %s16, 0
      %p167 = por %p165, %p166
      %p168 = scmp.ne.s32.totalorder %s160, %s162
      %p169 = scmp.eq.s32.totalorder %s21, 1
      %p170 = por %p168, %p169
      %p171 = scmp.ne.s32.totalorder %s162, %s163
      %p172 = scmp.eq.s32.totalorder %s21, 0
      %p173 = por %p171, %p172
      %p174 = scmp.ne.s32.totalorder %s162, %s163
      %p175 = scmp.eq.s32.totalorder %s22, 1
      %p176 = por %p174, %p175
      %p178 = scmp.ne.s32.totalorder %s163, %s177
      %p179 = scmp.eq.s32.totalorder %s22, 0
      %p180 = por %p178, %p179
      %s182 = sadd.s32 %s181, 1
      %p185 = scmp.eq.s32.totalorder %s16, 1
      %p186 = scmp.ne.s32.totalorder %s181, %s183
      %p187 = scmp.eq.s32.totalorder %s16, 0
      %p188 = por %p186, %p187
      %p189 = scmp.ne.s32.totalorder %s181, %s183
      %p190 = scmp.eq.s32.totalorder %s21, 1
      %p191 = por %p189, %p190
      %p192 = scmp.ne.s32.totalorder %s183, %s184
      %p193 = scmp.eq.s32.totalorder %s21, 0
      %p194 = por %p192, %p193
      %p195 = scmp.ne.s32.totalorder %s183, %s184
      %p196 = scmp.eq.s32.totalorder %s22, 1
      %p197 = por %p195, %p196
      %p199 = scmp.ne.s32.totalorder %s184, %s198
      %p200 = scmp.eq.s32.totalorder %s22, 0
      %p201 = por %p199, %p200
      %s203 = sadd.s32 %s202, 1
      %p206 = scmp.eq.s32.totalorder %s16, 1
      %p207 = scmp.ne.s32.totalorder %s202, %s204
      %p208 = scmp.eq.s32.totalorder %s16, 0
      %p209 = por %p207, %p208
      %p210 = scmp.ne.s32.totalorder %s202, %s204
      %p211 = scmp.eq.s32.totalorder %s21, 1
      %p212 = por %p210, %p211
      %p213 = scmp.ne.s32.totalorder %s204, %s205
      %p214 = scmp.eq.s32.totalorder %s21, 0
      %p215 = por %p213, %p214
      %p216 = scmp.ne.s32.totalorder %s204, %s205
      %p217 = scmp.eq.s32.totalorder %s22, 1
      %p218 = por %p216, %p217
      %p220 = scmp.ne.s32.totalorder %s205, %s219
      %p221 = scmp.eq.s32.totalorder %s22, 0
      %p222 = por %p220, %p221
      %s224 = sadd.s32 %s223, 1
      %p227 = scmp.eq.s32.totalorder %s16, 1
      %p228 = scmp.ne.s32.totalorder %s223, %s225
      %p229 = scmp.eq.s32.totalorder %s16, 0
      %p230 = por %p228, %p229
      %p231 = scmp.ne.s32.totalorder %s223, %s225
      %p232 = scmp.eq.s32.totalorder %s21, 1
      %p233 = por %p231, %p232
      %p234 = scmp.ne.s32.totalorder %s225, %s226
      %p235 = scmp.eq.s32.totalorder %s21, 0
      %p236 = por %p234, %p235
      %p237 = scmp.ne.s32.totalorder %s225, %s226
      %p238 = scmp.eq.s32.totalorder %s22, 1
      %p239 = por %p237, %p238
      %p241 = scmp.ne.s32.totalorder %s226, %s240
      %p242 = scmp.eq.s32.totalorder %s22, 0
      %p243 = por %p241, %p242
      %s244 = ssub.s32 %s16, %s23
      %p245 = scmp.eq.s32.totalorder %s244, 0
      %s247 = sadd.s32 %s246, 1
      %s248 = scalar_select %p245, %s246, %s247
      %p251 = pneg %p245
      %p252 = scmp.eq.s32.totalorder %s16, 1
      %p253 = por %p251, %p252
      %p254 = scmp.ne.s32.totalorder %s246, %s249
      %p255 = scmp.eq.s32.totalorder %s16, 0
      %p256 = por %p254, %p255
      %p257 = scmp.ne.s32.totalorder %s246, %s249
      %p258 = scmp.eq.s32.totalorder %s21, 1
      %p259 = por %p257, %p258
      %p260 = scmp.ne.s32.totalorder %s249, %s250
      %p261 = scmp.eq.s32.totalorder %s21, 0
      %p262 = por %p260, %p261
      %p263 = scmp.ne.s32.totalorder %s249, %s250
      %p264 = scmp.eq.s32.totalorder %s22, 1
      %p265 = por %p263, %p264
      %p267 = scmp.ne.s32.totalorder %s250, %s266
      %p268 = scmp.eq.s32.totalorder %s22, 0
      %p269 = por %p267, %p268
      %p270 = scmp.le.s32.totalorder 1, %s16
      %p271 = scmp.lt.s32.totalorder %s16, 3
      %p272 = pnand %p270, %p271
      %p273 = pneg %p272
      // Predicated region
      $region9: #{fcfe_forward.10} parent=5 // pred_check
        _
      $region10: #{fcfe_forward.10} parent=5 // pred_check_branch
        %275 = sbr.rel (%p272) target = $region12
      $region11: #{fcfe_forward.10} parent=5 // pred_region
        %s276 = ssub.s32 %s16, 1
        // Predicated region
        $region13: #{fcfe_forward.10} parent=11 // pred_check
          %p277 = pneg %p89
        $region14: #{fcfe_forward.10} parent=11 // pred_check_branch
          %279 = sbr.rel (%p277) target = $region16
        $region15: #{fcfe_forward.10} parent=11 // pred_region
          _
        $region16: #{fcfe_forward.10} parent=11 // pred_fallthru
          _
        // Predicated region
        $region17: #{fcfe_forward.10} parent=11 // pred_check
          %p280 = pneg %p110
        $region18: #{fcfe_forward.10} parent=11 // pred_check_branch
          %282 = sbr.rel (%p280) target = $region20
        $region19: #{fcfe_forward.10} parent=11 // pred_region
          _
        $region20: #{fcfe_forward.10} parent=11 // pred_fallthru
          _
        // Predicated region
        $region21: #{fcfe_forward.10} parent=11 // pred_check
          %p283 = pneg %p131
        $region22: #{fcfe_forward.10} parent=11 // pred_check_branch
          %285 = sbr.rel (%p283) target = $region24
        $region23: #{fcfe_forward.10} parent=11 // pred_region
          _
        $region24: #{fcfe_forward.10} parent=11 // pred_fallthru
          _
        // Predicated region
        $region25: #{fcfe_forward.10} parent=11 // pred_check
          %p286 = pneg %p152
        $region26: #{fcfe_forward.10} parent=11 // pred_check_branch
          %288 = sbr.rel (%p286) target = $region28
        $region27: #{fcfe_forward.10} parent=11 // pred_region
          _
        $region28: #{fcfe_forward.10} parent=11 // pred_fallthru
          _
        // Predicated region
        $region29: #{fcfe_forward.10} parent=11 // pred_check
          %p289 = pneg %p173
        $region30: #{fcfe_forward.10} parent=11 // pred_check_branch
          %291 = sbr.rel (%p289) target = $region32
        $region31: #{fcfe_forward.10} parent=11 // pred_region
          _
        $region32: #{fcfe_forward.10} parent=11 // pred_fallthru
          _
        // Predicated region
        $region33: #{fcfe_forward.10} parent=11 // pred_check
          %p292 = pneg %p194
        $region34: #{fcfe_forward.10} parent=11 // pred_check_branch
          %294 = sbr.rel (%p292) target = $region36
        $region35: #{fcfe_forward.10} parent=11 // pred_region
          _
        $region36: #{fcfe_forward.10} parent=11 // pred_fallthru
          _
        // Predicated region
        $region37: #{fcfe_forward.10} parent=11 // pred_check
          %p295 = pneg %p215
        $region38: #{fcfe_forward.10} parent=11 // pred_check_branch
          %297 = sbr.rel (%p295) target = $region40
        $region39: #{fcfe_forward.10} parent=11 // pred_region
          _
        $region40: #{fcfe_forward.10} parent=11 // pred_fallthru
          _
        // Predicated region
        $region41: #{fcfe_forward.10} parent=11 // pred_check
          %p298 = pneg %p236
        $region42: #{fcfe_forward.10} parent=11 // pred_check_branch
          %300 = sbr.rel (%p298) target = $region44
        $region43: #{fcfe_forward.10} parent=11 // pred_region
          _
        $region44: #{fcfe_forward.10} parent=11 // pred_fallthru
          _
      $region12: #{fcfe_forward.10} parent=5 // pred_fallthru
        _
      %p301 = scmp.lt.s32.totalorder %s16, 2
      // Predicated region
      $region45: #{fcfe_forward.10} parent=5 // pred_check
        %p302 = pneg %p301
      $region46: #{fcfe_forward.10} parent=5 // pred_check_branch
        %304 = sbr.rel (%p302) target = $region48
      $region47: #{fcfe_forward.10} parent=5 // pred_region
        // Predicated region
        $region49: #{fcfe_forward.10} parent=47 // pred_check
          %p305 = pneg %p36
        $region50: #{fcfe_forward.10} parent=47 // pred_check_branch
          %307 = sbr.rel (%p305) target = $region52
        $region51: #{fcfe_forward.10} parent=47 // pred_region
          %s308 = sand.u32 %s26, 1
          %s309 = sand.u32 %s26, 1
          %s310 = smul.addr %s309, 16
          %s311 = scalar_lea.vmem [#allocation2], %s310
          %s312 = smul.addr %s16, 8
          %s313 = scalar_lea.vmem %s0, %s312
          // Predicated region
          $region53: #{fcfe_forward.10} parent=51 // pred_check
            _
          $region54: #{fcfe_forward.10} parent=51 // pred_check_branch
            %315 = sbr.rel (0) target = $region56
          $region55: #{fcfe_forward.10} parent=51 // pred_region
            // Predicated region
            $region57: #{fcfe_forward.10} parent=55 // pred_check
              _
            $region58: #{fcfe_forward.10} parent=55 // pred_check_branch
              %317 = sbr.rel (0) target = $region60
            $region59: #{fcfe_forward.10} parent=55 // pred_region
              // Predicated region
              $region72: #{fcfe_forward.10} parent=59 // pred_check
                _
              $region73: #{fcfe_forward.10} parent=59 // pred_check_branch
                %334 = sbr.rel (0) target = $region75
              $region74: #{fcfe_forward.10} parent=59 // pred_region
                loop: start=0, step=1, limit=1
                $region76: #{fcfe_forward.10} parent=74 // loop_pre_header
                  _
                $region77: #{fcfe_forward.10} parent=74 // loop_header
                  %s336 = sphi 0, %s340
                  %p337 = scmp.ge.s32.totalorder %s336, 1
                  %s341 = sphi %s313, %s313
                  %s342 = sphi %s311, %s311
                $region78: #{fcfe_forward.10} parent=74 // loop_header_branch
                  %339 = sbr.rel (%p337) target = $region82
                $region79: #{fcfe_forward.10} parent=74 // loop_body
                  %v343 = vld [vmem:[%s341] sm:$0xff]
                  %344 = vst [vmem:[%s342] sm:$0xff] %v343
                  %v345 = vld [vmem:[%s341 + $0x10] sm:$0xff]
                  %346 = vst [vmem:[%s342 + $0x8] sm:$0xff] %v345
                $region80: #{fcfe_forward.10} parent=74 // loop_footer
                  %s340 = sadd.s32 1, %s336
                $region81: #{fcfe_forward.10} parent=74 // loop_footer_branch
                  %335 = sbr.rel target = $region77
                $region82: #{fcfe_forward.10} parent=74 // loop_exit
                  _
              $region75: #{fcfe_forward.10} parent=59 // pred_fallthru
                _
              // Predicated region
              $region83: #{fcfe_forward.10} parent=59 // pred_check
                _
              $region84: #{fcfe_forward.10} parent=59 // pred_check_branch
                %348 = sbr.rel target = $region86
              $region85: #{fcfe_forward.10} parent=59 // pred_region
                _
              $region86: #{fcfe_forward.10} parent=59 // pred_fallthru
                _
            $region60: #{fcfe_forward.10} parent=55 // pred_fallthru
              _
            // Predicated region
            $region61: #{fcfe_forward.10} parent=55 // pred_check
              _
            $region62: #{fcfe_forward.10} parent=55 // pred_check_branch
              %319 = sbr.rel target = $region64
            $region63: #{fcfe_forward.10} parent=55 // pred_region
              loop: start=0, step=1, limit=1
              $region65: #{fcfe_forward.10} parent=63 // loop_pre_header
                _
              $region66: #{fcfe_forward.10} parent=63 // loop_header
                %s322 = sphi 0, %s326
                %p323 = scmp.ge.s32.totalorder %s322, 1
                %s327 = sphi %s313, %s313
                %s328 = sphi %s311, %s311
              $region67: #{fcfe_forward.10} parent=63 // loop_header_branch
                %325 = sbr.rel (%p323) target = $region71
              $region68: #{fcfe_forward.10} parent=63 // loop_body
                %v329 = vld [vmem:[%s327] sm:$0xff]
                %330 = vst [vmem:[%s328] sm:$0xff] %v329
                %v331 = vld [vmem:[%s327 + $0x10] sm:$0xff]
                %332 = vst [vmem:[%s328 + $0x8] sm:$0xff] %v331
              $region69: #{fcfe_forward.10} parent=63 // loop_footer
                %s326 = sadd.s32 1, %s322
              $region70: #{fcfe_forward.10} parent=63 // loop_footer_branch
                %321 = sbr.rel target = $region66
              $region71: #{fcfe_forward.10} parent=63 // loop_exit
                _
            $region64: #{fcfe_forward.10} parent=55 // pred_fallthru
              _
          $region56: #{fcfe_forward.10} parent=51 // pred_fallthru
            _
          %349 = vnop
        $region52: #{fcfe_forward.10} parent=47 // pred_fallthru
          _
        // Predicated region
        $region87: #{fcfe_forward.10} parent=47 // pred_check
          %p350 = pneg %p62
        $region88: #{fcfe_forward.10} parent=47 // pred_check_branch
          %352 = sbr.rel (%p350) target = $region90
        $region89: #{fcfe_forward.10} parent=47 // pred_region
          %s353 = sand.u32 %s52, 1
          %s354 = sand.u32 %s52, 1
          %s355 = smul.addr %s354, 8
          %s356 = scalar_lea.vmem [#allocation3], %s355
          %s357 = smul.addr %s16, 4
          %s358 = scalar_lea.vmem %s1, %s357
          // Predicated region
          $region91: #{fcfe_forward.10} parent=89 // pred_check
            _
          $region92: #{fcfe_forward.10} parent=89 // pred_check_branch
            %360 = sbr.rel (0) target = $region94
          $region93: #{fcfe_forward.10} parent=89 // pred_region
            // Predicated region
            $region95: #{fcfe_forward.10} parent=93 // pred_check
              _
            $region96: #{fcfe_forward.10} parent=93 // pred_check_branch
              %362 = sbr.rel target = $region98
            $region97: #{fcfe_forward.10} parent=93 // pred_region
              // Predicated region
              $region110: #{fcfe_forward.10} parent=97 // pred_check
                _
              $region111: #{fcfe_forward.10} parent=97 // pred_check_branch
                %379 = sbr.rel (0) target = $region113
              $region112: #{fcfe_forward.10} parent=97 // pred_region
                loop: start=0, step=1, limit=1
                $region114: #{fcfe_forward.10} parent=112 // loop_pre_header
                  _
                $region115: #{fcfe_forward.10} parent=112 // loop_header
                  %s381 = sphi 0, %s385
                  %p382 = scmp.ge.s32.totalorder %s381, 1
                  %s386 = sphi %s358, %s358
                  %s387 = sphi %s356, %s356
                $region116: #{fcfe_forward.10} parent=112 // loop_header_branch
                  %384 = sbr.rel (%p382) target = $region120
                $region117: #{fcfe_forward.10} parent=112 // loop_body
                  _
                $region118: #{fcfe_forward.10} parent=112 // loop_footer
                  %s385 = sadd.s32 1, %s381
                $region119: #{fcfe_forward.10} parent=112 // loop_footer_branch
                  %380 = sbr.rel target = $region115
                $region120: #{fcfe_forward.10} parent=112 // loop_exit
                  _
                loop: start=0, step=1, limit=1
                $region121: #{fcfe_forward.10} parent=112 // loop_pre_header
                  _
                $region122: #{fcfe_forward.10} parent=112 // loop_header
                  %s390 = sphi 0, %s394
                  %p391 = scmp.ge.s32.totalorder %s390, 1
                  %s395 = sphi %s358, %s358
                  %s396 = sphi %s356, %s356
                $region123: #{fcfe_forward.10} parent=112 // loop_header_branch
                  %393 = sbr.rel (%p391) target = $region127
                $region124: #{fcfe_forward.10} parent=112 // loop_body
                  %v397 = vld [vmem:[%s395] sm:$0xf]
                  %398 = vst [vmem:[%s396] sm:$0xf] %v397
                  %v399 = vld [vmem:[%s395 + $0x8] sm:$0xf]
                  %400 = vst [vmem:[%s396 + $0x4] sm:$0xf] %v399
                $region125: #{fcfe_forward.10} parent=112 // loop_footer
                  %s394 = sadd.s32 1, %s390
                $region126: #{fcfe_forward.10} parent=112 // loop_footer_branch
                  %389 = sbr.rel target = $region122
                $region127: #{fcfe_forward.10} parent=112 // loop_exit
                  _
              $region113: #{fcfe_forward.10} parent=97 // pred_fallthru
                _
            $region98: #{fcfe_forward.10} parent=93 // pred_fallthru
              _
            // Predicated region
            $region99: #{fcfe_forward.10} parent=93 // pred_check
              _
            $region100: #{fcfe_forward.10} parent=93 // pred_check_branch
              %364 = sbr.rel (0) target = $region102
            $region101: #{fcfe_forward.10} parent=93 // pred_region
              loop: start=0, step=1, limit=1
              $region103: #{fcfe_forward.10} parent=101 // loop_pre_header
                _
              $region104: #{fcfe_forward.10} parent=101 // loop_header
                %s367 = sphi 0, %s371
                %p368 = scmp.ge.s32.totalorder %s367, 1
                %s372 = sphi %s358, %s358
                %s373 = sphi %s356, %s356
              $region105: #{fcfe_forward.10} parent=101 // loop_header_branch
                %370 = sbr.rel (%p368) target = $region109
              $region106: #{fcfe_forward.10} parent=101 // loop_body
                %v374 = vld [vmem:[%s372] sm:$0xf]
                %375 = vst [vmem:[%s373] sm:$0xf] %v374
                %v376 = vld [vmem:[%s372 + $0x8] sm:$0xf]
                %377 = vst [vmem:[%s373 + $0x4] sm:$0xf] %v376
              $region107: #{fcfe_forward.10} parent=101 // loop_footer
                %s371 = sadd.s32 1, %s367
              $region108: #{fcfe_forward.10} parent=101 // loop_footer_branch
                %366 = sbr.rel target = $region104
              $region109: #{fcfe_forward.10} parent=101 // loop_exit
                _
            $region102: #{fcfe_forward.10} parent=93 // pred_fallthru
              _
          $region94: #{fcfe_forward.10} parent=89 // pred_fallthru
            _
          %401 = vnop
        $region90: #{fcfe_forward.10} parent=47 // pred_fallthru
          _
      $region48: #{fcfe_forward.10} parent=5 // pred_fallthru
        _
      %p402 = scmp.le.s32.totalorder 1, %s16
      %p403 = scmp.lt.s32.totalorder %s16, 3
      %p404 = pnand %p402, %p403
      %p405 = pneg %p404
      // Predicated region
      $region128: #{fcfe_forward.10} parent=5 // pred_check
        _
      $region129: #{fcfe_forward.10} parent=5 // pred_check_branch
        %407 = sbr.rel (%p404) target = $region131
      $region130: #{fcfe_forward.10} parent=5 // pred_region
        %s408 = ssub.s32 %s16, 1
        %s409 = sand.u32 %s29, 1
        %s410 = sand.u32 %s29, 1
        %s411 = smul.addr %s410, 16
        %s412 = scalar_lea.vmem [#allocation2], %s411
        // Predicated region
        $region132: #{fcfe_forward.10} parent=130 // pred_check
          %p413 = pneg %p42
        $region133: #{fcfe_forward.10} parent=130 // pred_check_branch
          %415 = sbr.rel (%p413) target = $region135
        $region134: #{fcfe_forward.10} parent=130 // pred_region
          _
        $region135: #{fcfe_forward.10} parent=130 // pred_fallthru
          _
        %s416 = sand.u32 %s55, 1
        %s417 = sand.u32 %s55, 1
        %s418 = smul.addr %s417, 8
        %s419 = scalar_lea.vmem [#allocation3], %s418
        // Predicated region
        $region136: #{fcfe_forward.10} parent=130 // pred_check
          %p420 = pneg %p68
        $region137: #{fcfe_forward.10} parent=130 // pred_check_branch
          %422 = sbr.rel (%p420) target = $region139
        $region138: #{fcfe_forward.10} parent=130 // pred_region
          _
        $region139: #{fcfe_forward.10} parent=130 // pred_fallthru
          _
        %s423 = sand.u32 %s29, 1
        %s424 = sand.u32 %s29, 1
        %s425 = smul.addr %s424, 16
        %s426 = scalar_lea.vmem [#allocation2], %s425
        %p427 = pneg %p42
        %p428 = pneg %p39
        %s429 = sand.u32 %s55, 1
        %s430 = sand.u32 %s55, 1
        %s431 = smul.addr %s430, 8
        %s432 = scalar_lea.vmem [#allocation3], %s431
        %p433 = pneg %p68
        %p434 = pneg %p65
        %p435 = pneg %p89
        %p436 = pneg %p86
        %p437 = pneg %p110
        %p438 = pneg %p107
        %p439 = pneg %p131
        %p440 = pneg %p128
        %p441 = pneg %p152
        %p442 = pneg %p149
        %p443 = pneg %p173
        %p444 = pneg %p170
        %p445 = pneg %p194
        %p446 = pneg %p191
        %p447 = pneg %p215
        %p448 = pneg %p212
        %p449 = pneg %p236
        %p450 = pneg %p233
        %p451 = pneg %p262
        %p452 = pneg %p259
        %s453 = sand.u32 %s249, 1
        %s454 = sand.u32 %s249, 1
        %s455 = smul.addr %s454, 8
        %s456 = scalar_lea.vmem [#allocation4], %s455
        %v457 = vld [vmem:[%s412] sm:$0xff]
        %v458 = vld [vmem:[%s2] sm:$0xff]
        %v459 = vld [vmem:[%s3] sm:$0xff]
        %461 = vset.pattern.permute.xlu0 0
        %462 = vperm.xlu0 %461, %v459
        %v463 = vpop.permute.xlu0 %462
        %vm465 = vcmask 64512
        %v467 = vsel %vm465, %v458, 0
        %469 = vmatprep.subr.mxu0 0.0
        %470 = vmatpush1.msra.mxu0 %v457
        %471 = vmatprep.subr.mxu0 0.0
        %472 = vmatpush1.msra.mxu0 0.0
        %473 = vmatprep.subr.mxu0 0.0
        %474 = vmatpush1.msra.mxu0 0.0
        %475 = vmatprep.subr.mxu0 0.0
        %476 = vmatpush1.msra.mxu0 0.0
        %477 = vmatprep.subr.mxu0 0.0
        %478 = vmatpush1.msra.mxu0 0.0
        %479 = vmatprep.subr.mxu0 0.0
        %480 = vmatpush1.msra.mxu0 0.0
        %481 = vmatprep.subr.mxu0 0.0
        %482 = vmatpush1.msra.mxu0 0.0
        %483 = vmatprep.subr.mxu0 0.0
        %484 = vmatpush1.msra.mxu0 0.0
        %485 = vmatprep.subr.mxu0 0.0
        %486 = vmatpush1.msra.mxu0 0.0
        %487 = vmatprep.subr.mxu0 0.0
        %488 = vmatpush1.msra.mxu0 0.0
        %489 = vmatprep.subr.mxu0 0.0
        %490 = vmatpush1.msra.mxu0 0.0
        %491 = vmatprep.subr.mxu0 0.0
        %492 = vmatpush1.msra.mxu0 0.0
        %493 = vmatprep.subr.mxu0 0.0
        %494 = vmatpush1.msra.mxu0 0.0
        %495 = vmatprep.subr.mxu0 0.0
        %496 = vmatpush1.msra.mxu0 0.0
        %497 = vmatprep.subr.mxu0 0.0
        %498 = vmatpush1.msra.mxu0 0.0
        %499 = vmatprep.subr.mxu0 0.0
        %500 = vmatpush1.msra.mxu0 0.0
        %501 = vmatprep.subr.mxu0 0.0
        %502 = vmatpush1.msra.mxu0 0.0
        %503 = vmatprep.subr.mxu0 0.0
        %504 = vmatpush1.msra.mxu0 0.0
        %505 = vmatprep.subr.mxu0 0.0
        %506 = vmatpush1.msra.mxu0 0.0
        %507 = vmatprep.subr.mxu0 0.0
        %508 = vmatpush1.msra.mxu0 0.0
        %509 = vmatprep.subr.mxu0 0.0
        %510 = vmatpush1.msra.mxu0 0.0
        %511 = vmatprep.subr.mxu0 0.0
        %512 = vmatpush1.msra.mxu0 0.0
        %513 = vmatprep.subr.mxu0 0.0
        %514 = vmatpush1.msra.mxu0 0.0
        %515 = vmatprep.subr.mxu0 0.0
        %516 = vmatpush1.msra.mxu0 0.0
        %517 = vmatprep.subr.mxu0 0.0
        %518 = vmatpush1.msra.mxu0 0.0
        %519 = vmatprep.subr.mxu0 0.0
        %520 = vmatpush1.msra.mxu0 0.0
        %521 = vmatprep.subr.mxu0 0.0
        %522 = vmatpush1.msra.mxu0 0.0
        %523 = vmatprep.subr.mxu0 0.0
        %524 = vmatpush1.msra.mxu0 0.0
        %525 = vmatprep.subr.mxu0 0.0
        %526 = vmatpush1.msra.mxu0 0.0
        %527 = vmatprep.subr.mxu0 0.0
        %528 = vmatpush1.msra.mxu0 0.0
        %529 = vmatprep.subr.mxu0 0.0
        %530 = vmatpush1.msra.mxu0 0.0
        %531 = vmatprep.subr.mxu0 0.0
        %532 = vmatpush1.msra.mxu0 0.0
        %533 = vmatprep.mubr.f32.mxu0 0.0
        %534 = vmatmul.mubr.f32.gmra.mrb[0].mxu0 %v467
        %v535 = vpop.f32.mrb[0].mxu0
        %v536 = vadd.f32 %v463, %v535
        %v537 = vpop.f32.mrb[0].mxu0
        %538 = vdwg.mxu0
        %v539 = vld [vmem:[%s419] sm:$0xf]
        %v540 = vld [vmem:[%s4] sm:$0xff]
        %v541 = vld [vmem:[%s4 + $0x8] sm:$0xff]
        %v542 = vld [vmem:[%s5] sm:$0xff]
        %v543 = vld [vmem:[%s5 + $0x8] sm:$0xff]
        %545 = vset.pattern.permute.xlu0 0
        %546 = vperm.xlu0 %545, %v542
        %v547 = vpop.permute.xlu0 %546
        %550 = vset.pattern.permute.xlu0 0
        %551 = vperm.xlu0 %550, %v543
        %v552 = vpop.permute.xlu0 %551
        %vm554 = vcmask 31744
        %v556 = vsel %vm554, %v540, 0
        %v559 = vsel %vm554, %v541, 0
        %vm561 = vcmask 1043456
        %v563 = vsel %vm561, %v539, 0
        %565 = vmatprep.subr.mxu0 0.0
        %566 = vmatpush1.msra.mxu0 %v563
        %567 = vmatprep.subr.mxu0 0.0
        %568 = vmatpush1.msra.mxu0 0.0
        %569 = vmatprep.subr.mxu0 0.0
        %570 = vmatpush1.msra.mxu0 0.0
        %571 = vmatprep.subr.mxu0 0.0
        %572 = vmatpush1.msra.mxu0 0.0
        %573 = vmatprep.subr.mxu0 0.0
        %574 = vmatpush1.msra.mxu0 0.0
        %575 = vmatprep.subr.mxu0 0.0
        %576 = vmatpush1.msra.mxu0 0.0
        %577 = vmatprep.subr.mxu0 0.0
        %578 = vmatpush1.msra.mxu0 0.0
        %579 = vmatprep.subr.mxu0 0.0
        %580 = vmatpush1.msra.mxu0 0.0
        %581 = vmatprep.subr.mxu0 0.0
        %582 = vmatpush1.msra.mxu0 0.0
        %583 = vmatprep.subr.mxu0 0.0
        %584 = vmatpush1.msra.mxu0 0.0
        %585 = vmatprep.subr.mxu0 0.0
        %586 = vmatpush1.msra.mxu0 0.0
        %587 = vmatprep.subr.mxu0 0.0
        %588 = vmatpush1.msra.mxu0 0.0
        %589 = vmatprep.subr.mxu0 0.0
        %590 = vmatpush1.msra.mxu0 0.0
        %591 = vmatprep.subr.mxu0 0.0
        %592 = vmatpush1.msra.mxu0 0.0
        %593 = vmatprep.subr.mxu0 0.0
        %594 = vmatpush1.msra.mxu0 0.0
        %595 = vmatprep.subr.mxu0 0.0
        %596 = vmatpush1.msra.mxu0 0.0
        %597 = vmatprep.subr.mxu0 0.0
        %598 = vmatpush1.msra.mxu0 0.0
        %599 = vmatprep.subr.mxu0 0.0
        %600 = vmatpush1.msra.mxu0 0.0
        %601 = vmatprep.subr.mxu0 0.0
        %602 = vmatpush1.msra.mxu0 0.0
        %603 = vmatprep.subr.mxu0 0.0
        %604 = vmatpush1.msra.mxu0 0.0
        %605 = vmatprep.subr.mxu0 0.0
        %606 = vmatpush1.msra.mxu0 0.0
        %607 = vmatprep.subr.mxu0 0.0
        %608 = vmatpush1.msra.mxu0 0.0
        %609 = vmatprep.subr.mxu0 0.0
        %610 = vmatpush1.msra.mxu0 0.0
        %611 = vmatprep.subr.mxu0 0.0
        %612 = vmatpush1.msra.mxu0 0.0
        %613 = vmatprep.subr.mxu0 0.0
        %614 = vmatpush1.msra.mxu0 0.0
        %615 = vmatprep.subr.mxu0 0.0
        %616 = vmatpush1.msra.mxu0 0.0
        %617 = vmatprep.subr.mxu0 0.0
        %618 = vmatpush1.msra.mxu0 0.0
        %619 = vmatprep.subr.mxu0 0.0
        %620 = vmatpush1.msra.mxu0 0.0
        %621 = vmatprep.subr.mxu0 0.0
        %622 = vmatpush1.msra.mxu0 0.0
        %623 = vmatprep.subr.mxu0 0.0
        %624 = vmatpush1.msra.mxu0 0.0
        %625 = vmatprep.subr.mxu0 0.0
        %626 = vmatpush1.msra.mxu0 0.0
        %627 = vmatprep.subr.mxu0 0.0
        %628 = vmatpush1.msra.mxu0 0.0
        %629 = vmatprep.mubr.f32.mxu0 0.0
        %630 = vmatmul.mubr.f32.gmra.mrb[0].mxu0 %v556
        %v631 = vpop.f32.mrb[0].mxu0
        %v632 = vadd.f32 %v547, %v631
        %v633 = vpop.f32.mrb[0].mxu0
        %634 = vmatprep.mubr.f32.mxu0 0.0
        %635 = vmatmul.mubr.f32.gmra.mrb[0].mxu0 %v559
        %v636 = vpop.f32.mrb[0].mxu0
        %v637 = vadd.f32 %v552, %v636
        %v638 = vpop.f32.mrb[0].mxu0
        %639 = vdwg.mxu0
        %s640 = scalar_lea.vmem %s412, 8 [#allocation2]
        %v641 = vld [vmem:[%s640] sm:$0xff]
        %642 = vmatprep.subr.mxu0 0.0
        %643 = vmatpush1.msra.mxu0 %v641
        %644 = vmatprep.subr.mxu0 0.0
        %645 = vmatpush1.msra.mxu0 0.0
        %646 = vmatprep.subr.mxu0 0.0
        %647 = vmatpush1.msra.mxu0 0.0
        %648 = vmatprep.subr.mxu0 0.0
        %649 = vmatpush1.msra.mxu0 0.0
        %650 = vmatprep.subr.mxu0 0.0
        %651 = vmatpush1.msra.mxu0 0.0
        %652 = vmatprep.subr.mxu0 0.0
        %653 = vmatpush1.msra.mxu0 0.0
        %654 = vmatprep.subr.mxu0 0.0
        %655 = vmatpush1.msra.mxu0 0.0
        %656 = vmatprep.subr.mxu0 0.0
        %657 = vmatpush1.msra.mxu0 0.0
        %658 = vmatprep.subr.mxu0 0.0
        %659 = vmatpush1.msra.mxu0 0.0
        %660 = vmatprep.subr.mxu0 0.0
        %661 = vmatpush1.msra.mxu0 0.0
        %662 = vmatprep.subr.mxu0 0.0
        %663 = vmatpush1.msra.mxu0 0.0
        %664 = vmatprep.subr.mxu0 0.0
        %665 = vmatpush1.msra.mxu0 0.0
        %666 = vmatprep.subr.mxu0 0.0
        %667 = vmatpush1.msra.mxu0 0.0
        %668 = vmatprep.subr.mxu0 0.0
        %669 = vmatpush1.msra.mxu0 0.0
        %670 = vmatprep.subr.mxu0 0.0
        %671 = vmatpush1.msra.mxu0 0.0
        %672 = vmatprep.subr.mxu0 0.0
        %673 = vmatpush1.msra.mxu0 0.0
        %674 = vmatprep.subr.mxu0 0.0
        %675 = vmatpush1.msra.mxu0 0.0
        %676 = vmatprep.subr.mxu0 0.0
        %677 = vmatpush1.msra.mxu0 0.0
        %678 = vmatprep.subr.mxu0 0.0
        %679 = vmatpush1.msra.mxu0 0.0
        %680 = vmatprep.subr.mxu0 0.0
        %681 = vmatpush1.msra.mxu0 0.0
        %682 = vmatprep.subr.mxu0 0.0
        %683 = vmatpush1.msra.mxu0 0.0
        %684 = vmatprep.subr.mxu0 0.0
        %685 = vmatpush1.msra.mxu0 0.0
        %686 = vmatprep.subr.mxu0 0.0
        %687 = vmatpush1.msra.mxu0 0.0
        %688 = vmatprep.subr.mxu0 0.0
        %689 = vmatpush1.msra.mxu0 0.0
        %690 = vmatprep.subr.mxu0 0.0
        %691 = vmatpush1.msra.mxu0 0.0
        %692 = vmatprep.subr.mxu0 0.0
        %693 = vmatpush1.msra.mxu0 0.0
        %694 = vmatprep.subr.mxu0 0.0
        %695 = vmatpush1.msra.mxu0 0.0
        %696 = vmatprep.subr.mxu0 0.0
        %697 = vmatpush1.msra.mxu0 0.0
        %698 = vmatprep.subr.mxu0 0.0
        %699 = vmatpush1.msra.mxu0 0.0
        %700 = vmatprep.subr.mxu0 0.0
        %701 = vmatpush1.msra.mxu0 0.0
        %702 = vmatprep.subr.mxu0 0.0
        %703 = vmatpush1.msra.mxu0 0.0
        %704 = vmatprep.subr.mxu0 0.0
        %705 = vmatpush1.msra.mxu0 0.0
        %706 = vmatprep.mubr.f32.mxu0 0.0
        %707 = vmatmul.mubr.f32.gmra.mrb[0].mxu0 %v467
        %v708 = vpop.f32.mrb[0].mxu0
        %v709 = vadd.f32 %v463, %v708
        %v710 = vpop.f32.mrb[0].mxu0
        %711 = vdwg.mxu0
        %s712 = scalar_lea.vmem %s419, 4 [#allocation3]
        %v713 = vld [vmem:[%s712] sm:$0xf]
        %v715 = vsel %vm561, %v713, 0
        %717 = vmatprep.subr.mxu0 0.0
        %718 = vmatpush1.msra.mxu0 %v715
        %719 = vmatprep.subr.mxu0 0.0
        %720 = vmatpush1.msra.mxu0 0.0
        %721 = vmatprep.subr.mxu0 0.0
        %722 = vmatpush1.msra.mxu0 0.0
        %723 = vmatprep.subr.mxu0 0.0
        %724 = vmatpush1.msra.mxu0 0.0
        %725 = vmatprep.subr.mxu0 0.0
        %726 = vmatpush1.msra.mxu0 0.0
        %727 = vmatprep.subr.mxu0 0.0
        %728 = vmatpush1.msra.mxu0 0.0
        %729 = vmatprep.subr.mxu0 0.0
        %730 = vmatpush1.msra.mxu0 0.0
        %731 = vmatprep.subr.mxu0 0.0
        %732 = vmatpush1.msra.mxu0 0.0
        %733 = vmatprep.subr.mxu0 0.0
        %734 = vmatpush1.msra.mxu0 0.0
        %735 = vmatprep.subr.mxu0 0.0
        %736 = vmatpush1.msra.mxu0 0.0
        %737 = vmatprep.subr.mxu0 0.0
        %738 = vmatpush1.msra.mxu0 0.0
        %739 = vmatprep.subr.mxu0 0.0
        %740 = vmatpush1.msra.mxu0 0.0
        %741 = vmatprep.subr.mxu0 0.0
        %742 = vmatpush1.msra.mxu0 0.0
        %743 = vmatprep.subr.mxu0 0.0
        %744 = vmatpush1.msra.mxu0 0.0
        %745 = vmatprep.subr.mxu0 0.0
        %746 = vmatpush1.msra.mxu0 0.0
        %747 = vmatprep.subr.mxu0 0.0
        %748 = vmatpush1.msra.mxu0 0.0
        %749 = vmatprep.subr.mxu0 0.0
        %750 = vmatpush1.msra.mxu0 0.0
        %751 = vmatprep.subr.mxu0 0.0
        %752 = vmatpush1.msra.mxu0 0.0
        %753 = vmatprep.subr.mxu0 0.0
        %754 = vmatpush1.msra.mxu0 0.0
        %755 = vmatprep.subr.mxu0 0.0
        %756 = vmatpush1.msra.mxu0 0.0
        %757 = vmatprep.subr.mxu0 0.0
        %758 = vmatpush1.msra.mxu0 0.0
        %759 = vmatprep.subr.mxu0 0.0
        %760 = vmatpush1.msra.mxu0 0.0
        %761 = vmatprep.subr.mxu0 0.0
        %762 = vmatpush1.msra.mxu0 0.0
        %763 = vmatprep.subr.mxu0 0.0
        %764 = vmatpush1.msra.mxu0 0.0
        %765 = vmatprep.subr.mxu0 0.0
        %766 = vmatpush1.msra.mxu0 0.0
        %767 = vmatprep.subr.mxu0 0.0
        %768 = vmatpush1.msra.mxu0 0.0
        %769 = vmatprep.subr.mxu0 0.0
        %770 = vmatpush1.msra.mxu0 0.0
        %771 = vmatprep.subr.mxu0 0.0
        %772 = vmatpush1.msra.mxu0 0.0
        %773 = vmatprep.subr.mxu0 0.0
        %774 = vmatpush1.msra.mxu0 0.0
        %775 = vmatprep.subr.mxu0 0.0
        %776 = vmatpush1.msra.mxu0 0.0
        %777 = vmatprep.subr.mxu0 0.0
        %778 = vmatpush1.msra.mxu0 0.0
        %779 = vmatprep.subr.mxu0 0.0
        %780 = vmatpush1.msra.mxu0 0.0
        %781 = vmatprep.mubr.f32.mxu0 0.0
        %782 = vmatmul.mubr.f32.gmra.mrb[0].mxu0 %v556
        %v783 = vpop.f32.mrb[0].mxu0
        %v784 = vadd.f32 %v547, %v783
        %v785 = vpop.f32.mrb[0].mxu0
        %786 = vmatprep.mubr.f32.mxu0 0.0
        %787 = vmatmul.mubr.f32.gmra.mrb[0].mxu0 %v559
        %v788 = vpop.f32.mrb[0].mxu0
        %v789 = vadd.f32 %v552, %v788
        %v790 = vpop.f32.mrb[0].mxu0
        %791 = vdwg.mxu0
        %v792 = vmul.f32 %v536, %v632
        %v793 = vsel %vm561, %v792, 0.0
        %v794 = vrot.slane %v793, 4
        %v795 = vadd.f32 %v793, %v794
        %v796 = vrot.slane %v795, 2
        %v797 = vadd.f32 %v795, %v796
        %v798 = vrot.slane %v797, 1
        %v799 = vadd.f32 %v797, %v798
        %v800 = vmul.f32 %v799, 0.5
        %v801 = vmul.f32 %v536, %v784
        %v802 = vsel %vm561, %v801, 0.0
        %v803 = vrot.slane %v802, 4
        %v804 = vadd.f32 %v802, %v803
        %v805 = vrot.slane %v804, 2
        %v806 = vadd.f32 %v804, %v805
        %v807 = vrot.slane %v806, 1
        %v808 = vadd.f32 %v806, %v807
        %v809 = vmul.f32 %v808, 0.5
        %v810 = vmax.f32 %v800, %v809
        %v811 = vsub.f32 %v800, %v810
        %v812 = vmul.f32 %v811, 1.442695
        %v813 = vpow.pop %v812
        %v814 = vsub.f32 %v809, %v810
        %v815 = vmul.f32 %v814, 1.442695
        %v816 = vpow.pop %v815
        %v817 = vadd.f32 %v813, %v816
        %v818 = vmul.f32 %v813, %v632
        %v819 = vmul.f32 %v816, %v784
        %v820 = vadd.f32 %v818, %v819
        %v821 = vrcp.pop %v817
        %v822 = vmul.f32 %v820, %v821
        %v823 = vld [vmem:[%s6] sm:$0xf]
        %v824 = vld [vmem:[%s7] sm:$0xf]
        %826 = vset.pattern.permute.xlu0 0
        %827 = vperm.xlu0 %826, %v824
        %v828 = vpop.permute.xlu0 %827
        %v831 = vrot.slane %v822, 4
        %v833 = vsel %vm554, %v823, 0
        %v835 = vsel %vm561, %v831, 0
        %837 = vmatprep.subr.mxu0 0.0
        %838 = vmatpush1.msra.mxu0 %v835
        %839 = vmatprep.subr.mxu0 0.0
        %840 = vmatpush1.msra.mxu0 0.0
        %841 = vmatprep.subr.mxu0 0.0
        %842 = vmatpush1.msra.mxu0 0.0
        %843 = vmatprep.subr.mxu0 0.0
        %844 = vmatpush1.msra.mxu0 0.0
        %845 = vmatprep.subr.mxu0 0.0
        %846 = vmatpush1.msra.mxu0 0.0
        %847 = vmatprep.subr.mxu0 0.0
        %848 = vmatpush1.msra.mxu0 0.0
        %849 = vmatprep.subr.mxu0 0.0
        %850 = vmatpush1.msra.mxu0 0.0
        %851 = vmatprep.subr.mxu0 0.0
        %852 = vmatpush1.msra.mxu0 0.0
        %853 = vmatprep.subr.mxu0 0.0
        %854 = vmatpush1.msra.mxu0 0.0
        %855 = vmatprep.subr.mxu0 0.0
        %856 = vmatpush1.msra.mxu0 0.0
        %857 = vmatprep.subr.mxu0 0.0
        %858 = vmatpush1.msra.mxu0 0.0
        %859 = vmatprep.subr.mxu0 0.0
        %860 = vmatpush1.msra.mxu0 0.0
        %861 = vmatprep.subr.mxu0 0.0
        %862 = vmatpush1.msra.mxu0 0.0
        %863 = vmatprep.subr.mxu0 0.0
        %864 = vmatpush1.msra.mxu0 0.0
        %865 = vmatprep.subr.mxu0 0.0
        %866 = vmatpush1.msra.mxu0 0.0
        %867 = vmatprep.subr.mxu0 0.0
        %868 = vmatpush1.msra.mxu0 0.0
        %869 = vmatprep.subr.mxu0 0.0
        %870 = vmatpush1.msra.mxu0 0.0
        %871 = vmatprep.subr.mxu0 0.0
        %872 = vmatpush1.msra.mxu0 0.0
        %873 = vmatprep.subr.mxu0 0.0
        %874 = vmatpush1.msra.mxu0 0.0
        %875 = vmatprep.subr.mxu0 0.0
        %876 = vmatpush1.msra.mxu0 0.0
        %877 = vmatprep.subr.mxu0 0.0
        %878 = vmatpush1.msra.mxu0 0.0
        %879 = vmatprep.subr.mxu0 0.0
        %880 = vmatpush1.msra.mxu0 0.0
        %881 = vmatprep.subr.mxu0 0.0
        %882 = vmatpush1.msra.mxu0 0.0
        %883 = vmatprep.subr.mxu0 0.0
        %884 = vmatpush1.msra.mxu0 0.0
        %885 = vmatprep.subr.mxu0 0.0
        %886 = vmatpush1.msra.mxu0 0.0
        %887 = vmatprep.subr.mxu0 0.0
        %888 = vmatpush1.msra.mxu0 0.0
        %889 = vmatprep.subr.mxu0 0.0
        %890 = vmatpush1.msra.mxu0 0.0
        %891 = vmatprep.subr.mxu0 0.0
        %892 = vmatpush1.msra.mxu0 0.0
        %893 = vmatprep.subr.mxu0 0.0
        %894 = vmatpush1.msra.mxu0 0.0
        %895 = vmatprep.subr.mxu0 0.0
        %896 = vmatpush1.msra.mxu0 0.0
        %897 = vmatprep.subr.mxu0 0.0
        %898 = vmatpush1.msra.mxu0 0.0
        %899 = vmatprep.subr.mxu0 0.0
        %900 = vmatpush1.msra.mxu0 0.0
        %901 = vmatprep.mubr.f32.mxu0 0.0
        %902 = vmatmul.mubr.f32.gmra.mrb[0].mxu0 %v833
        %v903 = vpop.f32.mrb[0].mxu0
        %v904 = vadd.f32 %v828, %v903
        %v905 = vpop.f32.mrb[0].mxu0
        %906 = vdwg.mxu0
        %v907 = vmul.f32 %v709, %v632
        %v908 = vsel %vm561, %v907, 0.0
        %v909 = vrot.slane %v908, 4
        %v910 = vadd.f32 %v908, %v909
        %v911 = vrot.slane %v910, 2
        %v912 = vadd.f32 %v910, %v911
        %v913 = vrot.slane %v912, 1
        %v914 = vadd.f32 %v912, %v913
        %v915 = vmul.f32 %v914, 0.5
        %v916 = vmul.f32 %v709, %v784
        %v917 = vsel %vm561, %v916, 0.0
        %v918 = vrot.slane %v917, 4
        %v919 = vadd.f32 %v917, %v918
        %v920 = vrot.slane %v919, 2
        %v921 = vadd.f32 %v919, %v920
        %v922 = vrot.slane %v921, 1
        %v923 = vadd.f32 %v921, %v922
        %v924 = vmul.f32 %v923, 0.5
        %v925 = vmax.f32 %v915, %v924
        %v926 = vsub.f32 %v915, %v925
        %v927 = vmul.f32 %v926, 1.442695
        %v928 = vpow.pop %v927
        %v929 = vsub.f32 %v924, %v925
        %v930 = vmul.f32 %v929, 1.442695
        %v931 = vpow.pop %v930
        %v932 = vadd.f32 %v928, %v931
        %v933 = vmul.f32 %v928, %v632
        %v934 = vmul.f32 %v931, %v784
        %v935 = vadd.f32 %v933, %v934
        %v936 = vrcp.pop %v932
        %v937 = vmul.f32 %v935, %v936
        %v939 = vrot.slane %v937, 4
        %v940 = vsel %vm561, %v939, 0
        %942 = vmatprep.subr.mxu0 0.0
        %943 = vmatpush1.msra.mxu0 %v940
        %944 = vmatprep.subr.mxu0 0.0
        %945 = vmatpush1.msra.mxu0 0.0
        %946 = vmatprep.subr.mxu0 0.0
        %947 = vmatpush1.msra.mxu0 0.0
        %948 = vmatprep.subr.mxu0 0.0
        %949 = vmatpush1.msra.mxu0 0.0
        %950 = vmatprep.subr.mxu0 0.0
        %951 = vmatpush1.msra.mxu0 0.0
        %952 = vmatprep.subr.mxu0 0.0
        %953 = vmatpush1.msra.mxu0 0.0
        %954 = vmatprep.subr.mxu0 0.0
        %955 = vmatpush1.msra.mxu0 0.0
        %956 = vmatprep.subr.mxu0 0.0
        %957 = vmatpush1.msra.mxu0 0.0
        %958 = vmatprep.subr.mxu0 0.0
        %959 = vmatpush1.msra.mxu0 0.0
        %960 = vmatprep.subr.mxu0 0.0
        %961 = vmatpush1.msra.mxu0 0.0
        %962 = vmatprep.subr.mxu0 0.0
        %963 = vmatpush1.msra.mxu0 0.0
        %964 = vmatprep.subr.mxu0 0.0
        %965 = vmatpush1.msra.mxu0 0.0
        %966 = vmatprep.subr.mxu0 0.0
        %967 = vmatpush1.msra.mxu0 0.0
        %968 = vmatprep.subr.mxu0 0.0
        %969 = vmatpush1.msra.mxu0 0.0
        %970 = vmatprep.subr.mxu0 0.0
        %971 = vmatpush1.msra.mxu0 0.0
        %972 = vmatprep.subr.mxu0 0.0
        %973 = vmatpush1.msra.mxu0 0.0
        %974 = vmatprep.subr.mxu0 0.0
        %975 = vmatpush1.msra.mxu0 0.0
        %976 = vmatprep.subr.mxu0 0.0
        %977 = vmatpush1.msra.mxu0 0.0
        %978 = vmatprep.subr.mxu0 0.0
        %979 = vmatpush1.msra.mxu0 0.0
        %980 = vmatprep.subr.mxu0 0.0
        %981 = vmatpush1.msra.mxu0 0.0
        %982 = vmatprep.subr.mxu0 0.0
        %983 = vmatpush1.msra.mxu0 0.0
        %984 = vmatprep.subr.mxu0 0.0
        %985 = vmatpush1.msra.mxu0 0.0
        %986 = vmatprep.subr.mxu0 0.0
        %987 = vmatpush1.msra.mxu0 0.0
        %988 = vmatprep.subr.mxu0 0.0
        %989 = vmatpush1.msra.mxu0 0.0
        %990 = vmatprep.subr.mxu0 0.0
        %991 = vmatpush1.msra.mxu0 0.0
        %992 = vmatprep.subr.mxu0 0.0
        %993 = vmatpush1.msra.mxu0 0.0
        %994 = vmatprep.subr.mxu0 0.0
        %995 = vmatpush1.msra.mxu0 0.0
        %996 = vmatprep.subr.mxu0 0.0
        %997 = vmatpush1.msra.mxu0 0.0
        %998 = vmatprep.subr.mxu0 0.0
        %999 = vmatpush1.msra.mxu0 0.0
        %1000 = vmatprep.subr.mxu0 0.0
        %1001 = vmatpush1.msra.mxu0 0.0
        %1002 = vmatprep.subr.mxu0 0.0
        %1003 = vmatpush1.msra.mxu0 0.0
        %1004 = vmatprep.subr.mxu0 0.0
        %1005 = vmatpush1.msra.mxu0 0.0
        %1006 = vmatprep.mubr.f32.mxu0 0.0
        %1007 = vmatmul.mubr.f32.gmra.mrb[0].mxu0 %v833
        %v1008 = vpop.f32.mrb[0].mxu0
        %v1009 = vadd.f32 %v828, %v1008
        %v1010 = vpop.f32.mrb[0].mxu0
        %1011 = vdwg.mxu0
        %v1013 = vrot.slane %v637, 4
        %v1015 = vmul.f32 %v536, %v1013
        %v1017 = vrot.slane %v1015, 4
        %v1019 = vsel %vm561, %v1017, 0.0
        %v1020 = vrot.slane %v1019, 4
        %v1021 = vadd.f32 %v1019, %v1020
        %v1022 = vrot.slane %v1021, 2
        %v1023 = vadd.f32 %v1021, %v1022
        %v1024 = vrot.slane %v1023, 1
        %v1025 = vadd.f32 %v1023, %v1024
        %v1026 = vmul.f32 %v1025, 0.5
        %v1028 = vrot.slane %v789, 4
        %v1030 = vmul.f32 %v536, %v1028
        %v1032 = vrot.slane %v1030, 4
        %v1034 = vsel %vm561, %v1032, 0.0
        %v1035 = vrot.slane %v1034, 4
        %v1036 = vadd.f32 %v1034, %v1035
        %v1037 = vrot.slane %v1036, 2
        %v1038 = vadd.f32 %v1036, %v1037
        %v1039 = vrot.slane %v1038, 1
        %v1040 = vadd.f32 %v1038, %v1039
        %v1041 = vmul.f32 %v1040, 0.5
        %v1042 = vmax.f32 %v1026, %v1041
        %v1043 = vsub.f32 %v1026, %v1042
        %v1044 = vmul.f32 %v1043, 1.442695
        %v1045 = vpow.pop %v1044
        %v1046 = vsub.f32 %v1041, %v1042
        %v1047 = vmul.f32 %v1046, 1.442695
        %v1048 = vpow.pop %v1047
        %v1049 = vadd.f32 %v1045, %v1048
        %v1050 = vmul.f32 %v1045, %v637
        %v1051 = vmul.f32 %v1048, %v789
        %v1052 = vadd.f32 %v1050, %v1051
        %v1053 = vrcp.pop %v1049
        %v1054 = vmul.f32 %v1052, %v1053
        %v1055 = vld [vmem:[%s8] sm:$0xf]
        %v1056 = vld [vmem:[%s9] sm:$0xf]
        %1058 = vset.pattern.permute.xlu0 0
        %1059 = vperm.xlu0 %1058, %v1056
        %v1060 = vpop.permute.xlu0 %1059
        %v1063 = vrot.slane %v1054, 4
        %v1065 = vsel %vm554, %v1055, 0
        %v1067 = vsel %vm561, %v1063, 0
        %1069 = vmatprep.subr.mxu0 0.0
        %1070 = vmatpush1.msra.mxu0 %v1067
        %1071 = vmatprep.subr.mxu0 0.0
        %1072 = vmatpush1.msra.mxu0 0.0
        %1073 = vmatprep.subr.mxu0 0.0
        %1074 = vmatpush1.msra.mxu0 0.0
        %1075 = vmatprep.subr.mxu0 0.0
        %1076 = vmatpush1.msra.mxu0 0.0
        %1077 = vmatprep.subr.mxu0 0.0
        %1078 = vmatpush1.msra.mxu0 0.0
        %1079 = vmatprep.subr.mxu0 0.0
        %1080 = vmatpush1.msra.mxu0 0.0
        %1081 = vmatprep.subr.mxu0 0.0
        %1082 = vmatpush1.msra.mxu0 0.0
        %1083 = vmatprep.subr.mxu0 0.0
        %1084 = vmatpush1.msra.mxu0 0.0
        %1085 = vmatprep.subr.mxu0 0.0
        %1086 = vmatpush1.msra.mxu0 0.0
        %1087 = vmatprep.subr.mxu0 0.0
        %1088 = vmatpush1.msra.mxu0 0.0
        %1089 = vmatprep.subr.mxu0 0.0
        %1090 = vmatpush1.msra.mxu0 0.0
        %1091 = vmatprep.subr.mxu0 0.0
        %1092 = vmatpush1.msra.mxu0 0.0
        %1093 = vmatprep.subr.mxu0 0.0
        %1094 = vmatpush1.msra.mxu0 0.0
        %1095 = vmatprep.subr.mxu0 0.0
        %1096 = vmatpush1.msra.mxu0 0.0
        %1097 = vmatprep.subr.mxu0 0.0
        %1098 = vmatpush1.msra.mxu0 0.0
        %1099 = vmatprep.subr.mxu0 0.0
        %1100 = vmatpush1.msra.mxu0 0.0
        %1101 = vmatprep.subr.mxu0 0.0
        %1102 = vmatpush1.msra.mxu0 0.0
        %1103 = vmatprep.subr.mxu0 0.0
        %1104 = vmatpush1.msra.mxu0 0.0
        %1105 = vmatprep.subr.mxu0 0.0
        %1106 = vmatpush1.msra.mxu0 0.0
        %1107 = vmatprep.subr.mxu0 0.0
        %1108 = vmatpush1.msra.mxu0 0.0
        %1109 = vmatprep.subr.mxu0 0.0
        %1110 = vmatpush1.msra.mxu0 0.0
        %1111 = vmatprep.subr.mxu0 0.0
        %1112 = vmatpush1.msra.mxu0 0.0
        %1113 = vmatprep.subr.mxu0 0.0
        %1114 = vmatpush1.msra.mxu0 0.0
        %1115 = vmatprep.subr.mxu0 0.0
        %1116 = vmatpush1.msra.mxu0 0.0
        %1117 = vmatprep.subr.mxu0 0.0
        %1118 = vmatpush1.msra.mxu0 0.0
        %1119 = vmatprep.subr.mxu0 0.0
        %1120 = vmatpush1.msra.mxu0 0.0
        %1121 = vmatprep.subr.mxu0 0.0
        %1122 = vmatpush1.msra.mxu0 0.0
        %1123 = vmatprep.subr.mxu0 0.0
        %1124 = vmatpush1.msra.mxu0 0.0
        %1125 = vmatprep.subr.mxu0 0.0
        %1126 = vmatpush1.msra.mxu0 0.0
        %1127 = vmatprep.subr.mxu0 0.0
        %1128 = vmatpush1.msra.mxu0 0.0
        %1129 = vmatprep.subr.mxu0 0.0
        %1130 = vmatpush1.msra.mxu0 0.0
        %1131 = vmatprep.subr.mxu0 0.0
        %1132 = vmatpush1.msra.mxu0 0.0
        %1133 = vmatprep.mubr.f32.mxu0 0.0
        %1134 = vmatmul.mubr.f32.gmra.mrb[0].mxu0 %v1065
        %v1135 = vpop.f32.mrb[0].mxu0
        %v1136 = vadd.f32 %v1060, %v1135
        %v1137 = vpop.f32.mrb[0].mxu0
        %1138 = vdwg.mxu0
        %v1139 = vmul.f32 %v709, %v1013
        %v1141 = vrot.slane %v1139, 4
        %v1143 = vsel %vm561, %v1141, 0.0
        %v1144 = vrot.slane %v1143, 4
        %v1145 = vadd.f32 %v1143, %v1144
        %v1146 = vrot.slane %v1145, 2
        %v1147 = vadd.f32 %v1145, %v1146
        %v1148 = vrot.slane %v1147, 1
        %v1149 = vadd.f32 %v1147, %v1148
        %v1150 = vmul.f32 %v1149, 0.5
        %v1151 = vmul.f32 %v709, %v1028
        %v1153 = vrot.slane %v1151, 4
        %v1155 = vsel %vm561, %v1153, 0.0
        %v1156 = vrot.slane %v1155, 4
        %v1157 = vadd.f32 %v1155, %v1156
        %v1158 = vrot.slane %v1157, 2
        %v1159 = vadd.f32 %v1157, %v1158
        %v1160 = vrot.slane %v1159, 1
        %v1161 = vadd.f32 %v1159, %v1160
        %v1162 = vmul.f32 %v1161, 0.5
        %v1163 = vmax.f32 %v1150, %v1162
        %v1164 = vsub.f32 %v1150, %v1163
        %v1165 = vmul.f32 %v1164, 1.442695
        %v1166 = vpow.pop %v1165
        %v1167 = vsub.f32 %v1162, %v1163
        %v1168 = vmul.f32 %v1167, 1.442695
        %v1169 = vpow.pop %v1168
        %v1170 = vadd.f32 %v1166, %v1169
        %v1171 = vmul.f32 %v1166, %v637
        %v1172 = vmul.f32 %v1169, %v789
        %v1173 = vadd.f32 %v1171, %v1172
        %v1174 = vrcp.pop %v1170
        %v1175 = vmul.f32 %v1173, %v1174
        %v1177 = vrot.slane %v1175, 4
        %v1178 = vsel %vm561, %v1177, 0
        %1180 = vmatprep.subr.mxu0 0.0
        %1181 = vmatpush1.msra.mxu0 %v1178
        %1182 = vmatprep.subr.mxu0 0.0
        %1183 = vmatpush1.msra.mxu0 0.0
        %1184 = vmatprep.subr.mxu0 0.0
        %1185 = vmatpush1.msra.mxu0 0.0
        %1186 = vmatprep.subr.mxu0 0.0
        %1187 = vmatpush1.msra.mxu0 0.0
        %1188 = vmatprep.subr.mxu0 0.0
        %1189 = vmatpush1.msra.mxu0 0.0
        %1190 = vmatprep.subr.mxu0 0.0
        %1191 = vmatpush1.msra.mxu0 0.0
        %1192 = vmatprep.subr.mxu0 0.0
        %1193 = vmatpush1.msra.mxu0 0.0
        %1194 = vmatprep.subr.mxu0 0.0
        %1195 = vmatpush1.msra.mxu0 0.0
        %1196 = vmatprep.subr.mxu0 0.0
        %1197 = vmatpush1.msra.mxu0 0.0
        %1198 = vmatprep.subr.mxu0 0.0
        %1199 = vmatpush1.msra.mxu0 0.0
        %1200 = vmatprep.subr.mxu0 0.0
        %1201 = vmatpush1.msra.mxu0 0.0
        %1202 = vmatprep.subr.mxu0 0.0
        %1203 = vmatpush1.msra.mxu0 0.0
        %1204 = vmatprep.subr.mxu0 0.0
        %1205 = vmatpush1.msra.mxu0 0.0
        %1206 = vmatprep.subr.mxu0 0.0
        %1207 = vmatpush1.msra.mxu0 0.0
        %1208 = vmatprep.subr.mxu0 0.0
        %1209 = vmatpush1.msra.mxu0 0.0
        %1210 = vmatprep.subr.mxu0 0.0
        %1211 = vmatpush1.msra.mxu0 0.0
        %1212 = vmatprep.subr.mxu0 0.0
        %1213 = vmatpush1.msra.mxu0 0.0
        %1214 = vmatprep.subr.mxu0 0.0
        %1215 = vmatpush1.msra.mxu0 0.0
        %1216 = vmatprep.subr.mxu0 0.0
        %1217 = vmatpush1.msra.mxu0 0.0
        %1218 = vmatprep.subr.mxu0 0.0
        %1219 = vmatpush1.msra.mxu0 0.0
        %1220 = vmatprep.subr.mxu0 0.0
        %1221 = vmatpush1.msra.mxu0 0.0
        %1222 = vmatprep.subr.mxu0 0.0
        %1223 = vmatpush1.msra.mxu0 0.0
        %1224 = vmatprep.subr.mxu0 0.0
        %1225 = vmatpush1.msra.mxu0 0.0
        %1226 = vmatprep.subr.mxu0 0.0
        %1227 = vmatpush1.msra.mxu0 0.0
        %1228 = vmatprep.subr.mxu0 0.0
        %1229 = vmatpush1.msra.mxu0 0.0
        %1230 = vmatprep.subr.mxu0 0.0
        %1231 = vmatpush1.msra.mxu0 0.0
        %1232 = vmatprep.subr.mxu0 0.0
        %1233 = vmatpush1.msra.mxu0 0.0
        %1234 = vmatprep.subr.mxu0 0.0
        %1235 = vmatpush1.msra.mxu0 0.0
        %1236 = vmatprep.subr.mxu0 0.0
        %1237 = vmatpush1.msra.mxu0 0.0
        %1238 = vmatprep.subr.mxu0 0.0
        %1239 = vmatpush1.msra.mxu0 0.0
        %1240 = vmatprep.subr.mxu0 0.0
        %1241 = vmatpush1.msra.mxu0 0.0
        %1242 = vmatprep.subr.mxu0 0.0
        %1243 = vmatpush1.msra.mxu0 0.0
        %1244 = vmatprep.mubr.f32.mxu0 0.0
        %1245 = vmatmul.mubr.f32.gmra.mrb[0].mxu0 %v1065
        %v1246 = vpop.f32.mrb[0].mxu0
        %v1247 = vadd.f32 %v1060, %v1246
        %v1248 = vpop.f32.mrb[0].mxu0
        %1249 = vdwg.mxu0
        %v1250 = vmul.f32 %v904, %v904
        %v1251 = vmul.f32 %v1136, %v1136
        %v1252 = vadd.f32 %v1250, %v1251
        %v1253 = vrsqrt.pop %v1252
        %v1254 = vmul.f32 %v1252, %v1253
        %vm1255 = vcmp.eq.f32.partialorder %v1252, inf
        %v1256 = vsel %vm1255, %v1252, %v1254
        %vm1257 = vcmp.eq.f32.partialorder %v1252, 0.0
        %v1258 = vand.u32 %v1252, 2147483648
        %v1259 = vsel %vm1257, %v1258, %v1256
        %1260 = vst [vmem:[%s456] sm:$0xf] %v1259
        %v1261 = vmul.f32 %v1009, %v1009
        %v1262 = vmul.f32 %v1247, %v1247
        %v1263 = vadd.f32 %v1261, %v1262
        %v1264 = vrsqrt.pop %v1263
        %v1265 = vmul.f32 %v1263, %v1264
        %vm1266 = vcmp.eq.f32.partialorder %v1263, inf
        %v1267 = vsel %vm1266, %v1263, %v1265
        %vm1268 = vcmp.eq.f32.partialorder %v1263, 0.0
        %v1269 = vand.u32 %v1263, 2147483648
        %v1270 = vsel %vm1268, %v1269, %v1267
        %s1271 = scalar_lea.vmem %s456, 4 [#allocation4]
        %1272 = vst [vmem:[%s1271] sm:$0xf] %v1270
        %s1273 = sand.u32 %s249, 1
        %s1274 = sand.u32 %s249, 1
        %s1275 = smul.addr %s1274, 8
        %s1276 = scalar_lea.vmem [#allocation4], %s1275
        // Predicated region
        $region140: #{fcfe_forward.10} parent=130 // pred_check
          %p1277 = pneg %p259
        $region141: #{fcfe_forward.10} parent=130 // pred_check_branch
          %1279 = sbr.rel (%p1277) target = $region143
        $region142: #{fcfe_forward.10} parent=130 // pred_region
          %s1280 = smul.addr %s21, 4
          %s1281 = scalar_lea.vmem %s10, %s1280
          // Predicated region
          $region144: #{fcfe_forward.10} parent=142 // pred_check
            _
          $region145: #{fcfe_forward.10} parent=142 // pred_check_branch
            %1283 = sbr.rel (0) target = $region147
          $region146: #{fcfe_forward.10} parent=142 // pred_region
            // Predicated region
            $region148: #{fcfe_forward.10} parent=146 // pred_check
              _
            $region149: #{fcfe_forward.10} parent=146 // pred_check_branch
              %1285 = sbr.rel target = $region151
            $region150: #{fcfe_forward.10} parent=146 // pred_region
              // Predicated region
              $region163: #{fcfe_forward.10} parent=150 // pred_check
                _
              $region164: #{fcfe_forward.10} parent=150 // pred_check_branch
                %1302 = sbr.rel (0) target = $region166
              $region165: #{fcfe_forward.10} parent=150 // pred_region
                loop: start=0, step=1, limit=1
                $region167: #{fcfe_forward.10} parent=165 // loop_pre_header
                  _
                $region168: #{fcfe_forward.10} parent=165 // loop_header
                  %s1304 = sphi 0, %s1308
                  %p1305 = scmp.ge.s32.totalorder %s1304, 1
                  %s1309 = sphi %s1276, %s1276
                  %s1310 = sphi %s1281, %s1281
                $region169: #{fcfe_forward.10} parent=165 // loop_header_branch
                  %1307 = sbr.rel (%p1305) target = $region173
                $region170: #{fcfe_forward.10} parent=165 // loop_body
                  _
                $region171: #{fcfe_forward.10} parent=165 // loop_footer
                  %s1308 = sadd.s32 1, %s1304
                $region172: #{fcfe_forward.10} parent=165 // loop_footer_branch
                  %1303 = sbr.rel target = $region168
                $region173: #{fcfe_forward.10} parent=165 // loop_exit
                  _
                loop: start=0, step=1, limit=1
                $region174: #{fcfe_forward.10} parent=165 // loop_pre_header
                  _
                $region175: #{fcfe_forward.10} parent=165 // loop_header
                  %s1313 = sphi 0, %s1317
                  %p1314 = scmp.ge.s32.totalorder %s1313, 1
                  %s1318 = sphi %s1276, %s1276
                  %s1319 = sphi %s1281, %s1281
                $region176: #{fcfe_forward.10} parent=165 // loop_header_branch
                  %1316 = sbr.rel (%p1314) target = $region180
                $region177: #{fcfe_forward.10} parent=165 // loop_body
                  %v1320 = vld [vmem:[%s1318] sm:$0xf]
                  %1321 = vst [vmem:[%s1319] sm:$0xf] %v1320
                  %v1322 = vld [vmem:[%s1318 + $0x4] sm:$0xf]
                  %1323 = vst [vmem:[%s1319 + $0x8] sm:$0xf] %v1322
                $region178: #{fcfe_forward.10} parent=165 // loop_footer
                  %s1317 = sadd.s32 1, %s1313
                $region179: #{fcfe_forward.10} parent=165 // loop_footer_branch
                  %1312 = sbr.rel target = $region175
                $region180: #{fcfe_forward.10} parent=165 // loop_exit
                  _
              $region166: #{fcfe_forward.10} parent=150 // pred_fallthru
                _
            $region151: #{fcfe_forward.10} parent=146 // pred_fallthru
              _
            // Predicated region
            $region152: #{fcfe_forward.10} parent=146 // pred_check
              _
            $region153: #{fcfe_forward.10} parent=146 // pred_check_branch
              %1287 = sbr.rel (0) target = $region155
            $region154: #{fcfe_forward.10} parent=146 // pred_region
              loop: start=0, step=1, limit=1
              $region156: #{fcfe_forward.10} parent=154 // loop_pre_header
                _
              $region157: #{fcfe_forward.10} parent=154 // loop_header
                %s1290 = sphi 0, %s1294
                %p1291 = scmp.ge.s32.totalorder %s1290, 1
                %s1295 = sphi %s1276, %s1276
                %s1296 = sphi %s1281, %s1281
              $region158: #{fcfe_forward.10} parent=154 // loop_header_branch
                %1293 = sbr.rel (%p1291) target = $region162
              $region159: #{fcfe_forward.10} parent=154 // loop_body
                %v1297 = vld [vmem:[%s1295] sm:$0xf]
                %1298 = vst [vmem:[%s1296] sm:$0xf] %v1297
                %v1299 = vld [vmem:[%s1295 + $0x4] sm:$0xf]
                %1300 = vst [vmem:[%s1296 + $0x8] sm:$0xf] %v1299
              $region160: #{fcfe_forward.10} parent=154 // loop_footer
                %s1294 = sadd.s32 1, %s1290
              $region161: #{fcfe_forward.10} parent=154 // loop_footer_branch
                %1289 = sbr.rel target = $region157
              $region162: #{fcfe_forward.10} parent=154 // loop_exit
                _
            $region155: #{fcfe_forward.10} parent=146 // pred_fallthru
              _
          $region147: #{fcfe_forward.10} parent=142 // pred_fallthru
            _
          %1324 = vnop
        $region143: #{fcfe_forward.10} parent=130 // pred_fallthru
          _
      $region131: #{fcfe_forward.10} parent=5 // pred_fallthru
        _
      %p1325 = scmp.le.s32.totalorder 2, %s16
      // Predicated region
      $region181: #{fcfe_forward.10} parent=5 // pred_check
        %p1326 = pneg %p1325
      $region182: #{fcfe_forward.10} parent=5 // pred_check_branch
        %1328 = sbr.rel (%p1326) target = $region184
      $region183: #{fcfe_forward.10} parent=5 // pred_region
        %s1329 = ssub.s32 %s16, 2
        // Predicated region
        $region185: #{fcfe_forward.10} parent=183 // pred_check
          %p1330 = pneg %p265
        $region186: #{fcfe_forward.10} parent=183 // pred_check_branch
          %1332 = sbr.rel (%p1330) target = $region188
        $region187: #{fcfe_forward.10} parent=183 // pred_region
          %s1333 = sand.u32 %s250, 1
          %s1334 = sand.u32 %s250, 1
          %s1335 = smul.addr %s1334, 8
          %s1336 = scalar_lea.vmem [#allocation4], %s1335
        $region188: #{fcfe_forward.10} parent=183 // pred_fallthru
          _
      $region184: #{fcfe_forward.10} parent=5 // pred_fallthru
        _
    $region6: #{fcfe_forward.10} parent=1 // loop_footer
      %s20 = sadd.s32 1, %s16
    $region7: #{fcfe_forward.10} parent=1 // loop_footer_branch
      %15 = sbr.rel target = $region3
    $region8: #{fcfe_forward.10} parent=1 // loop_exit
      _

// kernel: fcfe_forward.11
$region0: #{fcfe_forward.11}
  #allocation0 [shape = 'u32[]', space=smem, size = 0x4, offset = 0x4, fixed_abs, tag = 'smem constant byte address 0x4 - core index']
  #allocation1 [shape = 'u32[144,128]{1,0:T(1,128)}', space=vmem, size = 0x12000, scoped, tag = 'internal scratch']
  %s0 = inlined_call_operand.vmem [shape: f32[2,4,16,16], index: 0, kind: input, shape index: {}]
  %s1 = inlined_call_operand.vmem [shape: f32[2,4,16,16], index: 1, kind: input, shape index: {}]
  %s2 = inlined_call_operand.vmem [shape: f32[9,4,1,1], index: 2, kind: input, shape index: {}]
  %s3 = inlined_call_operand.vmem [shape: f32[4,1,1], index: 3, kind: input, shape index: {}]
  %s4 = inlined_call_operand.vmem [shape: f32[4,4,1,1], index: 4, kind: input, shape index: {}]
  %s5 = inlined_call_operand.vmem [shape: f32[4,1,1], index: 5, kind: input, shape index: {}]
  %s6 = inlined_call_operand.hbm [shape: f32[2,4,16,16], index: 6, kind: output, shape index: {}]
  %s7 = sld [smem:[#allocation0]]
  $region57: #{fcfe_forward.11} parent=0
    _
  %s9 = ssub.s32 1, %s7
  %s10 = scalar_select 0, %s9, %s7
  $region1: #{fcfe_forward.11} parent=0
    #allocation2 [shape = 'u8[65536]{0}', space=vmem, size = 0x10000, scoped, tag = 'output window, operand 0']
    #allocation3 [shape = 's32[2]{0}', space=sflag, size = 0x8, scoped, tag = 'scoped memory for fcfe_forward.11']
    %11 = vsyncpa [#allocation3], 0
    %s12 = scalar_lea.sflag [#allocation3], 1
    %13 = vsyncpa %s12, 0
    loop: start=0, step=1, limit=4
    $region2: #{fcfe_forward.11} parent=1 // loop_pre_header
      _
    $region3: #{fcfe_forward.11} parent=1 // loop_header
      %s15 = sphi 0, %s19
      %p16 = scmp.ge.s32.totalorder %s15, 4
      %s25 = sphi 0, %s27
      %s28 = sphi 0, %s25
      %s29 = sphi 0, %s28
      %s45 = sphi 0, %s29
      %s51 = sphi 0, %s53
      %s54 = sphi 0, %s51
      %s55 = sphi 0, %s54
      %s71 = sphi 0, %s55
      %s75 = sphi 0, %s75
      %s77 = sphi 0, %s75
      %s78 = sphi 0, %s77
      %s92 = sphi 0, %s78
      %s96 = sphi 0, %s96
      %s98 = sphi 0, %s96
      %s99 = sphi 0, %s98
      %s113 = sphi 0, %s99
      %s117 = sphi 0, %s117
      %s119 = sphi 0, %s117
      %s120 = sphi 0, %s119
      %s134 = sphi 0, %s120
      %s138 = sphi 0, %s138
      %s140 = sphi 0, %s138
      %s141 = sphi 0, %s140
      %s155 = sphi 0, %s141
      %s161 = sphi 0, %s163
      %s164 = sphi 0, %s161
      %s165 = sphi 0, %s164
      %s181 = sphi 0, %s165
    $region4: #{fcfe_forward.11} parent=1 // loop_header_branch
      %18 = sbr.rel (%p16) target = $region8
    $region5: #{fcfe_forward.11} parent=1 // loop_body
      %s20 = ssub.s32 %s15, 1
      %s21 = ssub.s32 %s15, 2
      %s22 = sadd.s32 %s15, 1
      %s23 = ssub.s32 %s15, %s22
      %p24 = scmp.eq.s32.totalorder %s23, 0
      %s26 = sadd.s32 %s25, 1
      %s27 = scalar_select %p24, %s25, %s26
      %p30 = pneg %p24
      %p31 = scmp.eq.s32.totalorder %s15, 1
      %p32 = por %p30, %p31
      %p33 = scmp.ne.s32.totalorder %s25, %s28
      %p34 = scmp.eq.s32.totalorder %s15, 0
      %p35 = por %p33, %p34
      %p36 = scmp.ne.s32.totalorder %s25, %s28
      %p37 = scmp.eq.s32.totalorder %s20, 1
      %p38 = por %p36, %p37
      %p39 = scmp.ne.s32.totalorder %s28, %s29
      %p40 = scmp.eq.s32.totalorder %s20, 0
      %p41 = por %p39, %p40
      %p42 = scmp.ne.s32.totalorder %s28, %s29
      %p43 = scmp.eq.s32.totalorder %s21, 1
      %p44 = por %p42, %p43
      %p46 = scmp.ne.s32.totalorder %s29, %s45
      %p47 = scmp.eq.s32.totalorder %s21, 0
      %p48 = por %p46, %p47
      %s49 = ssub.s32 %s15, %s22
      %p50 = scmp.eq.s32.totalorder %s49, 0
      %s52 = sadd.s32 %s51, 1
      %s53 = scalar_select %p50, %s51, %s52
      %p56 = pneg %p50
      %p57 = scmp.eq.s32.totalorder %s15, 1
      %p58 = por %p56, %p57
      %p59 = scmp.ne.s32.totalorder %s51, %s54
      %p60 = scmp.eq.s32.totalorder %s15, 0
      %p61 = por %p59, %p60
      %p62 = scmp.ne.s32.totalorder %s51, %s54
      %p63 = scmp.eq.s32.totalorder %s20, 1
      %p64 = por %p62, %p63
      %p65 = scmp.ne.s32.totalorder %s54, %s55
      %p66 = scmp.eq.s32.totalorder %s20, 0
      %p67 = por %p65, %p66
      %p68 = scmp.ne.s32.totalorder %s54, %s55
      %p69 = scmp.eq.s32.totalorder %s21, 1
      %p70 = por %p68, %p69
      %p72 = scmp.ne.s32.totalorder %s55, %s71
      %p73 = scmp.eq.s32.totalorder %s21, 0
      %p74 = por %p72, %p73
      %s76 = sadd.s32 %s75, 1
      %p79 = scmp.eq.s32.totalorder %s15, 1
      %p80 = scmp.ne.s32.totalorder %s75, %s77
      %p81 = scmp.eq.s32.totalorder %s15, 0
      %p82 = por %p80, %p81
      %p83 = scmp.ne.s32.totalorder %s75, %s77
      %p84 = scmp.eq.s32.totalorder %s20, 1
      %p85 = por %p83, %p84
      %p86 = scmp.ne.s32.totalorder %s77, %s78
      %p87 = scmp.eq.s32.totalorder %s20, 0
      %p88 = por %p86, %p87
      %p89 = scmp.ne.s32.totalorder %s77, %s78
      %p90 = scmp.eq.s32.totalorder %s21, 1
      %p91 = por %p89, %p90
      %p93 = scmp.ne.s32.totalorder %s78, %s92
      %p94 = scmp.eq.s32.totalorder %s21, 0
      %p95 = por %p93, %p94
      %s97 = sadd.s32 %s96, 1
      %p100 = scmp.eq.s32.totalorder %s15, 1
      %p101 = scmp.ne.s32.totalorder %s96, %s98
      %p102 = scmp.eq.s32.totalorder %s15, 0
      %p103 = por %p101, %p102
      %p104 = scmp.ne.s32.totalorder %s96, %s98
      %p105 = scmp.eq.s32.totalorder %s20, 1
      %p106 = por %p104, %p105
      %p107 = scmp.ne.s32.totalorder %s98, %s99
      %p108 = scmp.eq.s32.totalorder %s20, 0
      %p109 = por %p107, %p108
      %p110 = scmp.ne.s32.totalorder %s98, %s99
      %p111 = scmp.eq.s32.totalorder %s21, 1
      %p112 = por %p110, %p111
      %p114 = scmp.ne.s32.totalorder %s99, %s113
      %p115 = scmp.eq.s32.totalorder %s21, 0
      %p116 = por %p114, %p115
      %s118 = sadd.s32 %s117, 1
      %p121 = scmp.eq.s32.totalorder %s15, 1
      %p122 = scmp.ne.s32.totalorder %s117, %s119
      %p123 = scmp.eq.s32.totalorder %s15, 0
      %p124 = por %p122, %p123
      %p125 = scmp.ne.s32.totalorder %s117, %s119
      %p126 = scmp.eq.s32.totalorder %s20, 1
      %p127 = por %p125, %p126
      %p128 = scmp.ne.s32.totalorder %s119, %s120
      %p129 = scmp.eq.s32.totalorder %s20, 0
      %p130 = por %p128, %p129
      %p131 = scmp.ne.s32.totalorder %s119, %s120
      %p132 = scmp.eq.s32.totalorder %s21, 1
      %p133 = por %p131, %p132
      %p135 = scmp.ne.s32.totalorder %s120, %s134
      %p136 = scmp.eq.s32.totalorder %s21, 0
      %p137 = por %p135, %p136
      %s139 = sadd.s32 %s138, 1
      %p142 = scmp.eq.s32.totalorder %s15, 1
      %p143 = scmp.ne.s32.totalorder %s138, %s140
      %p144 = scmp.eq.s32.totalorder %s15, 0
      %p145 = por %p143, %p144
      %p146 = scmp.ne.s32.totalorder %s138, %s140
      %p147 = scmp.eq.s32.totalorder %s20, 1
      %p148 = por %p146, %p147
      %p149 = scmp.ne.s32.totalorder %s140, %s141
      %p150 = scmp.eq.s32.totalorder %s20, 0
      %p151 = por %p149, %p150
      %p152 = scmp.ne.s32.totalorder %s140, %s141
      %p153 = scmp.eq.s32.totalorder %s21, 1
      %p154 = por %p152, %p153
      %p156 = scmp.ne.s32.totalorder %s141, %s155
      %p157 = scmp.eq.s32.totalorder %s21, 0
      %p158 = por %p156, %p157
      %s159 = ssub.s32 %s15, %s22
      %p160 = scmp.eq.s32.totalorder %s159, 0
      %s162 = sadd.s32 %s161, 1
      %s163 = scalar_select %p160, %s161, %s162
      %p166 = pneg %p160
      %p167 = scmp.eq.s32.totalorder %s15, 1
      %p168 = por %p166, %p167
      %p169 = scmp.ne.s32.totalorder %s161, %s164
      %p170 = scmp.eq.s32.totalorder %s15, 0
      %p171 = por %p169, %p170
      %p172 = scmp.ne.s32.totalorder %s161, %s164
      %p173 = scmp.eq.s32.totalorder %s20, 1
      %p174 = por %p172, %p173
      %p175 = scmp.ne.s32.totalorder %s164, %s165
      %p176 = scmp.eq.s32.totalorder %s20, 0
      %p177 = por %p175, %p176
      %p178 = scmp.ne.s32.totalorder %s164, %s165
      %p179 = scmp.eq.s32.totalorder %s21, 1
      %p180 = por %p178, %p179
      %p182 = scmp.ne.s32.totalorder %s165, %s181
      %p183 = scmp.eq.s32.totalorder %s21, 0
      %p184 = por %p182, %p183
      %p185 = scmp.le.s32.totalorder 1, %s15
      %p186 = scmp.lt.s32.totalorder %s15, 3
      %p187 = pnand %p185, %p186
      %p188 = pneg %p187
      // Predicated region
      $region9: #{fcfe_forward.11} parent=5 // pred_check
        _
      $region10: #{fcfe_forward.11} parent=5 // pred_check_branch
        %190 = sbr.rel (%p187) target = $region12
      $region11: #{fcfe_forward.11} parent=5 // pred_region
        %s191 = ssub.s32 %s15, 1
        // Predicated region
        $region13: #{fcfe_forward.11} parent=11 // pred_check
          %p192 = pneg %p88
        $region14: #{fcfe_forward.11} parent=11 // pred_check_branch
          %194 = sbr.rel (%p192) target = $region16
        $region15: #{fcfe_forward.11} parent=11 // pred_region
          _
        $region16: #{fcfe_forward.11} parent=11 // pred_fallthru
          _
        // Predicated region
        $region17: #{fcfe_forward.11} parent=11 // pred_check
          %p195 = pneg %p109
        $region18: #{fcfe_forward.11} parent=11 // pred_check_branch
          %197 = sbr.rel (%p195) target = $region20
        $region19: #{fcfe_forward.11} parent=11 // pred_region
          _
        $region20: #{fcfe_forward.11} parent=11 // pred_fallthru
          _
        // Predicated region
        $region21: #{fcfe_forward.11} parent=11 // pred_check
          %p198 = pneg %p130
        $region22: #{fcfe_forward.11} parent=11 // pred_check_branch
          %200 = sbr.rel (%p198) target = $region24
        $region23: #{fcfe_forward.11} parent=11 // pred_region
          _
        $region24: #{fcfe_forward.11} parent=11 // pred_fallthru
          _
        // Predicated region
        $region25: #{fcfe_forward.11} parent=11 // pred_check
          %p201 = pneg %p151
        $region26: #{fcfe_forward.11} parent=11 // pred_check_branch
          %203 = sbr.rel (%p201) target = $region28
        $region27: #{fcfe_forward.11} parent=11 // pred_region
          _
        $region28: #{fcfe_forward.11} parent=11 // pred_fallthru
          _
      $region12: #{fcfe_forward.11} parent=5 // pred_fallthru
        _
      %p204 = scmp.lt.s32.totalorder %s15, 2
      // Predicated region
      $region29: #{fcfe_forward.11} parent=5 // pred_check
        %p205 = pneg %p204
      $region30: #{fcfe_forward.11} parent=5 // pred_check_branch
        %207 = sbr.rel (%p205) target = $region32
      $region31: #{fcfe_forward.11} parent=5 // pred_region
        // Predicated region
        $region33: #{fcfe_forward.11} parent=31 // pred_check
          %p208 = pneg %p35
        $region34: #{fcfe_forward.11} parent=31 // pred_check_branch
          %210 = sbr.rel (%p208) target = $region36
        $region35: #{fcfe_forward.11} parent=31 // pred_region
          %p211 = scmp.lt.s32.totalorder %s15, 1
          %s212 = scalar_select %p211, %s15, 1
          %s213 = smul.addr %s212, 8
          %s214 = smul.addr %s213, 8
          %s215 = scalar_lea.vmem %s0, %s214
        $region36: #{fcfe_forward.11} parent=31 // pred_fallthru
          _
        // Predicated region
        $region37: #{fcfe_forward.11} parent=31 // pred_check
          %p216 = pneg %p61
        $region38: #{fcfe_forward.11} parent=31 // pred_check_branch
          %218 = sbr.rel (%p216) target = $region40
        $region39: #{fcfe_forward.11} parent=31 // pred_region
          %p219 = scmp.lt.s32.totalorder %s15, 1
          %s220 = scalar_select %p219, %s15, 1
          %s221 = smul.addr %s220, 8
          %s222 = smul.addr %s221, 8
          %s223 = scalar_lea.vmem %s1, %s222
        $region40: #{fcfe_forward.11} parent=31 // pred_fallthru
          _
      $region32: #{fcfe_forward.11} parent=5 // pred_fallthru
        _
      %p224 = scmp.le.s32.totalorder 1, %s15
      %p225 = scmp.lt.s32.totalorder %s15, 3
      %p226 = pnand %p224, %p225
      %p227 = pneg %p226
      // Predicated region
      $region41: #{fcfe_forward.11} parent=5 // pred_check
        _
      $region42: #{fcfe_forward.11} parent=5 // pred_check_branch
        %229 = sbr.rel (%p226) target = $region44
      $region43: #{fcfe_forward.11} parent=5 // pred_region
        %s230 = ssub.s32 %s15, 1
        %p231 = scmp.lt.s32.totalorder %s20, 1
        %s232 = scalar_select %p231, %s20, 1
        %s233 = smul.addr %s232, 8
        %s234 = smul.addr %s233, 8
        %s235 = scalar_lea.vmem %s0, %s234
        %p236 = pneg %p41
        %p237 = pneg %p38
        %p238 = scmp.lt.s32.totalorder %s20, 1
        %s239 = scalar_select %p238, %s20, 1
        %s240 = smul.addr %s239, 8
        %s241 = smul.addr %s240, 8
        %s242 = scalar_lea.vmem %s1, %s241
        %p243 = pneg %p67
        %p244 = pneg %p64
        %p245 = pneg %p88
        %p246 = pneg %p85
        %p247 = pneg %p109
        %p248 = pneg %p106
        %p249 = pneg %p130
        %p250 = pneg %p127
        %p251 = pneg %p151
        %p252 = pneg %p148
        %p253 = pneg %p177
        %p254 = pneg %p174
        %s255 = sand.u32 %s164, 1
        %s256 = scalar_lea.sflag [#allocation3], %s255
        %s257 = sand.u32 %s164, 1
        %s258 = smul.addr %s257, 64
        %s259 = scalar_lea.vmem [#allocation2], %s258
        %p260 = scmp.lt.s32.totalorder %s20, 1
        %s261 = scalar_select %p260, %s20, 1
        %s262 = smul.addr %s261, 8
        %s263 = smul.addr %s262, 8
        %s264 = scalar_lea.vmem %s0, %s263
        %p265 = scmp.lt.s32.totalorder %s20, 1
        %s266 = scalar_select %p265, %s20, 1
        %s267 = smul.addr %s266, 8
        %s268 = smul.addr %s267, 8
        %s269 = scalar_lea.vmem %s1, %s268
        %v270 = vld [vmem:[%s264] sm:$0xff]
        %v271 = vld [vmem:[%s264 + $0x8] sm:$0xff]
        %v272 = vld [vmem:[%s264 + $0x10] sm:$0xff]
        %v273 = vld [vmem:[%s264 + $0x18] sm:$0xff]
        %v274 = vld [vmem:[%s264 + $0x20] sm:$0xff]
        %v275 = vld [vmem:[%s264 + $0x28] sm:$0xff]
        %v276 = vld [vmem:[%s264 + $0x30] sm:$0xff]
        %v277 = vld [vmem:[%s264 + $0x38] sm:$0xff]
        %286 = vrot.lane.b32.xlu0 %v270, 1
        %v287 = vpop.permute.xlu0 %286
        %288 = vrot.lane.b32.xlu0 %v271, 1
        %v289 = vpop.permute.xlu0 %288
        %290 = vrot.lane.b32.xlu0 %v272, 1
        %v291 = vpop.permute.xlu0 %290
        %292 = vrot.lane.b32.xlu0 %v273, 1
        %v293 = vpop.permute.xlu0 %292
        %294 = vrot.lane.b32.xlu0 %v274, 1
        %v295 = vpop.permute.xlu0 %294
        %296 = vrot.lane.b32.xlu0 %v275, 1
        %v297 = vpop.permute.xlu0 %296
        %298 = vrot.lane.b32.xlu0 %v276, 1
        %v299 = vpop.permute.xlu0 %298
        %300 = vrot.lane.b32.xlu0 %v277, 1
        %v301 = vpop.permute.xlu0 %300
        %vm310 = vcmask 7168
        %v311 = vsel %vm310, 0.0, %v287
        %v312 = vsel %vm310, 0.0, %v289
        %v313 = vsel %vm310, 0.0, %v291
        %v314 = vsel %vm310, 0.0, %v293
        %v315 = vsel %vm310, 0.0, %v295
        %v316 = vsel %vm310, 0.0, %v297
        %v317 = vsel %vm310, 0.0, %v299
        %v318 = vsel %vm310, 0.0, %v301
        %vm319 = vcmask 138240
        %v320 = vsel %vm319, %v311, 0.0
        %v321 = vsel %vm319, %v312, 0.0
        %v322 = vsel %vm319, %v313, 0.0
        %v323 = vsel %vm319, %v314, 0.0
        %v324 = vsel %vm319, %v315, 0.0
        %v325 = vsel %vm319, %v316, 0.0
        %v326 = vsel %vm319, %v317, 0.0
        %v327 = vsel %vm319, %v318, 0.0
        %vm336 = vcmask 1040384
        %v337 = vrot.slane %v320, 7
        %v338 = vrot.slane %v321, 7
        %v339 = vsel %vm336, %v337, %v338
        %v340 = vrot.slane %v322, 7
        %v341 = vrot.slane %v323, 7
        %v342 = vsel %vm336, %v340, %v341
        %v343 = vrot.slane %v324, 7
        %v344 = vrot.slane %v325, 7
        %v345 = vsel %vm336, %v343, %v344
        %v346 = vrot.slane %v326, 7
        %v347 = vrot.slane %v327, 7
        %v348 = vsel %vm336, %v346, %v347
        %v361 = vsel %vm336, 0.0, %v337
        %v362 = vsel %vm336, 0.0, %v340
        %v363 = vsel %vm336, 0.0, %v343
        %v364 = vsel %vm336, 0.0, %v346
        %v365 = vsel %vm336, %v338, 0.0
        %v366 = vsel %vm336, %v341, 0.0
        %v367 = vsel %vm336, %v344, 0.0
        %v368 = vsel %vm336, %v347, 0.0
        %v369 = vld [vmem:[%s3] sm:$0x1]
        %v370 = vld [vmem:[%s3 + $0x1] sm:$0x1]
        %v371 = vld [vmem:[%s3 + $0x2] sm:$0x1]
        %v372 = vld [vmem:[%s3 + $0x3] sm:$0x1]
        %v373 = vld [vmem:[%s2] sm:$0x1]
        %v374 = vld [vmem:[%s2 + $0x1] sm:$0x1]
        %v375 = vld [vmem:[%s2 + $0x2] sm:$0x1]
        %v376 = vld [vmem:[%s2 + $0x3] sm:$0x1]
        %v381 = vlaneseq
        %v382 = vshrl.u32 %v381, 7
        %v383 = vsub.s32 0, %v382
        %v384 = vrot.slane %v373, %v383
        %v385 = vlaneseq
        %v386 = vshrl.u32 %v385, 7
        %v387 = vsub.s32 0, %v386
        %v388 = vrot.slane %v374, %v387
        %v389 = vlaneseq
        %v390 = vshrl.u32 %v389, 7
        %v391 = vsub.s32 0, %v390
        %v392 = vrot.slane %v375, %v391
        %v393 = vlaneseq
        %v394 = vshrl.u32 %v393, 7
        %v395 = vsub.s32 0, %v394
        %v396 = vrot.slane %v376, %v395
        %397 = vset.pattern.permute.xlu0 0
        %398 = vperm.xlu0 %397, %v384
        %v399 = vpop.permute.xlu0 %398
        %401 = vset.pattern.permute.xlu0 0
        %402 = vperm.xlu0 %401, %v388
        %v403 = vpop.permute.xlu0 %402
        %405 = vset.pattern.permute.xlu0 0
        %406 = vperm.xlu0 %405, %v392
        %v407 = vpop.permute.xlu0 %406
        %409 = vset.pattern.permute.xlu0 0
        %410 = vperm.xlu0 %409, %v396
        %v411 = vpop.permute.xlu0 %410
        %v413 = vmul.f32 %v361, %v399
        %v414 = vmul.f32 %v339, %v399
        %v415 = vmul.f32 %v362, %v403
        %v416 = vmul.f32 %v342, %v403
        %v417 = vmul.f32 %v363, %v407
        %v418 = vmul.f32 %v345, %v407
        %v419 = vmul.f32 %v364, %v411
        %v420 = vmul.f32 %v348, %v411
        %v425 = vlaneseq
        %v426 = vshrl.u32 %v425, 7
        %v427 = vsub.s32 0, %v426
        %v428 = vrot.slane %v369, %v427
        %v429 = vlaneseq
        %v430 = vshrl.u32 %v429, 7
        %v431 = vsub.s32 0, %v430
        %v432 = vrot.slane %v370, %v431
        %v433 = vlaneseq
        %v434 = vshrl.u32 %v433, 7
        %v435 = vsub.s32 0, %v434
        %v436 = vrot.slane %v371, %v435
        %v437 = vlaneseq
        %v438 = vshrl.u32 %v437, 7
        %v439 = vsub.s32 0, %v438
        %v440 = vrot.slane %v372, %v439
        %441 = vset.pattern.permute.xlu0 0
        %442 = vperm.xlu0 %441, %v428
        %v443 = vpop.permute.xlu0 %442
        %445 = vset.pattern.permute.xlu0 0
        %446 = vperm.xlu0 %445, %v432
        %v447 = vpop.permute.xlu0 %446
        %449 = vset.pattern.permute.xlu0 0
        %450 = vperm.xlu0 %449, %v436
        %v451 = vpop.permute.xlu0 %450
        %453 = vset.pattern.permute.xlu0 0
        %454 = vperm.xlu0 %453, %v440
        %v455 = vpop.permute.xlu0 %454
        %v457 = vadd.f32 %v443, %v413
        %v458 = vadd.f32 %v443, %v414
        %v459 = vadd.f32 %v447, %v415
        %v460 = vadd.f32 %v447, %v416
        %v461 = vadd.f32 %v451, %v417
        %v462 = vadd.f32 %v451, %v418
        %v463 = vadd.f32 %v455, %v419
        %v464 = vadd.f32 %v455, %v420
        %s465 = scalar_lea.vmem %s2, 4
        %v466 = vld [vmem:[%s465] sm:$0x1]
        %v467 = vld [vmem:[%s465 + $0x1] sm:$0x1]
        %v468 = vld [vmem:[%s465 + $0x2] sm:$0x1]
        %v469 = vld [vmem:[%s465 + $0x3] sm:$0x1]
        %v474 = vlaneseq
        %v475 = vshrl.u32 %v474, 7
        %v476 = vsub.s32 0, %v475
        %v477 = vrot.slane %v466, %v476
        %v478 = vlaneseq
        %v479 = vshrl.u32 %v478, 7
        %v480 = vsub.s32 0, %v479
        %v481 = vrot.slane %v467, %v480
        %v482 = vlaneseq
        %v483 = vshrl.u32 %v482, 7
        %v484 = vsub.s32 0, %v483
        %v485 = vrot.slane %v468, %v484
        %v486 = vlaneseq
        %v487 = vshrl.u32 %v486, 7
        %v488 = vsub.s32 0, %v487
        %v489 = vrot.slane %v469, %v488
        %490 = vset.pattern.permute.xlu0 0
        %491 = vperm.xlu0 %490, %v477
        %v492 = vpop.permute.xlu0 %491
        %494 = vset.pattern.permute.xlu0 0
        %495 = vperm.xlu0 %494, %v481
        %v496 = vpop.permute.xlu0 %495
        %498 = vset.pattern.permute.xlu0 0
        %499 = vperm.xlu0 %498, %v485
        %v500 = vpop.permute.xlu0 %499
        %502 = vset.pattern.permute.xlu0 0
        %503 = vperm.xlu0 %502, %v489
        %v504 = vpop.permute.xlu0 %503
        %v506 = vmul.f32 %v361, %v492
        %v507 = vmul.f32 %v339, %v492
        %v508 = vmul.f32 %v362, %v496
        %v509 = vmul.f32 %v342, %v496
        %v510 = vmul.f32 %v363, %v500
        %v511 = vmul.f32 %v345, %v500
        %v512 = vmul.f32 %v364, %v504
        %v513 = vmul.f32 %v348, %v504
        %522 = vrot.lane.b32.xlu0 %v506, 127
        %v523 = vpop.permute.xlu0 %522
        %524 = vrot.lane.b32.xlu0 %v507, 127
        %v525 = vpop.permute.xlu0 %524
        %526 = vrot.lane.b32.xlu0 %v508, 127
        %v527 = vpop.permute.xlu0 %526
        %528 = vrot.lane.b32.xlu0 %v509, 127
        %v529 = vpop.permute.xlu0 %528
        %530 = vrot.lane.b32.xlu0 %v510, 127
        %v531 = vpop.permute.xlu0 %530
        %532 = vrot.lane.b32.xlu0 %v511, 127
        %v533 = vpop.permute.xlu0 %532
        %534 = vrot.lane.b32.xlu0 %v512, 127
        %v535 = vpop.permute.xlu0 %534
        %536 = vrot.lane.b32.xlu0 %v513, 127
        %v537 = vpop.permute.xlu0 %536
        %v546 = vadd.f32 %v457, %v523
        %v547 = vadd.f32 %v458, %v525
        %v548 = vadd.f32 %v459, %v527
        %v549 = vadd.f32 %v460, %v529
        %v550 = vadd.f32 %v461, %v531
        %v551 = vadd.f32 %v462, %v533
        %v552 = vadd.f32 %v463, %v535
        %v553 = vadd.f32 %v464, %v537
        %s554 = scalar_lea.vmem %s2, 8
        %v555 = vld [vmem:[%s554] sm:$0x1]
        %v556 = vld [vmem:[%s554 + $0x1] sm:$0x1]
        %v557 = vld [vmem:[%s554 + $0x2] sm:$0x1]
        %v558 = vld [vmem:[%s554 + $0x3] sm:$0x1]
        %v563 = vlaneseq
        %v564 = vshrl.u32 %v563, 7
        %v565 = vsub.s32 0, %v564
        %v566 = vrot.slane %v555, %v565
        %v567 = vlaneseq
        %v568 = vshrl.u32 %v567, 7
        %v569 = vsub.s32 0, %v568
        %v570 = vrot.slane %v556, %v569
        %v571 = vlaneseq
        %v572 = vshrl.u32 %v571, 7
        %v573 = vsub.s32 0, %v572
        %v574 = vrot.slane %v557, %v573
        %v575 = vlaneseq
        %v576 = vshrl.u32 %v575, 7
        %v577 = vsub.s32 0, %v576
        %v578 = vrot.slane %v558, %v577
        %579 = vset.pattern.permute.xlu0 0
        %580 = vperm.xlu0 %579, %v566
        %v581 = vpop.permute.xlu0 %580
        %583 = vset.pattern.permute.xlu0 0
        %584 = vperm.xlu0 %583, %v570
        %v585 = vpop.permute.xlu0 %584
        %587 = vset.pattern.permute.xlu0 0
        %588 = vperm.xlu0 %587, %v574
        %v589 = vpop.permute.xlu0 %588
        %591 = vset.pattern.permute.xlu0 0
        %592 = vperm.xlu0 %591, %v578
        %v593 = vpop.permute.xlu0 %592
        %v595 = vmul.f32 %v361, %v581
        %v596 = vmul.f32 %v339, %v581
        %v597 = vmul.f32 %v362, %v585
        %v598 = vmul.f32 %v342, %v585
        %v599 = vmul.f32 %v363, %v589
        %v600 = vmul.f32 %v345, %v589
        %v601 = vmul.f32 %v364, %v593
        %v602 = vmul.f32 %v348, %v593
        %611 = vrot.lane.b32.xlu0 %v595, 126
        %v612 = vpop.permute.xlu0 %611
        %613 = vrot.lane.b32.xlu0 %v596, 126
        %v614 = vpop.permute.xlu0 %613
        %615 = vrot.lane.b32.xlu0 %v597, 126
        %v616 = vpop.permute.xlu0 %615
        %617 = vrot.lane.b32.xlu0 %v598, 126
        %v618 = vpop.permute.xlu0 %617
        %619 = vrot.lane.b32.xlu0 %v599, 126
        %v620 = vpop.permute.xlu0 %619
        %621 = vrot.lane.b32.xlu0 %v600, 126
        %v622 = vpop.permute.xlu0 %621
        %623 = vrot.lane.b32.xlu0 %v601, 126
        %v624 = vpop.permute.xlu0 %623
        %625 = vrot.lane.b32.xlu0 %v602, 126
        %v626 = vpop.permute.xlu0 %625
        %v635 = vadd.f32 %v546, %v612
        %v636 = vadd.f32 %v547, %v614
        %v637 = vadd.f32 %v548, %v616
        %v638 = vadd.f32 %v549, %v618
        %v639 = vadd.f32 %v550, %v620
        %v640 = vadd.f32 %v551, %v622
        %v641 = vadd.f32 %v552, %v624
        %v642 = vadd.f32 %v553, %v626
        %s643 = scalar_lea.vmem %s2, 12
        %v644 = vld [vmem:[%s643] sm:$0x1]
        %v645 = vld [vmem:[%s643 + $0x1] sm:$0x1]
        %v646 = vld [vmem:[%s643 + $0x2] sm:$0x1]
        %v647 = vld [vmem:[%s643 + $0x3] sm:$0x1]
        %v652 = vlaneseq
        %v653 = vshrl.u32 %v652, 7
        %v654 = vsub.s32 0, %v653
        %v655 = vrot.slane %v644, %v654
        %v656 = vlaneseq
        %v657 = vshrl.u32 %v656, 7
        %v658 = vsub.s32 0, %v657
        %v659 = vrot.slane %v645, %v658
        %v660 = vlaneseq
        %v661 = vshrl.u32 %v660, 7
        %v662 = vsub.s32 0, %v661
        %v663 = vrot.slane %v646, %v662
        %v664 = vlaneseq
        %v665 = vshrl.u32 %v664, 7
        %v666 = vsub.s32 0, %v665
        %v667 = vrot.slane %v647, %v666
        %668 = vset.pattern.permute.xlu0 0
        %669 = vperm.xlu0 %668, %v655
        %v670 = vpop.permute.xlu0 %669
        %672 = vset.pattern.permute.xlu0 0
        %673 = vperm.xlu0 %672, %v659
        %v674 = vpop.permute.xlu0 %673
        %676 = vset.pattern.permute.xlu0 0
        %677 = vperm.xlu0 %676, %v663
        %v678 = vpop.permute.xlu0 %677
        %680 = vset.pattern.permute.xlu0 0
        %681 = vperm.xlu0 %680, %v667
        %v682 = vpop.permute.xlu0 %681
        %v684 = vmul.f32 %v361, %v670
        %v685 = vmul.f32 %v339, %v670
        %v686 = vmul.f32 %v365, %v670
        %v687 = vmul.f32 %v362, %v674
        %v688 = vmul.f32 %v342, %v674
        %v689 = vmul.f32 %v366, %v674
        %v690 = vmul.f32 %v363, %v678
        %v691 = vmul.f32 %v345, %v678
        %v692 = vmul.f32 %v367, %v678
        %v693 = vmul.f32 %v364, %v682
        %v694 = vmul.f32 %v348, %v682
        %v695 = vmul.f32 %v368, %v682
        %vm708 = vcmask 1046528
        %v709 = vrot.slane %v684, 1
        %v710 = vrot.slane %v685, 1
        %v711 = vsel %vm708, %v709, %v710
        %v712 = vrot.slane %v686, 1
        %v713 = vsel %vm708, %v710, %v712
        %v714 = vrot.slane %v687, 1
        %v715 = vrot.slane %v688, 1
        %v716 = vsel %vm708, %v714, %v715
        %v717 = vrot.slane %v689, 1
        %v718 = vsel %vm708, %v715, %v717
        %v719 = vrot.slane %v690, 1
        %v720 = vrot.slane %v691, 1
        %v721 = vsel %vm708, %v719, %v720
        %v722 = vrot.slane %v692, 1
        %v723 = vsel %vm708, %v720, %v722
        %v724 = vrot.slane %v693, 1
        %v725 = vrot.slane %v694, 1
        %v726 = vsel %vm708, %v724, %v725
        %v727 = vrot.slane %v695, 1
        %v728 = vsel %vm708, %v725, %v727
        %v737 = vadd.f32 %v635, %v711
        %v738 = vadd.f32 %v636, %v713
        %v739 = vadd.f32 %v637, %v716
        %v740 = vadd.f32 %v638, %v718
        %v741 = vadd.f32 %v639, %v721
        %v742 = vadd.f32 %v640, %v723
        %v743 = vadd.f32 %v641, %v726
        %v744 = vadd.f32 %v642, %v728
        %s745 = scalar_lea.vmem %s2, 16
        %v746 = vld [vmem:[%s745] sm:$0x1]
        %v747 = vld [vmem:[%s745 + $0x1] sm:$0x1]
        %v748 = vld [vmem:[%s745 + $0x2] sm:$0x1]
        %v749 = vld [vmem:[%s745 + $0x3] sm:$0x1]
        %v754 = vlaneseq
        %v755 = vshrl.u32 %v754, 7
        %v756 = vsub.s32 0, %v755
        %v757 = vrot.slane %v746, %v756
        %v758 = vlaneseq
        %v759 = vshrl.u32 %v758, 7
        %v760 = vsub.s32 0, %v759
        %v761 = vrot.slane %v747, %v760
        %v762 = vlaneseq
        %v763 = vshrl.u32 %v762, 7
        %v764 = vsub.s32 0, %v763
        %v765 = vrot.slane %v748, %v764
        %v766 = vlaneseq
        %v767 = vshrl.u32 %v766, 7
        %v768 = vsub.s32 0, %v767
        %v769 = vrot.slane %v749, %v768
        %770 = vset.pattern.permute.xlu0 0
        %771 = vperm.xlu0 %770, %v757
        %v772 = vpop.permute.xlu0 %771
        %774 = vset.pattern.permute.xlu0 0
        %775 = vperm.xlu0 %774, %v761
        %v776 = vpop.permute.xlu0 %775
        %778 = vset.pattern.permute.xlu0 0
        %779 = vperm.xlu0 %778, %v765
        %v780 = vpop.permute.xlu0 %779
        %782 = vset.pattern.permute.xlu0 0
        %783 = vperm.xlu0 %782, %v769
        %v784 = vpop.permute.xlu0 %783
        %v786 = vmul.f32 %v361, %v772
        %v787 = vmul.f32 %v339, %v772
        %v788 = vmul.f32 %v365, %v772
        %v789 = vmul.f32 %v362, %v776
        %v790 = vmul.f32 %v342, %v776
        %v791 = vmul.f32 %v366, %v776
        %v792 = vmul.f32 %v363, %v780
        %v793 = vmul.f32 %v345, %v780
        %v794 = vmul.f32 %v367, %v780
        %v795 = vmul.f32 %v364, %v784
        %v796 = vmul.f32 %v348, %v784
        %v797 = vmul.f32 %v368, %v784
        %v810 = vrot.slane %v786, 1
        %v811 = vrot.slane %v787, 1
        %v812 = vsel %vm708, %v810, %v811
        %v813 = vrot.slane %v788, 1
        %v814 = vsel %vm708, %v811, %v813
        %v815 = vrot.slane %v789, 1
        %v816 = vrot.slane %v790, 1
        %v817 = vsel %vm708, %v815, %v816
        %v818 = vrot.slane %v791, 1
        %v819 = vsel %vm708, %v816, %v818
        %v820 = vrot.slane %v792, 1
        %v821 = vrot.slane %v793, 1
        %v822 = vsel %vm708, %v820, %v821
        %v823 = vrot.slane %v794, 1
        %v824 = vsel %vm708, %v821, %v823
        %v825 = vrot.slane %v795, 1
        %v826 = vrot.slane %v796, 1
        %v827 = vsel %vm708, %v825, %v826
        %v828 = vrot.slane %v797, 1
        %v829 = vsel %vm708, %v826, %v828
        %830 = vrot.lane.b32.xlu0 %v812, 127
        %v831 = vpop.permute.xlu0 %830
        %832 = vrot.lane.b32.xlu0 %v814, 127
        %v833 = vpop.permute.xlu0 %832
        %834 = vrot.lane.b32.xlu0 %v817, 127
        %v835 = vpop.permute.xlu0 %834
        %836 = vrot.lane.b32.xlu0 %v819, 127
        %v837 = vpop.permute.xlu0 %836
        %838 = vrot.lane.b32.xlu0 %v822, 127
        %v839 = vpop.permute.xlu0 %838
        %840 = vrot.lane.b32.xlu0 %v824, 127
        %v841 = vpop.permute.xlu0 %840
        %842 = vrot.lane.b32.xlu0 %v827, 127
        %v843 = vpop.permute.xlu0 %842
        %844 = vrot.lane.b32.xlu0 %v829, 127
        %v845 = vpop.permute.xlu0 %844
        %v854 = vadd.f32 %v737, %v831
        %v855 = vadd.f32 %v738, %v833
        %v856 = vadd.f32 %v739, %v835
        %v857 = vadd.f32 %v740, %v837
        %v858 = vadd.f32 %v741, %v839
        %v859 = vadd.f32 %v742, %v841
        %v860 = vadd.f32 %v743, %v843
        %v861 = vadd.f32 %v744, %v845
        %s862 = scalar_lea.vmem %s2, 20
        %v863 = vld [vmem:[%s862] sm:$0x1]
        %v864 = vld [vmem:[%s862 + $0x1] sm:$0x1]
        %v865 = vld [vmem:[%s862 + $0x2] sm:$0x1]
        %v866 = vld [vmem:[%s862 + $0x3] sm:$0x1]
        %v871 = vlaneseq
        %v872 = vshrl.u32 %v871, 7
        %v873 = vsub.s32 0, %v872
        %v874 = vrot.slane %v863, %v873
        %v875 = vlaneseq
        %v876 = vshrl.u32 %v875, 7
        %v877 = vsub.s32 0, %v876
        %v878 = vrot.slane %v864, %v877
        %v879 = vlaneseq
        %v880 = vshrl.u32 %v879, 7
        %v881 = vsub.s32 0, %v880
        %v882 = vrot.slane %v865, %v881
        %v883 = vlaneseq
        %v884 = vshrl.u32 %v883, 7
        %v885 = vsub.s32 0, %v884
        %v886 = vrot.slane %v866, %v885
        %887 = vset.pattern.permute.xlu0 0
        %888 = vperm.xlu0 %887, %v874
        %v889 = vpop.permute.xlu0 %888
        %891 = vset.pattern.permute.xlu0 0
        %892 = vperm.xlu0 %891, %v878
        %v893 = vpop.permute.xlu0 %892
        %895 = vset.pattern.permute.xlu0 0
        %896 = vperm.xlu0 %895, %v882
        %v897 = vpop.permute.xlu0 %896
        %899 = vset.pattern.permute.xlu0 0
        %900 = vperm.xlu0 %899, %v886
        %v901 = vpop.permute.xlu0 %900
        %v903 = vmul.f32 %v361, %v889
        %v904 = vmul.f32 %v339, %v889
        %v905 = vmul.f32 %v365, %v889
        %v906 = vmul.f32 %v362, %v893
        %v907 = vmul.f32 %v342, %v893
        %v908 = vmul.f32 %v366, %v893
        %v909 = vmul.f32 %v363, %v897
        %v910 = vmul.f32 %v345, %v897
        %v911 = vmul.f32 %v367, %v897
        %v912 = vmul.f32 %v364, %v901
        %v913 = vmul.f32 %v348, %v901
        %v914 = vmul.f32 %v368, %v901
        %v927 = vrot.slane %v903, 1
        %v928 = vrot.slane %v904, 1
        %v929 = vsel %vm708, %v927, %v928
        %v930 = vrot.slane %v905, 1
        %v931 = vsel %vm708, %v928, %v930
        %v932 = vrot.slane %v906, 1
        %v933 = vrot.slane %v907, 1
        %v934 = vsel %vm708, %v932, %v933
        %v935 = vrot.slane %v908, 1
        %v936 = vsel %vm708, %v933, %v935
        %v937 = vrot.slane %v909, 1
        %v938 = vrot.slane %v910, 1
        %v939 = vsel %vm708, %v937, %v938
        %v940 = vrot.slane %v911, 1
        %v941 = vsel %vm708, %v938, %v940
        %v942 = vrot.slane %v912, 1
        %v943 = vrot.slane %v913, 1
        %v944 = vsel %vm708, %v942, %v943
        %v945 = vrot.slane %v914, 1
        %v946 = vsel %vm708, %v943, %v945
        %947 = vrot.lane.b32.xlu0 %v929, 126
        %v948 = vpop.permute.xlu0 %947
        %949 = vrot.lane.b32.xlu0 %v931, 126
        %v950 = vpop.permute.xlu0 %949
        %951 = vrot.lane.b32.xlu0 %v934, 126
        %v952 = vpop.permute.xlu0 %951
        %953 = vrot.lane.b32.xlu0 %v936, 126
        %v954 = vpop.permute.xlu0 %953
        %955 = vrot.lane.b32.xlu0 %v939, 126
        %v956 = vpop.permute.xlu0 %955
        %957 = vrot.lane.b32.xlu0 %v941, 126
        %v958 = vpop.permute.xlu0 %957
        %959 = vrot.lane.b32.xlu0 %v944, 126
        %v960 = vpop.permute.xlu0 %959
        %961 = vrot.lane.b32.xlu0 %v946, 126
        %v962 = vpop.permute.xlu0 %961
        %v971 = vadd.f32 %v854, %v948
        %v972 = vadd.f32 %v855, %v950
        %v973 = vadd.f32 %v856, %v952
        %v974 = vadd.f32 %v857, %v954
        %v975 = vadd.f32 %v858, %v956
        %v976 = vadd.f32 %v859, %v958
        %v977 = vadd.f32 %v860, %v960
        %v978 = vadd.f32 %v861, %v962
        %s979 = scalar_lea.vmem %s2, 24
        %v980 = vld [vmem:[%s979] sm:$0x1]
        %v981 = vld [vmem:[%s979 + $0x1] sm:$0x1]
        %v982 = vld [vmem:[%s979 + $0x2] sm:$0x1]
        %v983 = vld [vmem:[%s979 + $0x3] sm:$0x1]
        %v988 = vlaneseq
        %v989 = vshrl.u32 %v988, 7
        %v990 = vsub.s32 0, %v989
        %v991 = vrot.slane %v980, %v990
        %v992 = vlaneseq
        %v993 = vshrl.u32 %v992, 7
        %v994 = vsub.s32 0, %v993
        %v995 = vrot.slane %v981, %v994
        %v996 = vlaneseq
        %v997 = vshrl.u32 %v996, 7
        %v998 = vsub.s32 0, %v997
        %v999 = vrot.slane %v982, %v998
        %v1000 = vlaneseq
        %v1001 = vshrl.u32 %v1000, 7
        %v1002 = vsub.s32 0, %v1001
        %v1003 = vrot.slane %v983, %v1002
        %1004 = vset.pattern.permute.xlu0 0
        %1005 = vperm.xlu0 %1004, %v991
        %v1006 = vpop.permute.xlu0 %1005
        %1008 = vset.pattern.permute.xlu0 0
        %1009 = vperm.xlu0 %1008, %v995
        %v1010 = vpop.permute.xlu0 %1009
        %1012 = vset.pattern.permute.xlu0 0
        %1013 = vperm.xlu0 %1012, %v999
        %v1014 = vpop.permute.xlu0 %1013
        %1016 = vset.pattern.permute.xlu0 0
        %1017 = vperm.xlu0 %1016, %v1003
        %v1018 = vpop.permute.xlu0 %1017
        %v1020 = vmul.f32 %v361, %v1006
        %v1021 = vmul.f32 %v339, %v1006
        %v1022 = vmul.f32 %v365, %v1006
        %v1023 = vmul.f32 %v362, %v1010
        %v1024 = vmul.f32 %v342, %v1010
        %v1025 = vmul.f32 %v366, %v1010
        %v1026 = vmul.f32 %v363, %v1014
        %v1027 = vmul.f32 %v345, %v1014
        %v1028 = vmul.f32 %v367, %v1014
        %v1029 = vmul.f32 %v364, %v1018
        %v1030 = vmul.f32 %v348, %v1018
        %v1031 = vmul.f32 %v368, %v1018
        %vm1044 = vcmask 1045504
        %v1045 = vrot.slane %v1020, 2
        %v1046 = vrot.slane %v1021, 2
        %v1047 = vsel %vm1044, %v1045, %v1046
        %v1048 = vrot.slane %v1022, 2
        %v1049 = vsel %vm1044, %v1046, %v1048
        %v1050 = vrot.slane %v1023, 2
        %v1051 = vrot.slane %v1024, 2
        %v1052 = vsel %vm1044, %v1050, %v1051
        %v1053 = vrot.slane %v1025, 2
        %v1054 = vsel %vm1044, %v1051, %v1053
        %v1055 = vrot.slane %v1026, 2
        %v1056 = vrot.slane %v1027, 2
        %v1057 = vsel %vm1044, %v1055, %v1056
        %v1058 = vrot.slane %v1028, 2
        %v1059 = vsel %vm1044, %v1056, %v1058
        %v1060 = vrot.slane %v1029, 2
        %v1061 = vrot.slane %v1030, 2
        %v1062 = vsel %vm1044, %v1060, %v1061
        %v1063 = vrot.slane %v1031, 2
        %v1064 = vsel %vm1044, %v1061, %v1063
        %v1073 = vadd.f32 %v971, %v1047
        %v1074 = vadd.f32 %v972, %v1049
        %v1075 = vadd.f32 %v973, %v1052
        %v1076 = vadd.f32 %v974, %v1054
        %v1077 = vadd.f32 %v975, %v1057
        %v1078 = vadd.f32 %v976, %v1059
        %v1079 = vadd.f32 %v977, %v1062
        %v1080 = vadd.f32 %v978, %v1064
        %s1081 = scalar_lea.vmem %s2, 28
        %v1082 = vld [vmem:[%s1081] sm:$0x1]
        %v1083 = vld [vmem:[%s1081 + $0x1] sm:$0x1]
        %v1084 = vld [vmem:[%s1081 + $0x2] sm:$0x1]
        %v1085 = vld [vmem:[%s1081 + $0x3] sm:$0x1]
        %v1090 = vlaneseq
        %v1091 = vshrl.u32 %v1090, 7
        %v1092 = vsub.s32 0, %v1091
        %v1093 = vrot.slane %v1082, %v1092
        %v1094 = vlaneseq
        %v1095 = vshrl.u32 %v1094, 7
        %v1096 = vsub.s32 0, %v1095
        %v1097 = vrot.slane %v1083, %v1096
        %v1098 = vlaneseq
        %v1099 = vshrl.u32 %v1098, 7
        %v1100 = vsub.s32 0, %v1099
        %v1101 = vrot.slane %v1084, %v1100
        %v1102 = vlaneseq
        %v1103 = vshrl.u32 %v1102, 7
        %v1104 = vsub.s32 0, %v1103
        %v1105 = vrot.slane %v1085, %v1104
        %1106 = vset.pattern.permute.xlu0 0
        %1107 = vperm.xlu0 %1106, %v1093
        %v1108 = vpop.permute.xlu0 %1107
        %1110 = vset.pattern.permute.xlu0 0
        %1111 = vperm.xlu0 %1110, %v1097
        %v1112 = vpop.permute.xlu0 %1111
        %1114 = vset.pattern.permute.xlu0 0
        %1115 = vperm.xlu0 %1114, %v1101
        %v1116 = vpop.permute.xlu0 %1115
        %1118 = vset.pattern.permute.xlu0 0
        %1119 = vperm.xlu0 %1118, %v1105
        %v1120 = vpop.permute.xlu0 %1119
        %v1122 = vmul.f32 %v361, %v1108
        %v1123 = vmul.f32 %v339, %v1108
        %v1124 = vmul.f32 %v365, %v1108
        %v1125 = vmul.f32 %v362, %v1112
        %v1126 = vmul.f32 %v342, %v1112
        %v1127 = vmul.f32 %v366, %v1112
        %v1128 = vmul.f32 %v363, %v1116
        %v1129 = vmul.f32 %v345, %v1116
        %v1130 = vmul.f32 %v367, %v1116
        %v1131 = vmul.f32 %v364, %v1120
        %v1132 = vmul.f32 %v348, %v1120
        %v1133 = vmul.f32 %v368, %v1120
        %v1146 = vrot.slane %v1122, 2
        %v1147 = vrot.slane %v1123, 2
        %v1148 = vsel %vm1044, %v1146, %v1147
        %v1149 = vrot.slane %v1124, 2
        %v1150 = vsel %vm1044, %v1147, %v1149
        %v1151 = vrot.slane %v1125, 2
        %v1152 = vrot.slane %v1126, 2
        %v1153 = vsel %vm1044, %v1151, %v1152
        %v1154 = vrot.slane %v1127, 2
        %v1155 = vsel %vm1044, %v1152, %v1154
        %v1156 = vrot.slane %v1128, 2
        %v1157 = vrot.slane %v1129, 2
        %v1158 = vsel %vm1044, %v1156, %v1157
        %v1159 = vrot.slane %v1130, 2
        %v1160 = vsel %vm1044, %v1157, %v1159
        %v1161 = vrot.slane %v1131, 2
        %v1162 = vrot.slane %v1132, 2
        %v1163 = vsel %vm1044, %v1161, %v1162
        %v1164 = vrot.slane %v1133, 2
        %v1165 = vsel %vm1044, %v1162, %v1164
        %1166 = vrot.lane.b32.xlu0 %v1148, 127
        %v1167 = vpop.permute.xlu0 %1166
        %1168 = vrot.lane.b32.xlu0 %v1150, 127
        %v1169 = vpop.permute.xlu0 %1168
        %1170 = vrot.lane.b32.xlu0 %v1153, 127
        %v1171 = vpop.permute.xlu0 %1170
        %1172 = vrot.lane.b32.xlu0 %v1155, 127
        %v1173 = vpop.permute.xlu0 %1172
        %1174 = vrot.lane.b32.xlu0 %v1158, 127
        %v1175 = vpop.permute.xlu0 %1174
        %1176 = vrot.lane.b32.xlu0 %v1160, 127
        %v1177 = vpop.permute.xlu0 %1176
        %1178 = vrot.lane.b32.xlu0 %v1163, 127
        %v1179 = vpop.permute.xlu0 %1178
        %1180 = vrot.lane.b32.xlu0 %v1165, 127
        %v1181 = vpop.permute.xlu0 %1180
        %v1190 = vadd.f32 %v1073, %v1167
        %v1191 = vadd.f32 %v1074, %v1169
        %v1192 = vadd.f32 %v1075, %v1171
        %v1193 = vadd.f32 %v1076, %v1173
        %v1194 = vadd.f32 %v1077, %v1175
        %v1195 = vadd.f32 %v1078, %v1177
        %v1196 = vadd.f32 %v1079, %v1179
        %v1197 = vadd.f32 %v1080, %v1181
        %s1198 = scalar_lea.vmem %s2, 32
        %v1199 = vld [vmem:[%s1198] sm:$0x1]
        %v1200 = vld [vmem:[%s1198 + $0x1] sm:$0x1]
        %v1201 = vld [vmem:[%s1198 + $0x2] sm:$0x1]
        %v1202 = vld [vmem:[%s1198 + $0x3] sm:$0x1]
        %v1207 = vlaneseq
        %v1208 = vshrl.u32 %v1207, 7
        %v1209 = vsub.s32 0, %v1208
        %v1210 = vrot.slane %v1199, %v1209
        %v1211 = vlaneseq
        %v1212 = vshrl.u32 %v1211, 7
        %v1213 = vsub.s32 0, %v1212
        %v1214 = vrot.slane %v1200, %v1213
        %v1215 = vlaneseq
        %v1216 = vshrl.u32 %v1215, 7
        %v1217 = vsub.s32 0, %v1216
        %v1218 = vrot.slane %v1201, %v1217
        %v1219 = vlaneseq
        %v1220 = vshrl.u32 %v1219, 7
        %v1221 = vsub.s32 0, %v1220
        %v1222 = vrot.slane %v1202, %v1221
        %1223 = vset.pattern.permute.xlu0 0
        %1224 = vperm.xlu0 %1223, %v1210
        %v1225 = vpop.permute.xlu0 %1224
        %1227 = vset.pattern.permute.xlu0 0
        %1228 = vperm.xlu0 %1227, %v1214
        %v1229 = vpop.permute.xlu0 %1228
        %1231 = vset.pattern.permute.xlu0 0
        %1232 = vperm.xlu0 %1231, %v1218
        %v1233 = vpop.permute.xlu0 %1232
        %1235 = vset.pattern.permute.xlu0 0
        %1236 = vperm.xlu0 %1235, %v1222
        %v1237 = vpop.permute.xlu0 %1236
        %v1239 = vmul.f32 %v361, %v1225
        %v1240 = vmul.f32 %v339, %v1225
        %v1241 = vmul.f32 %v365, %v1225
        %v1242 = vmul.f32 %v362, %v1229
        %v1243 = vmul.f32 %v342, %v1229
        %v1244 = vmul.f32 %v366, %v1229
        %v1245 = vmul.f32 %v363, %v1233
        %v1246 = vmul.f32 %v345, %v1233
        %v1247 = vmul.f32 %v367, %v1233
        %v1248 = vmul.f32 %v364, %v1237
        %v1249 = vmul.f32 %v348, %v1237
        %v1250 = vmul.f32 %v368, %v1237
        %v1263 = vrot.slane %v1239, 2
        %v1264 = vrot.slane %v1240, 2
        %v1265 = vsel %vm1044, %v1263, %v1264
        %v1266 = vrot.slane %v1241, 2
        %v1267 = vsel %vm1044, %v1264, %v1266
        %v1268 = vrot.slane %v1242, 2
        %v1269 = vrot.slane %v1243, 2
        %v1270 = vsel %vm1044, %v1268, %v1269
        %v1271 = vrot.slane %v1244, 2
        %v1272 = vsel %vm1044, %v1269, %v1271
        %v1273 = vrot.slane %v1245, 2
        %v1274 = vrot.slane %v1246, 2
        %v1275 = vsel %vm1044, %v1273, %v1274
        %v1276 = vrot.slane %v1247, 2
        %v1277 = vsel %vm1044, %v1274, %v1276
        %v1278 = vrot.slane %v1248, 2
        %v1279 = vrot.slane %v1249, 2
        %v1280 = vsel %vm1044, %v1278, %v1279
        %v1281 = vrot.slane %v1250, 2
        %v1282 = vsel %vm1044, %v1279, %v1281
        %1283 = vrot.lane.b32.xlu0 %v1265, 126
        %v1284 = vpop.permute.xlu0 %1283
        %1285 = vrot.lane.b32.xlu0 %v1267, 126
        %v1286 = vpop.permute.xlu0 %1285
        %1287 = vrot.lane.b32.xlu0 %v1270, 126
        %v1288 = vpop.permute.xlu0 %1287
        %1289 = vrot.lane.b32.xlu0 %v1272, 126
        %v1290 = vpop.permute.xlu0 %1289
        %1291 = vrot.lane.b32.xlu0 %v1275, 126
        %v1292 = vpop.permute.xlu0 %1291
        %1293 = vrot.lane.b32.xlu0 %v1277, 126
        %v1294 = vpop.permute.xlu0 %1293
        %1295 = vrot.lane.b32.xlu0 %v1280, 126
        %v1296 = vpop.permute.xlu0 %1295
        %1297 = vrot.lane.b32.xlu0 %v1282, 126
        %v1298 = vpop.permute.xlu0 %1297
        %v1307 = vadd.f32 %v1190, %v1284
        %v1308 = vadd.f32 %v1191, %v1286
        %v1309 = vadd.f32 %v1192, %v1288
        %v1310 = vadd.f32 %v1193, %v1290
        %v1311 = vadd.f32 %v1194, %v1292
        %v1312 = vadd.f32 %v1195, %v1294
        %v1313 = vadd.f32 %v1196, %v1296
        %v1314 = vadd.f32 %v1197, %v1298
        %v1315 = vmul.f32 %v1307, 0.70710677
        %v1316 = vmul.f32 %v1308, 0.70710677
        %v1317 = vmul.f32 %v1309, 0.70710677
        %v1318 = vmul.f32 %v1310, 0.70710677
        %v1319 = vmul.f32 %v1311, 0.70710677
        %v1320 = vmul.f32 %v1312, 0.70710677
        %v1321 = vmul.f32 %v1313, 0.70710677
        %v1322 = vmul.f32 %v1314, 0.70710677
        %v1323 = vand.u32 2147483647, %v1315
        %v1324 = vand.u32 2147483647, %v1316
        %v1325 = vand.u32 2147483647, %v1317
        %v1326 = vand.u32 2147483647, %v1318
        %v1327 = vand.u32 2147483647, %v1319
        %v1328 = vand.u32 2147483647, %v1320
        %v1329 = vand.u32 2147483647, %v1321
        %v1330 = vand.u32 2147483647, %v1322
        %v1331 = vmul.f32 %v1323, 0.3275911
        %v1332 = vmul.f32 %v1324, 0.3275911
        %v1333 = vmul.f32 %v1325, 0.3275911
        %v1334 = vmul.f32 %v1326, 0.3275911
        %v1335 = vmul.f32 %v1327, 0.3275911
        %v1336 = vmul.f32 %v1328, 0.3275911
        %v1337 = vmul.f32 %v1329, 0.3275911
        %v1338 = vmul.f32 %v1330, 0.3275911
        %v1339 = vadd.f32 %v1331, 1.0
        %v1340 = vadd.f32 %v1332, 1.0
        %v1341 = vadd.f32 %v1333, 1.0
        %v1342 = vadd.f32 %v1334, 1.0
        %v1343 = vadd.f32 %v1335, 1.0
        %v1344 = vadd.f32 %v1336, 1.0
        %v1345 = vadd.f32 %v1337, 1.0
        %v1346 = vadd.f32 %v1338, 1.0
        %v1347 = vrcp.pop %v1339
        %v1348 = vmul.f32 1.0, %v1347
        %v1349 = vrcp.pop %v1340
        %v1350 = vmul.f32 1.0, %v1349
        %v1351 = vrcp.pop %v1341
        %v1352 = vmul.f32 1.0, %v1351
        %v1353 = vrcp.pop %v1342
        %v1354 = vmul.f32 1.0, %v1353
        %v1355 = vrcp.pop %v1343
        %v1356 = vmul.f32 1.0, %v1355
        %v1357 = vrcp.pop %v1344
        %v1358 = vmul.f32 1.0, %v1357
        %v1359 = vrcp.pop %v1345
        %v1360 = vmul.f32 1.0, %v1359
        %v1361 = vrcp.pop %v1346
        %v1362 = vmul.f32 1.0, %v1361
        %v1363 = vmul.f32 %v1348, 1.0614054
        %v1364 = vmul.f32 %v1350, 1.0614054
        %v1365 = vmul.f32 %v1352, 1.0614054
        %v1366 = vmul.f32 %v1354, 1.0614054
        %v1367 = vmul.f32 %v1356, 1.0614054
        %v1368 = vmul.f32 %v1358, 1.0614054
        %v1369 = vmul.f32 %v1360, 1.0614054
        %v1370 = vmul.f32 %v1362, 1.0614054
        %v1371 = vadd.f32 %v1363, -1.4531521
        %v1372 = vadd.f32 %v1364, -1.4531521
        %v1373 = vadd.f32 %v1365, -1.4531521
        %v1374 = vadd.f32 %v1366, -1.4531521
        %v1375 = vadd.f32 %v1367, -1.4531521
        %v1376 = vadd.f32 %v1368, -1.4531521
        %v1377 = vadd.f32 %v1369, -1.4531521
        %v1378 = vadd.f32 %v1370, -1.4531521
        %v1379 = vmul.f32 %v1348, %v1371
        %v1380 = vmul.f32 %v1350, %v1372
        %v1381 = vmul.f32 %v1352, %v1373
        %v1382 = vmul.f32 %v1354, %v1374
        %v1383 = vmul.f32 %v1356, %v1375
        %v1384 = vmul.f32 %v1358, %v1376
        %v1385 = vmul.f32 %v1360, %v1377
        %v1386 = vmul.f32 %v1362, %v1378
        %v1387 = vadd.f32 %v1379, 1.4214138
        %v1388 = vadd.f32 %v1380, 1.4214138
        %v1389 = vadd.f32 %v1381, 1.4214138
        %v1390 = vadd.f32 %v1382, 1.4214138
        %v1391 = vadd.f32 %v1383, 1.4214138
        %v1392 = vadd.f32 %v1384, 1.4214138
        %v1393 = vadd.f32 %v1385, 1.4214138
        %v1394 = vadd.f32 %v1386, 1.4214138
        %v1395 = vmul.f32 %v1348, %v1387
        %v1396 = vmul.f32 %v1350, %v1388
        %v1397 = vmul.f32 %v1352, %v1389
        %v1398 = vmul.f32 %v1354, %v1390
        %v1399 = vmul.f32 %v1356, %v1391
        %v1400 = vmul.f32 %v1358, %v1392
        %v1401 = vmul.f32 %v1360, %v1393
        %v1402 = vmul.f32 %v1362, %v1394
        %v1403 = vadd.f32 %v1395, -0.28449672
        %v1404 = vadd.f32 %v1396, -0.28449672
        %v1405 = vadd.f32 %v1397, -0.28449672
        %v1406 = vadd.f32 %v1398, -0.28449672
        %v1407 = vadd.f32 %v1399, -0.28449672
        %v1408 = vadd.f32 %v1400, -0.28449672
        %v1409 = vadd.f32 %v1401, -0.28449672
        %v1410 = vadd.f32 %v1402, -0.28449672
        %v1411 = vmul.f32 %v1348, %v1403
        %v1412 = vmul.f32 %v1350, %v1404
        %v1413 = vmul.f32 %v1352, %v1405
        %v1414 = vmul.f32 %v1354, %v1406
        %v1415 = vmul.f32 %v1356, %v1407
        %v1416 = vmul.f32 %v1358, %v1408
        %v1417 = vmul.f32 %v1360, %v1409
        %v1418 = vmul.f32 %v1362, %v1410
        %v1419 = vadd.f32 %v1411, 0.2548296
        %v1420 = vadd.f32 %v1412, 0.2548296
        %v1421 = vadd.f32 %v1413, 0.2548296
        %v1422 = vadd.f32 %v1414, 0.2548296
        %v1423 = vadd.f32 %v1415, 0.2548296
        %v1424 = vadd.f32 %v1416, 0.2548296
        %v1425 = vadd.f32 %v1417, 0.2548296
        %v1426 = vadd.f32 %v1418, 0.2548296
        %v1427 = vmul.f32 %v1348, %v1419
        %v1428 = vmul.f32 %v1350, %v1420
        %v1429 = vmul.f32 %v1352, %v1421
        %v1430 = vmul.f32 %v1354, %v1422
        %v1431 = vmul.f32 %v1356, %v1423
        %v1432 = vmul.f32 %v1358, %v1424
        %v1433 = vmul.f32 %v1360, %v1425
        %v1434 = vmul.f32 %v1362, %v1426
        %v1435 = vsub.f32 0.0, %v1323
        %v1436 = vsub.f32 0.0, %v1324
        %v1437 = vsub.f32 0.0, %v1325
        %v1438 = vsub.f32 0.0, %v1326
        %v1439 = vsub.f32 0.0, %v1327
        %v1440 = vsub.f32 0.0, %v1328
        %v1441 = vsub.f32 0.0, %v1329
        %v1442 = vsub.f32 0.0, %v1330
        %v1443 = vmul.f32 %v1435, %v1323
        %v1444 = vmul.f32 %v1436, %v1324
        %v1445 = vmul.f32 %v1437, %v1325
        %v1446 = vmul.f32 %v1438, %v1326
        %v1447 = vmul.f32 %v1439, %v1327
        %v1448 = vmul.f32 %v1440, %v1328
        %v1449 = vmul.f32 %v1441, %v1329
        %v1450 = vmul.f32 %v1442, %v1330
        %v1451 = vmul.f32 %v1443, 1.442695
        %v1452 = vpow.pop %v1451
        %v1453 = vmul.f32 %v1444, 1.442695
        %v1454 = vpow.pop %v1453
        %v1455 = vmul.f32 %v1445, 1.442695
        %v1456 = vpow.pop %v1455
        %v1457 = vmul.f32 %v1446, 1.442695
        %v1458 = vpow.pop %v1457
        %v1459 = vmul.f32 %v1447, 1.442695
        %v1460 = vpow.pop %v1459
        %v1461 = vmul.f32 %v1448, 1.442695
        %v1462 = vpow.pop %v1461
        %v1463 = vmul.f32 %v1449, 1.442695
        %v1464 = vpow.pop %v1463
        %v1465 = vmul.f32 %v1450, 1.442695
        %v1466 = vpow.pop %v1465
        %v1467 = vmul.f32 %v1427, %v1452
        %v1468 = vmul.f32 %v1428, %v1454
        %v1469 = vmul.f32 %v1429, %v1456
        %v1470 = vmul.f32 %v1430, %v1458
        %v1471 = vmul.f32 %v1431, %v1460
        %v1472 = vmul.f32 %v1432, %v1462
        %v1473 = vmul.f32 %v1433, %v1464
        %v1474 = vmul.f32 %v1434, %v1466
        %v1475 = vsub.f32 1.0, %v1467
        %v1476 = vsub.f32 1.0, %v1468
        %v1477 = vsub.f32 1.0, %v1469
        %v1478 = vsub.f32 1.0, %v1470
        %v1479 = vsub.f32 1.0, %v1471
        %v1480 = vsub.f32 1.0, %v1472
        %v1481 = vsub.f32 1.0, %v1473
        %v1482 = vsub.f32 1.0, %v1474
        %vm1483 = vcmp.lt.f32.partialorder %v1315, 0.0
        %vm1484 = vcmp.lt.f32.partialorder %v1316, 0.0
        %vm1485 = vcmp.lt.f32.partialorder %v1317, 0.0
        %vm1486 = vcmp.lt.f32.partialorder %v1318, 0.0
        %vm1487 = vcmp.lt.f32.partialorder %v1319, 0.0
        %vm1488 = vcmp.lt.f32.partialorder %v1320, 0.0
        %vm1489 = vcmp.lt.f32.partialorder %v1321, 0.0
        %vm1490 = vcmp.lt.f32.partialorder %v1322, 0.0
        %v1491 = vsub.f32 0.0, %v1475
        %v1492 = vsub.f32 0.0, %v1476
        %v1493 = vsub.f32 0.0, %v1477
        %v1494 = vsub.f32 0.0, %v1478
        %v1495 = vsub.f32 0.0, %v1479
        %v1496 = vsub.f32 0.0, %v1480
        %v1497 = vsub.f32 0.0, %v1481
        %v1498 = vsub.f32 0.0, %v1482
        %v1499 = vsel %vm1483, %v1491, %v1475
        %v1500 = vsel %vm1484, %v1492, %v1476
        %v1501 = vsel %vm1485, %v1493, %v1477
        %v1502 = vsel %vm1486, %v1494, %v1478
        %v1503 = vsel %vm1487, %v1495, %v1479
        %v1504 = vsel %vm1488, %v1496, %v1480
        %v1505 = vsel %vm1489, %v1497, %v1481
        %v1506 = vsel %vm1490, %v1498, %v1482
        %v1507 = vmul.f32 %v1307, 0.5
        %v1508 = vmul.f32 %v1308, 0.5
        %v1509 = vmul.f32 %v1309, 0.5
        %v1510 = vmul.f32 %v1310, 0.5
        %v1511 = vmul.f32 %v1311, 0.5
        %v1512 = vmul.f32 %v1312, 0.5
        %v1513 = vmul.f32 %v1313, 0.5
        %v1514 = vmul.f32 %v1314, 0.5
        %v1515 = vadd.f32 %v1499, 1.0
        %v1516 = vadd.f32 %v1500, 1.0
        %v1517 = vadd.f32 %v1501, 1.0
        %v1518 = vadd.f32 %v1502, 1.0
        %v1519 = vadd.f32 %v1503, 1.0
        %v1520 = vadd.f32 %v1504, 1.0
        %v1521 = vadd.f32 %v1505, 1.0
        %v1522 = vadd.f32 %v1506, 1.0
        %v1523 = vmul.f32 %v1507, %v1515
        %v1524 = vmul.f32 %v1508, %v1516
        %v1525 = vmul.f32 %v1509, %v1517
        %v1526 = vmul.f32 %v1510, %v1518
        %v1527 = vmul.f32 %v1511, %v1519
        %v1528 = vmul.f32 %v1512, %v1520
        %v1529 = vmul.f32 %v1513, %v1521
        %v1530 = vmul.f32 %v1514, %v1522
        %v1531 = vld [vmem:[%s5] sm:$0x1]
        %v1532 = vld [vmem:[%s5 + $0x1] sm:$0x1]
        %v1533 = vld [vmem:[%s5 + $0x2] sm:$0x1]
        %v1534 = vld [vmem:[%s5 + $0x3] sm:$0x1]
        %v1535 = vld [vmem:[%s4] sm:$0x1]
        %v1536 = vld [vmem:[%s4 + $0x1] sm:$0x1]
        %v1537 = vld [vmem:[%s4 + $0x2] sm:$0x1]
        %v1538 = vld [vmem:[%s4 + $0x3] sm:$0x1]
        %v1543 = vlaneseq
        %v1544 = vshrl.u32 %v1543, 7
        %v1545 = vsub.s32 0, %v1544
        %v1546 = vrot.slane %v1535, %v1545
        %v1547 = vlaneseq
        %v1548 = vshrl.u32 %v1547, 7
        %v1549 = vsub.s32 0, %v1548
        %v1550 = vrot.slane %v1536, %v1549
        %v1551 = vlaneseq
        %v1552 = vshrl.u32 %v1551, 7
        %v1553 = vsub.s32 0, %v1552
        %v1554 = vrot.slane %v1537, %v1553
        %v1555 = vlaneseq
        %v1556 = vshrl.u32 %v1555, 7
        %v1557 = vsub.s32 0, %v1556
        %v1558 = vrot.slane %v1538, %v1557
        %1559 = vset.pattern.permute.xlu0 0
        %1560 = vperm.xlu0 %1559, %v1546
        %v1561 = vpop.permute.xlu0 %1560
        %1563 = vset.pattern.permute.xlu0 0
        %1564 = vperm.xlu0 %1563, %v1550
        %v1565 = vpop.permute.xlu0 %1564
        %1567 = vset.pattern.permute.xlu0 0
        %1568 = vperm.xlu0 %1567, %v1554
        %v1569 = vpop.permute.xlu0 %1568
        %1571 = vset.pattern.permute.xlu0 0
        %1572 = vperm.xlu0 %1571, %v1558
        %v1573 = vpop.permute.xlu0 %1572
        %v1575 = vmul.f32 %v1561, %v1523
        %v1576 = vmul.f32 %v1561, %v1524
        %v1577 = vmul.f32 %v1565, %v1523
        %v1578 = vmul.f32 %v1565, %v1524
        %v1579 = vmul.f32 %v1569, %v1523
        %v1580 = vmul.f32 %v1569, %v1524
        %v1581 = vmul.f32 %v1573, %v1523
        %v1582 = vmul.f32 %v1573, %v1524
        %v1587 = vlaneseq
        %v1588 = vshrl.u32 %v1587, 7
        %v1589 = vsub.s32 0, %v1588
        %v1590 = vrot.slane %v1531, %v1589
        %v1591 = vlaneseq
        %v1592 = vshrl.u32 %v1591, 7
        %v1593 = vsub.s32 0, %v1592
        %v1594 = vrot.slane %v1532, %v1593
        %v1595 = vlaneseq
        %v1596 = vshrl.u32 %v1595, 7
        %v1597 = vsub.s32 0, %v1596
        %v1598 = vrot.slane %v1533, %v1597
        %v1599 = vlaneseq
        %v1600 = vshrl.u32 %v1599, 7
        %v1601 = vsub.s32 0, %v1600
        %v1602 = vrot.slane %v1534, %v1601
        %1603 = vset.pattern.permute.xlu0 0
        %1604 = vperm.xlu0 %1603, %v1590
        %v1605 = vpop.permute.xlu0 %1604
        %1607 = vset.pattern.permute.xlu0 0
        %1608 = vperm.xlu0 %1607, %v1594
        %v1609 = vpop.permute.xlu0 %1608
        %1611 = vset.pattern.permute.xlu0 0
        %1612 = vperm.xlu0 %1611, %v1598
        %v1613 = vpop.permute.xlu0 %1612
        %1615 = vset.pattern.permute.xlu0 0
        %1616 = vperm.xlu0 %1615, %v1602
        %v1617 = vpop.permute.xlu0 %1616
        %v1619 = vadd.f32 %v1605, %v1575
        %v1620 = vadd.f32 %v1605, %v1576
        %v1621 = vadd.f32 %v1609, %v1577
        %v1622 = vadd.f32 %v1609, %v1578
        %v1623 = vadd.f32 %v1613, %v1579
        %v1624 = vadd.f32 %v1613, %v1580
        %v1625 = vadd.f32 %v1617, %v1581
        %v1626 = vadd.f32 %v1617, %v1582
        %s1627 = scalar_lea.vmem %s4, 4
        %v1628 = vld [vmem:[%s1627] sm:$0x1]
        %v1629 = vld [vmem:[%s1627 + $0x1] sm:$0x1]
        %v1630 = vld [vmem:[%s1627 + $0x2] sm:$0x1]
        %v1631 = vld [vmem:[%s1627 + $0x3] sm:$0x1]
        %v1636 = vlaneseq
        %v1637 = vshrl.u32 %v1636, 7
        %v1638 = vsub.s32 0, %v1637
        %v1639 = vrot.slane %v1628, %v1638
        %v1640 = vlaneseq
        %v1641 = vshrl.u32 %v1640, 7
        %v1642 = vsub.s32 0, %v1641
        %v1643 = vrot.slane %v1629, %v1642
        %v1644 = vlaneseq
        %v1645 = vshrl.u32 %v1644, 7
        %v1646 = vsub.s32 0, %v1645
        %v1647 = vrot.slane %v1630, %v1646
        %v1648 = vlaneseq
        %v1649 = vshrl.u32 %v1648, 7
        %v1650 = vsub.s32 0, %v1649
        %v1651 = vrot.slane %v1631, %v1650
        %1652 = vset.pattern.permute.xlu0 0
        %1653 = vperm.xlu0 %1652, %v1639
        %v1654 = vpop.permute.xlu0 %1653
        %1656 = vset.pattern.permute.xlu0 0
        %1657 = vperm.xlu0 %1656, %v1643
        %v1658 = vpop.permute.xlu0 %1657
        %1660 = vset.pattern.permute.xlu0 0
        %1661 = vperm.xlu0 %1660, %v1647
        %v1662 = vpop.permute.xlu0 %1661
        %1664 = vset.pattern.permute.xlu0 0
        %1665 = vperm.xlu0 %1664, %v1651
        %v1666 = vpop.permute.xlu0 %1665
        %v1668 = vmul.f32 %v1654, %v1525
        %v1669 = vmul.f32 %v1654, %v1526
        %v1670 = vmul.f32 %v1658, %v1525
        %v1671 = vmul.f32 %v1658, %v1526
        %v1672 = vmul.f32 %v1662, %v1525
        %v1673 = vmul.f32 %v1662, %v1526
        %v1674 = vmul.f32 %v1666, %v1525
        %v1675 = vmul.f32 %v1666, %v1526
        %v1676 = vadd.f32 %v1619, %v1668
        %v1677 = vadd.f32 %v1620, %v1669
        %v1678 = vadd.f32 %v1621, %v1670
        %v1679 = vadd.f32 %v1622, %v1671
        %v1680 = vadd.f32 %v1623, %v1672
        %v1681 = vadd.f32 %v1624, %v1673
        %v1682 = vadd.f32 %v1625, %v1674
        %v1683 = vadd.f32 %v1626, %v1675
        %s1684 = scalar_lea.vmem %s4, 8
        %v1685 = vld [vmem:[%s1684] sm:$0x1]
        %v1686 = vld [vmem:[%s1684 + $0x1] sm:$0x1]
        %v1687 = vld [vmem:[%s1684 + $0x2] sm:$0x1]
        %v1688 = vld [vmem:[%s1684 + $0x3] sm:$0x1]
        %v1693 = vlaneseq
        %v1694 = vshrl.u32 %v1693, 7
        %v1695 = vsub.s32 0, %v1694
        %v1696 = vrot.slane %v1685, %v1695
        %v1697 = vlaneseq
        %v1698 = vshrl.u32 %v1697, 7
        %v1699 = vsub.s32 0, %v1698
        %v1700 = vrot.slane %v1686, %v1699
        %v1701 = vlaneseq
        %v1702 = vshrl.u32 %v1701, 7
        %v1703 = vsub.s32 0, %v1702
        %v1704 = vrot.slane %v1687, %v1703
        %v1705 = vlaneseq
        %v1706 = vshrl.u32 %v1705, 7
        %v1707 = vsub.s32 0, %v1706
        %v1708 = vrot.slane %v1688, %v1707
        %1709 = vset.pattern.permute.xlu0 0
        %1710 = vperm.xlu0 %1709, %v1696
        %v1711 = vpop.permute.xlu0 %1710
        %1713 = vset.pattern.permute.xlu0 0
        %1714 = vperm.xlu0 %1713, %v1700
        %v1715 = vpop.permute.xlu0 %1714
        %1717 = vset.pattern.permute.xlu0 0
        %1718 = vperm.xlu0 %1717, %v1704
        %v1719 = vpop.permute.xlu0 %1718
        %1721 = vset.pattern.permute.xlu0 0
        %1722 = vperm.xlu0 %1721, %v1708
        %v1723 = vpop.permute.xlu0 %1722
        %v1725 = vmul.f32 %v1711, %v1527
        %v1726 = vmul.f32 %v1711, %v1528
        %v1727 = vmul.f32 %v1715, %v1527
        %v1728 = vmul.f32 %v1715, %v1528
        %v1729 = vmul.f32 %v1719, %v1527
        %v1730 = vmul.f32 %v1719, %v1528
        %v1731 = vmul.f32 %v1723, %v1527
        %v1732 = vmul.f32 %v1723, %v1528
        %v1733 = vadd.f32 %v1676, %v1725
        %v1734 = vadd.f32 %v1677, %v1726
        %v1735 = vadd.f32 %v1678, %v1727
        %v1736 = vadd.f32 %v1679, %v1728
        %v1737 = vadd.f32 %v1680, %v1729
        %v1738 = vadd.f32 %v1681, %v1730
        %v1739 = vadd.f32 %v1682, %v1731
        %v1740 = vadd.f32 %v1683, %v1732
        %s1741 = scalar_lea.vmem %s4, 12
        %v1742 = vld [vmem:[%s1741] sm:$0x1]
        %v1743 = vld [vmem:[%s1741 + $0x1] sm:$0x1]
        %v1744 = vld [vmem:[%s1741 + $0x2] sm:$0x1]
        %v1745 = vld [vmem:[%s1741 + $0x3] sm:$0x1]
        %v1750 = vlaneseq
        %v1751 = vshrl.u32 %v1750, 7
        %v1752 = vsub.s32 0, %v1751
        %v1753 = vrot.slane %v1742, %v1752
        %v1754 = vlaneseq
        %v1755 = vshrl.u32 %v1754, 7
        %v1756 = vsub.s32 0, %v1755
        %v1757 = vrot.slane %v1743, %v1756
        %v1758 = vlaneseq
        %v1759 = vshrl.u32 %v1758, 7
        %v1760 = vsub.s32 0, %v1759
        %v1761 = vrot.slane %v1744, %v1760
        %v1762 = vlaneseq
        %v1763 = vshrl.u32 %v1762, 7
        %v1764 = vsub.s32 0, %v1763
        %v1765 = vrot.slane %v1745, %v1764
        %1766 = vset.pattern.permute.xlu0 0
        %1767 = vperm.xlu0 %1766, %v1753
        %v1768 = vpop.permute.xlu0 %1767
        %1770 = vset.pattern.permute.xlu0 0
        %1771 = vperm.xlu0 %1770, %v1757
        %v1772 = vpop.permute.xlu0 %1771
        %1774 = vset.pattern.permute.xlu0 0
        %1775 = vperm.xlu0 %1774, %v1761
        %v1776 = vpop.permute.xlu0 %1775
        %1778 = vset.pattern.permute.xlu0 0
        %1779 = vperm.xlu0 %1778, %v1765
        %v1780 = vpop.permute.xlu0 %1779
        %v1782 = vmul.f32 %v1768, %v1529
        %v1783 = vmul.f32 %v1768, %v1530
        %v1784 = vmul.f32 %v1772, %v1529
        %v1785 = vmul.f32 %v1772, %v1530
        %v1786 = vmul.f32 %v1776, %v1529
        %v1787 = vmul.f32 %v1776, %v1530
        %v1788 = vmul.f32 %v1780, %v1529
        %v1789 = vmul.f32 %v1780, %v1530
        %v1790 = vadd.f32 %v1733, %v1782
        %v1791 = vadd.f32 %v1734, %v1783
        %v1792 = vadd.f32 %v1735, %v1784
        %v1793 = vadd.f32 %v1736, %v1785
        %v1794 = vadd.f32 %v1737, %v1786
        %v1795 = vadd.f32 %v1738, %v1787
        %v1796 = vadd.f32 %v1739, %v1788
        %v1797 = vadd.f32 %v1740, %v1789
        %v1798 = vld [vmem:[%s269] sm:$0xff]
        %v1799 = vld [vmem:[%s269 + $0x8] sm:$0xff]
        %v1800 = vld [vmem:[%s269 + $0x10] sm:$0xff]
        %v1801 = vld [vmem:[%s269 + $0x18] sm:$0xff]
        %v1802 = vld [vmem:[%s269 + $0x20] sm:$0xff]
        %v1803 = vld [vmem:[%s269 + $0x28] sm:$0xff]
        %v1804 = vld [vmem:[%s269 + $0x30] sm:$0xff]
        %v1805 = vld [vmem:[%s269 + $0x38] sm:$0xff]
        %v1806 = vadd.f32 %v1790, %v1798
        %v1807 = vadd.f32 %v1791, %v1799
        %v1808 = vadd.f32 %v1792, %v1800
        %v1809 = vadd.f32 %v1793, %v1801
        %v1810 = vadd.f32 %v1794, %v1802
        %v1811 = vadd.f32 %v1795, %v1803
        %v1812 = vadd.f32 %v1796, %v1804
        %v1813 = vadd.f32 %v1797, %v1805
        %vm1814 = vcmask 130048
        %1815 = vst.msk [vmem:[%s259] sm:$0xff] %vm1814, %v1806
        %1816 = vst.msk [vmem:[%s259 + $0x8] sm:$0xff] %vm1814, %v1807
        %1817 = vst.msk [vmem:[%s259 + $0x10] sm:$0xff] %vm1814, %v1808
        %1818 = vst.msk [vmem:[%s259 + $0x18] sm:$0xff] %vm1814, %v1809
        %1819 = vst.msk [vmem:[%s259 + $0x20] sm:$0xff] %vm1814, %v1810
        %1820 = vst.msk [vmem:[%s259 + $0x28] sm:$0xff] %vm1814, %v1811
        %1821 = vst.msk [vmem:[%s259 + $0x30] sm:$0xff] %vm1814, %v1812
        %1822 = vst.msk [vmem:[%s259 + $0x38] sm:$0xff] %vm1814, %v1813
        %s1823 = sand.u32 %s164, 1
        %s1824 = scalar_lea.sflag [#allocation3], %s1823
        %s1825 = sand.u32 %s164, 1
        %s1826 = smul.addr %s1825, 64
        %s1827 = scalar_lea.vmem [#allocation2], %s1826
        // Predicated region
        $region45: #{fcfe_forward.11} parent=43 // pred_check
          %p1828 = pneg %p174
        $region46: #{fcfe_forward.11} parent=43 // pred_check_branch
          %1830 = sbr.rel (%p1828) target = $region48
        $region47: #{fcfe_forward.11} parent=43 // pred_region
          %s1832 = ssub.s32 1024, 1024
          %1833 = vsyncadd %s1824, %s1832
          %s1834 = smul.addr %s20, 8
          %s1835 = smul.addr %s1834, 128
          %s1836 = scalar_lea.hbm %s6, %s1835
          %s1837 = sshll.u32 %s1827, 4
          %s1838 = int_to_ptr.vmem [resolvable:$true] %s1837
          %1843 = dma.vmem_to_hbm [thread:$0]  %s1838, 1024, %s1836, %s1824, 128, 128, 8
        $region48: #{fcfe_forward.11} parent=43 // pred_fallthru
          _
      $region44: #{fcfe_forward.11} parent=5 // pred_fallthru
        _
      %p1844 = scmp.le.s32.totalorder 2, %s15
      // Predicated region
      $region49: #{fcfe_forward.11} parent=5 // pred_check
        %p1845 = pneg %p1844
      $region50: #{fcfe_forward.11} parent=5 // pred_check_branch
        %1847 = sbr.rel (%p1845) target = $region52
      $region51: #{fcfe_forward.11} parent=5 // pred_region
        %s1848 = ssub.s32 %s15, 2
        // Predicated region
        $region53: #{fcfe_forward.11} parent=51 // pred_check
          %p1849 = pneg %p180
        $region54: #{fcfe_forward.11} parent=51 // pred_check_branch
          %1851 = sbr.rel (%p1849) target = $region56
        $region55: #{fcfe_forward.11} parent=51 // pred_region
          %s1852 = sand.u32 %s165, 1
          %s1853 = scalar_lea.sflag [#allocation3], %s1852
          %s1854 = sand.u32 %s165, 1
          %s1855 = smul.addr %s1854, 64
          %s1856 = scalar_lea.vmem [#allocation2], %s1855
          %1857 = dma.done %s1853, 1024
        $region56: #{fcfe_forward.11} parent=51 // pred_fallthru
          _
      $region52: #{fcfe_forward.11} parent=5 // pred_fallthru
        _
    $region6: #{fcfe_forward.11} parent=1 // loop_footer
      %s19 = sadd.s32 1, %s15
    $region7: #{fcfe_forward.11} parent=1 // loop_footer_branch
      %14 = sbr.rel target = $region3
    $region8: #{fcfe_forward.11} parent=1 // loop_exit
      _
    %1858 = vsyncpa [#allocation3], 1
    %s1859 = scalar_lea.sflag [#allocation3], 1
    %1860 = vsyncpa %s1859, 1

</llo_original>
